<compile_context>
chip_gen: v5e
topology: v5e:2x2
jax: 0.10.0
libtpu: 0.0.40
codegen_flags: <defaults>
</compile_context>

<pallas_src>
import functools

import jax
import jax.numpy as jnp
from jax import lax
from jax.experimental import pallas as pl
from jax.experimental.pallas import tpu as pltpu


_PARALLEL = pltpu.CompilerParams(dimension_semantics=("parallel",))
_ARBITRARY = pltpu.CompilerParams(dimension_semantics=("arbitrary",))


# ----------------------------------------------------------------------------
# Fused CNN extractor kernel (conv1 -> pool -> conv2 -> pool -> conv3 -> GAP)
# ----------------------------------------------------------------------------
def cnn_extractor_kernel(xcol_ref, w1_ref, s1_ref, b1_ref,
                         w2_ref, s2_ref, b2_ref,
                         w3_ref, s3_ref, b3_ref,
                         feat_ref, a2_ref, a3_ref, *, H, W):
    """Fused CNNExtractor forward for a block of F frames.

    xcol_ref : (F, H*W, 27)   bf16  im2col'ed 3x3 patches of the input frames (pad=1)
    w1_ref   : (27, C1)       bf16  conv1 weight, (ky, kx, cin) flattened
    w2_ref   : (9*C1, C2)     bf16  conv2 weight, (ky, kx, cin) flattened
    w3_ref   : (9*C2, C3)     bf16  conv3 weight
    s*_ref   : (1, C*)        f32   folded BN scale  (gamma / sqrt(var + eps))
    b*_ref   : (1, C*)        f32   folded BN bias   (beta + scale*(conv_bias - mean))
    feat_ref : (1, F, C3)     f32   per-frame global-average-pooled features
    a2_ref   : (F, H/2+2, W, C1)    VMEM scratch: H-halo-padded conv2 input (stretched W)
    a3_ref   : (F, H/4+2, W, C2)    VMEM scratch: H-halo-padded conv3 input (stretched W)

    The W axis keeps its full width after pooling ("stretched" grid): valid columns
    are w%2==0 after pool1 and w%4==0 after pool2.  Column shifts become XLU rolls +
    VPU edge masks, so the sublane layout never drops below the (8,128) tile.
    """
    F = xcol_ref.shape[0]
    C1 = w1_ref.shape[1]
    C2 = w2_ref.shape[1]
    C3 = w3_ref.shape[1]
    H2, H3 = H // 2, H // 4

    s1, b1 = s1_ref[...], b1_ref[...]
    s2, b2 = s2_ref[...], b2_ref[...]
    s3, b3 = s3_ref[...], b3_ref[...]

    # Edge masks for the stretched-grid column shifts (also kill roll wrap-around).
    col = lax.broadcasted_iota(jnp.int32, (1, W, 1), 1)

    def edge_masks(step):
        return {-1: (col >= step).astype(jnp.float32),
                +1: (col < W - step).astype(jnp.float32)}

    m2, m3 = edge_masks(2), edge_masks(4)

    # GAP as a selector matmul: picks each frame's rows with w % 4 == 0 and folds the
    # 1/((H/4)*(W/4)) mean scaling, so the reduction uses the MXU, not the XLU.
    R3 = F * H3 * W
    fidx = lax.broadcasted_iota(jnp.int32, (F, R3), 0)
    ridx = lax.broadcasted_iota(jnp.int32, (F, R3), 1)
    lo = fidx * (H3 * W)
    in_frame = (ridx >= lo) & (ridx < lo + H3 * W)
    valid_w = jnp.bitwise_and(ridx, 3) == 0                    # w % 4 == 0 (W % 4 == 0)
    gap_sel = jnp.where(in_frame & valid_w,
                        1.0 / ((H // 4) * (W // 4)), 0.0).astype(jnp.float32)

    # Zero the per-frame H-halo rows of the conv2/conv3 input scratches.
    a2_ref[:, 0:1, :, :] = jnp.zeros((F, 1, W, C1), jnp.float32)
    a2_ref[:, H2 + 1:H2 + 2, :, :] = jnp.zeros((F, 1, W, C1), jnp.float32)
    a3_ref[:, 0:1, :, :] = jnp.zeros((F, 1, W, C2), jnp.float32)
    a3_ref[:, H3 + 1:H3 + 2, :, :] = jnp.zeros((F, 1, W, C2), jnp.float32)

    # ---- conv1 + bn1 + relu: ONE (F*H*W, 27) matmul for the whole frame block ----
    y1 = jnp.dot(xcol_ref[...].reshape(F * H * W, -1), w1_ref[...],
                 preferred_element_type=jnp.float32)
    y1 = jnp.maximum(y1 * s1 + b1, 0.0)                        # (F*H*W, C1) f32

    # ---- maxpool 2x2 #1: compact H (aligned slices), keep W stretched ----
    v1 = y1.reshape(F * H2, 2 * W, C1)
    hp1 = jnp.maximum(v1[:, :W, :], v1[:, W:, :])              # (F*H2, W, C1)
    wp1 = jnp.maximum(hp1, pltpu.roll(hp1, shift=W - 1, axis=1))   # valid @ w%2==0
    a2_ref[:, 1:H2 + 1, :, :] = wp1.reshape(F, H2, W, C1)

    def conv3x3(src_ref, rows, w_ref, cin, w_step, masks):
        """3x3 conv as ONE big-K matmul: lane-concat the 9 shifted/masked planes."""
        planes = []
        for ky in range(3):
            base = src_ref[:, ky:ky + rows, :, :].reshape(F * rows, W, cin)
            for kx in range(3):
                dx = kx - 1
                if dx == 0:
                    planes.append(base)
                else:
                    # out[w] needs in[w + w_step*dx]: rotate on the sublane (W) axis,
                    # then zero the conv zero-padding / wrap-around columns.
                    sh = pltpu.roll(base, shift=(-w_step * dx) % W, axis=1)
                    planes.append(sh * masks[dx])
        patches = jnp.concatenate(planes, axis=-1)             # (F*rows, W, 9*cin)
        patches = patches.reshape(F * rows * W, 9 * cin).astype(jnp.bfloat16)
        return jnp.dot(patches, w_ref[...], preferred_element_type=jnp.float32)

    # ---- conv2 + bn2 + relu (stride-2 column shifts on the stretched grid) ----
    y2 = jnp.maximum(conv3x3(a2_ref, H2, w2_ref, C1, 2, m2) * s2 + b2, 0.0)

    # ---- maxpool 2x2 #2 ----
    v2 = y2.reshape(F * H3, 2 * W, C2)
    hp2 = jnp.maximum(v2[:, :W, :], v2[:, W:, :])              # (F*H3, W, C2)
    wp2 = jnp.maximum(hp2, pltpu.roll(hp2, shift=W - 2, axis=1))   # valid @ w%4==0
    a3_ref[:, 1:H3 + 1, :, :] = wp2.reshape(F, H3, W, C2)

    # ---- conv3 + bn3 + relu (stride-4 column shifts) ----
    y3 = jnp.maximum(conv3x3(a3_ref, H3, w3_ref, C2, 4, m3) * s3 + b3, 0.0)

    # ---- AdaptiveAvgPool2d(1): selector matmul, one store per grid step ----
    feat = jnp.dot(gap_sel, y3, preferred_element_type=jnp.float32)   # (F, C3)
    feat_ref[...] = feat[None]


# ----------------------------------------------------------------------------
# Fused LSTM (+ final Linear) kernel
# ----------------------------------------------------------------------------
def lstm_fc_kernel(x_ref, wih_ref, whh_ref, b_ref, wfc_ref, bfc_ref, o_ref, xg_ref,
                   *, B, T, S):
    """Single-layer batch_first LSTM (PyTorch i,f,g,o gate order) + final Linear.

    x_ref : (T*S, F) bf16   time-major features; timestep t occupies rows
                            [t*S, t*S + B); S = B rounded up to 8 so each step is a
                            full, aligned sublane granule.  Padding rows are zeros.
    The input projection (+ summed b_ih + b_hh) for ALL timesteps is one matmul, the
    serial recurrence only carries h @ whh, runs on all S rows (aligned loads/stores),
    and is statically unrolled over the small trace-time constant T.
    """
    Hd = whh_ref.shape[0]
    xg = jnp.dot(x_ref[...], wih_ref[...],
                 preferred_element_type=jnp.float32) + b_ref[...]       # (T*S, 4H)
    xg_ref[...] = xg.reshape(T, S, 4 * Hd)
    whh = whh_ref[...]

    h = jnp.zeros((S, Hd), jnp.float32)
    c = jnp.zeros((S, Hd), jnp.float32)
    for t in range(T):                                  # static unroll (LLO visibility)
        gates = xg_ref[t] + jnp.dot(h.astype(jnp.bfloat16), whh,
                                    preferred_element_type=jnp.float32)  # (S, 4H)
        i_g = jax.nn.sigmoid(gates[:, 0:Hd])
        f_g = jax.nn.sigmoid(gates[:, Hd:2 * Hd])
        g_g = jnp.tanh(gates[:, 2 * Hd:3 * Hd])
        o_g = jax.nn.sigmoid(gates[:, 3 * Hd:4 * Hd])
        c = f_g * c + i_g * g_g
        h = o_g * jnp.tanh(c)

    logits = jnp.dot(h.astype(jnp.bfloat16), wfc_ref[...],
                     preferred_element_type=jnp.float32) + bfc_ref[...]
    o_ref[...] = logits[:B, :].astype(o_ref.dtype)      # dropout: identity (eval)


# ----------------------------------------------------------------------------
# Wrappers (pallas_call plumbing + pure-glue layout prep)
# ----------------------------------------------------------------------------
def _im2col_3x3(x_nhwc):
    """(N, H, W, C) -> (N, H*W, 9*C) patches of a 3x3 / stride-1 / pad-1 conv (XLA glue)."""
    N, H, W, C = x_nhwc.shape
    xp = jnp.pad(x_nhwc, ((0, 0), (1, 1), (1, 1), (0, 0)))
    cols = [xp[:, ky:ky + H, kx:kx + W, :] for ky in range(3) for kx in range(3)]
    return jnp.concatenate(cols, axis=-1).reshape(N, H * W, 9 * C)


def _frames_per_block(n, cap=16):
    """Largest block (<= cap) dividing N that still leaves >=2 grid steps (so v7x's two
    TensorCores both get work); otherwise the largest divisor <= cap."""
    for fb in range(min(cap, n), 0, -1):
        if n % fb == 0 and n // fb >= 2:
            return fb
    for fb in range(min(cap, n), 0, -1):
        if n % fb == 0:
            return fb
    return 1


def cnn_extractor(frames_nhwc, params):
    """Fused conv1->pool->conv2->pool->conv3->GAP for all frames in one pallas_call."""
    N, H, W, Cin = frames_nhwc.shape
    assert H % 4 == 0 and W % 8 == 0, "kernel assumes H % 4 == 0 and W % 8 == 0"

    # Flatten (ky, kx, cin) into K and cast MXU operands to bf16 in the wrapper.
    w1 = params["w1"].reshape(9 * Cin, -1).astype(jnp.bfloat16)                 # (27, C1)
    w2 = params["w2"].reshape(-1, params["w2"].shape[-1]).astype(jnp.bfloat16)  # (9*C1, C2)
    w3 = params["w3"].reshape(-1, params["w3"].shape[-1]).astype(jnp.bfloat16)  # (9*C2, C3)
    C1, C2, C3 = w1.shape[1], w2.shape[1], w3.shape[1]
    s1, b1 = params["s1"].reshape(1, C1), params["b1"].reshape(1, C1)
    s2, b2 = params["s2"].reshape(1, C2), params["b2"].reshape(1, C2)
    s3, b3 = params["s3"].reshape(1, C3), params["b3"].reshape(1, C3)

    xcol = _im2col_3x3(frames_nhwc).astype(jnp.bfloat16)                # (N, H*W, 9*Cin)
    fb = _frames_per_block(N)

    out = pl.pallas_call(
        functools.partial(cnn_extractor_kernel, H=H, W=W),
        out_shape=jax.ShapeDtypeStruct((N // fb, fb, C3), jnp.float32),
        grid=(N // fb,),
        in_specs=[
            pl.BlockSpec((fb, H * W, 9 * Cin), lambda i: (i, 0, 0)),
            pl.BlockSpec((9 * Cin, C1), lambda i: (0, 0)),
            pl.BlockSpec((1, C1), lambda i: (0, 0)),
            pl.BlockSpec((1, C1), lambda i: (0, 0)),
            pl.BlockSpec((9 * C1, C2), lambda i: (0, 0)),
            pl.BlockSpec((1, C2), lambda i: (0, 0)),
            pl.BlockSpec((1, C2), lambda i: (0, 0)),
            pl.BlockSpec((9 * C2, C3), lambda i: (0, 0)),
            pl.BlockSpec((1, C3), lambda i: (0, 0)),
            pl.BlockSpec((1, C3), lambda i: (0, 0)),
        ],
        out_specs=pl.BlockSpec((1, fb, C3), lambda i: (i, 0, 0)),
        scratch_shapes=[
            pltpu.VMEM((fb, H // 2 + 2, W, C1), jnp.float32),   # conv2 input (H-halo)
            pltpu.VMEM((fb, H // 4 + 2, W, C2), jnp.float32),   # conv3 input (H-halo)
        ],
        compiler_params=_PARALLEL,
    )(xcol, w1, s1, b1, w2, s2, b2, w3, s3, b3)
    return out.reshape(N, C3)


def lstm_fc(feats, params):
    """feats: (B, T, F) f32. Returns (B, num_classes)."""
    B, T, Fd = feats.shape
    Hd = params["whh"].shape[0]
    NC = params["wfc"].shape[1]
    S = ((B + 7) // 8) * 8
    # Time-major, sublane-padded layout (XLA glue): row t*S + b <- feats[b, t].
    x_tm = jnp.pad(jnp.transpose(feats, (1, 0, 2)), ((0, 0), (0, S - B), (0, 0)))
    x_tm = x_tm.reshape(T * S, Fd).astype(jnp.bfloat16)

    return pl.pallas_call(
        functools.partial(lstm_fc_kernel, B=B, T=T, S=S),
        out_shape=jax.ShapeDtypeStruct((B, NC), jnp.float32),
        grid=(1,),
        in_specs=[
            pl.BlockSpec((T * S, Fd), lambda i: (0, 0)),
            pl.BlockSpec((Fd, 4 * Hd), lambda i: (0, 0)),
            pl.BlockSpec((Hd, 4 * Hd), lambda i: (0, 0)),
            pl.BlockSpec((1, 4 * Hd), lambda i: (0, 0)),
            pl.BlockSpec((Hd, NC), lambda i: (0, 0)),
            pl.BlockSpec((1, NC), lambda i: (0, 0)),
        ],
        out_specs=pl.BlockSpec((B, NC), lambda i: (0, 0)),
        scratch_shapes=[pltpu.VMEM((T, S, 4 * Hd), jnp.float32)],
        compiler_params=_ARBITRARY,
    )(x_tm,
      params["wih"].astype(jnp.bfloat16),
      params["whh"].astype(jnp.bfloat16),
      params["blstm"],
      params["wfc"].astype(jnp.bfloat16),
      params["bfc"])


# ----------------------------------------------------------------------------
# Full model forward
# ----------------------------------------------------------------------------
def cnn_lstm_forward(x, params):
    """x: (B, T, 3, H, W) float32 (PyTorch NCHW frames). Returns (B, num_classes)."""
    B, T, C, H, W = x.shape
    frames = jnp.transpose(x.reshape(B * T, C, H, W), (0, 2, 3, 1))  # NHWC glue
    feats = cnn_extractor(frames, params)                            # (B*T, 64)
    feats = feats.reshape(B, T, -1)                                  # stack over time
    return lstm_fc(feats, params)                                    # (B, num_classes)


def init_params(key):
    ks = jax.random.split(key, 16)

    def conv_bn(kw, kb, kg, kbt, cin, cout):
        w = jax.random.normal(kw, (3, 3, cin, cout), jnp.float32) / jnp.sqrt(9.0 * cin)
        b_conv = 0.01 * jax.random.normal(kb, (cout,), jnp.float32)
        gamma = 1.0 + 0.1 * jax.random.normal(kg, (cout,), jnp.float32)
        beta = 0.1 * jax.random.normal(kbt, (cout,), jnp.float32)
        rmean = jnp.zeros((cout,), jnp.float32)
        rvar = jnp.ones((cout,), jnp.float32)
        eps = 1e-5
        scale = gamma / jnp.sqrt(rvar + eps)
        bias = beta + scale * (b_conv - rmean)
        return w, scale, bias

    w1, s1, b1 = conv_bn(ks[0], ks[1], ks[2], ks[3], 3, 32)
    w2, s2, b2 = conv_bn(ks[4], ks[5], ks[6], ks[7], 32, 64)
    w3, s3, b3 = conv_bn(ks[8], ks[9], ks[10], ks[11], 64, 64)

    F, Hd, NC = 64, 128, 5
    k = 1.0 / jnp.sqrt(Hd)
    wih = jax.random.uniform(ks[12], (F, 4 * Hd), jnp.float32, -k, k)
    whh = jax.random.uniform(ks[13], (Hd, 4 * Hd), jnp.float32, -k, k)
    blstm = 2.0 * jax.random.uniform(ks[14], (1, 4 * Hd), jnp.float32, -k, k)  # b_ih + b_hh
    kfc1, kfc2 = jax.random.split(ks[15])
    wfc = jax.random.uniform(kfc1, (Hd, NC), jnp.float32, -k, k)
    bfc = jax.random.uniform(kfc2, (1, NC), jnp.float32, -k, k)

    return dict(w1=w1, s1=s1, b1=b1, w2=w2, s2=s2, b2=b2, w3=w3, s3=s3, b3=b3,
                wih=wih, whh=whh, blstm=blstm, wfc=wfc, bfc=bfc)


if __name__ == "__main__":
    B, T, C, H, W = 2, 4, 3, 16, 16          # conv1 requires 3 input channels
    x = jax.random.normal(jax.random.PRNGKey(0), (B, T, C, H, W), jnp.float32)
    params = init_params(jax.random.PRNGKey(42))

    fwd = jax.jit(cnn_lstm_forward)
    out = jax.block_until_ready(fwd(x, params))

    assert out.shape == (B, 5), out.shape
    assert bool(jnp.all(jnp.isfinite(out)))
    print("KERNEL_OK")
</pallas_src>

<mosaic_0001>
module attributes {stable_mosaic.version = 11 : i64} {
  func.func @cnn_extractor_kernel(%arg0: i32, %arg1: memref<4x256x27xbf16, #tpu.memory_space<vmem>>, %arg2: memref<27x32xbf16, #tpu.memory_space<vmem>>, %arg3: memref<1x32xf32, #tpu.memory_space<vmem>>, %arg4: memref<1x32xf32, #tpu.memory_space<vmem>>, %arg5: memref<288x64xbf16, #tpu.memory_space<vmem>>, %arg6: memref<1x64xf32, #tpu.memory_space<vmem>>, %arg7: memref<1x64xf32, #tpu.memory_space<vmem>>, %arg8: memref<576x64xbf16, #tpu.memory_space<vmem>>, %arg9: memref<1x64xf32, #tpu.memory_space<vmem>>, %arg10: memref<1x64xf32, #tpu.memory_space<vmem>>, %arg11: memref<1x4x64xf32, #tpu.memory_space<vmem>>, %arg12: memref<4x10x16x32xf32, #tpu.memory_space<vmem>>, %arg13: memref<4x6x16x64xf32, #tpu.memory_space<vmem>>) attributes {dimension_semantics = [#tpu.dimension_semantics<parallel>], iteration_bounds = array<i64: 2>, scalar_prefetch = 0 : i64, scratch_operands = 2 : i64, tpu.core_type = #tpu.core_type<tc>, window_params = [{transform_indices = @transform_0, window_bounds = array<i64: 4, 256, 27>}, {pipeline_mode = #tpu.pipeline_mode<synchronous>, transform_indices = @transform_1, window_bounds = array<i64: 27, 32>}, {pipeline_mode = #tpu.pipeline_mode<synchronous>, transform_indices = @transform_2, window_bounds = array<i64: 1, 32>}, {pipeline_mode = #tpu.pipeline_mode<synchronous>, transform_indices = @transform_3, window_bounds = array<i64: 1, 32>}, {pipeline_mode = #tpu.pipeline_mode<synchronous>, transform_indices = @transform_4, window_bounds = array<i64: 288, 64>}, {pipeline_mode = #tpu.pipeline_mode<synchronous>, transform_indices = @transform_5, window_bounds = array<i64: 1, 64>}, {pipeline_mode = #tpu.pipeline_mode<synchronous>, transform_indices = @transform_6, window_bounds = array<i64: 1, 64>}, {pipeline_mode = #tpu.pipeline_mode<synchronous>, transform_indices = @transform_7, window_bounds = array<i64: 576, 64>}, {pipeline_mode = #tpu.pipeline_mode<synchronous>, transform_indices = @transform_8, window_bounds = array<i64: 1, 64>}, {pipeline_mode = #tpu.pipeline_mode<synchronous>, transform_indices = @transform_9, window_bounds = array<i64: 1, 64>}, {transform_indices = @transform_10, window_bounds = array<i64: 1, 4, 64>}]} {
    %c0 = arith.constant 0 : index
    %c0_0 = arith.constant 0 : index
    %0 = vector.load %arg3[%c0, %c0_0] : memref<1x32xf32, #tpu.memory_space<vmem>>, vector<1x32xf32>
    %c0_1 = arith.constant 0 : index
    %c0_2 = arith.constant 0 : index
    %1 = vector.load %arg4[%c0_1, %c0_2] : memref<1x32xf32, #tpu.memory_space<vmem>>, vector<1x32xf32>
    %c0_3 = arith.constant 0 : index
    %c0_4 = arith.constant 0 : index
    %2 = vector.load %arg6[%c0_3, %c0_4] : memref<1x64xf32, #tpu.memory_space<vmem>>, vector<1x64xf32>
    %c0_5 = arith.constant 0 : index
    %c0_6 = arith.constant 0 : index
    %3 = vector.load %arg7[%c0_5, %c0_6] : memref<1x64xf32, #tpu.memory_space<vmem>>, vector<1x64xf32>
    %c0_7 = arith.constant 0 : index
    %c0_8 = arith.constant 0 : index
    %4 = vector.load %arg9[%c0_7, %c0_8] : memref<1x64xf32, #tpu.memory_space<vmem>>, vector<1x64xf32>
    %c0_9 = arith.constant 0 : index
    %c0_10 = arith.constant 0 : index
    %5 = vector.load %arg10[%c0_9, %c0_10] : memref<1x64xf32, #tpu.memory_space<vmem>>, vector<1x64xf32>
    %6 = tpu.iota {dimensions = array<i32: 1>} : vector<1x16x1xi32>
    %c2_i32 = arith.constant 2 : i32
    %7 = vector.broadcast %c2_i32 : i32 to vector<1x16x1xi32>
    %8 = arith.cmpi sge, %6, %7 : vector<1x16x1xi32>
    %9 = arith.extui %8 : vector<1x16x1xi1> to vector<1x16x1xi32>
    %10 = arith.sitofp %9 : vector<1x16x1xi32> to vector<1x16x1xf32>
    %c14_i32 = arith.constant 14 : i32
    %11 = vector.broadcast %c14_i32 : i32 to vector<1x16x1xi32>
    %12 = arith.cmpi slt, %6, %11 : vector<1x16x1xi32>
    %13 = arith.extui %12 : vector<1x16x1xi1> to vector<1x16x1xi32>
    %14 = arith.sitofp %13 : vector<1x16x1xi32> to vector<1x16x1xf32>
    %c4_i32 = arith.constant 4 : i32
    %15 = vector.broadcast %c4_i32 : i32 to vector<1x16x1xi32>
    %16 = arith.cmpi sge, %6, %15 : vector<1x16x1xi32>
    %17 = arith.extui %16 : vector<1x16x1xi1> to vector<1x16x1xi32>
    %18 = arith.sitofp %17 : vector<1x16x1xi32> to vector<1x16x1xf32>
    %c12_i32 = arith.constant 12 : i32
    %19 = vector.broadcast %c12_i32 : i32 to vector<1x16x1xi32>
    %20 = arith.cmpi slt, %6, %19 : vector<1x16x1xi32>
    %21 = arith.extui %20 : vector<1x16x1xi1> to vector<1x16x1xi32>
    %22 = arith.sitofp %21 : vector<1x16x1xi32> to vector<1x16x1xf32>
    %23 = tpu.iota {dimensions = array<i32: 0>} : vector<4x256xi32>
    %24 = tpu.iota {dimensions = array<i32: 1>} : vector<4x256xi32>
    %c64_i32 = arith.constant 64 : i32
    %25 = vector.broadcast %c64_i32 : i32 to vector<4x256xi32>
    %26 = arith.muli %23, %25 : vector<4x256xi32>
    %27 = arith.cmpi sge, %24, %26 : vector<4x256xi32>
    %c64_i32_11 = arith.constant 64 : i32
    %28 = vector.broadcast %c64_i32_11 : i32 to vector<4x256xi32>
    %29 = arith.addi %26, %28 : vector<4x256xi32>
    %30 = arith.cmpi slt, %24, %29 : vector<4x256xi32>
    %31 = arith.andi %27, %30 : vector<4x256xi1>
    %c3_i32 = arith.constant 3 : i32
    %32 = vector.broadcast %c3_i32 : i32 to vector<4x256xi32>
    %33 = arith.andi %24, %32 : vector<4x256xi32>
    %c0_i32 = arith.constant 0 : i32
    %34 = vector.broadcast %c0_i32 : i32 to vector<4x256xi32>
    %35 = arith.cmpi eq, %33, %34 : vector<4x256xi32>
    %36 = arith.andi %31, %35 : vector<4x256xi1>
    %cst = arith.constant 6.250000e-02 : f32
    %cst_12 = arith.constant 0.000000e+00 : f32
    %37 = vector.broadcast %cst : f32 to vector<4x256xf32>
    %38 = vector.broadcast %cst_12 : f32 to vector<4x256xf32>
    %39 = arith.select %36, %37, %38 : vector<4x256xi1>, vector<4x256xf32>
    %cst_13 = arith.constant 0.000000e+00 : f32
    %40 = vector.broadcast %cst_13 : f32 to vector<4x1x16x32xf32>
    %c0_14 = arith.constant 0 : index
    %c0_15 = arith.constant 0 : index
    %c0_16 = arith.constant 0 : index
    %c0_17 = arith.constant 0 : index
    %41 = vector.load %arg12[%c0_14, %c0_15, %c0_16, %c0_17] : memref<4x10x16x32xf32, #tpu.memory_space<vmem>>, vector<4x1x16x32xf32>
    tpu.vector_store %arg12[%c0_14, %c0_15, %c0_16, %c0_17], %40 {strides = array<i32>} : memref<4x10x16x32xf32, #tpu.memory_space<vmem>>, vector<4x1x16x32xf32>,
    %cst_18 = arith.constant 0.000000e+00 : f32
    %42 = vector.broadcast %cst_18 : f32 to vector<4x1x16x32xf32>
    %c0_19 = arith.constant 0 : index
    %c9 = arith.constant 9 : index
    %c0_20 = arith.constant 0 : index
    %c0_21 = arith.constant 0 : index
    %43 = vector.load %arg12[%c0_19, %c9, %c0_20, %c0_21] : memref<4x10x16x32xf32, #tpu.memory_space<vmem>>, vector<4x1x16x32xf32>
    tpu.vector_store %arg12[%c0_19, %c9, %c0_20, %c0_21], %42 {strides = array<i32>} : memref<4x10x16x32xf32, #tpu.memory_space<vmem>>, vector<4x1x16x32xf32>,
    %cst_22 = arith.constant 0.000000e+00 : f32
    %44 = vector.broadcast %cst_22 : f32 to vector<4x1x16x64xf32>
    %c0_23 = arith.constant 0 : index
    %c0_24 = arith.constant 0 : index
    %c0_25 = arith.constant 0 : index
    %c0_26 = arith.constant 0 : index
    %45 = vector.load %arg13[%c0_23, %c0_24, %c0_25, %c0_26] : memref<4x6x16x64xf32, #tpu.memory_space<vmem>>, vector<4x1x16x64xf32>
    tpu.vector_store %arg13[%c0_23, %c0_24, %c0_25, %c0_26], %44 {strides = array<i32>} : memref<4x6x16x64xf32, #tpu.memory_space<vmem>>, vector<4x1x16x64xf32>,
    %cst_27 = arith.constant 0.000000e+00 : f32
    %46 = vector.broadcast %cst_27 : f32 to vector<4x1x16x64xf32>
    %c0_28 = arith.constant 0 : index
    %c5 = arith.constant 5 : index
    %c0_29 = arith.constant 0 : index
    %c0_30 = arith.constant 0 : index
    %47 = vector.load %arg13[%c0_28, %c5, %c0_29, %c0_30] : memref<4x6x16x64xf32, #tpu.memory_space<vmem>>, vector<4x1x16x64xf32>
    tpu.vector_store %arg13[%c0_28, %c5, %c0_29, %c0_30], %46 {strides = array<i32>} : memref<4x6x16x64xf32, #tpu.memory_space<vmem>>, vector<4x1x16x64xf32>,
    %c0_31 = arith.constant 0 : index
    %c0_32 = arith.constant 0 : index
    %c0_33 = arith.constant 0 : index
    %48 = vector.load %arg1[%c0_31, %c0_32, %c0_33] : memref<4x256x27xbf16, #tpu.memory_space<vmem>>, vector<4x256x27xbf16>
    %49 = vector.shape_cast %48 : vector<4x256x27xbf16> to vector<1024x27xbf16>
    %c0_34 = arith.constant 0 : index
    %c0_35 = arith.constant 0 : index
    %50 = vector.load %arg2[%c0_34, %c0_35] : memref<27x32xbf16, #tpu.memory_space<vmem>>, vector<27x32xbf16>
    %cst_36 = arith.constant dense<0.000000e+00> : vector<1024x32xf32>
    %51 = tpu.matmul %49, %50, %cst_36 {dimension_numbers = #tpu.dot_dimension_numbers<[1], [0], [0], [1], [0, 0, 1, 1], [], []>} : vector<1024x27xbf16>, vector<27x32xbf16>, vector<1024x32xf32> -> vector<1024x32xf32>
    %52 = vector.broadcast %0 : vector<1x32xf32> to vector<1024x32xf32>
    %53 = arith.mulf %51, %52 : vector<1024x32xf32>
    %54 = vector.broadcast %1 : vector<1x32xf32> to vector<1024x32xf32>
    %55 = arith.addf %53, %54 : vector<1024x32xf32>
    %cst_37 = arith.constant 0.000000e+00 : f32
    %56 = vector.broadcast %cst_37 : f32 to vector<1024x32xf32>
    %57 = arith.maximumf %55, %56 : vector<1024x32xf32>
    %58 = vector.shape_cast %57 : vector<1024x32xf32> to vector<32x32x32xf32>
    %59 = vector.extract_strided_slice %58 {offsets = [0, 0, 0], sizes = [32, 16, 32], strides = [1, 1, 1]} : vector<32x32x32xf32> to vector<32x16x32xf32>
    %60 = vector.extract_strided_slice %58 {offsets = [0, 16, 0], sizes = [32, 16, 32], strides = [1, 1, 1]} : vector<32x32x32xf32> to vector<32x16x32xf32>
    %61 = arith.maximumf %59, %60 : vector<32x16x32xf32>
    %c15_i32 = arith.constant 15 : i32
    %62 = tpu.dynamic_rotate %61 by %c15_i32 dim 1 : vector<32x16x32xf32>, i32 -> vector<32x16x32xf32>
    %63 = arith.maximumf %61, %62 : vector<32x16x32xf32>
    %64 = vector.shape_cast %63 : vector<32x16x32xf32> to vector<4x8x16x32xf32>
    %c0_38 = arith.constant 0 : index
    %c1 = arith.constant 1 : index
    %c0_39 = arith.constant 0 : index
    %c0_40 = arith.constant 0 : index
    %65 = vector.load %arg12[%c0_38, %c1, %c0_39, %c0_40] : memref<4x10x16x32xf32, #tpu.memory_space<vmem>>, vector<4x8x16x32xf32>
    tpu.vector_store %arg12[%c0_38, %c1, %c0_39, %c0_40], %64 {strides = array<i32>} : memref<4x10x16x32xf32, #tpu.memory_space<vmem>>, vector<4x8x16x32xf32>,
    %c0_41 = arith.constant 0 : index
    %c0_42 = arith.constant 0 : index
    %c0_43 = arith.constant 0 : index
    %c0_44 = arith.constant 0 : index
    %66 = vector.load %arg12[%c0_41, %c0_42, %c0_43, %c0_44] : memref<4x10x16x32xf32, #tpu.memory_space<vmem>>, vector<4x8x16x32xf32>
    %67 = vector.shape_cast %66 : vector<4x8x16x32xf32> to vector<32x16x32xf32>
    %c2_i32_45 = arith.constant 2 : i32
    %68 = tpu.dynamic_rotate %67 by %c2_i32_45 dim 1 : vector<32x16x32xf32>, i32 -> vector<32x16x32xf32>
    %69 = vector.broadcast %10 : vector<1x16x1xf32> to vector<32x16x32xf32>
    %70 = arith.mulf %68, %69 : vector<32x16x32xf32>
    %c14_i32_46 = arith.constant 14 : i32
    %71 = tpu.dynamic_rotate %67 by %c14_i32_46 dim 1 : vector<32x16x32xf32>, i32 -> vector<32x16x32xf32>
    %72 = vector.broadcast %14 : vector<1x16x1xf32> to vector<32x16x32xf32>
    %73 = arith.mulf %71, %72 : vector<32x16x32xf32>
    %c0_47 = arith.constant 0 : index
    %c1_48 = arith.constant 1 : index
    %c0_49 = arith.constant 0 : index
    %c0_50 = arith.constant 0 : index
    %74 = vector.load %arg12[%c0_47, %c1_48, %c0_49, %c0_50] : memref<4x10x16x32xf32, #tpu.memory_space<vmem>>, vector<4x8x16x32xf32>
    %75 = vector.shape_cast %74 : vector<4x8x16x32xf32> to vector<32x16x32xf32>
    %c2_i32_51 = arith.constant 2 : i32
    %76 = tpu.dynamic_rotate %75 by %c2_i32_51 dim 1 : vector<32x16x32xf32>, i32 -> vector<32x16x32xf32>
    %77 = vector.broadcast %10 : vector<1x16x1xf32> to vector<32x16x32xf32>
    %78 = arith.mulf %76, %77 : vector<32x16x32xf32>
    %c14_i32_52 = arith.constant 14 : i32
    %79 = tpu.dynamic_rotate %75 by %c14_i32_52 dim 1 : vector<32x16x32xf32>, i32 -> vector<32x16x32xf32>
    %80 = vector.broadcast %14 : vector<1x16x1xf32> to vector<32x16x32xf32>
    %81 = arith.mulf %79, %80 : vector<32x16x32xf32>
    %c0_53 = arith.constant 0 : index
    %c2 = arith.constant 2 : index
    %c0_54 = arith.constant 0 : index
    %c0_55 = arith.constant 0 : index
    %82 = vector.load %arg12[%c0_53, %c2, %c0_54, %c0_55] : memref<4x10x16x32xf32, #tpu.memory_space<vmem>>, vector<4x8x16x32xf32>
    %83 = vector.shape_cast %82 : vector<4x8x16x32xf32> to vector<32x16x32xf32>
    %c2_i32_56 = arith.constant 2 : i32
    %84 = tpu.dynamic_rotate %83 by %c2_i32_56 dim 1 : vector<32x16x32xf32>, i32 -> vector<32x16x32xf32>
    %85 = vector.broadcast %10 : vector<1x16x1xf32> to vector<32x16x32xf32>
    %86 = arith.mulf %84, %85 : vector<32x16x32xf32>
    %c14_i32_57 = arith.constant 14 : i32
    %87 = tpu.dynamic_rotate %83 by %c14_i32_57 dim 1 : vector<32x16x32xf32>, i32 -> vector<32x16x32xf32>
    %88 = vector.broadcast %14 : vector<1x16x1xf32> to vector<32x16x32xf32>
    %89 = arith.mulf %87, %88 : vector<32x16x32xf32>
    %90 = tpu.concatenate %70, %67, %73, %78, %75, %81, %86, %83, %89 in 2 : vector<32x16x32xf32>, vector<32x16x32xf32>, vector<32x16x32xf32>, vector<32x16x32xf32>, vector<32x16x32xf32>, vector<32x16x32xf32>, vector<32x16x32xf32>, vector<32x16x32xf32>, vector<32x16x32xf32> -> vector<32x16x288xf32>
    %91 = vector.shape_cast %90 : vector<32x16x288xf32> to vector<512x288xf32>
    %92 = arith.truncf %91 : vector<512x288xf32> to vector<512x288xbf16>
    %c0_58 = arith.constant 0 : index
    %c0_59 = arith.constant 0 : index
    %93 = vector.load %arg5[%c0_58, %c0_59] : memref<288x64xbf16, #tpu.memory_space<vmem>>, vector<288x64xbf16>
    %cst_60 = arith.constant dense<0.000000e+00> : vector<512x64xf32>
    %94 = tpu.matmul %92, %93, %cst_60 {dimension_numbers = #tpu.dot_dimension_numbers<[1], [0], [0], [1], [0, 0, 1, 1], [], []>} : vector<512x288xbf16>, vector<288x64xbf16>, vector<512x64xf32> -> vector<512x64xf32>
    %95 = vector.broadcast %2 : vector<1x64xf32> to vector<512x64xf32>
    %96 = arith.mulf %94, %95 : vector<512x64xf32>
    %97 = vector.broadcast %3 : vector<1x64xf32> to vector<512x64xf32>
    %98 = arith.addf %96, %97 : vector<512x64xf32>
    %cst_61 = arith.constant 0.000000e+00 : f32
    %99 = vector.broadcast %cst_61 : f32 to vector<512x64xf32>
    %100 = arith.maximumf %98, %99 : vector<512x64xf32>
    %101 = vector.shape_cast %100 : vector<512x64xf32> to vector<16x32x64xf32>
    %102 = vector.extract_strided_slice %101 {offsets = [0, 0, 0], sizes = [16, 16, 64], strides = [1, 1, 1]} : vector<16x32x64xf32> to vector<16x16x64xf32>
    %103 = vector.extract_strided_slice %101 {offsets = [0, 16, 0], sizes = [16, 16, 64], strides = [1, 1, 1]} : vector<16x32x64xf32> to vector<16x16x64xf32>
    %104 = arith.maximumf %102, %103 : vector<16x16x64xf32>
    %c14_i32_62 = arith.constant 14 : i32
    %105 = tpu.dynamic_rotate %104 by %c14_i32_62 dim 1 : vector<16x16x64xf32>, i32 -> vector<16x16x64xf32>
    %106 = arith.maximumf %104, %105 : vector<16x16x64xf32>
    %107 = vector.shape_cast %106 : vector<16x16x64xf32> to vector<4x4x16x64xf32>
    %c0_63 = arith.constant 0 : index
    %c1_64 = arith.constant 1 : index
    %c0_65 = arith.constant 0 : index
    %c0_66 = arith.constant 0 : index
    %108 = vector.load %arg13[%c0_63, %c1_64, %c0_65, %c0_66] : memref<4x6x16x64xf32, #tpu.memory_space<vmem>>, vector<4x4x16x64xf32>
    tpu.vector_store %arg13[%c0_63, %c1_64, %c0_65, %c0_66], %107 {strides = array<i32>} : memref<4x6x16x64xf32, #tpu.memory_space<vmem>>, vector<4x4x16x64xf32>,
    %c0_67 = arith.constant 0 : index
    %c0_68 = arith.constant 0 : index
    %c0_69 = arith.constant 0 : index
    %c0_70 = arith.constant 0 : index
    %109 = vector.load %arg13[%c0_67, %c0_68, %c0_69, %c0_70] : memref<4x6x16x64xf32, #tpu.memory_space<vmem>>, vector<4x4x16x64xf32>
    %110 = vector.shape_cast %109 : vector<4x4x16x64xf32> to vector<16x16x64xf32>
    %c4_i32_71 = arith.constant 4 : i32
    %111 = tpu.dynamic_rotate %110 by %c4_i32_71 dim 1 : vector<16x16x64xf32>, i32 -> vector<16x16x64xf32>
    %112 = vector.broadcast %18 : vector<1x16x1xf32> to vector<16x16x64xf32>
    %113 = arith.mulf %111, %112 : vector<16x16x64xf32>
    %c12_i32_72 = arith.constant 12 : i32
    %114 = tpu.dynamic_rotate %110 by %c12_i32_72 dim 1 : vector<16x16x64xf32>, i32 -> vector<16x16x64xf32>
    %115 = vector.broadcast %22 : vector<1x16x1xf32> to vector<16x16x64xf32>
    %116 = arith.mulf %114, %115 : vector<16x16x64xf32>
    %c0_73 = arith.constant 0 : index
    %c1_74 = arith.constant 1 : index
    %c0_75 = arith.constant 0 : index
    %c0_76 = arith.constant 0 : index
    %117 = vector.load %arg13[%c0_73, %c1_74, %c0_75, %c0_76] : memref<4x6x16x64xf32, #tpu.memory_space<vmem>>, vector<4x4x16x64xf32>
    %118 = vector.shape_cast %117 : vector<4x4x16x64xf32> to vector<16x16x64xf32>
    %c4_i32_77 = arith.constant 4 : i32
    %119 = tpu.dynamic_rotate %118 by %c4_i32_77 dim 1 : vector<16x16x64xf32>, i32 -> vector<16x16x64xf32>
    %120 = vector.broadcast %18 : vector<1x16x1xf32> to vector<16x16x64xf32>
    %121 = arith.mulf %119, %120 : vector<16x16x64xf32>
    %c12_i32_78 = arith.constant 12 : i32
    %122 = tpu.dynamic_rotate %118 by %c12_i32_78 dim 1 : vector<16x16x64xf32>, i32 -> vector<16x16x64xf32>
    %123 = vector.broadcast %22 : vector<1x16x1xf32> to vector<16x16x64xf32>
    %124 = arith.mulf %122, %123 : vector<16x16x64xf32>
    %c0_79 = arith.constant 0 : index
    %c2_80 = arith.constant 2 : index
    %c0_81 = arith.constant 0 : index
    %c0_82 = arith.constant 0 : index
    %125 = vector.load %arg13[%c0_79, %c2_80, %c0_81, %c0_82] : memref<4x6x16x64xf32, #tpu.memory_space<vmem>>, vector<4x4x16x64xf32>
    %126 = vector.shape_cast %125 : vector<4x4x16x64xf32> to vector<16x16x64xf32>
    %c4_i32_83 = arith.constant 4 : i32
    %127 = tpu.dynamic_rotate %126 by %c4_i32_83 dim 1 : vector<16x16x64xf32>, i32 -> vector<16x16x64xf32>
    %128 = vector.broadcast %18 : vector<1x16x1xf32> to vector<16x16x64xf32>
    %129 = arith.mulf %127, %128 : vector<16x16x64xf32>
    %c12_i32_84 = arith.constant 12 : i32
    %130 = tpu.dynamic_rotate %126 by %c12_i32_84 dim 1 : vector<16x16x64xf32>, i32 -> vector<16x16x64xf32>
    %131 = vector.broadcast %22 : vector<1x16x1xf32> to vector<16x16x64xf32>
    %132 = arith.mulf %130, %131 : vector<16x16x64xf32>
    %133 = tpu.concatenate %113, %110, %116, %121, %118, %124, %129, %126, %132 in 2 : vector<16x16x64xf32>, vector<16x16x64xf32>, vector<16x16x64xf32>, vector<16x16x64xf32>, vector<16x16x64xf32>, vector<16x16x64xf32>, vector<16x16x64xf32>, vector<16x16x64xf32>, vector<16x16x64xf32> -> vector<16x16x576xf32>
    %134 = vector.shape_cast %133 : vector<16x16x576xf32> to vector<256x576xf32>
    %135 = arith.truncf %134 : vector<256x576xf32> to vector<256x576xbf16>
    %c0_85 = arith.constant 0 : index
    %c0_86 = arith.constant 0 : index
    %136 = vector.load %arg8[%c0_85, %c0_86] : memref<576x64xbf16, #tpu.memory_space<vmem>>, vector<576x64xbf16>
    %cst_87 = arith.constant dense<0.000000e+00> : vector<256x64xf32>
    %137 = tpu.matmul %135, %136, %cst_87 {dimension_numbers = #tpu.dot_dimension_numbers<[1], [0], [0], [1], [0, 0, 1, 1], [], []>} : vector<256x576xbf16>, vector<576x64xbf16>, vector<256x64xf32> -> vector<256x64xf32>
    %138 = vector.broadcast %4 : vector<1x64xf32> to vector<256x64xf32>
    %139 = arith.mulf %137, %138 : vector<256x64xf32>
    %140 = vector.broadcast %5 : vector<1x64xf32> to vector<256x64xf32>
    %141 = arith.addf %139, %140 : vector<256x64xf32>
    %cst_88 = arith.constant 0.000000e+00 : f32
    %142 = vector.broadcast %cst_88 : f32 to vector<256x64xf32>
    %143 = arith.maximumf %141, %142 : vector<256x64xf32>
    %cst_89 = arith.constant dense<0.000000e+00> : vector<4x64xf32>
    %144 = tpu.matmul %39, %143, %cst_89 {dimension_numbers = #tpu.dot_dimension_numbers<[1], [0], [0], [1], [0, 0, 1, 1], [], []>} : vector<4x256xf32>, vector<256x64xf32>, vector<4x64xf32> -> vector<4x64xf32>
    %145 = vector.shape_cast %144 : vector<4x64xf32> to vector<1x4x64xf32>
    %c0_90 = arith.constant 0 : index
    %c0_91 = arith.constant 0 : index
    %c0_92 = arith.constant 0 : index
    %146 = vector.load %arg11[%c0_90, %c0_91, %c0_92] : memref<1x4x64xf32, #tpu.memory_space<vmem>>, vector<1x4x64xf32>
    tpu.vector_store %arg11[%c0_90, %c0_91, %c0_92], %145 {strides = array<i32>} : memref<1x4x64xf32, #tpu.memory_space<vmem>>, vector<1x4x64xf32>,
    return
  }
  func.func @transform_0(%arg0: i32) -> (i32, i32, i32) {
    %c0_i32 = arith.constant 0 : i32
    %c0_i32_0 = arith.constant 0 : i32
    %c0_i32_1 = arith.constant 0 : i32
    return %arg0, %c0_i32, %c0_i32_0 : i32, i32, i32
  }
  func.func @transform_1(%arg0: i32) -> (i32, i32) {
    %c0_i32 = arith.constant 0 : i32
    %c0_i32_0 = arith.constant 0 : i32
    %c0_i32_1 = arith.constant 0 : i32
    return %c0_i32, %c0_i32_0 : i32, i32
  }
  func.func @transform_2(%arg0: i32) -> (i32, i32) {
    %c0_i32 = arith.constant 0 : i32
    %c0_i32_0 = arith.constant 0 : i32
    %c0_i32_1 = arith.constant 0 : i32
    return %c0_i32, %c0_i32_0 : i32, i32
  }
  func.func @transform_3(%arg0: i32) -> (i32, i32) {
    %c0_i32 = arith.constant 0 : i32
    %c0_i32_0 = arith.constant 0 : i32
    %c0_i32_1 = arith.constant 0 : i32
    return %c0_i32, %c0_i32_0 : i32, i32
  }
  func.func @transform_4(%arg0: i32) -> (i32, i32) {
    %c0_i32 = arith.constant 0 : i32
    %c0_i32_0 = arith.constant 0 : i32
    %c0_i32_1 = arith.constant 0 : i32
    return %c0_i32, %c0_i32_0 : i32, i32
  }
  func.func @transform_5(%arg0: i32) -> (i32, i32) {
    %c0_i32 = arith.constant 0 : i32
    %c0_i32_0 = arith.constant 0 : i32
    %c0_i32_1 = arith.constant 0 : i32
    return %c0_i32, %c0_i32_0 : i32, i32
  }
  func.func @transform_6(%arg0: i32) -> (i32, i32) {
    %c0_i32 = arith.constant 0 : i32
    %c0_i32_0 = arith.constant 0 : i32
    %c0_i32_1 = arith.constant 0 : i32
    return %c0_i32, %c0_i32_0 : i32, i32
  }
  func.func @transform_7(%arg0: i32) -> (i32, i32) {
    %c0_i32 = arith.constant 0 : i32
    %c0_i32_0 = arith.constant 0 : i32
    %c0_i32_1 = arith.constant 0 : i32
    return %c0_i32, %c0_i32_0 : i32, i32
  }
  func.func @transform_8(%arg0: i32) -> (i32, i32) {
    %c0_i32 = arith.constant 0 : i32
    %c0_i32_0 = arith.constant 0 : i32
    %c0_i32_1 = arith.constant 0 : i32
    return %c0_i32, %c0_i32_0 : i32, i32
  }
  func.func @transform_9(%arg0: i32) -> (i32, i32) {
    %c0_i32 = arith.constant 0 : i32
    %c0_i32_0 = arith.constant 0 : i32
    %c0_i32_1 = arith.constant 0 : i32
    return %c0_i32, %c0_i32_0 : i32, i32
  }
  func.func @transform_10(%arg0: i32) -> (i32, i32, i32) {
    %c0_i32 = arith.constant 0 : i32
    %c0_i32_0 = arith.constant 0 : i32
    %c0_i32_1 = arith.constant 0 : i32
    return %arg0, %c0_i32, %c0_i32_0 : i32, i32, i32
  }
}

module attributes {stable_mosaic.version = 11 : i64} {
  func.func @lstm_fc_kernel(%arg0: i32, %arg1: memref<32x64xbf16, #tpu.memory_space<vmem>>, %arg2: memref<64x512xbf16, #tpu.memory_space<vmem>>, %arg3: memref<128x512xbf16, #tpu.memory_space<vmem>>, %arg4: memref<1x512xf32, #tpu.memory_space<vmem>>, %arg5: memref<128x5xbf16, #tpu.memory_space<vmem>>, %arg6: memref<1x5xf32, #tpu.memory_space<vmem>>, %arg7: memref<2x5xf32, #tpu.memory_space<vmem>>, %arg8: memref<4x8x512xf32, #tpu.memory_space<vmem>>) attributes {dimension_semantics = [#tpu.dimension_semantics<arbitrary>], iteration_bounds = array<i64: 1>, scalar_prefetch = 0 : i64, scratch_operands = 1 : i64, tpu.core_type = #tpu.core_type<tc>, window_params = [{pipeline_mode = #tpu.pipeline_mode<synchronous>, transform_indices = @transform_0, window_bounds = array<i64: 32, 64>}, {pipeline_mode = #tpu.pipeline_mode<synchronous>, transform_indices = @transform_1, window_bounds = array<i64: 64, 512>}, {pipeline_mode = #tpu.pipeline_mode<synchronous>, transform_indices = @transform_2, window_bounds = array<i64: 128, 512>}, {pipeline_mode = #tpu.pipeline_mode<synchronous>, transform_indices = @transform_3, window_bounds = array<i64: 1, 512>}, {pipeline_mode = #tpu.pipeline_mode<synchronous>, transform_indices = @transform_4, window_bounds = array<i64: 128, 5>}, {pipeline_mode = #tpu.pipeline_mode<synchronous>, transform_indices = @transform_5, window_bounds = array<i64: 1, 5>}, {pipeline_mode = #tpu.pipeline_mode<synchronous>, transform_indices = @transform_6, window_bounds = array<i64: 2, 5>}]} {
    %c0 = arith.constant 0 : index
    %c0_0 = arith.constant 0 : index
    %0 = vector.load %arg1[%c0, %c0_0] : memref<32x64xbf16, #tpu.memory_space<vmem>>, vector<32x64xbf16>
    %c0_1 = arith.constant 0 : index
    %c0_2 = arith.constant 0 : index
    %1 = vector.load %arg2[%c0_1, %c0_2] : memref<64x512xbf16, #tpu.memory_space<vmem>>, vector<64x512xbf16>
    %cst = arith.constant dense<0.000000e+00> : vector<32x512xf32>
    %2 = tpu.matmul %0, %1, %cst {dimension_numbers = #tpu.dot_dimension_numbers<[1], [0], [0], [1], [0, 0, 1, 1], [], []>} : vector<32x64xbf16>, vector<64x512xbf16>, vector<32x512xf32> -> vector<32x512xf32>
    %c0_3 = arith.constant 0 : index
    %c0_4 = arith.constant 0 : index
    %3 = vector.load %arg4[%c0_3, %c0_4] : memref<1x512xf32, #tpu.memory_space<vmem>>, vector<1x512xf32>
    %4 = vector.broadcast %3 : vector<1x512xf32> to vector<32x512xf32>
    %5 = arith.addf %2, %4 : vector<32x512xf32>
    %6 = vector.shape_cast %5 : vector<32x512xf32> to vector<4x8x512xf32>
    %c0_5 = arith.constant 0 : index
    %c0_6 = arith.constant 0 : index
    %c0_7 = arith.constant 0 : index
    %7 = vector.load %arg8[%c0_5, %c0_6, %c0_7] : memref<4x8x512xf32, #tpu.memory_space<vmem>>, vector<4x8x512xf32>
    tpu.vector_store %arg8[%c0_5, %c0_6, %c0_7], %6 {strides = array<i32>} : memref<4x8x512xf32, #tpu.memory_space<vmem>>, vector<4x8x512xf32>,
    %c0_8 = arith.constant 0 : index
    %c0_9 = arith.constant 0 : index
    %8 = vector.load %arg3[%c0_8, %c0_9] : memref<128x512xbf16, #tpu.memory_space<vmem>>, vector<128x512xbf16>
    %cst_10 = arith.constant 0.000000e+00 : f32
    %9 = vector.broadcast %cst_10 : f32 to vector<8x128xf32>
    %cst_11 = arith.constant 0.000000e+00 : f32
    %10 = vector.broadcast %cst_11 : f32 to vector<8x128xf32>
    %c0_12 = arith.constant 0 : index
    %c0_13 = arith.constant 0 : index
    %c0_14 = arith.constant 0 : index
    %11 = vector.load %arg8[%c0_12, %c0_13, %c0_14] : memref<4x8x512xf32, #tpu.memory_space<vmem>>, vector<1x8x512xf32>
    %12 = vector.shape_cast %11 : vector<1x8x512xf32> to vector<8x512xf32>
    %13 = arith.truncf %9 : vector<8x128xf32> to vector<8x128xbf16>
    %cst_15 = arith.constant dense<0.000000e+00> : vector<8x512xf32>
    %14 = tpu.matmul %13, %8, %cst_15 {dimension_numbers = #tpu.dot_dimension_numbers<[1], [0], [0], [1], [0, 0, 1, 1], [], []>} : vector<8x128xbf16>, vector<128x512xbf16>, vector<8x512xf32> -> vector<8x512xf32>
    %15 = arith.addf %12, %14 : vector<8x512xf32>
    %16 = vector.extract_strided_slice %15 {offsets = [0, 0], sizes = [8, 128], strides = [1, 1]} : vector<8x512xf32> to vector<8x128xf32>
    %17 = arith.negf %16 : vector<8x128xf32>
    %18 = math.exp %17 : vector<8x128xf32>
    %cst_16 = arith.constant 1.000000e+00 : f32
    %19 = vector.broadcast %cst_16 : f32 to vector<8x128xf32>
    %20 = arith.addf %19, %18 : vector<8x128xf32>
    %21 = arith.divf %19, %20 : vector<8x128xf32>
    %22 = vector.extract_strided_slice %15 {offsets = [0, 128], sizes = [8, 128], strides = [1, 1]} : vector<8x512xf32> to vector<8x128xf32>
    %23 = arith.negf %22 : vector<8x128xf32>
    %24 = math.exp %23 : vector<8x128xf32>
    %cst_17 = arith.constant 1.000000e+00 : f32
    %25 = vector.broadcast %cst_17 : f32 to vector<8x128xf32>
    %26 = arith.addf %25, %24 : vector<8x128xf32>
    %27 = arith.divf %25, %26 : vector<8x128xf32>
    %28 = vector.extract_strided_slice %15 {offsets = [0, 256], sizes = [8, 128], strides = [1, 1]} : vector<8x512xf32> to vector<8x128xf32>
    %29 = math.tanh %28 : vector<8x128xf32>
    %30 = vector.extract_strided_slice %15 {offsets = [0, 384], sizes = [8, 128], strides = [1, 1]} : vector<8x512xf32> to vector<8x128xf32>
    %31 = arith.negf %30 : vector<8x128xf32>
    %32 = math.exp %31 : vector<8x128xf32>
    %cst_18 = arith.constant 1.000000e+00 : f32
    %33 = vector.broadcast %cst_18 : f32 to vector<8x128xf32>
    %34 = arith.addf %33, %32 : vector<8x128xf32>
    %35 = arith.divf %33, %34 : vector<8x128xf32>
    %36 = arith.mulf %27, %10 : vector<8x128xf32>
    %37 = arith.mulf %21, %29 : vector<8x128xf32>
    %38 = arith.addf %36, %37 : vector<8x128xf32>
    %39 = math.tanh %38 : vector<8x128xf32>
    %40 = arith.mulf %35, %39 : vector<8x128xf32>
    %c1 = arith.constant 1 : index
    %c0_19 = arith.constant 0 : index
    %c0_20 = arith.constant 0 : index
    %41 = vector.load %arg8[%c1, %c0_19, %c0_20] : memref<4x8x512xf32, #tpu.memory_space<vmem>>, vector<1x8x512xf32>
    %42 = vector.shape_cast %41 : vector<1x8x512xf32> to vector<8x512xf32>
    %43 = arith.truncf %40 : vector<8x128xf32> to vector<8x128xbf16>
    %cst_21 = arith.constant dense<0.000000e+00> : vector<8x512xf32>
    %44 = tpu.matmul %43, %8, %cst_21 {dimension_numbers = #tpu.dot_dimension_numbers<[1], [0], [0], [1], [0, 0, 1, 1], [], []>} : vector<8x128xbf16>, vector<128x512xbf16>, vector<8x512xf32> -> vector<8x512xf32>
    %45 = arith.addf %42, %44 : vector<8x512xf32>
    %46 = vector.extract_strided_slice %45 {offsets = [0, 0], sizes = [8, 128], strides = [1, 1]} : vector<8x512xf32> to vector<8x128xf32>
    %47 = arith.negf %46 : vector<8x128xf32>
    %48 = math.exp %47 : vector<8x128xf32>
    %cst_22 = arith.constant 1.000000e+00 : f32
    %49 = vector.broadcast %cst_22 : f32 to vector<8x128xf32>
    %50 = arith.addf %49, %48 : vector<8x128xf32>
    %51 = arith.divf %49, %50 : vector<8x128xf32>
    %52 = vector.extract_strided_slice %45 {offsets = [0, 128], sizes = [8, 128], strides = [1, 1]} : vector<8x512xf32> to vector<8x128xf32>
    %53 = arith.negf %52 : vector<8x128xf32>
    %54 = math.exp %53 : vector<8x128xf32>
    %cst_23 = arith.constant 1.000000e+00 : f32
    %55 = vector.broadcast %cst_23 : f32 to vector<8x128xf32>
    %56 = arith.addf %55, %54 : vector<8x128xf32>
    %57 = arith.divf %55, %56 : vector<8x128xf32>
    %58 = vector.extract_strided_slice %45 {offsets = [0, 256], sizes = [8, 128], strides = [1, 1]} : vector<8x512xf32> to vector<8x128xf32>
    %59 = math.tanh %58 : vector<8x128xf32>
    %60 = vector.extract_strided_slice %45 {offsets = [0, 384], sizes = [8, 128], strides = [1, 1]} : vector<8x512xf32> to vector<8x128xf32>
    %61 = arith.negf %60 : vector<8x128xf32>
    %62 = math.exp %61 : vector<8x128xf32>
    %cst_24 = arith.constant 1.000000e+00 : f32
    %63 = vector.broadcast %cst_24 : f32 to vector<8x128xf32>
    %64 = arith.addf %63, %62 : vector<8x128xf32>
    %65 = arith.divf %63, %64 : vector<8x128xf32>
    %66 = arith.mulf %57, %38 : vector<8x128xf32>
    %67 = arith.mulf %51, %59 : vector<8x128xf32>
    %68 = arith.addf %66, %67 : vector<8x128xf32>
    %69 = math.tanh %68 : vector<8x128xf32>
    %70 = arith.mulf %65, %69 : vector<8x128xf32>
    %c2 = arith.constant 2 : index
    %c0_25 = arith.constant 0 : index
    %c0_26 = arith.constant 0 : index
    %71 = vector.load %arg8[%c2, %c0_25, %c0_26] : memref<4x8x512xf32, #tpu.memory_space<vmem>>, vector<1x8x512xf32>
    %72 = vector.shape_cast %71 : vector<1x8x512xf32> to vector<8x512xf32>
    %73 = arith.truncf %70 : vector<8x128xf32> to vector<8x128xbf16>
    %cst_27 = arith.constant dense<0.000000e+00> : vector<8x512xf32>
    %74 = tpu.matmul %73, %8, %cst_27 {dimension_numbers = #tpu.dot_dimension_numbers<[1], [0], [0], [1], [0, 0, 1, 1], [], []>} : vector<8x128xbf16>, vector<128x512xbf16>, vector<8x512xf32> -> vector<8x512xf32>
    %75 = arith.addf %72, %74 : vector<8x512xf32>
    %76 = vector.extract_strided_slice %75 {offsets = [0, 0], sizes = [8, 128], strides = [1, 1]} : vector<8x512xf32> to vector<8x128xf32>
    %77 = arith.negf %76 : vector<8x128xf32>
    %78 = math.exp %77 : vector<8x128xf32>
    %cst_28 = arith.constant 1.000000e+00 : f32
    %79 = vector.broadcast %cst_28 : f32 to vector<8x128xf32>
    %80 = arith.addf %79, %78 : vector<8x128xf32>
    %81 = arith.divf %79, %80 : vector<8x128xf32>
    %82 = vector.extract_strided_slice %75 {offsets = [0, 128], sizes = [8, 128], strides = [1, 1]} : vector<8x512xf32> to vector<8x128xf32>
    %83 = arith.negf %82 : vector<8x128xf32>
    %84 = math.exp %83 : vector<8x128xf32>
    %cst_29 = arith.constant 1.000000e+00 : f32
    %85 = vector.broadcast %cst_29 : f32 to vector<8x128xf32>
    %86 = arith.addf %85, %84 : vector<8x128xf32>
    %87 = arith.divf %85, %86 : vector<8x128xf32>
    %88 = vector.extract_strided_slice %75 {offsets = [0, 256], sizes = [8, 128], strides = [1, 1]} : vector<8x512xf32> to vector<8x128xf32>
    %89 = math.tanh %88 : vector<8x128xf32>
    %90 = vector.extract_strided_slice %75 {offsets = [0, 384], sizes = [8, 128], strides = [1, 1]} : vector<8x512xf32> to vector<8x128xf32>
    %91 = arith.negf %90 : vector<8x128xf32>
    %92 = math.exp %91 : vector<8x128xf32>
    %cst_30 = arith.constant 1.000000e+00 : f32
    %93 = vector.broadcast %cst_30 : f32 to vector<8x128xf32>
    %94 = arith.addf %93, %92 : vector<8x128xf32>
    %95 = arith.divf %93, %94 : vector<8x128xf32>
    %96 = arith.mulf %87, %68 : vector<8x128xf32>
    %97 = arith.mulf %81, %89 : vector<8x128xf32>
    %98 = arith.addf %96, %97 : vector<8x128xf32>
    %99 = math.tanh %98 : vector<8x128xf32>
    %100 = arith.mulf %95, %99 : vector<8x128xf32>
    %c3 = arith.constant 3 : index
    %c0_31 = arith.constant 0 : index
    %c0_32 = arith.constant 0 : index
    %101 = vector.load %arg8[%c3, %c0_31, %c0_32] : memref<4x8x512xf32, #tpu.memory_space<vmem>>, vector<1x8x512xf32>
    %102 = vector.shape_cast %101 : vector<1x8x512xf32> to vector<8x512xf32>
    %103 = arith.truncf %100 : vector<8x128xf32> to vector<8x128xbf16>
    %cst_33 = arith.constant dense<0.000000e+00> : vector<8x512xf32>
    %104 = tpu.matmul %103, %8, %cst_33 {dimension_numbers = #tpu.dot_dimension_numbers<[1], [0], [0], [1], [0, 0, 1, 1], [], []>} : vector<8x128xbf16>, vector<128x512xbf16>, vector<8x512xf32> -> vector<8x512xf32>
    %105 = arith.addf %102, %104 : vector<8x512xf32>
    %106 = vector.extract_strided_slice %105 {offsets = [0, 0], sizes = [8, 128], strides = [1, 1]} : vector<8x512xf32> to vector<8x128xf32>
    %107 = arith.negf %106 : vector<8x128xf32>
    %108 = math.exp %107 : vector<8x128xf32>
    %cst_34 = arith.constant 1.000000e+00 : f32
    %109 = vector.broadcast %cst_34 : f32 to vector<8x128xf32>
    %110 = arith.addf %109, %108 : vector<8x128xf32>
    %111 = arith.divf %109, %110 : vector<8x128xf32>
    %112 = vector.extract_strided_slice %105 {offsets = [0, 128], sizes = [8, 128], strides = [1, 1]} : vector<8x512xf32> to vector<8x128xf32>
    %113 = arith.negf %112 : vector<8x128xf32>
    %114 = math.exp %113 : vector<8x128xf32>
    %cst_35 = arith.constant 1.000000e+00 : f32
    %115 = vector.broadcast %cst_35 : f32 to vector<8x128xf32>
    %116 = arith.addf %115, %114 : vector<8x128xf32>
    %117 = arith.divf %115, %116 : vector<8x128xf32>
    %118 = vector.extract_strided_slice %105 {offsets = [0, 256], sizes = [8, 128], strides = [1, 1]} : vector<8x512xf32> to vector<8x128xf32>
    %119 = math.tanh %118 : vector<8x128xf32>
    %120 = vector.extract_strided_slice %105 {offsets = [0, 384], sizes = [8, 128], strides = [1, 1]} : vector<8x512xf32> to vector<8x128xf32>
    %121 = arith.negf %120 : vector<8x128xf32>
    %122 = math.exp %121 : vector<8x128xf32>
    %cst_36 = arith.constant 1.000000e+00 : f32
    %123 = vector.broadcast %cst_36 : f32 to vector<8x128xf32>
    %124 = arith.addf %123, %122 : vector<8x128xf32>
    %125 = arith.divf %123, %124 : vector<8x128xf32>
    %126 = arith.mulf %117, %98 : vector<8x128xf32>
    %127 = arith.mulf %111, %119 : vector<8x128xf32>
    %128 = arith.addf %126, %127 : vector<8x128xf32>
    %129 = math.tanh %128 : vector<8x128xf32>
    %130 = arith.mulf %125, %129 : vector<8x128xf32>
    %131 = arith.truncf %130 : vector<8x128xf32> to vector<8x128xbf16>
    %c0_37 = arith.constant 0 : index
    %c0_38 = arith.constant 0 : index
    %132 = vector.load %arg5[%c0_37, %c0_38] : memref<128x5xbf16, #tpu.memory_space<vmem>>, vector<128x5xbf16>
    %cst_39 = arith.constant dense<0.000000e+00> : vector<8x5xf32>
    %133 = tpu.matmul %131, %132, %cst_39 {dimension_numbers = #tpu.dot_dimension_numbers<[1], [0], [0], [1], [0, 0, 1, 1], [], []>} : vector<8x128xbf16>, vector<128x5xbf16>, vector<8x5xf32> -> vector<8x5xf32>
    %c0_40 = arith.constant 0 : index
    %c0_41 = arith.constant 0 : index
    %134 = vector.load %arg6[%c0_40, %c0_41] : memref<1x5xf32, #tpu.memory_space<vmem>>, vector<1x5xf32>
    %135 = vector.broadcast %134 : vector<1x5xf32> to vector<8x5xf32>
    %136 = arith.addf %133, %135 : vector<8x5xf32>
    %137 = vector.extract_strided_slice %136 {offsets = [0, 0], sizes = [2, 5], strides = [1, 1]} : vector<8x5xf32> to vector<2x5xf32>
    %c0_42 = arith.constant 0 : index
    %c0_43 = arith.constant 0 : index
    %138 = vector.load %arg7[%c0_42, %c0_43] : memref<2x5xf32, #tpu.memory_space<vmem>>, vector<2x5xf32>
    tpu.vector_store %arg7[%c0_42, %c0_43], %137 {strides = array<i32>} : memref<2x5xf32, #tpu.memory_space<vmem>>, vector<2x5xf32>,
    return
  }
  func.func @transform_0(%arg0: i32) -> (i32, i32) {
    %c0_i32 = arith.constant 0 : i32
    %c0_i32_0 = arith.constant 0 : i32
    %c0_i32_1 = arith.constant 0 : i32
    return %c0_i32, %c0_i32_0 : i32, i32
  }
  func.func @transform_1(%arg0: i32) -> (i32, i32) {
    %c0_i32 = arith.constant 0 : i32
    %c0_i32_0 = arith.constant 0 : i32
    %c0_i32_1 = arith.constant 0 : i32
    return %c0_i32, %c0_i32_0 : i32, i32
  }
  func.func @transform_2(%arg0: i32) -> (i32, i32) {
    %c0_i32 = arith.constant 0 : i32
    %c0_i32_0 = arith.constant 0 : i32
    %c0_i32_1 = arith.constant 0 : i32
    return %c0_i32, %c0_i32_0 : i32, i32
  }
  func.func @transform_3(%arg0: i32) -> (i32, i32) {
    %c0_i32 = arith.constant 0 : i32
    %c0_i32_0 = arith.constant 0 : i32
    %c0_i32_1 = arith.constant 0 : i32
    return %c0_i32, %c0_i32_0 : i32, i32
  }
  func.func @transform_4(%arg0: i32) -> (i32, i32) {
    %c0_i32 = arith.constant 0 : i32
    %c0_i32_0 = arith.constant 0 : i32
    %c0_i32_1 = arith.constant 0 : i32
    return %c0_i32, %c0_i32_0 : i32, i32
  }
  func.func @transform_5(%arg0: i32) -> (i32, i32) {
    %c0_i32 = arith.constant 0 : i32
    %c0_i32_0 = arith.constant 0 : i32
    %c0_i32_1 = arith.constant 0 : i32
    return %c0_i32, %c0_i32_0 : i32, i32
  }
  func.func @transform_6(%arg0: i32) -> (i32, i32) {
    %c0_i32 = arith.constant 0 : i32
    %c0_i32_0 = arith.constant 0 : i32
    %c0_i32_1 = arith.constant 0 : i32
    return %c0_i32, %c0_i32_0 : i32, i32
  }
}

</mosaic_0001>

<llo_original>
// kernel: cnn_lstm_forward.3
$region0: #{cnn_lstm_forward.3}
  #allocation0 [shape = 'u32[]', space=smem, size = 0x4, offset = 0x4, fixed_abs, tag = 'smem constant byte address 0x4 - core index']
  #allocation1 [shape = 'u32[72,128]{1,0:T(1,128)}', space=vmem, size = 0x9000, scoped, tag = 'internal scratch']
  #allocation2 [shape = 'f32[4,8,512]{2,1,0:T(8,128)}', space=vmem, size = 0x10000, scoped, tag = 'scratch operand']
  %s0 = inlined_call_operand.vmem [shape: bf16[32,64], index: 0, kind: input, shape index: {}]
  %s1 = inlined_call_operand.vmem [shape: bf16[64,512], index: 1, kind: input, shape index: {}]
  %s2 = inlined_call_operand.vmem [shape: bf16[128,512], index: 2, kind: input, shape index: {}]
  %s3 = inlined_call_operand.vmem [shape: f32[1,512], index: 3, kind: input, shape index: {}]
  %s4 = inlined_call_operand.vmem [shape: bf16[128,5], index: 4, kind: input, shape index: {}]
  %s5 = inlined_call_operand.vmem [shape: f32[1,5], index: 5, kind: input, shape index: {}]
  %s6 = inlined_call_operand.hbm [shape: f32[2,5], index: 6, kind: output, shape index: {}]
  %s7 = sld [smem:[#allocation0]]
  $region34: #{cnn_lstm_forward.3} parent=0
    _
  %s9 = ssub.s32 1, %s7
  %s10 = scalar_select 0, %s9, %s7
  $region1: #{cnn_lstm_forward.3} parent=0
    #allocation3 [shape = 'u8[1024]{0}', space=vmem, size = 0x400, scoped, tag = 'output window, operand 0, single buffered']
    #allocation4 [shape = 's32[1]{0}', space=sflag, size = 0x4, scoped, tag = 'scoped memory for cnn_lstm_forward.3']
    %11 = vsyncpa [#allocation4], 0
    // Predicated region
    $region2: #{cnn_lstm_forward.3} parent=1 // pred_check
      _
    $region3: #{cnn_lstm_forward.3} parent=1 // pred_check_branch
      %13 = sbr.rel (0) target = $region5
    $region4: #{cnn_lstm_forward.3} parent=1 // pred_region
      _
    $region5: #{cnn_lstm_forward.3} parent=1 // pred_fallthru
      _
    // Predicated region
    $region6: #{cnn_lstm_forward.3} parent=1 // pred_check
      _
    $region7: #{cnn_lstm_forward.3} parent=1 // pred_check_branch
      %15 = sbr.rel (0) target = $region9
    $region8: #{cnn_lstm_forward.3} parent=1 // pred_region
      _
    $region9: #{cnn_lstm_forward.3} parent=1 // pred_fallthru
      _
    // Predicated region
    $region10: #{cnn_lstm_forward.3} parent=1 // pred_check
      _
    $region11: #{cnn_lstm_forward.3} parent=1 // pred_check_branch
      %17 = sbr.rel (0) target = $region13
    $region12: #{cnn_lstm_forward.3} parent=1 // pred_region
      _
    $region13: #{cnn_lstm_forward.3} parent=1 // pred_fallthru
      _
    // Predicated region
    $region14: #{cnn_lstm_forward.3} parent=1 // pred_check
      _
    $region15: #{cnn_lstm_forward.3} parent=1 // pred_check_branch
      %19 = sbr.rel (0) target = $region17
    $region16: #{cnn_lstm_forward.3} parent=1 // pred_region
      _
    $region17: #{cnn_lstm_forward.3} parent=1 // pred_fallthru
      _
    // Predicated region
    $region18: #{cnn_lstm_forward.3} parent=1 // pred_check
      _
    $region19: #{cnn_lstm_forward.3} parent=1 // pred_check_branch
      %21 = sbr.rel (0) target = $region21
    $region20: #{cnn_lstm_forward.3} parent=1 // pred_region
      _
    $region21: #{cnn_lstm_forward.3} parent=1 // pred_fallthru
      _
    // Predicated region
    $region22: #{cnn_lstm_forward.3} parent=1 // pred_check
      _
    $region23: #{cnn_lstm_forward.3} parent=1 // pred_check_branch
      %23 = sbr.rel (0) target = $region25
    $region24: #{cnn_lstm_forward.3} parent=1 // pred_region
      _
    $region25: #{cnn_lstm_forward.3} parent=1 // pred_fallthru
      _
    %v25 = vld [vmem:[%s0] sm:$0xf]
    %v26 = vld [vmem:[%s0 + $0x4] sm:$0xf]
    %v27 = vld [vmem:[%s0 + $0x8] sm:$0xf]
    %v28 = vld [vmem:[%s0 + $0xc] sm:$0xf]
    %v29 = vld [vmem:[%s1] sm:$0xff]
    %v30 = vld [vmem:[%s1 + $0x8] sm:$0xff]
    %v31 = vld [vmem:[%s1 + $0x10] sm:$0xff]
    %v32 = vld [vmem:[%s1 + $0x18] sm:$0xff]
    %v33 = vld [vmem:[%s1 + $0x20] sm:$0xff]
    %v34 = vld [vmem:[%s1 + $0x28] sm:$0xff]
    %v35 = vld [vmem:[%s1 + $0x30] sm:$0xff]
    %v36 = vld [vmem:[%s1 + $0x38] sm:$0xff]
    %v37 = vld [vmem:[%s1 + $0x40] sm:$0xff]
    %v38 = vld [vmem:[%s1 + $0x48] sm:$0xff]
    %v39 = vld [vmem:[%s1 + $0x50] sm:$0xff]
    %v40 = vld [vmem:[%s1 + $0x58] sm:$0xff]
    %v41 = vld [vmem:[%s1 + $0x60] sm:$0xff]
    %v42 = vld [vmem:[%s1 + $0x68] sm:$0xff]
    %v43 = vld [vmem:[%s1 + $0x70] sm:$0xff]
    %v44 = vld [vmem:[%s1 + $0x78] sm:$0xff]
    %v45 = vld [vmem:[%s3] sm:$0xf]
    %v47 = vperm.slane %v45, 0
    %v48 = vperm.slane %v45, 1
    %v49 = vperm.slane %v45, 2
    %v50 = vperm.slane %v45, 3
    %v59 = vunpack.c.l.b16 %v25
    %v60 = vunpack.c.l.b16 %v26
    %v61 = vunpack.c.l.b16 %v27
    %v62 = vunpack.c.l.b16 %v28
    %v63 = vpack.c.b16 %v60, %v59
    %v64 = vpack.c.b16 %v62, %v61
    %v81 = vunpack.c.l.b16 %v29
    %v82 = vunpack.c.h.b16 %v29
    %v83 = vunpack.c.l.b16 %v30
    %v84 = vunpack.c.h.b16 %v30
    %v85 = vunpack.c.l.b16 %v31
    %v86 = vunpack.c.h.b16 %v31
    %v87 = vunpack.c.l.b16 %v32
    %v88 = vunpack.c.h.b16 %v32
    %v89 = vunpack.c.l.b16 %v33
    %v90 = vunpack.c.h.b16 %v33
    %v91 = vunpack.c.l.b16 %v34
    %v92 = vunpack.c.h.b16 %v34
    %v93 = vunpack.c.l.b16 %v35
    %v94 = vunpack.c.h.b16 %v35
    %v95 = vunpack.c.l.b16 %v36
    %v96 = vunpack.c.h.b16 %v36
    %v97 = vunpack.c.l.b16 %v37
    %v98 = vunpack.c.h.b16 %v37
    %v99 = vunpack.c.l.b16 %v38
    %v100 = vunpack.c.h.b16 %v38
    %v101 = vunpack.c.l.b16 %v39
    %v102 = vunpack.c.h.b16 %v39
    %v103 = vunpack.c.l.b16 %v40
    %v104 = vunpack.c.h.b16 %v40
    %v105 = vunpack.c.l.b16 %v41
    %v106 = vunpack.c.h.b16 %v41
    %v107 = vunpack.c.l.b16 %v42
    %v108 = vunpack.c.h.b16 %v42
    %v109 = vunpack.c.l.b16 %v43
    %v110 = vunpack.c.h.b16 %v43
    %v111 = vunpack.c.l.b16 %v44
    %v112 = vunpack.c.h.b16 %v44
    %v113 = vpack.c.b16 %v85, %v81
    %v114 = vpack.c.b16 %v86, %v82
    %v115 = vpack.c.b16 %v87, %v83
    %v116 = vpack.c.b16 %v88, %v84
    %v117 = vpack.c.b16 %v93, %v89
    %v118 = vpack.c.b16 %v94, %v90
    %v119 = vpack.c.b16 %v95, %v91
    %v120 = vpack.c.b16 %v96, %v92
    %v121 = vpack.c.b16 %v101, %v97
    %v122 = vpack.c.b16 %v102, %v98
    %v123 = vpack.c.b16 %v103, %v99
    %v124 = vpack.c.b16 %v104, %v100
    %v125 = vpack.c.b16 %v109, %v105
    %v126 = vpack.c.b16 %v110, %v106
    %v127 = vpack.c.b16 %v111, %v107
    %v128 = vpack.c.b16 %v112, %v108
    %vm145 = vcmask 523264
    %v147 = vsel %vm145, %v63, 0
    %v150 = vsel %vm145, %v64, 0
    %152 = vmatpush.bf16.msra.mxu0 0
    %153 = vmatpush.bf16.msra.mxu0 0
    %154 = vmatpush.bf16.msra.mxu0 0
    %155 = vmatpush.bf16.msra.mxu0 0
    %156 = vmatpush.bf16.msra.mxu0 %v125
    %157 = vmatpush.bf16.msra.mxu0 %v121
    %158 = vmatpush.bf16.msra.mxu0 %v117
    %159 = vmatpush.bf16.msra.mxu0 %v113
    %160 = vmatmul.bf16.gmra.mxu0 %v147
    %v161 = vpop.f32.mrf.mxu0
    %v162 = vadd.f32 %v47, %v161
    %v163 = vpop.f32.mrf.mxu0
    %v164 = vadd.f32 %v47, %v163
    %165 = vmatmul.bf16.gmra.mxu0 %v150
    %v166 = vpop.f32.mrf.mxu0
    %v167 = vadd.f32 %v47, %v166
    %v168 = vpop.f32.mrf.mxu0
    %v169 = vadd.f32 %v47, %v168
    %170 = vdwg.mxu0
    %171 = vmatpush.bf16.msra.mxu0 0
    %172 = vmatpush.bf16.msra.mxu0 0
    %173 = vmatpush.bf16.msra.mxu0 0
    %174 = vmatpush.bf16.msra.mxu0 0
    %175 = vmatpush.bf16.msra.mxu0 %v126
    %176 = vmatpush.bf16.msra.mxu0 %v122
    %177 = vmatpush.bf16.msra.mxu0 %v118
    %178 = vmatpush.bf16.msra.mxu0 %v114
    %179 = vmatmul.bf16.gmra.mxu0 %v147
    %v180 = vpop.f32.mrf.mxu0
    %v181 = vadd.f32 %v48, %v180
    %v182 = vpop.f32.mrf.mxu0
    %v183 = vadd.f32 %v48, %v182
    %184 = vmatmul.bf16.gmra.mxu0 %v150
    %v185 = vpop.f32.mrf.mxu0
    %v186 = vadd.f32 %v48, %v185
    %v187 = vpop.f32.mrf.mxu0
    %v188 = vadd.f32 %v48, %v187
    %189 = vdwg.mxu0
    %190 = vmatpush.bf16.msra.mxu0 0
    %191 = vmatpush.bf16.msra.mxu0 0
    %192 = vmatpush.bf16.msra.mxu0 0
    %193 = vmatpush.bf16.msra.mxu0 0
    %194 = vmatpush.bf16.msra.mxu0 %v127
    %195 = vmatpush.bf16.msra.mxu0 %v123
    %196 = vmatpush.bf16.msra.mxu0 %v119
    %197 = vmatpush.bf16.msra.mxu0 %v115
    %198 = vmatmul.bf16.gmra.mxu0 %v147
    %v199 = vpop.f32.mrf.mxu0
    %v200 = vadd.f32 %v49, %v199
    %v201 = vpop.f32.mrf.mxu0
    %v202 = vadd.f32 %v49, %v201
    %203 = vmatmul.bf16.gmra.mxu0 %v150
    %v204 = vpop.f32.mrf.mxu0
    %v205 = vadd.f32 %v49, %v204
    %v206 = vpop.f32.mrf.mxu0
    %v207 = vadd.f32 %v49, %v206
    %208 = vdwg.mxu0
    %209 = vmatpush.bf16.msra.mxu0 0
    %210 = vmatpush.bf16.msra.mxu0 0
    %211 = vmatpush.bf16.msra.mxu0 0
    %212 = vmatpush.bf16.msra.mxu0 0
    %213 = vmatpush.bf16.msra.mxu0 %v128
    %214 = vmatpush.bf16.msra.mxu0 %v124
    %215 = vmatpush.bf16.msra.mxu0 %v120
    %216 = vmatpush.bf16.msra.mxu0 %v116
    %217 = vmatmul.bf16.gmra.mxu0 %v147
    %v218 = vpop.f32.mrf.mxu0
    %v219 = vadd.f32 %v50, %v218
    %v220 = vpop.f32.mrf.mxu0
    %v221 = vadd.f32 %v50, %v220
    %222 = vmatmul.bf16.gmra.mxu0 %v150
    %v223 = vpop.f32.mrf.mxu0
    %v224 = vadd.f32 %v50, %v223
    %v225 = vpop.f32.mrf.mxu0
    %v226 = vadd.f32 %v50, %v225
    %227 = vdwg.mxu0
    %228 = vst [vmem:[#allocation2] sm:$0xff] %v162
    %229 = vst [vmem:[#allocation2 + $0x8] sm:$0xff] %v181
    %230 = vst [vmem:[#allocation2 + $0x10] sm:$0xff] %v200
    %231 = vst [vmem:[#allocation2 + $0x18] sm:$0xff] %v219
    %232 = vst [vmem:[#allocation2 + $0x20] sm:$0xff] %v164
    %233 = vst [vmem:[#allocation2 + $0x28] sm:$0xff] %v183
    %234 = vst [vmem:[#allocation2 + $0x30] sm:$0xff] %v202
    %235 = vst [vmem:[#allocation2 + $0x38] sm:$0xff] %v221
    %236 = vst [vmem:[#allocation2 + $0x40] sm:$0xff] %v167
    %237 = vst [vmem:[#allocation2 + $0x48] sm:$0xff] %v186
    %238 = vst [vmem:[#allocation2 + $0x50] sm:$0xff] %v205
    %239 = vst [vmem:[#allocation2 + $0x58] sm:$0xff] %v224
    %240 = vst [vmem:[#allocation2 + $0x60] sm:$0xff] %v169
    %241 = vst [vmem:[#allocation2 + $0x68] sm:$0xff] %v188
    %242 = vst [vmem:[#allocation2 + $0x70] sm:$0xff] %v207
    %243 = vst [vmem:[#allocation2 + $0x78] sm:$0xff] %v226
    %v244 = vld [vmem:[%s2] sm:$0xff]
    %v245 = vld [vmem:[%s2 + $0x8] sm:$0xff]
    %v246 = vld [vmem:[%s2 + $0x10] sm:$0xff]
    %v247 = vld [vmem:[%s2 + $0x18] sm:$0xff]
    %v248 = vld [vmem:[%s2 + $0x20] sm:$0xff]
    %v249 = vld [vmem:[%s2 + $0x28] sm:$0xff]
    %v250 = vld [vmem:[%s2 + $0x30] sm:$0xff]
    %v251 = vld [vmem:[%s2 + $0x38] sm:$0xff]
    %v252 = vld [vmem:[%s2 + $0x40] sm:$0xff]
    %v253 = vld [vmem:[%s2 + $0x48] sm:$0xff]
    %v254 = vld [vmem:[%s2 + $0x50] sm:$0xff]
    %v255 = vld [vmem:[%s2 + $0x58] sm:$0xff]
    %v256 = vld [vmem:[%s2 + $0x60] sm:$0xff]
    %v257 = vld [vmem:[%s2 + $0x68] sm:$0xff]
    %v258 = vld [vmem:[%s2 + $0x70] sm:$0xff]
    %v259 = vld [vmem:[%s2 + $0x78] sm:$0xff]
    %v260 = vld [vmem:[%s2 + $0x80] sm:$0xff]
    %v261 = vld [vmem:[%s2 + $0x88] sm:$0xff]
    %v262 = vld [vmem:[%s2 + $0x90] sm:$0xff]
    %v263 = vld [vmem:[%s2 + $0x98] sm:$0xff]
    %v264 = vld [vmem:[%s2 + $0xa0] sm:$0xff]
    %v265 = vld [vmem:[%s2 + $0xa8] sm:$0xff]
    %v266 = vld [vmem:[%s2 + $0xb0] sm:$0xff]
    %v267 = vld [vmem:[%s2 + $0xb8] sm:$0xff]
    %v268 = vld [vmem:[%s2 + $0xc0] sm:$0xff]
    %v269 = vld [vmem:[%s2 + $0xc8] sm:$0xff]
    %v270 = vld [vmem:[%s2 + $0xd0] sm:$0xff]
    %v271 = vld [vmem:[%s2 + $0xd8] sm:$0xff]
    %v272 = vld [vmem:[%s2 + $0xe0] sm:$0xff]
    %v273 = vld [vmem:[%s2 + $0xe8] sm:$0xff]
    %v274 = vld [vmem:[%s2 + $0xf0] sm:$0xff]
    %v275 = vld [vmem:[%s2 + $0xf8] sm:$0xff]
    %v276 = vld [vmem:[#allocation2] sm:$0xff]
    %v277 = vld [vmem:[#allocation2 + $0x8] sm:$0xff]
    %v278 = vld [vmem:[#allocation2 + $0x10] sm:$0xff]
    %v279 = vld [vmem:[#allocation2 + $0x18] sm:$0xff]
    %v312 = vunpack.c.l.b16 %v244
    %v313 = vunpack.c.h.b16 %v244
    %v314 = vunpack.c.l.b16 %v245
    %v315 = vunpack.c.h.b16 %v245
    %v316 = vunpack.c.l.b16 %v246
    %v317 = vunpack.c.h.b16 %v246
    %v318 = vunpack.c.l.b16 %v247
    %v319 = vunpack.c.h.b16 %v247
    %v320 = vunpack.c.l.b16 %v248
    %v321 = vunpack.c.h.b16 %v248
    %v322 = vunpack.c.l.b16 %v249
    %v323 = vunpack.c.h.b16 %v249
    %v324 = vunpack.c.l.b16 %v250
    %v325 = vunpack.c.h.b16 %v250
    %v326 = vunpack.c.l.b16 %v251
    %v327 = vunpack.c.h.b16 %v251
    %v328 = vunpack.c.l.b16 %v252
    %v329 = vunpack.c.h.b16 %v252
    %v330 = vunpack.c.l.b16 %v253
    %v331 = vunpack.c.h.b16 %v253
    %v332 = vunpack.c.l.b16 %v254
    %v333 = vunpack.c.h.b16 %v254
    %v334 = vunpack.c.l.b16 %v255
    %v335 = vunpack.c.h.b16 %v255
    %v336 = vunpack.c.l.b16 %v256
    %v337 = vunpack.c.h.b16 %v256
    %v338 = vunpack.c.l.b16 %v257
    %v339 = vunpack.c.h.b16 %v257
    %v340 = vunpack.c.l.b16 %v258
    %v341 = vunpack.c.h.b16 %v258
    %v342 = vunpack.c.l.b16 %v259
    %v343 = vunpack.c.h.b16 %v259
    %v344 = vunpack.c.l.b16 %v260
    %v345 = vunpack.c.h.b16 %v260
    %v346 = vunpack.c.l.b16 %v261
    %v347 = vunpack.c.h.b16 %v261
    %v348 = vunpack.c.l.b16 %v262
    %v349 = vunpack.c.h.b16 %v262
    %v350 = vunpack.c.l.b16 %v263
    %v351 = vunpack.c.h.b16 %v263
    %v352 = vunpack.c.l.b16 %v264
    %v353 = vunpack.c.h.b16 %v264
    %v354 = vunpack.c.l.b16 %v265
    %v355 = vunpack.c.h.b16 %v265
    %v356 = vunpack.c.l.b16 %v266
    %v357 = vunpack.c.h.b16 %v266
    %v358 = vunpack.c.l.b16 %v267
    %v359 = vunpack.c.h.b16 %v267
    %v360 = vunpack.c.l.b16 %v268
    %v361 = vunpack.c.h.b16 %v268
    %v362 = vunpack.c.l.b16 %v269
    %v363 = vunpack.c.h.b16 %v269
    %v364 = vunpack.c.l.b16 %v270
    %v365 = vunpack.c.h.b16 %v270
    %v366 = vunpack.c.l.b16 %v271
    %v367 = vunpack.c.h.b16 %v271
    %v368 = vunpack.c.l.b16 %v272
    %v369 = vunpack.c.h.b16 %v272
    %v370 = vunpack.c.l.b16 %v273
    %v371 = vunpack.c.h.b16 %v273
    %v372 = vunpack.c.l.b16 %v274
    %v373 = vunpack.c.h.b16 %v274
    %v374 = vunpack.c.l.b16 %v275
    %v375 = vunpack.c.h.b16 %v275
    %v376 = vpack.c.b16 %v316, %v312
    %v377 = vpack.c.b16 %v317, %v313
    %v378 = vpack.c.b16 %v318, %v314
    %v379 = vpack.c.b16 %v319, %v315
    %v380 = vpack.c.b16 %v324, %v320
    %v381 = vpack.c.b16 %v325, %v321
    %v382 = vpack.c.b16 %v326, %v322
    %v383 = vpack.c.b16 %v327, %v323
    %v384 = vpack.c.b16 %v332, %v328
    %v385 = vpack.c.b16 %v333, %v329
    %v386 = vpack.c.b16 %v334, %v330
    %v387 = vpack.c.b16 %v335, %v331
    %v388 = vpack.c.b16 %v340, %v336
    %v389 = vpack.c.b16 %v341, %v337
    %v390 = vpack.c.b16 %v342, %v338
    %v391 = vpack.c.b16 %v343, %v339
    %v392 = vpack.c.b16 %v348, %v344
    %v393 = vpack.c.b16 %v349, %v345
    %v394 = vpack.c.b16 %v350, %v346
    %v395 = vpack.c.b16 %v351, %v347
    %v396 = vpack.c.b16 %v356, %v352
    %v397 = vpack.c.b16 %v357, %v353
    %v398 = vpack.c.b16 %v358, %v354
    %v399 = vpack.c.b16 %v359, %v355
    %v400 = vpack.c.b16 %v364, %v360
    %v401 = vpack.c.b16 %v365, %v361
    %v402 = vpack.c.b16 %v366, %v362
    %v403 = vpack.c.b16 %v367, %v363
    %v404 = vpack.c.b16 %v372, %v368
    %v405 = vpack.c.b16 %v373, %v369
    %v406 = vpack.c.b16 %v374, %v370
    %v407 = vpack.c.b16 %v375, %v371
    %440 = vmatpush.bf16.msra.mxu0 %v404
    %441 = vmatpush.bf16.msra.mxu0 %v400
    %442 = vmatpush.bf16.msra.mxu0 %v396
    %443 = vmatpush.bf16.msra.mxu0 %v392
    %444 = vmatpush.bf16.msra.mxu0 %v388
    %445 = vmatpush.bf16.msra.mxu0 %v384
    %446 = vmatpush.bf16.msra.mxu0 %v380
    %447 = vmatpush.bf16.msra.mxu0 %v376
    %448 = vmatmul.bf16.gmra.mxu0 0
    %v449 = vpop.f32.mrf.mxu0
    %v450 = vadd.f32 0.0, %v449
    %v451 = vpop.f32.mrf.mxu0
    %452 = vdwg.mxu0
    %453 = vmatpush.bf16.msra.mxu0 %v405
    %454 = vmatpush.bf16.msra.mxu0 %v401
    %455 = vmatpush.bf16.msra.mxu0 %v397
    %456 = vmatpush.bf16.msra.mxu0 %v393
    %457 = vmatpush.bf16.msra.mxu0 %v389
    %458 = vmatpush.bf16.msra.mxu0 %v385
    %459 = vmatpush.bf16.msra.mxu0 %v381
    %460 = vmatpush.bf16.msra.mxu0 %v377
    %461 = vmatmul.bf16.gmra.mxu0 0
    %v462 = vpop.f32.mrf.mxu0
    %v463 = vadd.f32 0.0, %v462
    %v464 = vpop.f32.mrf.mxu0
    %465 = vdwg.mxu0
    %466 = vmatpush.bf16.msra.mxu0 %v406
    %467 = vmatpush.bf16.msra.mxu0 %v402
    %468 = vmatpush.bf16.msra.mxu0 %v398
    %469 = vmatpush.bf16.msra.mxu0 %v394
    %470 = vmatpush.bf16.msra.mxu0 %v390
    %471 = vmatpush.bf16.msra.mxu0 %v386
    %472 = vmatpush.bf16.msra.mxu0 %v382
    %473 = vmatpush.bf16.msra.mxu0 %v378
    %474 = vmatmul.bf16.gmra.mxu0 0
    %v475 = vpop.f32.mrf.mxu0
    %v476 = vadd.f32 0.0, %v475
    %v477 = vpop.f32.mrf.mxu0
    %478 = vdwg.mxu0
    %479 = vmatpush.bf16.msra.mxu0 %v407
    %480 = vmatpush.bf16.msra.mxu0 %v403
    %481 = vmatpush.bf16.msra.mxu0 %v399
    %482 = vmatpush.bf16.msra.mxu0 %v395
    %483 = vmatpush.bf16.msra.mxu0 %v391
    %484 = vmatpush.bf16.msra.mxu0 %v387
    %485 = vmatpush.bf16.msra.mxu0 %v383
    %486 = vmatpush.bf16.msra.mxu0 %v379
    %487 = vmatmul.bf16.gmra.mxu0 0
    %v488 = vpop.f32.mrf.mxu0
    %v489 = vadd.f32 0.0, %v488
    %v490 = vpop.f32.mrf.mxu0
    %491 = vdwg.mxu0
    %v492 = vadd.f32 %v276, %v450
    %v493 = vadd.f32 %v277, %v463
    %v494 = vadd.f32 %v278, %v476
    %v495 = vadd.f32 %v279, %v489
    %v496 = vxor.u32 %v492, 2147483648
    %v497 = vmul.f32 %v496, 1.442695
    %v498 = vpow.pop %v497
    %v499 = vadd.f32 %v498, 1.0
    %v500 = vrcp.pop %v499
    %v501 = vmul.f32 %v499, %v500
    %v502 = vsub.f32 1.0, %v501
    %v503 = vmul.f32 %v500, %v502
    %v504 = vadd.f32 %v500, %v503
    %vm505 = vweird.f32 %v499
    %vm506 = vweird.f32 %v500
    %vm507 = vmor %vm505, %vm506
    %v508 = vsel %vm507, %v500, %v504
    %v509 = vand.u32 2147483647, %v499
    %vm510 = vcmp.eq.f32.partialorder %v509, 8.507059e+37
    %v511 = vand.u32 %v499, 2147483648
    %v512 = vor.u32 1.1754944e-38, %v511
    %v513 = vsel %vm510, %v512, %v508
    %v514 = vmul.f32 1.0, %v513
    %v515 = vxor.u32 %v493, 2147483648
    %v516 = vmul.f32 %v515, 1.442695
    %v517 = vpow.pop %v516
    %v518 = vadd.f32 %v517, 1.0
    %v519 = vrcp.pop %v518
    %v520 = vmul.f32 %v518, %v519
    %v521 = vsub.f32 1.0, %v520
    %v522 = vmul.f32 %v519, %v521
    %v523 = vadd.f32 %v519, %v522
    %vm524 = vweird.f32 %v518
    %vm525 = vweird.f32 %v519
    %vm526 = vmor %vm524, %vm525
    %v527 = vsel %vm526, %v519, %v523
    %v528 = vand.u32 2147483647, %v518
    %vm529 = vcmp.eq.f32.partialorder %v528, 8.507059e+37
    %v530 = vand.u32 %v518, 2147483648
    %v531 = vor.u32 1.1754944e-38, %v530
    %v532 = vsel %vm529, %v531, %v527
    %v533 = vmul.f32 1.0, %v532
    %v534 = vtanh.pop %v494
    %v535 = vxor.u32 %v495, 2147483648
    %v536 = vmul.f32 %v535, 1.442695
    %v537 = vpow.pop %v536
    %v538 = vadd.f32 %v537, 1.0
    %v539 = vrcp.pop %v538
    %v540 = vmul.f32 %v538, %v539
    %v541 = vsub.f32 1.0, %v540
    %v542 = vmul.f32 %v539, %v541
    %v543 = vadd.f32 %v539, %v542
    %vm544 = vweird.f32 %v538
    %vm545 = vweird.f32 %v539
    %vm546 = vmor %vm544, %vm545
    %v547 = vsel %vm546, %v539, %v543
    %v548 = vand.u32 2147483647, %v538
    %vm549 = vcmp.eq.f32.partialorder %v548, 8.507059e+37
    %v550 = vand.u32 %v538, 2147483648
    %v551 = vor.u32 1.1754944e-38, %v550
    %v552 = vsel %vm549, %v551, %v547
    %v553 = vmul.f32 1.0, %v552
    %v554 = vmul.f32 %v533, 0.0
    %v555 = vmul.f32 %v514, %v534
    %v556 = vadd.f32 %v554, %v555
    %v557 = vtanh.pop %v556
    %v558 = vmul.f32 %v553, %v557
    %s559 = scalar_lea.vmem [#allocation2], 32
    %v560 = vld [vmem:[%s559] sm:$0xff]
    %v561 = vld [vmem:[%s559 + $0x8] sm:$0xff]
    %v562 = vld [vmem:[%s559 + $0x10] sm:$0xff]
    %v563 = vld [vmem:[%s559 + $0x18] sm:$0xff]
    %v564 = vpack.c.bf16 %v558, %v558
    %565 = vmatpush.bf16.msra.mxu0 %v404
    %566 = vmatpush.bf16.msra.mxu0 %v400
    %567 = vmatpush.bf16.msra.mxu0 %v396
    %568 = vmatpush.bf16.msra.mxu0 %v392
    %569 = vmatpush.bf16.msra.mxu0 %v388
    %570 = vmatpush.bf16.msra.mxu0 %v384
    %571 = vmatpush.bf16.msra.mxu0 %v380
    %572 = vmatpush.bf16.msra.mxu0 %v376
    %573 = vmatmul.bf16.gmra.mxu0 %v564
    %v574 = vpop.f32.mrf.mxu0
    %v575 = vadd.f32 0.0, %v574
    %v576 = vpop.f32.mrf.mxu0
    %577 = vdwg.mxu0
    %578 = vmatpush.bf16.msra.mxu0 %v405
    %579 = vmatpush.bf16.msra.mxu0 %v401
    %580 = vmatpush.bf16.msra.mxu0 %v397
    %581 = vmatpush.bf16.msra.mxu0 %v393
    %582 = vmatpush.bf16.msra.mxu0 %v389
    %583 = vmatpush.bf16.msra.mxu0 %v385
    %584 = vmatpush.bf16.msra.mxu0 %v381
    %585 = vmatpush.bf16.msra.mxu0 %v377
    %586 = vmatmul.bf16.gmra.mxu0 %v564
    %v587 = vpop.f32.mrf.mxu0
    %v588 = vadd.f32 0.0, %v587
    %v589 = vpop.f32.mrf.mxu0
    %590 = vdwg.mxu0
    %591 = vmatpush.bf16.msra.mxu0 %v406
    %592 = vmatpush.bf16.msra.mxu0 %v402
    %593 = vmatpush.bf16.msra.mxu0 %v398
    %594 = vmatpush.bf16.msra.mxu0 %v394
    %595 = vmatpush.bf16.msra.mxu0 %v390
    %596 = vmatpush.bf16.msra.mxu0 %v386
    %597 = vmatpush.bf16.msra.mxu0 %v382
    %598 = vmatpush.bf16.msra.mxu0 %v378
    %599 = vmatmul.bf16.gmra.mxu0 %v564
    %v600 = vpop.f32.mrf.mxu0
    %v601 = vadd.f32 0.0, %v600
    %v602 = vpop.f32.mrf.mxu0
    %603 = vdwg.mxu0
    %604 = vmatpush.bf16.msra.mxu0 %v407
    %605 = vmatpush.bf16.msra.mxu0 %v403
    %606 = vmatpush.bf16.msra.mxu0 %v399
    %607 = vmatpush.bf16.msra.mxu0 %v395
    %608 = vmatpush.bf16.msra.mxu0 %v391
    %609 = vmatpush.bf16.msra.mxu0 %v387
    %610 = vmatpush.bf16.msra.mxu0 %v383
    %611 = vmatpush.bf16.msra.mxu0 %v379
    %612 = vmatmul.bf16.gmra.mxu0 %v564
    %v613 = vpop.f32.mrf.mxu0
    %v614 = vadd.f32 0.0, %v613
    %v615 = vpop.f32.mrf.mxu0
    %616 = vdwg.mxu0
    %v617 = vadd.f32 %v560, %v575
    %v618 = vadd.f32 %v561, %v588
    %v619 = vadd.f32 %v562, %v601
    %v620 = vadd.f32 %v563, %v614
    %v621 = vxor.u32 %v617, 2147483648
    %v622 = vmul.f32 %v621, 1.442695
    %v623 = vpow.pop %v622
    %v624 = vadd.f32 %v623, 1.0
    %v625 = vrcp.pop %v624
    %v626 = vmul.f32 %v624, %v625
    %v627 = vsub.f32 1.0, %v626
    %v628 = vmul.f32 %v625, %v627
    %v629 = vadd.f32 %v625, %v628
    %vm630 = vweird.f32 %v624
    %vm631 = vweird.f32 %v625
    %vm632 = vmor %vm630, %vm631
    %v633 = vsel %vm632, %v625, %v629
    %v634 = vand.u32 2147483647, %v624
    %vm635 = vcmp.eq.f32.partialorder %v634, 8.507059e+37
    %v636 = vand.u32 %v624, 2147483648
    %v637 = vor.u32 1.1754944e-38, %v636
    %v638 = vsel %vm635, %v637, %v633
    %v639 = vmul.f32 1.0, %v638
    %v640 = vxor.u32 %v618, 2147483648
    %v641 = vmul.f32 %v640, 1.442695
    %v642 = vpow.pop %v641
    %v643 = vadd.f32 %v642, 1.0
    %v644 = vrcp.pop %v643
    %v645 = vmul.f32 %v643, %v644
    %v646 = vsub.f32 1.0, %v645
    %v647 = vmul.f32 %v644, %v646
    %v648 = vadd.f32 %v644, %v647
    %vm649 = vweird.f32 %v643
    %vm650 = vweird.f32 %v644
    %vm651 = vmor %vm649, %vm650
    %v652 = vsel %vm651, %v644, %v648
    %v653 = vand.u32 2147483647, %v643
    %vm654 = vcmp.eq.f32.partialorder %v653, 8.507059e+37
    %v655 = vand.u32 %v643, 2147483648
    %v656 = vor.u32 1.1754944e-38, %v655
    %v657 = vsel %vm654, %v656, %v652
    %v658 = vmul.f32 1.0, %v657
    %v659 = vtanh.pop %v619
    %v660 = vxor.u32 %v620, 2147483648
    %v661 = vmul.f32 %v660, 1.442695
    %v662 = vpow.pop %v661
    %v663 = vadd.f32 %v662, 1.0
    %v664 = vrcp.pop %v663
    %v665 = vmul.f32 %v663, %v664
    %v666 = vsub.f32 1.0, %v665
    %v667 = vmul.f32 %v664, %v666
    %v668 = vadd.f32 %v664, %v667
    %vm669 = vweird.f32 %v663
    %vm670 = vweird.f32 %v664
    %vm671 = vmor %vm669, %vm670
    %v672 = vsel %vm671, %v664, %v668
    %v673 = vand.u32 2147483647, %v663
    %vm674 = vcmp.eq.f32.partialorder %v673, 8.507059e+37
    %v675 = vand.u32 %v663, 2147483648
    %v676 = vor.u32 1.1754944e-38, %v675
    %v677 = vsel %vm674, %v676, %v672
    %v678 = vmul.f32 1.0, %v677
    %v679 = vmul.f32 %v658, %v556
    %v680 = vmul.f32 %v639, %v659
    %v681 = vadd.f32 %v679, %v680
    %v682 = vtanh.pop %v681
    %v683 = vmul.f32 %v678, %v682
    %s684 = scalar_lea.vmem [#allocation2], 64
    %v685 = vld [vmem:[%s684] sm:$0xff]
    %v686 = vld [vmem:[%s684 + $0x8] sm:$0xff]
    %v687 = vld [vmem:[%s684 + $0x10] sm:$0xff]
    %v688 = vld [vmem:[%s684 + $0x18] sm:$0xff]
    %v689 = vpack.c.bf16 %v683, %v683
    %690 = vmatpush.bf16.msra.mxu0 %v404
    %691 = vmatpush.bf16.msra.mxu0 %v400
    %692 = vmatpush.bf16.msra.mxu0 %v396
    %693 = vmatpush.bf16.msra.mxu0 %v392
    %694 = vmatpush.bf16.msra.mxu0 %v388
    %695 = vmatpush.bf16.msra.mxu0 %v384
    %696 = vmatpush.bf16.msra.mxu0 %v380
    %697 = vmatpush.bf16.msra.mxu0 %v376
    %698 = vmatmul.bf16.gmra.mxu0 %v689
    %v699 = vpop.f32.mrf.mxu0
    %v700 = vadd.f32 0.0, %v699
    %v701 = vpop.f32.mrf.mxu0
    %702 = vdwg.mxu0
    %703 = vmatpush.bf16.msra.mxu0 %v405
    %704 = vmatpush.bf16.msra.mxu0 %v401
    %705 = vmatpush.bf16.msra.mxu0 %v397
    %706 = vmatpush.bf16.msra.mxu0 %v393
    %707 = vmatpush.bf16.msra.mxu0 %v389
    %708 = vmatpush.bf16.msra.mxu0 %v385
    %709 = vmatpush.bf16.msra.mxu0 %v381
    %710 = vmatpush.bf16.msra.mxu0 %v377
    %711 = vmatmul.bf16.gmra.mxu0 %v689
    %v712 = vpop.f32.mrf.mxu0
    %v713 = vadd.f32 0.0, %v712
    %v714 = vpop.f32.mrf.mxu0
    %715 = vdwg.mxu0
    %716 = vmatpush.bf16.msra.mxu0 %v406
    %717 = vmatpush.bf16.msra.mxu0 %v402
    %718 = vmatpush.bf16.msra.mxu0 %v398
    %719 = vmatpush.bf16.msra.mxu0 %v394
    %720 = vmatpush.bf16.msra.mxu0 %v390
    %721 = vmatpush.bf16.msra.mxu0 %v386
    %722 = vmatpush.bf16.msra.mxu0 %v382
    %723 = vmatpush.bf16.msra.mxu0 %v378
    %724 = vmatmul.bf16.gmra.mxu0 %v689
    %v725 = vpop.f32.mrf.mxu0
    %v726 = vadd.f32 0.0, %v725
    %v727 = vpop.f32.mrf.mxu0
    %728 = vdwg.mxu0
    %729 = vmatpush.bf16.msra.mxu0 %v407
    %730 = vmatpush.bf16.msra.mxu0 %v403
    %731 = vmatpush.bf16.msra.mxu0 %v399
    %732 = vmatpush.bf16.msra.mxu0 %v395
    %733 = vmatpush.bf16.msra.mxu0 %v391
    %734 = vmatpush.bf16.msra.mxu0 %v387
    %735 = vmatpush.bf16.msra.mxu0 %v383
    %736 = vmatpush.bf16.msra.mxu0 %v379
    %737 = vmatmul.bf16.gmra.mxu0 %v689
    %v738 = vpop.f32.mrf.mxu0
    %v739 = vadd.f32 0.0, %v738
    %v740 = vpop.f32.mrf.mxu0
    %741 = vdwg.mxu0
    %v742 = vadd.f32 %v685, %v700
    %v743 = vadd.f32 %v686, %v713
    %v744 = vadd.f32 %v687, %v726
    %v745 = vadd.f32 %v688, %v739
    %v746 = vxor.u32 %v742, 2147483648
    %v747 = vmul.f32 %v746, 1.442695
    %v748 = vpow.pop %v747
    %v749 = vadd.f32 %v748, 1.0
    %v750 = vrcp.pop %v749
    %v751 = vmul.f32 %v749, %v750
    %v752 = vsub.f32 1.0, %v751
    %v753 = vmul.f32 %v750, %v752
    %v754 = vadd.f32 %v750, %v753
    %vm755 = vweird.f32 %v749
    %vm756 = vweird.f32 %v750
    %vm757 = vmor %vm755, %vm756
    %v758 = vsel %vm757, %v750, %v754
    %v759 = vand.u32 2147483647, %v749
    %vm760 = vcmp.eq.f32.partialorder %v759, 8.507059e+37
    %v761 = vand.u32 %v749, 2147483648
    %v762 = vor.u32 1.1754944e-38, %v761
    %v763 = vsel %vm760, %v762, %v758
    %v764 = vmul.f32 1.0, %v763
    %v765 = vxor.u32 %v743, 2147483648
    %v766 = vmul.f32 %v765, 1.442695
    %v767 = vpow.pop %v766
    %v768 = vadd.f32 %v767, 1.0
    %v769 = vrcp.pop %v768
    %v770 = vmul.f32 %v768, %v769
    %v771 = vsub.f32 1.0, %v770
    %v772 = vmul.f32 %v769, %v771
    %v773 = vadd.f32 %v769, %v772
    %vm774 = vweird.f32 %v768
    %vm775 = vweird.f32 %v769
    %vm776 = vmor %vm774, %vm775
    %v777 = vsel %vm776, %v769, %v773
    %v778 = vand.u32 2147483647, %v768
    %vm779 = vcmp.eq.f32.partialorder %v778, 8.507059e+37
    %v780 = vand.u32 %v768, 2147483648
    %v781 = vor.u32 1.1754944e-38, %v780
    %v782 = vsel %vm779, %v781, %v777
    %v783 = vmul.f32 1.0, %v782
    %v784 = vtanh.pop %v744
    %v785 = vxor.u32 %v745, 2147483648
    %v786 = vmul.f32 %v785, 1.442695
    %v787 = vpow.pop %v786
    %v788 = vadd.f32 %v787, 1.0
    %v789 = vrcp.pop %v788
    %v790 = vmul.f32 %v788, %v789
    %v791 = vsub.f32 1.0, %v790
    %v792 = vmul.f32 %v789, %v791
    %v793 = vadd.f32 %v789, %v792
    %vm794 = vweird.f32 %v788
    %vm795 = vweird.f32 %v789
    %vm796 = vmor %vm794, %vm795
    %v797 = vsel %vm796, %v789, %v793
    %v798 = vand.u32 2147483647, %v788
    %vm799 = vcmp.eq.f32.partialorder %v798, 8.507059e+37
    %v800 = vand.u32 %v788, 2147483648
    %v801 = vor.u32 1.1754944e-38, %v800
    %v802 = vsel %vm799, %v801, %v797
    %v803 = vmul.f32 1.0, %v802
    %v804 = vmul.f32 %v783, %v681
    %v805 = vmul.f32 %v764, %v784
    %v806 = vadd.f32 %v804, %v805
    %v807 = vtanh.pop %v806
    %v808 = vmul.f32 %v803, %v807
    %s809 = scalar_lea.vmem [#allocation2], 96
    %v810 = vld [vmem:[%s809] sm:$0xff]
    %v811 = vld [vmem:[%s809 + $0x8] sm:$0xff]
    %v812 = vld [vmem:[%s809 + $0x10] sm:$0xff]
    %v813 = vld [vmem:[%s809 + $0x18] sm:$0xff]
    %v814 = vpack.c.bf16 %v808, %v808
    %815 = vmatpush.bf16.msra.mxu0 %v404
    %816 = vmatpush.bf16.msra.mxu0 %v400
    %817 = vmatpush.bf16.msra.mxu0 %v396
    %818 = vmatpush.bf16.msra.mxu0 %v392
    %819 = vmatpush.bf16.msra.mxu0 %v388
    %820 = vmatpush.bf16.msra.mxu0 %v384
    %821 = vmatpush.bf16.msra.mxu0 %v380
    %822 = vmatpush.bf16.msra.mxu0 %v376
    %823 = vmatmul.bf16.gmra.mxu0 %v814
    %v824 = vpop.f32.mrf.mxu0
    %v825 = vadd.f32 0.0, %v824
    %v826 = vpop.f32.mrf.mxu0
    %827 = vdwg.mxu0
    %828 = vmatpush.bf16.msra.mxu0 %v405
    %829 = vmatpush.bf16.msra.mxu0 %v401
    %830 = vmatpush.bf16.msra.mxu0 %v397
    %831 = vmatpush.bf16.msra.mxu0 %v393
    %832 = vmatpush.bf16.msra.mxu0 %v389
    %833 = vmatpush.bf16.msra.mxu0 %v385
    %834 = vmatpush.bf16.msra.mxu0 %v381
    %835 = vmatpush.bf16.msra.mxu0 %v377
    %836 = vmatmul.bf16.gmra.mxu0 %v814
    %v837 = vpop.f32.mrf.mxu0
    %v838 = vadd.f32 0.0, %v837
    %v839 = vpop.f32.mrf.mxu0
    %840 = vdwg.mxu0
    %841 = vmatpush.bf16.msra.mxu0 %v406
    %842 = vmatpush.bf16.msra.mxu0 %v402
    %843 = vmatpush.bf16.msra.mxu0 %v398
    %844 = vmatpush.bf16.msra.mxu0 %v394
    %845 = vmatpush.bf16.msra.mxu0 %v390
    %846 = vmatpush.bf16.msra.mxu0 %v386
    %847 = vmatpush.bf16.msra.mxu0 %v382
    %848 = vmatpush.bf16.msra.mxu0 %v378
    %849 = vmatmul.bf16.gmra.mxu0 %v814
    %v850 = vpop.f32.mrf.mxu0
    %v851 = vadd.f32 0.0, %v850
    %v852 = vpop.f32.mrf.mxu0
    %853 = vdwg.mxu0
    %854 = vmatpush.bf16.msra.mxu0 %v407
    %855 = vmatpush.bf16.msra.mxu0 %v403
    %856 = vmatpush.bf16.msra.mxu0 %v399
    %857 = vmatpush.bf16.msra.mxu0 %v395
    %858 = vmatpush.bf16.msra.mxu0 %v391
    %859 = vmatpush.bf16.msra.mxu0 %v387
    %860 = vmatpush.bf16.msra.mxu0 %v383
    %861 = vmatpush.bf16.msra.mxu0 %v379
    %862 = vmatmul.bf16.gmra.mxu0 %v814
    %v863 = vpop.f32.mrf.mxu0
    %v864 = vadd.f32 0.0, %v863
    %v865 = vpop.f32.mrf.mxu0
    %866 = vdwg.mxu0
    %v867 = vadd.f32 %v810, %v825
    %v868 = vadd.f32 %v811, %v838
    %v869 = vadd.f32 %v812, %v851
    %v870 = vadd.f32 %v813, %v864
    %v871 = vxor.u32 %v867, 2147483648
    %v872 = vmul.f32 %v871, 1.442695
    %v873 = vpow.pop %v872
    %v874 = vadd.f32 %v873, 1.0
    %v875 = vrcp.pop %v874
    %v876 = vmul.f32 %v874, %v875
    %v877 = vsub.f32 1.0, %v876
    %v878 = vmul.f32 %v875, %v877
    %v879 = vadd.f32 %v875, %v878
    %vm880 = vweird.f32 %v874
    %vm881 = vweird.f32 %v875
    %vm882 = vmor %vm880, %vm881
    %v883 = vsel %vm882, %v875, %v879
    %v884 = vand.u32 2147483647, %v874
    %vm885 = vcmp.eq.f32.partialorder %v884, 8.507059e+37
    %v886 = vand.u32 %v874, 2147483648
    %v887 = vor.u32 1.1754944e-38, %v886
    %v888 = vsel %vm885, %v887, %v883
    %v889 = vmul.f32 1.0, %v888
    %v890 = vxor.u32 %v868, 2147483648
    %v891 = vmul.f32 %v890, 1.442695
    %v892 = vpow.pop %v891
    %v893 = vadd.f32 %v892, 1.0
    %v894 = vrcp.pop %v893
    %v895 = vmul.f32 %v893, %v894
    %v896 = vsub.f32 1.0, %v895
    %v897 = vmul.f32 %v894, %v896
    %v898 = vadd.f32 %v894, %v897
    %vm899 = vweird.f32 %v893
    %vm900 = vweird.f32 %v894
    %vm901 = vmor %vm899, %vm900
    %v902 = vsel %vm901, %v894, %v898
    %v903 = vand.u32 2147483647, %v893
    %vm904 = vcmp.eq.f32.partialorder %v903, 8.507059e+37
    %v905 = vand.u32 %v893, 2147483648
    %v906 = vor.u32 1.1754944e-38, %v905
    %v907 = vsel %vm904, %v906, %v902
    %v908 = vmul.f32 1.0, %v907
    %v909 = vtanh.pop %v869
    %v910 = vxor.u32 %v870, 2147483648
    %v911 = vmul.f32 %v910, 1.442695
    %v912 = vpow.pop %v911
    %v913 = vadd.f32 %v912, 1.0
    %v914 = vrcp.pop %v913
    %v915 = vmul.f32 %v913, %v914
    %v916 = vsub.f32 1.0, %v915
    %v917 = vmul.f32 %v914, %v916
    %v918 = vadd.f32 %v914, %v917
    %vm919 = vweird.f32 %v913
    %vm920 = vweird.f32 %v914
    %vm921 = vmor %vm919, %vm920
    %v922 = vsel %vm921, %v914, %v918
    %v923 = vand.u32 2147483647, %v913
    %vm924 = vcmp.eq.f32.partialorder %v923, 8.507059e+37
    %v925 = vand.u32 %v913, 2147483648
    %v926 = vor.u32 1.1754944e-38, %v925
    %v927 = vsel %vm924, %v926, %v922
    %v928 = vmul.f32 1.0, %v927
    %v929 = vmul.f32 %v908, %v806
    %v930 = vmul.f32 %v889, %v909
    %v931 = vadd.f32 %v929, %v930
    %v932 = vtanh.pop %v931
    %v933 = vmul.f32 %v928, %v932
    %v934 = vpack.c.bf16 %v933, %v933
    %v935 = vld [vmem:[%s4] sm:$0xf]
    %v936 = vld [vmem:[%s4 + $0x4] sm:$0xf]
    %v937 = vld [vmem:[%s4 + $0x8] sm:$0xf]
    %v938 = vld [vmem:[%s4 + $0xc] sm:$0xf]
    %v939 = vld [vmem:[%s4 + $0x10] sm:$0xf]
    %v940 = vld [vmem:[%s4 + $0x14] sm:$0xf]
    %v941 = vld [vmem:[%s4 + $0x18] sm:$0xf]
    %v942 = vld [vmem:[%s4 + $0x1c] sm:$0xf]
    %v943 = vld [vmem:[%s4 + $0x20] sm:$0xf]
    %v944 = vld [vmem:[%s4 + $0x24] sm:$0xf]
    %v945 = vld [vmem:[%s4 + $0x28] sm:$0xf]
    %v946 = vld [vmem:[%s4 + $0x2c] sm:$0xf]
    %v947 = vld [vmem:[%s4 + $0x30] sm:$0xf]
    %v948 = vld [vmem:[%s4 + $0x34] sm:$0xf]
    %v949 = vld [vmem:[%s4 + $0x38] sm:$0xf]
    %v950 = vld [vmem:[%s4 + $0x3c] sm:$0xf]
    %v951 = vld [vmem:[%s5] sm:$0x1]
    %v953 = vperm.slane %v951, 0
    %v971 = vunpack.c.l.b16 %v935
    %v972 = vunpack.c.l.b16 %v936
    %v973 = vunpack.c.l.b16 %v937
    %v974 = vunpack.c.l.b16 %v938
    %v975 = vunpack.c.l.b16 %v939
    %v976 = vunpack.c.l.b16 %v940
    %v977 = vunpack.c.l.b16 %v941
    %v978 = vunpack.c.l.b16 %v942
    %v979 = vunpack.c.l.b16 %v943
    %v980 = vunpack.c.l.b16 %v944
    %v981 = vunpack.c.l.b16 %v945
    %v982 = vunpack.c.l.b16 %v946
    %v983 = vunpack.c.l.b16 %v947
    %v984 = vunpack.c.l.b16 %v948
    %v985 = vunpack.c.l.b16 %v949
    %v986 = vunpack.c.l.b16 %v950
    %v987 = vpack.c.b16 %v972, %v971
    %v988 = vpack.c.b16 %v974, %v973
    %v989 = vpack.c.b16 %v976, %v975
    %v990 = vpack.c.b16 %v978, %v977
    %v991 = vpack.c.b16 %v980, %v979
    %v992 = vpack.c.b16 %v982, %v981
    %v993 = vpack.c.b16 %v984, %v983
    %v994 = vpack.c.b16 %v986, %v985
    %1003 = vmatpush.bf16.msra.mxu0 %v994
    %1004 = vmatpush.bf16.msra.mxu0 %v993
    %1005 = vmatpush.bf16.msra.mxu0 %v992
    %1006 = vmatpush.bf16.msra.mxu0 %v991
    %1007 = vmatpush.bf16.msra.mxu0 %v990
    %1008 = vmatpush.bf16.msra.mxu0 %v989
    %1009 = vmatpush.bf16.msra.mxu0 %v988
    %1010 = vmatpush.bf16.msra.mxu0 %v987
    %1011 = vmatmul.bf16.gmra.mxu0 %v934
    %v1012 = vpop.f32.mrf.mxu0
    %v1013 = vadd.f32 %v953, %v1012
    %v1014 = vpop.f32.mrf.mxu0
    %1015 = vdwg.mxu0
    %vm1016 = vcmask 33792
    %1017 = vst.msk [vmem:[#allocation3] sm:$0x3] %vm1016, %v1013
    // Predicated region
    $region26: #{cnn_lstm_forward.3} parent=1 // pred_check
      _
    $region27: #{cnn_lstm_forward.3} parent=1 // pred_check_branch
      %1019 = sbr.rel (0) target = $region29
    $region28: #{cnn_lstm_forward.3} parent=1 // pred_region
      %1021 = vsyncadd [#allocation4], 0
      %s1023 = sshll.u32 [#allocation3], 4
      %s1024 = int_to_ptr.vmem [resolvable:$true] %s1023
      %s1025 = sshll.u32 %s6, 4
      %s1026 = int_to_ptr.hbm [resolvable:$true] %s1025
      %1028 = dma.vmem_to_hbm [thread:$0]  %s1024, 32, %s1026, [#allocation4]
    $region29: #{cnn_lstm_forward.3} parent=1 // pred_fallthru
      _
    // Predicated region
    $region30: #{cnn_lstm_forward.3} parent=1 // pred_check
      _
    $region31: #{cnn_lstm_forward.3} parent=1 // pred_check_branch
      %1030 = sbr.rel (0) target = $region33
    $region32: #{cnn_lstm_forward.3} parent=1 // pred_region
      %1032 = dma.done [#allocation4], 32
    $region33: #{cnn_lstm_forward.3} parent=1 // pred_fallthru
      _
    %1033 = vsyncpa [#allocation4], 1

// kernel: cnn_lstm_forward.2
$region0: #{cnn_lstm_forward.2}
  #allocation0 [shape = 'u32[]', space=smem, size = 0x4, offset = 0x4, fixed_abs, tag = 'smem constant byte address 0x4 - core index']
  #allocation1 [shape = 'u32[72,128]{1,0:T(1,128)}', space=vmem, size = 0x9000, scoped, tag = 'internal scratch']
  #allocation2 [shape = 'f32[4,10,16,32]{3,2,1,0:T(8,128)}', space=vmem, size = 0x50000, scoped, tag = 'scratch operand']
  #allocation3 [shape = 'f32[4,6,16,64]{3,2,1,0:T(8,128)}', space=vmem, size = 0x30000, scoped, tag = 'scratch operand']
  %s0 = inlined_call_operand.vmem [shape: bf16[8,256,27], index: 0, kind: input, shape index: {}]
  %s1 = inlined_call_operand.vmem [shape: bf16[27,32], index: 1, kind: input, shape index: {}]
  %s2 = inlined_call_operand.vmem [shape: f32[1,32], index: 2, kind: input, shape index: {}]
  %s3 = inlined_call_operand.vmem [shape: f32[1,32], index: 3, kind: input, shape index: {}]
  %s4 = inlined_call_operand.vmem [shape: bf16[288,64], index: 4, kind: input, shape index: {}]
  %s5 = inlined_call_operand.vmem [shape: f32[1,64], index: 5, kind: input, shape index: {}]
  %s6 = inlined_call_operand.vmem [shape: f32[1,64], index: 6, kind: input, shape index: {}]
  %s7 = inlined_call_operand.vmem [shape: bf16[576,64], index: 7, kind: input, shape index: {}]
  %s8 = inlined_call_operand.vmem [shape: f32[1,64], index: 8, kind: input, shape index: {}]
  %s9 = inlined_call_operand.vmem [shape: f32[1,64], index: 9, kind: input, shape index: {}]
  %s10 = inlined_call_operand.vmem [shape: f32[2,4,64], index: 10, kind: output, shape index: {}]
  %s11 = sld [smem:[#allocation0]]
  $region73: #{cnn_lstm_forward.2} parent=0
    _
  %s13 = ssub.s32 1, %s11
  %s14 = scalar_select 0, %s13, %s11
  loop: start=0, step=1, limit=4
  $region2: #{cnn_lstm_forward.2} parent=0 // loop_pre_header
    _
  $region3: #{cnn_lstm_forward.2} parent=0 // loop_header
    %s16 = sphi 0, %s20
    %p17 = scmp.ge.s32.totalorder %s16, 4
    %s26 = sphi 0, %s28
    %s29 = sphi 0, %s26
    %s30 = sphi 0, %s29
    %s46 = sphi 0, %s30
    %s50 = sphi 0, %s50
    %s52 = sphi 0, %s50
    %s53 = sphi 0, %s52
    %s67 = sphi 0, %s53
    %s71 = sphi 0, %s71
    %s73 = sphi 0, %s71
    %s74 = sphi 0, %s73
    %s88 = sphi 0, %s74
    %s92 = sphi 0, %s92
    %s94 = sphi 0, %s92
    %s95 = sphi 0, %s94
    %s109 = sphi 0, %s95
    %s113 = sphi 0, %s113
    %s115 = sphi 0, %s113
    %s116 = sphi 0, %s115
    %s130 = sphi 0, %s116
    %s134 = sphi 0, %s134
    %s136 = sphi 0, %s134
    %s137 = sphi 0, %s136
    %s151 = sphi 0, %s137
    %s155 = sphi 0, %s155
    %s157 = sphi 0, %s155
    %s158 = sphi 0, %s157
    %s172 = sphi 0, %s158
    %s176 = sphi 0, %s176
    %s178 = sphi 0, %s176
    %s179 = sphi 0, %s178
    %s193 = sphi 0, %s179
    %s197 = sphi 0, %s197
    %s199 = sphi 0, %s197
    %s200 = sphi 0, %s199
    %s214 = sphi 0, %s200
    %s218 = sphi 0, %s218
    %s220 = sphi 0, %s218
    %s221 = sphi 0, %s220
    %s235 = sphi 0, %s221
    %s241 = sphi 0, %s243
    %s244 = sphi 0, %s241
    %s245 = sphi 0, %s244
    %s261 = sphi 0, %s245
  $region4: #{cnn_lstm_forward.2} parent=0 // loop_header_branch
    %19 = sbr.rel (%p17) target = $region8
  $region5: #{cnn_lstm_forward.2} parent=0 // loop_body
    %s21 = ssub.s32 %s16, 1
    %s22 = ssub.s32 %s16, 2
    %s23 = sadd.s32 %s16, 1
    %s24 = ssub.s32 %s16, %s23
    %p25 = scmp.eq.s32.totalorder %s24, 0
    %s27 = sadd.s32 %s26, 1
    %s28 = scalar_select %p25, %s26, %s27
    %p31 = pneg %p25
    %p32 = scmp.eq.s32.totalorder %s16, 1
    %p33 = por %p31, %p32
    %p34 = scmp.ne.s32.totalorder %s26, %s29
    %p35 = scmp.eq.s32.totalorder %s16, 0
    %p36 = por %p34, %p35
    %p37 = scmp.ne.s32.totalorder %s26, %s29
    %p38 = scmp.eq.s32.totalorder %s21, 1
    %p39 = por %p37, %p38
    %p40 = scmp.ne.s32.totalorder %s29, %s30
    %p41 = scmp.eq.s32.totalorder %s21, 0
    %p42 = por %p40, %p41
    %p43 = scmp.ne.s32.totalorder %s29, %s30
    %p44 = scmp.eq.s32.totalorder %s22, 1
    %p45 = por %p43, %p44
    %p47 = scmp.ne.s32.totalorder %s30, %s46
    %p48 = scmp.eq.s32.totalorder %s22, 0
    %p49 = por %p47, %p48
    %s51 = sadd.s32 %s50, 1
    %p54 = scmp.eq.s32.totalorder %s16, 1
    %p55 = scmp.ne.s32.totalorder %s50, %s52
    %p56 = scmp.eq.s32.totalorder %s16, 0
    %p57 = por %p55, %p56
    %p58 = scmp.ne.s32.totalorder %s50, %s52
    %p59 = scmp.eq.s32.totalorder %s21, 1
    %p60 = por %p58, %p59
    %p61 = scmp.ne.s32.totalorder %s52, %s53
    %p62 = scmp.eq.s32.totalorder %s21, 0
    %p63 = por %p61, %p62
    %p64 = scmp.ne.s32.totalorder %s52, %s53
    %p65 = scmp.eq.s32.totalorder %s22, 1
    %p66 = por %p64, %p65
    %p68 = scmp.ne.s32.totalorder %s53, %s67
    %p69 = scmp.eq.s32.totalorder %s22, 0
    %p70 = por %p68, %p69
    %s72 = sadd.s32 %s71, 1
    %p75 = scmp.eq.s32.totalorder %s16, 1
    %p76 = scmp.ne.s32.totalorder %s71, %s73
    %p77 = scmp.eq.s32.totalorder %s16, 0
    %p78 = por %p76, %p77
    %p79 = scmp.ne.s32.totalorder %s71, %s73
    %p80 = scmp.eq.s32.totalorder %s21, 1
    %p81 = por %p79, %p80
    %p82 = scmp.ne.s32.totalorder %s73, %s74
    %p83 = scmp.eq.s32.totalorder %s21, 0
    %p84 = por %p82, %p83
    %p85 = scmp.ne.s32.totalorder %s73, %s74
    %p86 = scmp.eq.s32.totalorder %s22, 1
    %p87 = por %p85, %p86
    %p89 = scmp.ne.s32.totalorder %s74, %s88
    %p90 = scmp.eq.s32.totalorder %s22, 0
    %p91 = por %p89, %p90
    %s93 = sadd.s32 %s92, 1
    %p96 = scmp.eq.s32.totalorder %s16, 1
    %p97 = scmp.ne.s32.totalorder %s92, %s94
    %p98 = scmp.eq.s32.totalorder %s16, 0
    %p99 = por %p97, %p98
    %p100 = scmp.ne.s32.totalorder %s92, %s94
    %p101 = scmp.eq.s32.totalorder %s21, 1
    %p102 = por %p100, %p101
    %p103 = scmp.ne.s32.totalorder %s94, %s95
    %p104 = scmp.eq.s32.totalorder %s21, 0
    %p105 = por %p103, %p104
    %p106 = scmp.ne.s32.totalorder %s94, %s95
    %p107 = scmp.eq.s32.totalorder %s22, 1
    %p108 = por %p106, %p107
    %p110 = scmp.ne.s32.totalorder %s95, %s109
    %p111 = scmp.eq.s32.totalorder %s22, 0
    %p112 = por %p110, %p111
    %s114 = sadd.s32 %s113, 1
    %p117 = scmp.eq.s32.totalorder %s16, 1
    %p118 = scmp.ne.s32.totalorder %s113, %s115
    %p119 = scmp.eq.s32.totalorder %s16, 0
    %p120 = por %p118, %p119
    %p121 = scmp.ne.s32.totalorder %s113, %s115
    %p122 = scmp.eq.s32.totalorder %s21, 1
    %p123 = por %p121, %p122
    %p124 = scmp.ne.s32.totalorder %s115, %s116
    %p125 = scmp.eq.s32.totalorder %s21, 0
    %p126 = por %p124, %p125
    %p127 = scmp.ne.s32.totalorder %s115, %s116
    %p128 = scmp.eq.s32.totalorder %s22, 1
    %p129 = por %p127, %p128
    %p131 = scmp.ne.s32.totalorder %s116, %s130
    %p132 = scmp.eq.s32.totalorder %s22, 0
    %p133 = por %p131, %p132
    %s135 = sadd.s32 %s134, 1
    %p138 = scmp.eq.s32.totalorder %s16, 1
    %p139 = scmp.ne.s32.totalorder %s134, %s136
    %p140 = scmp.eq.s32.totalorder %s16, 0
    %p141 = por %p139, %p140
    %p142 = scmp.ne.s32.totalorder %s134, %s136
    %p143 = scmp.eq.s32.totalorder %s21, 1
    %p144 = por %p142, %p143
    %p145 = scmp.ne.s32.totalorder %s136, %s137
    %p146 = scmp.eq.s32.totalorder %s21, 0
    %p147 = por %p145, %p146
    %p148 = scmp.ne.s32.totalorder %s136, %s137
    %p149 = scmp.eq.s32.totalorder %s22, 1
    %p150 = por %p148, %p149
    %p152 = scmp.ne.s32.totalorder %s137, %s151
    %p153 = scmp.eq.s32.totalorder %s22, 0
    %p154 = por %p152, %p153
    %s156 = sadd.s32 %s155, 1
    %p159 = scmp.eq.s32.totalorder %s16, 1
    %p160 = scmp.ne.s32.totalorder %s155, %s157
    %p161 = scmp.eq.s32.totalorder %s16, 0
    %p162 = por %p160, %p161
    %p163 = scmp.ne.s32.totalorder %s155, %s157
    %p164 = scmp.eq.s32.totalorder %s21, 1
    %p165 = por %p163, %p164
    %p166 = scmp.ne.s32.totalorder %s157, %s158
    %p167 = scmp.eq.s32.totalorder %s21, 0
    %p168 = por %p166, %p167
    %p169 = scmp.ne.s32.totalorder %s157, %s158
    %p170 = scmp.eq.s32.totalorder %s22, 1
    %p171 = por %p169, %p170
    %p173 = scmp.ne.s32.totalorder %s158, %s172
    %p174 = scmp.eq.s32.totalorder %s22, 0
    %p175 = por %p173, %p174
    %s177 = sadd.s32 %s176, 1
    %p180 = scmp.eq.s32.totalorder %s16, 1
    %p181 = scmp.ne.s32.totalorder %s176, %s178
    %p182 = scmp.eq.s32.totalorder %s16, 0
    %p183 = por %p181, %p182
    %p184 = scmp.ne.s32.totalorder %s176, %s178
    %p185 = scmp.eq.s32.totalorder %s21, 1
    %p186 = por %p184, %p185
    %p187 = scmp.ne.s32.totalorder %s178, %s179
    %p188 = scmp.eq.s32.totalorder %s21, 0
    %p189 = por %p187, %p188
    %p190 = scmp.ne.s32.totalorder %s178, %s179
    %p191 = scmp.eq.s32.totalorder %s22, 1
    %p192 = por %p190, %p191
    %p194 = scmp.ne.s32.totalorder %s179, %s193
    %p195 = scmp.eq.s32.totalorder %s22, 0
    %p196 = por %p194, %p195
    %s198 = sadd.s32 %s197, 1
    %p201 = scmp.eq.s32.totalorder %s16, 1
    %p202 = scmp.ne.s32.totalorder %s197, %s199
    %p203 = scmp.eq.s32.totalorder %s16, 0
    %p204 = por %p202, %p203
    %p205 = scmp.ne.s32.totalorder %s197, %s199
    %p206 = scmp.eq.s32.totalorder %s21, 1
    %p207 = por %p205, %p206
    %p208 = scmp.ne.s32.totalorder %s199, %s200
    %p209 = scmp.eq.s32.totalorder %s21, 0
    %p210 = por %p208, %p209
    %p211 = scmp.ne.s32.totalorder %s199, %s200
    %p212 = scmp.eq.s32.totalorder %s22, 1
    %p213 = por %p211, %p212
    %p215 = scmp.ne.s32.totalorder %s200, %s214
    %p216 = scmp.eq.s32.totalorder %s22, 0
    %p217 = por %p215, %p216
    %s219 = sadd.s32 %s218, 1
    %p222 = scmp.eq.s32.totalorder %s16, 1
    %p223 = scmp.ne.s32.totalorder %s218, %s220
    %p224 = scmp.eq.s32.totalorder %s16, 0
    %p225 = por %p223, %p224
    %p226 = scmp.ne.s32.totalorder %s218, %s220
    %p227 = scmp.eq.s32.totalorder %s21, 1
    %p228 = por %p226, %p227
    %p229 = scmp.ne.s32.totalorder %s220, %s221
    %p230 = scmp.eq.s32.totalorder %s21, 0
    %p231 = por %p229, %p230
    %p232 = scmp.ne.s32.totalorder %s220, %s221
    %p233 = scmp.eq.s32.totalorder %s22, 1
    %p234 = por %p232, %p233
    %p236 = scmp.ne.s32.totalorder %s221, %s235
    %p237 = scmp.eq.s32.totalorder %s22, 0
    %p238 = por %p236, %p237
    %s239 = ssub.s32 %s16, %s23
    %p240 = scmp.eq.s32.totalorder %s239, 0
    %s242 = sadd.s32 %s241, 1
    %s243 = scalar_select %p240, %s241, %s242
    %p246 = pneg %p240
    %p247 = scmp.eq.s32.totalorder %s16, 1
    %p248 = por %p246, %p247
    %p249 = scmp.ne.s32.totalorder %s241, %s244
    %p250 = scmp.eq.s32.totalorder %s16, 0
    %p251 = por %p249, %p250
    %p252 = scmp.ne.s32.totalorder %s241, %s244
    %p253 = scmp.eq.s32.totalorder %s21, 1
    %p254 = por %p252, %p253
    %p255 = scmp.ne.s32.totalorder %s244, %s245
    %p256 = scmp.eq.s32.totalorder %s21, 0
    %p257 = por %p255, %p256
    %p258 = scmp.ne.s32.totalorder %s244, %s245
    %p259 = scmp.eq.s32.totalorder %s22, 1
    %p260 = por %p258, %p259
    %p262 = scmp.ne.s32.totalorder %s245, %s261
    %p263 = scmp.eq.s32.totalorder %s22, 0
    %p264 = por %p262, %p263
    %p265 = scmp.le.s32.totalorder 1, %s16
    %p266 = scmp.lt.s32.totalorder %s16, 3
    %p267 = pnand %p265, %p266
    %p268 = pneg %p267
    // Predicated region
    $region9: #{cnn_lstm_forward.2} parent=5 // pred_check
      _
    $region10: #{cnn_lstm_forward.2} parent=5 // pred_check_branch
      %270 = sbr.rel (%p267) target = $region12
    $region11: #{cnn_lstm_forward.2} parent=5 // pred_region
      %s271 = ssub.s32 %s16, 1
      // Predicated region
      $region13: #{cnn_lstm_forward.2} parent=11 // pred_check
        %p272 = pneg %p63
      $region14: #{cnn_lstm_forward.2} parent=11 // pred_check_branch
        %274 = sbr.rel (%p272) target = $region16
      $region15: #{cnn_lstm_forward.2} parent=11 // pred_region
        _
      $region16: #{cnn_lstm_forward.2} parent=11 // pred_fallthru
        _
      // Predicated region
      $region17: #{cnn_lstm_forward.2} parent=11 // pred_check
        %p275 = pneg %p84
      $region18: #{cnn_lstm_forward.2} parent=11 // pred_check_branch
        %277 = sbr.rel (%p275) target = $region20
      $region19: #{cnn_lstm_forward.2} parent=11 // pred_region
        _
      $region20: #{cnn_lstm_forward.2} parent=11 // pred_fallthru
        _
      // Predicated region
      $region21: #{cnn_lstm_forward.2} parent=11 // pred_check
        %p278 = pneg %p105
      $region22: #{cnn_lstm_forward.2} parent=11 // pred_check_branch
        %280 = sbr.rel (%p278) target = $region24
      $region23: #{cnn_lstm_forward.2} parent=11 // pred_region
        _
      $region24: #{cnn_lstm_forward.2} parent=11 // pred_fallthru
        _
      // Predicated region
      $region25: #{cnn_lstm_forward.2} parent=11 // pred_check
        %p281 = pneg %p126
      $region26: #{cnn_lstm_forward.2} parent=11 // pred_check_branch
        %283 = sbr.rel (%p281) target = $region28
      $region27: #{cnn_lstm_forward.2} parent=11 // pred_region
        _
      $region28: #{cnn_lstm_forward.2} parent=11 // pred_fallthru
        _
      // Predicated region
      $region29: #{cnn_lstm_forward.2} parent=11 // pred_check
        %p284 = pneg %p147
      $region30: #{cnn_lstm_forward.2} parent=11 // pred_check_branch
        %286 = sbr.rel (%p284) target = $region32
      $region31: #{cnn_lstm_forward.2} parent=11 // pred_region
        _
      $region32: #{cnn_lstm_forward.2} parent=11 // pred_fallthru
        _
      // Predicated region
      $region33: #{cnn_lstm_forward.2} parent=11 // pred_check
        %p287 = pneg %p168
      $region34: #{cnn_lstm_forward.2} parent=11 // pred_check_branch
        %289 = sbr.rel (%p287) target = $region36
      $region35: #{cnn_lstm_forward.2} parent=11 // pred_region
        _
      $region36: #{cnn_lstm_forward.2} parent=11 // pred_fallthru
        _
      // Predicated region
      $region37: #{cnn_lstm_forward.2} parent=11 // pred_check
        %p290 = pneg %p189
      $region38: #{cnn_lstm_forward.2} parent=11 // pred_check_branch
        %292 = sbr.rel (%p290) target = $region40
      $region39: #{cnn_lstm_forward.2} parent=11 // pred_region
        _
      $region40: #{cnn_lstm_forward.2} parent=11 // pred_fallthru
        _
      // Predicated region
      $region41: #{cnn_lstm_forward.2} parent=11 // pred_check
        %p293 = pneg %p210
      $region42: #{cnn_lstm_forward.2} parent=11 // pred_check_branch
        %295 = sbr.rel (%p293) target = $region44
      $region43: #{cnn_lstm_forward.2} parent=11 // pred_region
        _
      $region44: #{cnn_lstm_forward.2} parent=11 // pred_fallthru
        _
      // Predicated region
      $region45: #{cnn_lstm_forward.2} parent=11 // pred_check
        %p296 = pneg %p231
      $region46: #{cnn_lstm_forward.2} parent=11 // pred_check_branch
        %298 = sbr.rel (%p296) target = $region48
      $region47: #{cnn_lstm_forward.2} parent=11 // pred_region
        _
      $region48: #{cnn_lstm_forward.2} parent=11 // pred_fallthru
        _
    $region12: #{cnn_lstm_forward.2} parent=5 // pred_fallthru
      _
    %p299 = scmp.lt.s32.totalorder %s16, 2
    // Predicated region
    $region49: #{cnn_lstm_forward.2} parent=5 // pred_check
      %p300 = pneg %p299
    $region50: #{cnn_lstm_forward.2} parent=5 // pred_check_branch
      %302 = sbr.rel (%p300) target = $region52
    $region51: #{cnn_lstm_forward.2} parent=5 // pred_region
      // Predicated region
      $region53: #{cnn_lstm_forward.2} parent=51 // pred_check
        %p303 = pneg %p36
      $region54: #{cnn_lstm_forward.2} parent=51 // pred_check_branch
        %305 = sbr.rel (%p303) target = $region56
      $region55: #{cnn_lstm_forward.2} parent=51 // pred_region
        %s306 = smul.u32 4, %s16
        %p307 = scmp.lt.s32.totalorder %s306, 7
        %s308 = scalar_select %p307, %s306, 7
        %s309 = smul.addr %s308, 32
        %s310 = smul.addr %s309, 4
        %s311 = scalar_lea.vmem %s0, %s310
        %s312 = smul.u32 4, %s16
      $region56: #{cnn_lstm_forward.2} parent=51 // pred_fallthru
        _
    $region52: #{cnn_lstm_forward.2} parent=5 // pred_fallthru
      _
    %p313 = scmp.le.s32.totalorder 1, %s16
    %p314 = scmp.lt.s32.totalorder %s16, 3
    %p315 = pnand %p313, %p314
    %p316 = pneg %p315
    // Predicated region
    $region57: #{cnn_lstm_forward.2} parent=5 // pred_check
      _
    $region58: #{cnn_lstm_forward.2} parent=5 // pred_check_branch
      %318 = sbr.rel (%p315) target = $region60
    $region59: #{cnn_lstm_forward.2} parent=5 // pred_region
      %s319 = ssub.s32 %s16, 1
      %s320 = smul.u32 4, %s21
      %p321 = scmp.lt.s32.totalorder %s320, 7
      %s322 = scalar_select %p321, %s320, 7
      %s323 = smul.addr %s322, 32
      %s324 = smul.addr %s323, 4
      %s325 = scalar_lea.vmem %s0, %s324
      %p326 = pneg %p42
      %p327 = pneg %p39
      %p328 = pneg %p63
      %p329 = pneg %p60
      %p330 = pneg %p84
      %p331 = pneg %p81
      %p332 = pneg %p105
      %p333 = pneg %p102
      %p334 = pneg %p126
      %p335 = pneg %p123
      %p336 = pneg %p147
      %p337 = pneg %p144
      %p338 = pneg %p168
      %p339 = pneg %p165
      %p340 = pneg %p189
      %p341 = pneg %p186
      %p342 = pneg %p210
      %p343 = pneg %p207
      %p344 = pneg %p231
      %p345 = pneg %p228
      %p346 = pneg %p257
      %p347 = pneg %p254
      %p348 = scmp.lt.s32.totalorder %s21, 1
      %s349 = scalar_select %p348, %s21, 1
      %s350 = smul.addr %s349, 4
      %s351 = scalar_lea.vmem %s10, %s350
      %s352 = smul.u32 4, %s21
      %p353 = scmp.lt.s32.totalorder %s352, 7
      %s354 = scalar_select %p353, %s352, 7
      %s355 = smul.addr %s354, 32
      %s356 = smul.addr %s355, 4
      %s357 = scalar_lea.vmem %s0, %s356
      %s358 = smul.u32 4, %s21
      %p359 = scmp.lt.s32.totalorder %s21, 1
      %s360 = scalar_select %p359, %s21, 1
      %s361 = smul.addr %s360, 4
      %s362 = scalar_lea.vmem %s10, %s361
      %v364 = vld [vmem:[%s2] sm:$0x1]
      %v365 = vld [vmem:[%s3] sm:$0x1]
      %v366 = vld [vmem:[%s5] sm:$0x1]
      %v367 = vld [vmem:[%s6] sm:$0x1]
      %v368 = vld [vmem:[%s8] sm:$0x1]
      %v369 = vld [vmem:[%s9] sm:$0x1]
      %v370 = vlaneseq
      %v371 = vshrl.u32 %v370, 7
      %v372 = vadd.s32 %v371, 8
      %vm373 = vcmp.ge.s32.totalorder %v371, 2
      %vm374 = vcmp.ge.s32.totalorder %v372, 2
      %v375 = vsel %vm373, 1, 0
      %v376 = vsel %vm374, 1, 0
      %v377 = vcvt.s32.f32 %v375
      %v378 = vcvt.s32.f32 %v376
      %vm379 = vcmp.lt.s32.totalorder %v371, 14
      %vm380 = vcmp.lt.s32.totalorder %v372, 14
      %v381 = vsel %vm379, 1, 0
      %v382 = vsel %vm380, 1, 0
      %v383 = vcvt.s32.f32 %v381
      %v384 = vcvt.s32.f32 %v382
      %vm385 = vcmp.ge.s32.totalorder %v371, 4
      %vm386 = vcmp.ge.s32.totalorder %v372, 4
      %v387 = vsel %vm385, 1, 0
      %v388 = vsel %vm386, 1, 0
      %v389 = vcvt.s32.f32 %v387
      %v390 = vcvt.s32.f32 %v388
      %vm391 = vcmp.lt.s32.totalorder %v371, 12
      %vm392 = vcmp.lt.s32.totalorder %v372, 12
      %v393 = vsel %vm391, 1, 0
      %v394 = vsel %vm392, 1, 0
      %v395 = vcvt.s32.f32 %v393
      %v396 = vcvt.s32.f32 %v394
      %v397 = vlaneseq
      %v398 = vand.u32 %v397, 127
      %v399 = vadd.s32 %v398, 128
      %v400 = vmul.u32 %v371, 64
      %vm401 = vcmp.ge.s32.totalorder %v398, %v400
      %vm402 = vcmp.ge.s32.totalorder %v399, %v400
      %v403 = vadd.s32 %v400, 64
      %vm404 = vcmp.lt.s32.totalorder %v398, %v403
      %vm405 = vcmp.lt.s32.totalorder %v399, %v403
      %vm406 = vmand %vm401, %vm404
      %vm407 = vmand %vm402, %vm405
      %v408 = vand.u32 %v398, 3
      %v409 = vand.u32 %v399, 3
      %vm410 = vcmp.eq.s32.totalorder %v408, 0
      %vm411 = vcmp.eq.s32.totalorder %v409, 0
      %vm412 = vmand %vm406, %vm410
      %vm413 = vmand %vm407, %vm411
      %v414 = vsel %vm412, 0.0625, 0.0
      %v415 = vsel %vm413, 0.0625, 0.0
      %vm416 = vcmask 261120
      %417 = vst.msk [vmem:[#allocation2] sm:$0xff] %vm416, 0.0
      %418 = vst.msk [vmem:[#allocation2 + $0x8] sm:$0xff] %vm416, 0.0
      %419 = vst.msk [vmem:[#allocation2 + $0xa0] sm:$0xff] %vm416, 0.0
      %420 = vst.msk [vmem:[#allocation2 + $0xa8] sm:$0xff] %vm416, 0.0
      %421 = vst.msk [vmem:[#allocation2 + $0x140] sm:$0xff] %vm416, 0.0
      %422 = vst.msk [vmem:[#allocation2 + $0x148] sm:$0xff] %vm416, 0.0
      %423 = vst.msk [vmem:[#allocation2 + $0x1e0] sm:$0xff] %vm416, 0.0
      %424 = vst.msk [vmem:[#allocation2 + $0x1e8] sm:$0xff] %vm416, 0.0
      %s425 = scalar_lea.vmem [#allocation2], 144
      %426 = vst.msk [vmem:[%s425] sm:$0xff] %vm416, 0.0
      %427 = vst.msk [vmem:[%s425 + $0x8] sm:$0xff] %vm416, 0.0
      %428 = vst.msk [vmem:[%s425 + $0xa0] sm:$0xff] %vm416, 0.0
      %429 = vst.msk [vmem:[%s425 + $0xa8] sm:$0xff] %vm416, 0.0
      %430 = vst.msk [vmem:[%s425 + $0x140] sm:$0xff] %vm416, 0.0
      %431 = vst.msk [vmem:[%s425 + $0x148] sm:$0xff] %vm416, 0.0
      %432 = vst.msk [vmem:[%s425 + $0x1e0] sm:$0xff] %vm416, 0.0
      %433 = vst.msk [vmem:[%s425 + $0x1e8] sm:$0xff] %vm416, 0.0
      %vm434 = vcmask 523264
      %435 = vst.msk [vmem:[#allocation3] sm:$0xff] %vm434, 0.0
      %436 = vst.msk [vmem:[#allocation3 + $0x8] sm:$0xff] %vm434, 0.0
      %437 = vst.msk [vmem:[#allocation3 + $0x60] sm:$0xff] %vm434, 0.0
      %438 = vst.msk [vmem:[#allocation3 + $0x68] sm:$0xff] %vm434, 0.0
      %439 = vst.msk [vmem:[#allocation3 + $0xc0] sm:$0xff] %vm434, 0.0
      %440 = vst.msk [vmem:[#allocation3 + $0xc8] sm:$0xff] %vm434, 0.0
      %441 = vst.msk [vmem:[#allocation3 + $0x120] sm:$0xff] %vm434, 0.0
      %442 = vst.msk [vmem:[#allocation3 + $0x128] sm:$0xff] %vm434, 0.0
      %s443 = scalar_lea.vmem [#allocation3], 80
      %444 = vst.msk [vmem:[%s443] sm:$0xff] %vm434, 0.0
      %445 = vst.msk [vmem:[%s443 + $0x8] sm:$0xff] %vm434, 0.0
      %446 = vst.msk [vmem:[%s443 + $0x60] sm:$0xff] %vm434, 0.0
      %447 = vst.msk [vmem:[%s443 + $0x68] sm:$0xff] %vm434, 0.0
      %448 = vst.msk [vmem:[%s443 + $0xc0] sm:$0xff] %vm434, 0.0
      %449 = vst.msk [vmem:[%s443 + $0xc8] sm:$0xff] %vm434, 0.0
      %450 = vst.msk [vmem:[%s443 + $0x120] sm:$0xff] %vm434, 0.0
      %451 = vst.msk [vmem:[%s443 + $0x128] sm:$0xff] %vm434, 0.0
      %v452 = vld [vmem:[%s357] sm:$0xf]
      %v453 = vld [vmem:[%s357 + $0x4] sm:$0xf]
      %v454 = vld [vmem:[%s357 + $0x8] sm:$0xf]
      %v455 = vld [vmem:[%s357 + $0xc] sm:$0xf]
      %v456 = vld [vmem:[%s357 + $0x10] sm:$0xf]
      %v457 = vld [vmem:[%s357 + $0x14] sm:$0xf]
      %v458 = vld [vmem:[%s357 + $0x18] sm:$0xf]
      %v459 = vld [vmem:[%s357 + $0x1c] sm:$0xf]
      %v460 = vld [vmem:[%s357 + $0x20] sm:$0xf]
      %v461 = vld [vmem:[%s357 + $0x24] sm:$0xf]
      %v462 = vld [vmem:[%s357 + $0x28] sm:$0xf]
      %v463 = vld [vmem:[%s357 + $0x2c] sm:$0xf]
      %v464 = vld [vmem:[%s357 + $0x30] sm:$0xf]
      %v465 = vld [vmem:[%s357 + $0x34] sm:$0xf]
      %v466 = vld [vmem:[%s357 + $0x38] sm:$0xf]
      %v467 = vld [vmem:[%s357 + $0x3c] sm:$0xf]
      %v468 = vld [vmem:[%s357 + $0x40] sm:$0xf]
      %v469 = vld [vmem:[%s357 + $0x44] sm:$0xf]
      %v470 = vld [vmem:[%s357 + $0x48] sm:$0xf]
      %v471 = vld [vmem:[%s357 + $0x4c] sm:$0xf]
      %v472 = vld [vmem:[%s357 + $0x50] sm:$0xf]
      %v473 = vld [vmem:[%s357 + $0x54] sm:$0xf]
      %v474 = vld [vmem:[%s357 + $0x58] sm:$0xf]
      %v475 = vld [vmem:[%s357 + $0x5c] sm:$0xf]
      %v476 = vld [vmem:[%s357 + $0x60] sm:$0xf]
      %v477 = vld [vmem:[%s357 + $0x64] sm:$0xf]
      %v478 = vld [vmem:[%s357 + $0x68] sm:$0xf]
      %v479 = vld [vmem:[%s357 + $0x6c] sm:$0xf]
      %v480 = vld [vmem:[%s357 + $0x70] sm:$0xf]
      %v481 = vld [vmem:[%s357 + $0x74] sm:$0xf]
      %v482 = vld [vmem:[%s357 + $0x78] sm:$0xf]
      %v483 = vld [vmem:[%s357 + $0x7c] sm:$0xf]
      %v484 = vld [vmem:[%s357 + $0x80] sm:$0xf]
      %v485 = vld [vmem:[%s357 + $0x84] sm:$0xf]
      %v486 = vld [vmem:[%s357 + $0x88] sm:$0xf]
      %v487 = vld [vmem:[%s357 + $0x8c] sm:$0xf]
      %v488 = vld [vmem:[%s357 + $0x90] sm:$0xf]
      %v489 = vld [vmem:[%s357 + $0x94] sm:$0xf]
      %v490 = vld [vmem:[%s357 + $0x98] sm:$0xf]
      %v491 = vld [vmem:[%s357 + $0x9c] sm:$0xf]
      %v492 = vld [vmem:[%s357 + $0xa0] sm:$0xf]
      %v493 = vld [vmem:[%s357 + $0xa4] sm:$0xf]
      %v494 = vld [vmem:[%s357 + $0xa8] sm:$0xf]
      %v495 = vld [vmem:[%s357 + $0xac] sm:$0xf]
      %v496 = vld [vmem:[%s357 + $0xb0] sm:$0xf]
      %v497 = vld [vmem:[%s357 + $0xb4] sm:$0xf]
      %v498 = vld [vmem:[%s357 + $0xb8] sm:$0xf]
      %v499 = vld [vmem:[%s357 + $0xbc] sm:$0xf]
      %v500 = vld [vmem:[%s357 + $0xc0] sm:$0xf]
      %v501 = vld [vmem:[%s357 + $0xc4] sm:$0xf]
      %v502 = vld [vmem:[%s357 + $0xc8] sm:$0xf]
      %v503 = vld [vmem:[%s357 + $0xcc] sm:$0xf]
      %v504 = vld [vmem:[%s357 + $0xd0] sm:$0xf]
      %v505 = vld [vmem:[%s357 + $0xd4] sm:$0xf]
      %v506 = vld [vmem:[%s357 + $0xd8] sm:$0xf]
      %v507 = vld [vmem:[%s357 + $0xdc] sm:$0xf]
      %v508 = vld [vmem:[%s357 + $0xe0] sm:$0xf]
      %v509 = vld [vmem:[%s357 + $0xe4] sm:$0xf]
      %v510 = vld [vmem:[%s357 + $0xe8] sm:$0xf]
      %v511 = vld [vmem:[%s357 + $0xec] sm:$0xf]
      %v512 = vld [vmem:[%s357 + $0xf0] sm:$0xf]
      %v513 = vld [vmem:[%s357 + $0xf4] sm:$0xf]
      %v514 = vld [vmem:[%s357 + $0xf8] sm:$0xf]
      %v515 = vld [vmem:[%s357 + $0xfc] sm:$0xf]
      %v516 = vld [vmem:[%s357 + $0x100] sm:$0xf]
      %v517 = vld [vmem:[%s357 + $0x104] sm:$0xf]
      %v518 = vld [vmem:[%s357 + $0x108] sm:$0xf]
      %v519 = vld [vmem:[%s357 + $0x10c] sm:$0xf]
      %v520 = vld [vmem:[%s357 + $0x110] sm:$0xf]
      %v521 = vld [vmem:[%s357 + $0x114] sm:$0xf]
      %v522 = vld [vmem:[%s357 + $0x118] sm:$0xf]
      %v523 = vld [vmem:[%s357 + $0x11c] sm:$0xf]
      %v524 = vld [vmem:[%s357 + $0x120] sm:$0xf]
      %v525 = vld [vmem:[%s357 + $0x124] sm:$0xf]
      %v526 = vld [vmem:[%s357 + $0x128] sm:$0xf]
      %v527 = vld [vmem:[%s357 + $0x12c] sm:$0xf]
      %v528 = vld [vmem:[%s357 + $0x130] sm:$0xf]
      %v529 = vld [vmem:[%s357 + $0x134] sm:$0xf]
      %v530 = vld [vmem:[%s357 + $0x138] sm:$0xf]
      %v531 = vld [vmem:[%s357 + $0x13c] sm:$0xf]
      %v532 = vld [vmem:[%s357 + $0x140] sm:$0xf]
      %v533 = vld [vmem:[%s357 + $0x144] sm:$0xf]
      %v534 = vld [vmem:[%s357 + $0x148] sm:$0xf]
      %v535 = vld [vmem:[%s357 + $0x14c] sm:$0xf]
      %v536 = vld [vmem:[%s357 + $0x150] sm:$0xf]
      %v537 = vld [vmem:[%s357 + $0x154] sm:$0xf]
      %v538 = vld [vmem:[%s357 + $0x158] sm:$0xf]
      %v539 = vld [vmem:[%s357 + $0x15c] sm:$0xf]
      %v540 = vld [vmem:[%s357 + $0x160] sm:$0xf]
      %v541 = vld [vmem:[%s357 + $0x164] sm:$0xf]
      %v542 = vld [vmem:[%s357 + $0x168] sm:$0xf]
      %v543 = vld [vmem:[%s357 + $0x16c] sm:$0xf]
      %v544 = vld [vmem:[%s357 + $0x170] sm:$0xf]
      %v545 = vld [vmem:[%s357 + $0x174] sm:$0xf]
      %v546 = vld [vmem:[%s357 + $0x178] sm:$0xf]
      %v547 = vld [vmem:[%s357 + $0x17c] sm:$0xf]
      %v548 = vld [vmem:[%s357 + $0x180] sm:$0xf]
      %v549 = vld [vmem:[%s357 + $0x184] sm:$0xf]
      %v550 = vld [vmem:[%s357 + $0x188] sm:$0xf]
      %v551 = vld [vmem:[%s357 + $0x18c] sm:$0xf]
      %v552 = vld [vmem:[%s357 + $0x190] sm:$0xf]
      %v553 = vld [vmem:[%s357 + $0x194] sm:$0xf]
      %v554 = vld [vmem:[%s357 + $0x198] sm:$0xf]
      %v555 = vld [vmem:[%s357 + $0x19c] sm:$0xf]
      %v556 = vld [vmem:[%s357 + $0x1a0] sm:$0xf]
      %v557 = vld [vmem:[%s357 + $0x1a4] sm:$0xf]
      %v558 = vld [vmem:[%s357 + $0x1a8] sm:$0xf]
      %v559 = vld [vmem:[%s357 + $0x1ac] sm:$0xf]
      %v560 = vld [vmem:[%s357 + $0x1b0] sm:$0xf]
      %v561 = vld [vmem:[%s357 + $0x1b4] sm:$0xf]
      %v562 = vld [vmem:[%s357 + $0x1b8] sm:$0xf]
      %v563 = vld [vmem:[%s357 + $0x1bc] sm:$0xf]
      %v564 = vld [vmem:[%s357 + $0x1c0] sm:$0xf]
      %v565 = vld [vmem:[%s357 + $0x1c4] sm:$0xf]
      %v566 = vld [vmem:[%s357 + $0x1c8] sm:$0xf]
      %v567 = vld [vmem:[%s357 + $0x1cc] sm:$0xf]
      %v568 = vld [vmem:[%s357 + $0x1d0] sm:$0xf]
      %v569 = vld [vmem:[%s357 + $0x1d4] sm:$0xf]
      %v570 = vld [vmem:[%s357 + $0x1d8] sm:$0xf]
      %v571 = vld [vmem:[%s357 + $0x1dc] sm:$0xf]
      %v572 = vld [vmem:[%s357 + $0x1e0] sm:$0xf]
      %v573 = vld [vmem:[%s357 + $0x1e4] sm:$0xf]
      %v574 = vld [vmem:[%s357 + $0x1e8] sm:$0xf]
      %v575 = vld [vmem:[%s357 + $0x1ec] sm:$0xf]
      %v576 = vld [vmem:[%s357 + $0x1f0] sm:$0xf]
      %v577 = vld [vmem:[%s357 + $0x1f4] sm:$0xf]
      %v578 = vld [vmem:[%s357 + $0x1f8] sm:$0xf]
      %v579 = vld [vmem:[%s357 + $0x1fc] sm:$0xf]
      %v580 = vld [vmem:[%s1] sm:$0xf]
      %v581 = vld [vmem:[%s1 + $0x4] sm:$0xf]
      %v582 = vld [vmem:[%s1 + $0x8] sm:$0xf]
      %v583 = vld [vmem:[%s1 + $0xc] sm:$0x3]
      %v712 = vunpack.c.l.b16 %v452
      %v713 = vunpack.c.l.b16 %v453
      %v714 = vunpack.c.l.b16 %v454
      %v715 = vunpack.c.l.b16 %v455
      %v716 = vunpack.c.l.b16 %v456
      %v717 = vunpack.c.l.b16 %v457
      %v718 = vunpack.c.l.b16 %v458
      %v719 = vunpack.c.l.b16 %v459
      %v720 = vunpack.c.l.b16 %v460
      %v721 = vunpack.c.l.b16 %v461
      %v722 = vunpack.c.l.b16 %v462
      %v723 = vunpack.c.l.b16 %v463
      %v724 = vunpack.c.l.b16 %v464
      %v725 = vunpack.c.l.b16 %v465
      %v726 = vunpack.c.l.b16 %v466
      %v727 = vunpack.c.l.b16 %v467
      %v728 = vunpack.c.l.b16 %v468
      %v729 = vunpack.c.l.b16 %v469
      %v730 = vunpack.c.l.b16 %v470
      %v731 = vunpack.c.l.b16 %v471
      %v732 = vunpack.c.l.b16 %v472
      %v733 = vunpack.c.l.b16 %v473
      %v734 = vunpack.c.l.b16 %v474
      %v735 = vunpack.c.l.b16 %v475
      %v736 = vunpack.c.l.b16 %v476
      %v737 = vunpack.c.l.b16 %v477
      %v738 = vunpack.c.l.b16 %v478
      %v739 = vunpack.c.l.b16 %v479
      %v740 = vunpack.c.l.b16 %v480
      %v741 = vunpack.c.l.b16 %v481
      %v742 = vunpack.c.l.b16 %v482
      %v743 = vunpack.c.l.b16 %v483
      %v744 = vunpack.c.l.b16 %v484
      %v745 = vunpack.c.l.b16 %v485
      %v746 = vunpack.c.l.b16 %v486
      %v747 = vunpack.c.l.b16 %v487
      %v748 = vunpack.c.l.b16 %v488
      %v749 = vunpack.c.l.b16 %v489
      %v750 = vunpack.c.l.b16 %v490
      %v751 = vunpack.c.l.b16 %v491
      %v752 = vunpack.c.l.b16 %v492
      %v753 = vunpack.c.l.b16 %v493
      %v754 = vunpack.c.l.b16 %v494
      %v755 = vunpack.c.l.b16 %v495
      %v756 = vunpack.c.l.b16 %v496
      %v757 = vunpack.c.l.b16 %v497
      %v758 = vunpack.c.l.b16 %v498
      %v759 = vunpack.c.l.b16 %v499
      %v760 = vunpack.c.l.b16 %v500
      %v761 = vunpack.c.l.b16 %v501
      %v762 = vunpack.c.l.b16 %v502
      %v763 = vunpack.c.l.b16 %v503
      %v764 = vunpack.c.l.b16 %v504
      %v765 = vunpack.c.l.b16 %v505
      %v766 = vunpack.c.l.b16 %v506
      %v767 = vunpack.c.l.b16 %v507
      %v768 = vunpack.c.l.b16 %v508
      %v769 = vunpack.c.l.b16 %v509
      %v770 = vunpack.c.l.b16 %v510
      %v771 = vunpack.c.l.b16 %v511
      %v772 = vunpack.c.l.b16 %v512
      %v773 = vunpack.c.l.b16 %v513
      %v774 = vunpack.c.l.b16 %v514
      %v775 = vunpack.c.l.b16 %v515
      %v776 = vunpack.c.l.b16 %v516
      %v777 = vunpack.c.l.b16 %v517
      %v778 = vunpack.c.l.b16 %v518
      %v779 = vunpack.c.l.b16 %v519
      %v780 = vunpack.c.l.b16 %v520
      %v781 = vunpack.c.l.b16 %v521
      %v782 = vunpack.c.l.b16 %v522
      %v783 = vunpack.c.l.b16 %v523
      %v784 = vunpack.c.l.b16 %v524
      %v785 = vunpack.c.l.b16 %v525
      %v786 = vunpack.c.l.b16 %v526
      %v787 = vunpack.c.l.b16 %v527
      %v788 = vunpack.c.l.b16 %v528
      %v789 = vunpack.c.l.b16 %v529
      %v790 = vunpack.c.l.b16 %v530
      %v791 = vunpack.c.l.b16 %v531
      %v792 = vunpack.c.l.b16 %v532
      %v793 = vunpack.c.l.b16 %v533
      %v794 = vunpack.c.l.b16 %v534
      %v795 = vunpack.c.l.b16 %v535
      %v796 = vunpack.c.l.b16 %v536
      %v797 = vunpack.c.l.b16 %v537
      %v798 = vunpack.c.l.b16 %v538
      %v799 = vunpack.c.l.b16 %v539
      %v800 = vunpack.c.l.b16 %v540
      %v801 = vunpack.c.l.b16 %v541
      %v802 = vunpack.c.l.b16 %v542
      %v803 = vunpack.c.l.b16 %v543
      %v804 = vunpack.c.l.b16 %v544
      %v805 = vunpack.c.l.b16 %v545
      %v806 = vunpack.c.l.b16 %v546
      %v807 = vunpack.c.l.b16 %v547
      %v808 = vunpack.c.l.b16 %v548
      %v809 = vunpack.c.l.b16 %v549
      %v810 = vunpack.c.l.b16 %v550
      %v811 = vunpack.c.l.b16 %v551
      %v812 = vunpack.c.l.b16 %v552
      %v813 = vunpack.c.l.b16 %v553
      %v814 = vunpack.c.l.b16 %v554
      %v815 = vunpack.c.l.b16 %v555
      %v816 = vunpack.c.l.b16 %v556
      %v817 = vunpack.c.l.b16 %v557
      %v818 = vunpack.c.l.b16 %v558
      %v819 = vunpack.c.l.b16 %v559
      %v820 = vunpack.c.l.b16 %v560
      %v821 = vunpack.c.l.b16 %v561
      %v822 = vunpack.c.l.b16 %v562
      %v823 = vunpack.c.l.b16 %v563
      %v824 = vunpack.c.l.b16 %v564
      %v825 = vunpack.c.l.b16 %v565
      %v826 = vunpack.c.l.b16 %v566
      %v827 = vunpack.c.l.b16 %v567
      %v828 = vunpack.c.l.b16 %v568
      %v829 = vunpack.c.l.b16 %v569
      %v830 = vunpack.c.l.b16 %v570
      %v831 = vunpack.c.l.b16 %v571
      %v832 = vunpack.c.l.b16 %v572
      %v833 = vunpack.c.l.b16 %v573
      %v834 = vunpack.c.l.b16 %v574
      %v835 = vunpack.c.l.b16 %v575
      %v836 = vunpack.c.l.b16 %v576
      %v837 = vunpack.c.l.b16 %v577
      %v838 = vunpack.c.l.b16 %v578
      %v839 = vunpack.c.l.b16 %v579
      %v840 = vpack.c.b16 %v713, %v712
      %v841 = vpack.c.b16 %v715, %v714
      %v842 = vpack.c.b16 %v717, %v716
      %v843 = vpack.c.b16 %v719, %v718
      %v844 = vpack.c.b16 %v721, %v720
      %v845 = vpack.c.b16 %v723, %v722
      %v846 = vpack.c.b16 %v725, %v724
      %v847 = vpack.c.b16 %v727, %v726
      %v848 = vpack.c.b16 %v729, %v728
      %v849 = vpack.c.b16 %v731, %v730
      %v850 = vpack.c.b16 %v733, %v732
      %v851 = vpack.c.b16 %v735, %v734
      %v852 = vpack.c.b16 %v737, %v736
      %v853 = vpack.c.b16 %v739, %v738
      %v854 = vpack.c.b16 %v741, %v740
      %v855 = vpack.c.b16 %v743, %v742
      %v856 = vpack.c.b16 %v745, %v744
      %v857 = vpack.c.b16 %v747, %v746
      %v858 = vpack.c.b16 %v749, %v748
      %v859 = vpack.c.b16 %v751, %v750
      %v860 = vpack.c.b16 %v753, %v752
      %v861 = vpack.c.b16 %v755, %v754
      %v862 = vpack.c.b16 %v757, %v756
      %v863 = vpack.c.b16 %v759, %v758
      %v864 = vpack.c.b16 %v761, %v760
      %v865 = vpack.c.b16 %v763, %v762
      %v866 = vpack.c.b16 %v765, %v764
      %v867 = vpack.c.b16 %v767, %v766
      %v868 = vpack.c.b16 %v769, %v768
      %v869 = vpack.c.b16 %v771, %v770
      %v870 = vpack.c.b16 %v773, %v772
      %v871 = vpack.c.b16 %v775, %v774
      %v872 = vpack.c.b16 %v777, %v776
      %v873 = vpack.c.b16 %v779, %v778
      %v874 = vpack.c.b16 %v781, %v780
      %v875 = vpack.c.b16 %v783, %v782
      %v876 = vpack.c.b16 %v785, %v784
      %v877 = vpack.c.b16 %v787, %v786
      %v878 = vpack.c.b16 %v789, %v788
      %v879 = vpack.c.b16 %v791, %v790
      %v880 = vpack.c.b16 %v793, %v792
      %v881 = vpack.c.b16 %v795, %v794
      %v882 = vpack.c.b16 %v797, %v796
      %v883 = vpack.c.b16 %v799, %v798
      %v884 = vpack.c.b16 %v801, %v800
      %v885 = vpack.c.b16 %v803, %v802
      %v886 = vpack.c.b16 %v805, %v804
      %v887 = vpack.c.b16 %v807, %v806
      %v888 = vpack.c.b16 %v809, %v808
      %v889 = vpack.c.b16 %v811, %v810
      %v890 = vpack.c.b16 %v813, %v812
      %v891 = vpack.c.b16 %v815, %v814
      %v892 = vpack.c.b16 %v817, %v816
      %v893 = vpack.c.b16 %v819, %v818
      %v894 = vpack.c.b16 %v821, %v820
      %v895 = vpack.c.b16 %v823, %v822
      %v896 = vpack.c.b16 %v825, %v824
      %v897 = vpack.c.b16 %v827, %v826
      %v898 = vpack.c.b16 %v829, %v828
      %v899 = vpack.c.b16 %v831, %v830
      %v900 = vpack.c.b16 %v833, %v832
      %v901 = vpack.c.b16 %v835, %v834
      %v902 = vpack.c.b16 %v837, %v836
      %v903 = vpack.c.b16 %v839, %v838
      %v908 = vunpack.c.l.b16 %v580
      %v909 = vunpack.c.l.b16 %v581
      %v910 = vunpack.c.l.b16 %v582
      %v911 = vunpack.c.l.b16 %v583
      %v912 = vpack.c.b16 %v909, %v908
      %v913 = vpack.c.b16 %v911, %v910
      %vm915 = vcmask 220160
      %v917 = vsel %vm915, %v840, 0
      %v920 = vsel %vm915, %v841, 0
      %v923 = vsel %vm915, %v842, 0
      %v926 = vsel %vm915, %v843, 0
      %v929 = vsel %vm915, %v844, 0
      %v932 = vsel %vm915, %v845, 0
      %v935 = vsel %vm915, %v846, 0
      %v938 = vsel %vm915, %v847, 0
      %v941 = vsel %vm915, %v848, 0
      %v944 = vsel %vm915, %v849, 0
      %v947 = vsel %vm915, %v850, 0
      %v950 = vsel %vm915, %v851, 0
      %v953 = vsel %vm915, %v852, 0
      %v956 = vsel %vm915, %v853, 0
      %v959 = vsel %vm915, %v854, 0
      %v962 = vsel %vm915, %v855, 0
      %v965 = vsel %vm915, %v856, 0
      %v968 = vsel %vm915, %v857, 0
      %v971 = vsel %vm915, %v858, 0
      %v974 = vsel %vm915, %v859, 0
      %v977 = vsel %vm915, %v860, 0
      %v980 = vsel %vm915, %v861, 0
      %v983 = vsel %vm915, %v862, 0
      %v986 = vsel %vm915, %v863, 0
      %v989 = vsel %vm915, %v864, 0
      %v992 = vsel %vm915, %v865, 0
      %v995 = vsel %vm915, %v866, 0
      %v998 = vsel %vm915, %v867, 0
      %v1001 = vsel %vm915, %v868, 0
      %v1004 = vsel %vm915, %v869, 0
      %v1007 = vsel %vm915, %v870, 0
      %v1010 = vsel %vm915, %v871, 0
      %v1013 = vsel %vm915, %v872, 0
      %v1016 = vsel %vm915, %v873, 0
      %v1019 = vsel %vm915, %v874, 0
      %v1022 = vsel %vm915, %v875, 0
      %v1025 = vsel %vm915, %v876, 0
      %v1028 = vsel %vm915, %v877, 0
      %v1031 = vsel %vm915, %v878, 0
      %v1034 = vsel %vm915, %v879, 0
      %v1037 = vsel %vm915, %v880, 0
      %v1040 = vsel %vm915, %v881, 0
      %v1043 = vsel %vm915, %v882, 0
      %v1046 = vsel %vm915, %v883, 0
      %v1049 = vsel %vm915, %v884, 0
      %v1052 = vsel %vm915, %v885, 0
      %v1055 = vsel %vm915, %v886, 0
      %v1058 = vsel %vm915, %v887, 0
      %v1061 = vsel %vm915, %v888, 0
      %v1064 = vsel %vm915, %v889, 0
      %v1067 = vsel %vm915, %v890, 0
      %v1070 = vsel %vm915, %v891, 0
      %v1073 = vsel %vm915, %v892, 0
      %v1076 = vsel %vm915, %v893, 0
      %v1079 = vsel %vm915, %v894, 0
      %v1082 = vsel %vm915, %v895, 0
      %v1085 = vsel %vm915, %v896, 0
      %v1088 = vsel %vm915, %v897, 0
      %v1091 = vsel %vm915, %v898, 0
      %v1094 = vsel %vm915, %v899, 0
      %v1097 = vsel %vm915, %v900, 0
      %v1100 = vsel %vm915, %v901, 0
      %v1103 = vsel %vm915, %v902, 0
      %v1106 = vsel %vm915, %v903, 0
      %vm1108 = vcmask 1044480
      %vm1109 = vcmask 1045504
      %v1110 = vsel %vm1108, 4294967295, 65535
      %v1111 = vsel %vm1109, %v1110, 0
      %v1113 = vand.u32 %v913, %v1111
      %1115 = vmatpush.bf16.msra.mxu0 0
      %1116 = vmatpush.bf16.msra.mxu0 0
      %1117 = vmatpush.bf16.msra.mxu0 0
      %1118 = vmatpush.bf16.msra.mxu0 0
      %1119 = vmatpush.bf16.msra.mxu0 0
      %1120 = vmatpush.bf16.msra.mxu0 0
      %1121 = vmatpush.bf16.msra.mxu0 %v1113
      %1122 = vmatpush.bf16.msra.mxu0 %v912
      %1123 = vmatmul.bf16.gmra.mxu0 %v917
      %v1124 = vpop.f32.mrf.mxu0
      %v1125 = vadd.f32 0.0, %v1124
      %v1126 = vpop.f32.mrf.mxu0
      %v1127 = vadd.f32 0.0, %v1126
      %1128 = vmatmul.bf16.gmra.mxu0 %v920
      %v1129 = vpop.f32.mrf.mxu0
      %v1130 = vadd.f32 0.0, %v1129
      %v1131 = vpop.f32.mrf.mxu0
      %v1132 = vadd.f32 0.0, %v1131
      %1133 = vmatmul.bf16.gmra.mxu0 %v923
      %v1134 = vpop.f32.mrf.mxu0
      %v1135 = vadd.f32 0.0, %v1134
      %v1136 = vpop.f32.mrf.mxu0
      %v1137 = vadd.f32 0.0, %v1136
      %1138 = vmatmul.bf16.gmra.mxu0 %v926
      %v1139 = vpop.f32.mrf.mxu0
      %v1140 = vadd.f32 0.0, %v1139
      %v1141 = vpop.f32.mrf.mxu0
      %v1142 = vadd.f32 0.0, %v1141
      %1143 = vmatmul.bf16.gmra.mxu0 %v929
      %v1144 = vpop.f32.mrf.mxu0
      %v1145 = vadd.f32 0.0, %v1144
      %v1146 = vpop.f32.mrf.mxu0
      %v1147 = vadd.f32 0.0, %v1146
      %1148 = vmatmul.bf16.gmra.mxu0 %v932
      %v1149 = vpop.f32.mrf.mxu0
      %v1150 = vadd.f32 0.0, %v1149
      %v1151 = vpop.f32.mrf.mxu0
      %v1152 = vadd.f32 0.0, %v1151
      %1153 = vmatmul.bf16.gmra.mxu0 %v935
      %v1154 = vpop.f32.mrf.mxu0
      %v1155 = vadd.f32 0.0, %v1154
      %v1156 = vpop.f32.mrf.mxu0
      %v1157 = vadd.f32 0.0, %v1156
      %1158 = vmatmul.bf16.gmra.mxu0 %v938
      %v1159 = vpop.f32.mrf.mxu0
      %v1160 = vadd.f32 0.0, %v1159
      %v1161 = vpop.f32.mrf.mxu0
      %v1162 = vadd.f32 0.0, %v1161
      %1163 = vmatmul.bf16.gmra.mxu0 %v941
      %v1164 = vpop.f32.mrf.mxu0
      %v1165 = vadd.f32 0.0, %v1164
      %v1166 = vpop.f32.mrf.mxu0
      %v1167 = vadd.f32 0.0, %v1166
      %1168 = vmatmul.bf16.gmra.mxu0 %v944
      %v1169 = vpop.f32.mrf.mxu0
      %v1170 = vadd.f32 0.0, %v1169
      %v1171 = vpop.f32.mrf.mxu0
      %v1172 = vadd.f32 0.0, %v1171
      %1173 = vmatmul.bf16.gmra.mxu0 %v947
      %v1174 = vpop.f32.mrf.mxu0
      %v1175 = vadd.f32 0.0, %v1174
      %v1176 = vpop.f32.mrf.mxu0
      %v1177 = vadd.f32 0.0, %v1176
      %1178 = vmatmul.bf16.gmra.mxu0 %v950
      %v1179 = vpop.f32.mrf.mxu0
      %v1180 = vadd.f32 0.0, %v1179
      %v1181 = vpop.f32.mrf.mxu0
      %v1182 = vadd.f32 0.0, %v1181
      %1183 = vmatmul.bf16.gmra.mxu0 %v953
      %v1184 = vpop.f32.mrf.mxu0
      %v1185 = vadd.f32 0.0, %v1184
      %v1186 = vpop.f32.mrf.mxu0
      %v1187 = vadd.f32 0.0, %v1186
      %1188 = vmatmul.bf16.gmra.mxu0 %v956
      %v1189 = vpop.f32.mrf.mxu0
      %v1190 = vadd.f32 0.0, %v1189
      %v1191 = vpop.f32.mrf.mxu0
      %v1192 = vadd.f32 0.0, %v1191
      %1193 = vmatmul.bf16.gmra.mxu0 %v959
      %v1194 = vpop.f32.mrf.mxu0
      %v1195 = vadd.f32 0.0, %v1194
      %v1196 = vpop.f32.mrf.mxu0
      %v1197 = vadd.f32 0.0, %v1196
      %1198 = vmatmul.bf16.gmra.mxu0 %v962
      %v1199 = vpop.f32.mrf.mxu0
      %v1200 = vadd.f32 0.0, %v1199
      %v1201 = vpop.f32.mrf.mxu0
      %v1202 = vadd.f32 0.0, %v1201
      %1203 = vmatmul.bf16.gmra.mxu0 %v965
      %v1204 = vpop.f32.mrf.mxu0
      %v1205 = vadd.f32 0.0, %v1204
      %v1206 = vpop.f32.mrf.mxu0
      %v1207 = vadd.f32 0.0, %v1206
      %1208 = vmatmul.bf16.gmra.mxu0 %v968
      %v1209 = vpop.f32.mrf.mxu0
      %v1210 = vadd.f32 0.0, %v1209
      %v1211 = vpop.f32.mrf.mxu0
      %v1212 = vadd.f32 0.0, %v1211
      %1213 = vmatmul.bf16.gmra.mxu0 %v971
      %v1214 = vpop.f32.mrf.mxu0
      %v1215 = vadd.f32 0.0, %v1214
      %v1216 = vpop.f32.mrf.mxu0
      %v1217 = vadd.f32 0.0, %v1216
      %1218 = vmatmul.bf16.gmra.mxu0 %v974
      %v1219 = vpop.f32.mrf.mxu0
      %v1220 = vadd.f32 0.0, %v1219
      %v1221 = vpop.f32.mrf.mxu0
      %v1222 = vadd.f32 0.0, %v1221
      %1223 = vmatmul.bf16.gmra.mxu0 %v977
      %v1224 = vpop.f32.mrf.mxu0
      %v1225 = vadd.f32 0.0, %v1224
      %v1226 = vpop.f32.mrf.mxu0
      %v1227 = vadd.f32 0.0, %v1226
      %1228 = vmatmul.bf16.gmra.mxu0 %v980
      %v1229 = vpop.f32.mrf.mxu0
      %v1230 = vadd.f32 0.0, %v1229
      %v1231 = vpop.f32.mrf.mxu0
      %v1232 = vadd.f32 0.0, %v1231
      %1233 = vmatmul.bf16.gmra.mxu0 %v983
      %v1234 = vpop.f32.mrf.mxu0
      %v1235 = vadd.f32 0.0, %v1234
      %v1236 = vpop.f32.mrf.mxu0
      %v1237 = vadd.f32 0.0, %v1236
      %1238 = vmatmul.bf16.gmra.mxu0 %v986
      %v1239 = vpop.f32.mrf.mxu0
      %v1240 = vadd.f32 0.0, %v1239
      %v1241 = vpop.f32.mrf.mxu0
      %v1242 = vadd.f32 0.0, %v1241
      %1243 = vmatmul.bf16.gmra.mxu0 %v989
      %v1244 = vpop.f32.mrf.mxu0
      %v1245 = vadd.f32 0.0, %v1244
      %v1246 = vpop.f32.mrf.mxu0
      %v1247 = vadd.f32 0.0, %v1246
      %1248 = vmatmul.bf16.gmra.mxu0 %v992
      %v1249 = vpop.f32.mrf.mxu0
      %v1250 = vadd.f32 0.0, %v1249
      %v1251 = vpop.f32.mrf.mxu0
      %v1252 = vadd.f32 0.0, %v1251
      %1253 = vmatmul.bf16.gmra.mxu0 %v995
      %v1254 = vpop.f32.mrf.mxu0
      %v1255 = vadd.f32 0.0, %v1254
      %v1256 = vpop.f32.mrf.mxu0
      %v1257 = vadd.f32 0.0, %v1256
      %1258 = vmatmul.bf16.gmra.mxu0 %v998
      %v1259 = vpop.f32.mrf.mxu0
      %v1260 = vadd.f32 0.0, %v1259
      %v1261 = vpop.f32.mrf.mxu0
      %v1262 = vadd.f32 0.0, %v1261
      %1263 = vmatmul.bf16.gmra.mxu0 %v1001
      %v1264 = vpop.f32.mrf.mxu0
      %v1265 = vadd.f32 0.0, %v1264
      %v1266 = vpop.f32.mrf.mxu0
      %v1267 = vadd.f32 0.0, %v1266
      %1268 = vmatmul.bf16.gmra.mxu0 %v1004
      %v1269 = vpop.f32.mrf.mxu0
      %v1270 = vadd.f32 0.0, %v1269
      %v1271 = vpop.f32.mrf.mxu0
      %v1272 = vadd.f32 0.0, %v1271
      %1273 = vmatmul.bf16.gmra.mxu0 %v1007
      %v1274 = vpop.f32.mrf.mxu0
      %v1275 = vadd.f32 0.0, %v1274
      %v1276 = vpop.f32.mrf.mxu0
      %v1277 = vadd.f32 0.0, %v1276
      %1278 = vmatmul.bf16.gmra.mxu0 %v1010
      %v1279 = vpop.f32.mrf.mxu0
      %v1280 = vadd.f32 0.0, %v1279
      %v1281 = vpop.f32.mrf.mxu0
      %v1282 = vadd.f32 0.0, %v1281
      %1283 = vmatmul.bf16.gmra.mxu0 %v1013
      %v1284 = vpop.f32.mrf.mxu0
      %v1285 = vadd.f32 0.0, %v1284
      %v1286 = vpop.f32.mrf.mxu0
      %v1287 = vadd.f32 0.0, %v1286
      %1288 = vmatmul.bf16.gmra.mxu0 %v1016
      %v1289 = vpop.f32.mrf.mxu0
      %v1290 = vadd.f32 0.0, %v1289
      %v1291 = vpop.f32.mrf.mxu0
      %v1292 = vadd.f32 0.0, %v1291
      %1293 = vmatmul.bf16.gmra.mxu0 %v1019
      %v1294 = vpop.f32.mrf.mxu0
      %v1295 = vadd.f32 0.0, %v1294
      %v1296 = vpop.f32.mrf.mxu0
      %v1297 = vadd.f32 0.0, %v1296
      %1298 = vmatmul.bf16.gmra.mxu0 %v1022
      %v1299 = vpop.f32.mrf.mxu0
      %v1300 = vadd.f32 0.0, %v1299
      %v1301 = vpop.f32.mrf.mxu0
      %v1302 = vadd.f32 0.0, %v1301
      %1303 = vmatmul.bf16.gmra.mxu0 %v1025
      %v1304 = vpop.f32.mrf.mxu0
      %v1305 = vadd.f32 0.0, %v1304
      %v1306 = vpop.f32.mrf.mxu0
      %v1307 = vadd.f32 0.0, %v1306
      %1308 = vmatmul.bf16.gmra.mxu0 %v1028
      %v1309 = vpop.f32.mrf.mxu0
      %v1310 = vadd.f32 0.0, %v1309
      %v1311 = vpop.f32.mrf.mxu0
      %v1312 = vadd.f32 0.0, %v1311
      %1313 = vmatmul.bf16.gmra.mxu0 %v1031
      %v1314 = vpop.f32.mrf.mxu0
      %v1315 = vadd.f32 0.0, %v1314
      %v1316 = vpop.f32.mrf.mxu0
      %v1317 = vadd.f32 0.0, %v1316
      %1318 = vmatmul.bf16.gmra.mxu0 %v1034
      %v1319 = vpop.f32.mrf.mxu0
      %v1320 = vadd.f32 0.0, %v1319
      %v1321 = vpop.f32.mrf.mxu0
      %v1322 = vadd.f32 0.0, %v1321
      %1323 = vmatmul.bf16.gmra.mxu0 %v1037
      %v1324 = vpop.f32.mrf.mxu0
      %v1325 = vadd.f32 0.0, %v1324
      %v1326 = vpop.f32.mrf.mxu0
      %v1327 = vadd.f32 0.0, %v1326
      %1328 = vmatmul.bf16.gmra.mxu0 %v1040
      %v1329 = vpop.f32.mrf.mxu0
      %v1330 = vadd.f32 0.0, %v1329
      %v1331 = vpop.f32.mrf.mxu0
      %v1332 = vadd.f32 0.0, %v1331
      %1333 = vmatmul.bf16.gmra.mxu0 %v1043
      %v1334 = vpop.f32.mrf.mxu0
      %v1335 = vadd.f32 0.0, %v1334
      %v1336 = vpop.f32.mrf.mxu0
      %v1337 = vadd.f32 0.0, %v1336
      %1338 = vmatmul.bf16.gmra.mxu0 %v1046
      %v1339 = vpop.f32.mrf.mxu0
      %v1340 = vadd.f32 0.0, %v1339
      %v1341 = vpop.f32.mrf.mxu0
      %v1342 = vadd.f32 0.0, %v1341
      %1343 = vmatmul.bf16.gmra.mxu0 %v1049
      %v1344 = vpop.f32.mrf.mxu0
      %v1345 = vadd.f32 0.0, %v1344
      %v1346 = vpop.f32.mrf.mxu0
      %v1347 = vadd.f32 0.0, %v1346
      %1348 = vmatmul.bf16.gmra.mxu0 %v1052
      %v1349 = vpop.f32.mrf.mxu0
      %v1350 = vadd.f32 0.0, %v1349
      %v1351 = vpop.f32.mrf.mxu0
      %v1352 = vadd.f32 0.0, %v1351
      %1353 = vmatmul.bf16.gmra.mxu0 %v1055
      %v1354 = vpop.f32.mrf.mxu0
      %v1355 = vadd.f32 0.0, %v1354
      %v1356 = vpop.f32.mrf.mxu0
      %v1357 = vadd.f32 0.0, %v1356
      %1358 = vmatmul.bf16.gmra.mxu0 %v1058
      %v1359 = vpop.f32.mrf.mxu0
      %v1360 = vadd.f32 0.0, %v1359
      %v1361 = vpop.f32.mrf.mxu0
      %v1362 = vadd.f32 0.0, %v1361
      %1363 = vmatmul.bf16.gmra.mxu0 %v1061
      %v1364 = vpop.f32.mrf.mxu0
      %v1365 = vadd.f32 0.0, %v1364
      %v1366 = vpop.f32.mrf.mxu0
      %v1367 = vadd.f32 0.0, %v1366
      %1368 = vmatmul.bf16.gmra.mxu0 %v1064
      %v1369 = vpop.f32.mrf.mxu0
      %v1370 = vadd.f32 0.0, %v1369
      %v1371 = vpop.f32.mrf.mxu0
      %v1372 = vadd.f32 0.0, %v1371
      %1373 = vmatmul.bf16.gmra.mxu0 %v1067
      %v1374 = vpop.f32.mrf.mxu0
      %v1375 = vadd.f32 0.0, %v1374
      %v1376 = vpop.f32.mrf.mxu0
      %v1377 = vadd.f32 0.0, %v1376
      %1378 = vmatmul.bf16.gmra.mxu0 %v1070
      %v1379 = vpop.f32.mrf.mxu0
      %v1380 = vadd.f32 0.0, %v1379
      %v1381 = vpop.f32.mrf.mxu0
      %v1382 = vadd.f32 0.0, %v1381
      %1383 = vmatmul.bf16.gmra.mxu0 %v1073
      %v1384 = vpop.f32.mrf.mxu0
      %v1385 = vadd.f32 0.0, %v1384
      %v1386 = vpop.f32.mrf.mxu0
      %v1387 = vadd.f32 0.0, %v1386
      %1388 = vmatmul.bf16.gmra.mxu0 %v1076
      %v1389 = vpop.f32.mrf.mxu0
      %v1390 = vadd.f32 0.0, %v1389
      %v1391 = vpop.f32.mrf.mxu0
      %v1392 = vadd.f32 0.0, %v1391
      %1393 = vmatmul.bf16.gmra.mxu0 %v1079
      %v1394 = vpop.f32.mrf.mxu0
      %v1395 = vadd.f32 0.0, %v1394
      %v1396 = vpop.f32.mrf.mxu0
      %v1397 = vadd.f32 0.0, %v1396
      %1398 = vmatmul.bf16.gmra.mxu0 %v1082
      %v1399 = vpop.f32.mrf.mxu0
      %v1400 = vadd.f32 0.0, %v1399
      %v1401 = vpop.f32.mrf.mxu0
      %v1402 = vadd.f32 0.0, %v1401
      %1403 = vmatmul.bf16.gmra.mxu0 %v1085
      %v1404 = vpop.f32.mrf.mxu0
      %v1405 = vadd.f32 0.0, %v1404
      %v1406 = vpop.f32.mrf.mxu0
      %v1407 = vadd.f32 0.0, %v1406
      %1408 = vmatmul.bf16.gmra.mxu0 %v1088
      %v1409 = vpop.f32.mrf.mxu0
      %v1410 = vadd.f32 0.0, %v1409
      %v1411 = vpop.f32.mrf.mxu0
      %v1412 = vadd.f32 0.0, %v1411
      %1413 = vmatmul.bf16.gmra.mxu0 %v1091
      %v1414 = vpop.f32.mrf.mxu0
      %v1415 = vadd.f32 0.0, %v1414
      %v1416 = vpop.f32.mrf.mxu0
      %v1417 = vadd.f32 0.0, %v1416
      %1418 = vmatmul.bf16.gmra.mxu0 %v1094
      %v1419 = vpop.f32.mrf.mxu0
      %v1420 = vadd.f32 0.0, %v1419
      %v1421 = vpop.f32.mrf.mxu0
      %v1422 = vadd.f32 0.0, %v1421
      %1423 = vmatmul.bf16.gmra.mxu0 %v1097
      %v1424 = vpop.f32.mrf.mxu0
      %v1425 = vadd.f32 0.0, %v1424
      %v1426 = vpop.f32.mrf.mxu0
      %v1427 = vadd.f32 0.0, %v1426
      %1428 = vmatmul.bf16.gmra.mxu0 %v1100
      %v1429 = vpop.f32.mrf.mxu0
      %v1430 = vadd.f32 0.0, %v1429
      %v1431 = vpop.f32.mrf.mxu0
      %v1432 = vadd.f32 0.0, %v1431
      %1433 = vmatmul.bf16.gmra.mxu0 %v1103
      %v1434 = vpop.f32.mrf.mxu0
      %v1435 = vadd.f32 0.0, %v1434
      %v1436 = vpop.f32.mrf.mxu0
      %v1437 = vadd.f32 0.0, %v1436
      %1438 = vmatmul.bf16.gmra.mxu0 %v1106
      %v1439 = vpop.f32.mrf.mxu0
      %v1440 = vadd.f32 0.0, %v1439
      %v1441 = vpop.f32.mrf.mxu0
      %v1442 = vadd.f32 0.0, %v1441
      %1443 = vdwg.mxu0
      %v1445 = vperm.slane %v364, 0
      %v1447 = vmul.f32 %v1125, %v1445
      %v1448 = vmul.f32 %v1127, %v1445
      %v1449 = vmul.f32 %v1130, %v1445
      %v1450 = vmul.f32 %v1132, %v1445
      %v1451 = vmul.f32 %v1135, %v1445
      %v1452 = vmul.f32 %v1137, %v1445
      %v1453 = vmul.f32 %v1140, %v1445
      %v1454 = vmul.f32 %v1142, %v1445
      %v1455 = vmul.f32 %v1145, %v1445
      %v1456 = vmul.f32 %v1147, %v1445
      %v1457 = vmul.f32 %v1150, %v1445
      %v1458 = vmul.f32 %v1152, %v1445
      %v1459 = vmul.f32 %v1155, %v1445
      %v1460 = vmul.f32 %v1157, %v1445
      %v1461 = vmul.f32 %v1160, %v1445
      %v1462 = vmul.f32 %v1162, %v1445
      %v1463 = vmul.f32 %v1165, %v1445
      %v1464 = vmul.f32 %v1167, %v1445
      %v1465 = vmul.f32 %v1170, %v1445
      %v1466 = vmul.f32 %v1172, %v1445
      %v1467 = vmul.f32 %v1175, %v1445
      %v1468 = vmul.f32 %v1177, %v1445
      %v1469 = vmul.f32 %v1180, %v1445
      %v1470 = vmul.f32 %v1182, %v1445
      %v1471 = vmul.f32 %v1185, %v1445
      %v1472 = vmul.f32 %v1187, %v1445
      %v1473 = vmul.f32 %v1190, %v1445
      %v1474 = vmul.f32 %v1192, %v1445
      %v1475 = vmul.f32 %v1195, %v1445
      %v1476 = vmul.f32 %v1197, %v1445
      %v1477 = vmul.f32 %v1200, %v1445
      %v1478 = vmul.f32 %v1202, %v1445
      %v1479 = vmul.f32 %v1205, %v1445
      %v1480 = vmul.f32 %v1207, %v1445
      %v1481 = vmul.f32 %v1210, %v1445
      %v1482 = vmul.f32 %v1212, %v1445
      %v1483 = vmul.f32 %v1215, %v1445
      %v1484 = vmul.f32 %v1217, %v1445
      %v1485 = vmul.f32 %v1220, %v1445
      %v1486 = vmul.f32 %v1222, %v1445
      %v1487 = vmul.f32 %v1225, %v1445
      %v1488 = vmul.f32 %v1227, %v1445
      %v1489 = vmul.f32 %v1230, %v1445
      %v1490 = vmul.f32 %v1232, %v1445
      %v1491 = vmul.f32 %v1235, %v1445
      %v1492 = vmul.f32 %v1237, %v1445
      %v1493 = vmul.f32 %v1240, %v1445
      %v1494 = vmul.f32 %v1242, %v1445
      %v1495 = vmul.f32 %v1245, %v1445
      %v1496 = vmul.f32 %v1247, %v1445
      %v1497 = vmul.f32 %v1250, %v1445
      %v1498 = vmul.f32 %v1252, %v1445
      %v1499 = vmul.f32 %v1255, %v1445
      %v1500 = vmul.f32 %v1257, %v1445
      %v1501 = vmul.f32 %v1260, %v1445
      %v1502 = vmul.f32 %v1262, %v1445
      %v1503 = vmul.f32 %v1265, %v1445
      %v1504 = vmul.f32 %v1267, %v1445
      %v1505 = vmul.f32 %v1270, %v1445
      %v1506 = vmul.f32 %v1272, %v1445
      %v1507 = vmul.f32 %v1275, %v1445
      %v1508 = vmul.f32 %v1277, %v1445
      %v1509 = vmul.f32 %v1280, %v1445
      %v1510 = vmul.f32 %v1282, %v1445
      %v1511 = vmul.f32 %v1285, %v1445
      %v1512 = vmul.f32 %v1287, %v1445
      %v1513 = vmul.f32 %v1290, %v1445
      %v1514 = vmul.f32 %v1292, %v1445
      %v1515 = vmul.f32 %v1295, %v1445
      %v1516 = vmul.f32 %v1297, %v1445
      %v1517 = vmul.f32 %v1300, %v1445
      %v1518 = vmul.f32 %v1302, %v1445
      %v1519 = vmul.f32 %v1305, %v1445
      %v1520 = vmul.f32 %v1307, %v1445
      %v1521 = vmul.f32 %v1310, %v1445
      %v1522 = vmul.f32 %v1312, %v1445
      %v1523 = vmul.f32 %v1315, %v1445
      %v1524 = vmul.f32 %v1317, %v1445
      %v1525 = vmul.f32 %v1320, %v1445
      %v1526 = vmul.f32 %v1322, %v1445
      %v1527 = vmul.f32 %v1325, %v1445
      %v1528 = vmul.f32 %v1327, %v1445
      %v1529 = vmul.f32 %v1330, %v1445
      %v1530 = vmul.f32 %v1332, %v1445
      %v1531 = vmul.f32 %v1335, %v1445
      %v1532 = vmul.f32 %v1337, %v1445
      %v1533 = vmul.f32 %v1340, %v1445
      %v1534 = vmul.f32 %v1342, %v1445
      %v1535 = vmul.f32 %v1345, %v1445
      %v1536 = vmul.f32 %v1347, %v1445
      %v1537 = vmul.f32 %v1350, %v1445
      %v1538 = vmul.f32 %v1352, %v1445
      %v1539 = vmul.f32 %v1355, %v1445
      %v1540 = vmul.f32 %v1357, %v1445
      %v1541 = vmul.f32 %v1360, %v1445
      %v1542 = vmul.f32 %v1362, %v1445
      %v1543 = vmul.f32 %v1365, %v1445
      %v1544 = vmul.f32 %v1367, %v1445
      %v1545 = vmul.f32 %v1370, %v1445
      %v1546 = vmul.f32 %v1372, %v1445
      %v1547 = vmul.f32 %v1375, %v1445
      %v1548 = vmul.f32 %v1377, %v1445
      %v1549 = vmul.f32 %v1380, %v1445
      %v1550 = vmul.f32 %v1382, %v1445
      %v1551 = vmul.f32 %v1385, %v1445
      %v1552 = vmul.f32 %v1387, %v1445
      %v1553 = vmul.f32 %v1390, %v1445
      %v1554 = vmul.f32 %v1392, %v1445
      %v1555 = vmul.f32 %v1395, %v1445
      %v1556 = vmul.f32 %v1397, %v1445
      %v1557 = vmul.f32 %v1400, %v1445
      %v1558 = vmul.f32 %v1402, %v1445
      %v1559 = vmul.f32 %v1405, %v1445
      %v1560 = vmul.f32 %v1407, %v1445
      %v1561 = vmul.f32 %v1410, %v1445
      %v1562 = vmul.f32 %v1412, %v1445
      %v1563 = vmul.f32 %v1415, %v1445
      %v1564 = vmul.f32 %v1417, %v1445
      %v1565 = vmul.f32 %v1420, %v1445
      %v1566 = vmul.f32 %v1422, %v1445
      %v1567 = vmul.f32 %v1425, %v1445
      %v1568 = vmul.f32 %v1427, %v1445
      %v1569 = vmul.f32 %v1430, %v1445
      %v1570 = vmul.f32 %v1432, %v1445
      %v1571 = vmul.f32 %v1435, %v1445
      %v1572 = vmul.f32 %v1437, %v1445
      %v1573 = vmul.f32 %v1440, %v1445
      %v1574 = vmul.f32 %v1442, %v1445
      %v1576 = vperm.slane %v365, 0
      %v1578 = vadd.f32 %v1447, %v1576
      %v1579 = vadd.f32 %v1448, %v1576
      %v1580 = vadd.f32 %v1449, %v1576
      %v1581 = vadd.f32 %v1450, %v1576
      %v1582 = vadd.f32 %v1451, %v1576
      %v1583 = vadd.f32 %v1452, %v1576
      %v1584 = vadd.f32 %v1453, %v1576
      %v1585 = vadd.f32 %v1454, %v1576
      %v1586 = vadd.f32 %v1455, %v1576
      %v1587 = vadd.f32 %v1456, %v1576
      %v1588 = vadd.f32 %v1457, %v1576
      %v1589 = vadd.f32 %v1458, %v1576
      %v1590 = vadd.f32 %v1459, %v1576
      %v1591 = vadd.f32 %v1460, %v1576
      %v1592 = vadd.f32 %v1461, %v1576
      %v1593 = vadd.f32 %v1462, %v1576
      %v1594 = vadd.f32 %v1463, %v1576
      %v1595 = vadd.f32 %v1464, %v1576
      %v1596 = vadd.f32 %v1465, %v1576
      %v1597 = vadd.f32 %v1466, %v1576
      %v1598 = vadd.f32 %v1467, %v1576
      %v1599 = vadd.f32 %v1468, %v1576
      %v1600 = vadd.f32 %v1469, %v1576
      %v1601 = vadd.f32 %v1470, %v1576
      %v1602 = vadd.f32 %v1471, %v1576
      %v1603 = vadd.f32 %v1472, %v1576
      %v1604 = vadd.f32 %v1473, %v1576
      %v1605 = vadd.f32 %v1474, %v1576
      %v1606 = vadd.f32 %v1475, %v1576
      %v1607 = vadd.f32 %v1476, %v1576
      %v1608 = vadd.f32 %v1477, %v1576
      %v1609 = vadd.f32 %v1478, %v1576
      %v1610 = vadd.f32 %v1479, %v1576
      %v1611 = vadd.f32 %v1480, %v1576
      %v1612 = vadd.f32 %v1481, %v1576
      %v1613 = vadd.f32 %v1482, %v1576
      %v1614 = vadd.f32 %v1483, %v1576
      %v1615 = vadd.f32 %v1484, %v1576
      %v1616 = vadd.f32 %v1485, %v1576
      %v1617 = vadd.f32 %v1486, %v1576
      %v1618 = vadd.f32 %v1487, %v1576
      %v1619 = vadd.f32 %v1488, %v1576
      %v1620 = vadd.f32 %v1489, %v1576
      %v1621 = vadd.f32 %v1490, %v1576
      %v1622 = vadd.f32 %v1491, %v1576
      %v1623 = vadd.f32 %v1492, %v1576
      %v1624 = vadd.f32 %v1493, %v1576
      %v1625 = vadd.f32 %v1494, %v1576
      %v1626 = vadd.f32 %v1495, %v1576
      %v1627 = vadd.f32 %v1496, %v1576
      %v1628 = vadd.f32 %v1497, %v1576
      %v1629 = vadd.f32 %v1498, %v1576
      %v1630 = vadd.f32 %v1499, %v1576
      %v1631 = vadd.f32 %v1500, %v1576
      %v1632 = vadd.f32 %v1501, %v1576
      %v1633 = vadd.f32 %v1502, %v1576
      %v1634 = vadd.f32 %v1503, %v1576
      %v1635 = vadd.f32 %v1504, %v1576
      %v1636 = vadd.f32 %v1505, %v1576
      %v1637 = vadd.f32 %v1506, %v1576
      %v1638 = vadd.f32 %v1507, %v1576
      %v1639 = vadd.f32 %v1508, %v1576
      %v1640 = vadd.f32 %v1509, %v1576
      %v1641 = vadd.f32 %v1510, %v1576
      %v1642 = vadd.f32 %v1511, %v1576
      %v1643 = vadd.f32 %v1512, %v1576
      %v1644 = vadd.f32 %v1513, %v1576
      %v1645 = vadd.f32 %v1514, %v1576
      %v1646 = vadd.f32 %v1515, %v1576
      %v1647 = vadd.f32 %v1516, %v1576
      %v1648 = vadd.f32 %v1517, %v1576
      %v1649 = vadd.f32 %v1518, %v1576
      %v1650 = vadd.f32 %v1519, %v1576
      %v1651 = vadd.f32 %v1520, %v1576
      %v1652 = vadd.f32 %v1521, %v1576
      %v1653 = vadd.f32 %v1522, %v1576
      %v1654 = vadd.f32 %v1523, %v1576
      %v1655 = vadd.f32 %v1524, %v1576
      %v1656 = vadd.f32 %v1525, %v1576
      %v1657 = vadd.f32 %v1526, %v1576
      %v1658 = vadd.f32 %v1527, %v1576
      %v1659 = vadd.f32 %v1528, %v1576
      %v1660 = vadd.f32 %v1529, %v1576
      %v1661 = vadd.f32 %v1530, %v1576
      %v1662 = vadd.f32 %v1531, %v1576
      %v1663 = vadd.f32 %v1532, %v1576
      %v1664 = vadd.f32 %v1533, %v1576
      %v1665 = vadd.f32 %v1534, %v1576
      %v1666 = vadd.f32 %v1535, %v1576
      %v1667 = vadd.f32 %v1536, %v1576
      %v1668 = vadd.f32 %v1537, %v1576
      %v1669 = vadd.f32 %v1538, %v1576
      %v1670 = vadd.f32 %v1539, %v1576
      %v1671 = vadd.f32 %v1540, %v1576
      %v1672 = vadd.f32 %v1541, %v1576
      %v1673 = vadd.f32 %v1542, %v1576
      %v1674 = vadd.f32 %v1543, %v1576
      %v1675 = vadd.f32 %v1544, %v1576
      %v1676 = vadd.f32 %v1545, %v1576
      %v1677 = vadd.f32 %v1546, %v1576
      %v1678 = vadd.f32 %v1547, %v1576
      %v1679 = vadd.f32 %v1548, %v1576
      %v1680 = vadd.f32 %v1549, %v1576
      %v1681 = vadd.f32 %v1550, %v1576
      %v1682 = vadd.f32 %v1551, %v1576
      %v1683 = vadd.f32 %v1552, %v1576
      %v1684 = vadd.f32 %v1553, %v1576
      %v1685 = vadd.f32 %v1554, %v1576
      %v1686 = vadd.f32 %v1555, %v1576
      %v1687 = vadd.f32 %v1556, %v1576
      %v1688 = vadd.f32 %v1557, %v1576
      %v1689 = vadd.f32 %v1558, %v1576
      %v1690 = vadd.f32 %v1559, %v1576
      %v1691 = vadd.f32 %v1560, %v1576
      %v1692 = vadd.f32 %v1561, %v1576
      %v1693 = vadd.f32 %v1562, %v1576
      %v1694 = vadd.f32 %v1563, %v1576
      %v1695 = vadd.f32 %v1564, %v1576
      %v1696 = vadd.f32 %v1565, %v1576
      %v1697 = vadd.f32 %v1566, %v1576
      %v1698 = vadd.f32 %v1567, %v1576
      %v1699 = vadd.f32 %v1568, %v1576
      %v1700 = vadd.f32 %v1569, %v1576
      %v1701 = vadd.f32 %v1570, %v1576
      %v1702 = vadd.f32 %v1571, %v1576
      %v1703 = vadd.f32 %v1572, %v1576
      %v1704 = vadd.f32 %v1573, %v1576
      %v1705 = vadd.f32 %v1574, %v1576
      %v1706 = vmax.f32 %v1578, 0.0
      %v1707 = vmax.f32 %v1579, 0.0
      %v1708 = vmax.f32 %v1580, 0.0
      %v1709 = vmax.f32 %v1581, 0.0
      %v1710 = vmax.f32 %v1582, 0.0
      %v1711 = vmax.f32 %v1583, 0.0
      %v1712 = vmax.f32 %v1584, 0.0
      %v1713 = vmax.f32 %v1585, 0.0
      %v1714 = vmax.f32 %v1586, 0.0
      %v1715 = vmax.f32 %v1587, 0.0
      %v1716 = vmax.f32 %v1588, 0.0
      %v1717 = vmax.f32 %v1589, 0.0
      %v1718 = vmax.f32 %v1590, 0.0
      %v1719 = vmax.f32 %v1591, 0.0
      %v1720 = vmax.f32 %v1592, 0.0
      %v1721 = vmax.f32 %v1593, 0.0
      %v1722 = vmax.f32 %v1594, 0.0
      %v1723 = vmax.f32 %v1595, 0.0
      %v1724 = vmax.f32 %v1596, 0.0
      %v1725 = vmax.f32 %v1597, 0.0
      %v1726 = vmax.f32 %v1598, 0.0
      %v1727 = vmax.f32 %v1599, 0.0
      %v1728 = vmax.f32 %v1600, 0.0
      %v1729 = vmax.f32 %v1601, 0.0
      %v1730 = vmax.f32 %v1602, 0.0
      %v1731 = vmax.f32 %v1603, 0.0
      %v1732 = vmax.f32 %v1604, 0.0
      %v1733 = vmax.f32 %v1605, 0.0
      %v1734 = vmax.f32 %v1606, 0.0
      %v1735 = vmax.f32 %v1607, 0.0
      %v1736 = vmax.f32 %v1608, 0.0
      %v1737 = vmax.f32 %v1609, 0.0
      %v1738 = vmax.f32 %v1610, 0.0
      %v1739 = vmax.f32 %v1611, 0.0
      %v1740 = vmax.f32 %v1612, 0.0
      %v1741 = vmax.f32 %v1613, 0.0
      %v1742 = vmax.f32 %v1614, 0.0
      %v1743 = vmax.f32 %v1615, 0.0
      %v1744 = vmax.f32 %v1616, 0.0
      %v1745 = vmax.f32 %v1617, 0.0
      %v1746 = vmax.f32 %v1618, 0.0
      %v1747 = vmax.f32 %v1619, 0.0
      %v1748 = vmax.f32 %v1620, 0.0
      %v1749 = vmax.f32 %v1621, 0.0
      %v1750 = vmax.f32 %v1622, 0.0
      %v1751 = vmax.f32 %v1623, 0.0
      %v1752 = vmax.f32 %v1624, 0.0
      %v1753 = vmax.f32 %v1625, 0.0
      %v1754 = vmax.f32 %v1626, 0.0
      %v1755 = vmax.f32 %v1627, 0.0
      %v1756 = vmax.f32 %v1628, 0.0
      %v1757 = vmax.f32 %v1629, 0.0
      %v1758 = vmax.f32 %v1630, 0.0
      %v1759 = vmax.f32 %v1631, 0.0
      %v1760 = vmax.f32 %v1632, 0.0
      %v1761 = vmax.f32 %v1633, 0.0
      %v1762 = vmax.f32 %v1634, 0.0
      %v1763 = vmax.f32 %v1635, 0.0
      %v1764 = vmax.f32 %v1636, 0.0
      %v1765 = vmax.f32 %v1637, 0.0
      %v1766 = vmax.f32 %v1638, 0.0
      %v1767 = vmax.f32 %v1639, 0.0
      %v1768 = vmax.f32 %v1640, 0.0
      %v1769 = vmax.f32 %v1641, 0.0
      %v1770 = vmax.f32 %v1642, 0.0
      %v1771 = vmax.f32 %v1643, 0.0
      %v1772 = vmax.f32 %v1644, 0.0
      %v1773 = vmax.f32 %v1645, 0.0
      %v1774 = vmax.f32 %v1646, 0.0
      %v1775 = vmax.f32 %v1647, 0.0
      %v1776 = vmax.f32 %v1648, 0.0
      %v1777 = vmax.f32 %v1649, 0.0
      %v1778 = vmax.f32 %v1650, 0.0
      %v1779 = vmax.f32 %v1651, 0.0
      %v1780 = vmax.f32 %v1652, 0.0
      %v1781 = vmax.f32 %v1653, 0.0
      %v1782 = vmax.f32 %v1654, 0.0
      %v1783 = vmax.f32 %v1655, 0.0
      %v1784 = vmax.f32 %v1656, 0.0
      %v1785 = vmax.f32 %v1657, 0.0
      %v1786 = vmax.f32 %v1658, 0.0
      %v1787 = vmax.f32 %v1659, 0.0
      %v1788 = vmax.f32 %v1660, 0.0
      %v1789 = vmax.f32 %v1661, 0.0
      %v1790 = vmax.f32 %v1662, 0.0
      %v1791 = vmax.f32 %v1663, 0.0
      %v1792 = vmax.f32 %v1664, 0.0
      %v1793 = vmax.f32 %v1665, 0.0
      %v1794 = vmax.f32 %v1666, 0.0
      %v1795 = vmax.f32 %v1667, 0.0
      %v1796 = vmax.f32 %v1668, 0.0
      %v1797 = vmax.f32 %v1669, 0.0
      %v1798 = vmax.f32 %v1670, 0.0
      %v1799 = vmax.f32 %v1671, 0.0
      %v1800 = vmax.f32 %v1672, 0.0
      %v1801 = vmax.f32 %v1673, 0.0
      %v1802 = vmax.f32 %v1674, 0.0
      %v1803 = vmax.f32 %v1675, 0.0
      %v1804 = vmax.f32 %v1676, 0.0
      %v1805 = vmax.f32 %v1677, 0.0
      %v1806 = vmax.f32 %v1678, 0.0
      %v1807 = vmax.f32 %v1679, 0.0
      %v1808 = vmax.f32 %v1680, 0.0
      %v1809 = vmax.f32 %v1681, 0.0
      %v1810 = vmax.f32 %v1682, 0.0
      %v1811 = vmax.f32 %v1683, 0.0
      %v1812 = vmax.f32 %v1684, 0.0
      %v1813 = vmax.f32 %v1685, 0.0
      %v1814 = vmax.f32 %v1686, 0.0
      %v1815 = vmax.f32 %v1687, 0.0
      %v1816 = vmax.f32 %v1688, 0.0
      %v1817 = vmax.f32 %v1689, 0.0
      %v1818 = vmax.f32 %v1690, 0.0
      %v1819 = vmax.f32 %v1691, 0.0
      %v1820 = vmax.f32 %v1692, 0.0
      %v1821 = vmax.f32 %v1693, 0.0
      %v1822 = vmax.f32 %v1694, 0.0
      %v1823 = vmax.f32 %v1695, 0.0
      %v1824 = vmax.f32 %v1696, 0.0
      %v1825 = vmax.f32 %v1697, 0.0
      %v1826 = vmax.f32 %v1698, 0.0
      %v1827 = vmax.f32 %v1699, 0.0
      %v1828 = vmax.f32 %v1700, 0.0
      %v1829 = vmax.f32 %v1701, 0.0
      %v1830 = vmax.f32 %v1702, 0.0
      %v1831 = vmax.f32 %v1703, 0.0
      %v1832 = vmax.f32 %v1704, 0.0
      %v1833 = vmax.f32 %v1705, 0.0
      %v1834 = vmax.f32 %v1706, %v1708
      %v1835 = vmax.f32 %v1707, %v1709
      %v1836 = vmax.f32 %v1710, %v1712
      %v1837 = vmax.f32 %v1711, %v1713
      %v1838 = vmax.f32 %v1714, %v1716
      %v1839 = vmax.f32 %v1715, %v1717
      %v1840 = vmax.f32 %v1718, %v1720
      %v1841 = vmax.f32 %v1719, %v1721
      %v1842 = vmax.f32 %v1722, %v1724
      %v1843 = vmax.f32 %v1723, %v1725
      %v1844 = vmax.f32 %v1726, %v1728
      %v1845 = vmax.f32 %v1727, %v1729
      %v1846 = vmax.f32 %v1730, %v1732
      %v1847 = vmax.f32 %v1731, %v1733
      %v1848 = vmax.f32 %v1734, %v1736
      %v1849 = vmax.f32 %v1735, %v1737
      %v1850 = vmax.f32 %v1738, %v1740
      %v1851 = vmax.f32 %v1739, %v1741
      %v1852 = vmax.f32 %v1742, %v1744
      %v1853 = vmax.f32 %v1743, %v1745
      %v1854 = vmax.f32 %v1746, %v1748
      %v1855 = vmax.f32 %v1747, %v1749
      %v1856 = vmax.f32 %v1750, %v1752
      %v1857 = vmax.f32 %v1751, %v1753
      %v1858 = vmax.f32 %v1754, %v1756
      %v1859 = vmax.f32 %v1755, %v1757
      %v1860 = vmax.f32 %v1758, %v1760
      %v1861 = vmax.f32 %v1759, %v1761
      %v1862 = vmax.f32 %v1762, %v1764
      %v1863 = vmax.f32 %v1763, %v1765
      %v1864 = vmax.f32 %v1766, %v1768
      %v1865 = vmax.f32 %v1767, %v1769
      %v1866 = vmax.f32 %v1770, %v1772
      %v1867 = vmax.f32 %v1771, %v1773
      %v1868 = vmax.f32 %v1774, %v1776
      %v1869 = vmax.f32 %v1775, %v1777
      %v1870 = vmax.f32 %v1778, %v1780
      %v1871 = vmax.f32 %v1779, %v1781
      %v1872 = vmax.f32 %v1782, %v1784
      %v1873 = vmax.f32 %v1783, %v1785
      %v1874 = vmax.f32 %v1786, %v1788
      %v1875 = vmax.f32 %v1787, %v1789
      %v1876 = vmax.f32 %v1790, %v1792
      %v1877 = vmax.f32 %v1791, %v1793
      %v1878 = vmax.f32 %v1794, %v1796
      %v1879 = vmax.f32 %v1795, %v1797
      %v1880 = vmax.f32 %v1798, %v1800
      %v1881 = vmax.f32 %v1799, %v1801
      %v1882 = vmax.f32 %v1802, %v1804
      %v1883 = vmax.f32 %v1803, %v1805
      %v1884 = vmax.f32 %v1806, %v1808
      %v1885 = vmax.f32 %v1807, %v1809
      %v1886 = vmax.f32 %v1810, %v1812
      %v1887 = vmax.f32 %v1811, %v1813
      %v1888 = vmax.f32 %v1814, %v1816
      %v1889 = vmax.f32 %v1815, %v1817
      %v1890 = vmax.f32 %v1818, %v1820
      %v1891 = vmax.f32 %v1819, %v1821
      %v1892 = vmax.f32 %v1822, %v1824
      %v1893 = vmax.f32 %v1823, %v1825
      %v1894 = vmax.f32 %v1826, %v1828
      %v1895 = vmax.f32 %v1827, %v1829
      %v1896 = vmax.f32 %v1830, %v1832
      %v1897 = vmax.f32 %v1831, %v1833
      %v1898 = vrot.slane %v1834, 1
      %v1899 = vrot.slane %v1836, 1
      %v1900 = vrot.slane %v1838, 1
      %v1901 = vrot.slane %v1840, 1
      %v1902 = vrot.slane %v1842, 1
      %v1903 = vrot.slane %v1844, 1
      %v1904 = vrot.slane %v1846, 1
      %v1905 = vrot.slane %v1848, 1
      %v1906 = vrot.slane %v1850, 1
      %v1907 = vrot.slane %v1852, 1
      %v1908 = vrot.slane %v1854, 1
      %v1909 = vrot.slane %v1856, 1
      %v1910 = vrot.slane %v1858, 1
      %v1911 = vrot.slane %v1860, 1
      %v1912 = vrot.slane %v1862, 1
      %v1913 = vrot.slane %v1864, 1
      %v1914 = vrot.slane %v1866, 1
      %v1915 = vrot.slane %v1868, 1
      %v1916 = vrot.slane %v1870, 1
      %v1917 = vrot.slane %v1872, 1
      %v1918 = vrot.slane %v1874, 1
      %v1919 = vrot.slane %v1876, 1
      %v1920 = vrot.slane %v1878, 1
      %v1921 = vrot.slane %v1880, 1
      %v1922 = vrot.slane %v1882, 1
      %v1923 = vrot.slane %v1884, 1
      %v1924 = vrot.slane %v1886, 1
      %v1925 = vrot.slane %v1888, 1
      %v1926 = vrot.slane %v1890, 1
      %v1927 = vrot.slane %v1892, 1
      %v1928 = vrot.slane %v1894, 1
      %v1929 = vrot.slane %v1896, 1
      %v1930 = vrot.slane %v1835, 1
      %v1931 = vrot.slane %v1837, 1
      %v1932 = vrot.slane %v1839, 1
      %v1933 = vrot.slane %v1841, 1
      %v1934 = vrot.slane %v1843, 1
      %v1935 = vrot.slane %v1845, 1
      %v1936 = vrot.slane %v1847, 1
      %v1937 = vrot.slane %v1849, 1
      %v1938 = vrot.slane %v1851, 1
      %v1939 = vrot.slane %v1853, 1
      %v1940 = vrot.slane %v1855, 1
      %v1941 = vrot.slane %v1857, 1
      %v1942 = vrot.slane %v1859, 1
      %v1943 = vrot.slane %v1861, 1
      %v1944 = vrot.slane %v1863, 1
      %v1945 = vrot.slane %v1865, 1
      %v1946 = vrot.slane %v1867, 1
      %v1947 = vrot.slane %v1869, 1
      %v1948 = vrot.slane %v1871, 1
      %v1949 = vrot.slane %v1873, 1
      %v1950 = vrot.slane %v1875, 1
      %v1951 = vrot.slane %v1877, 1
      %v1952 = vrot.slane %v1879, 1
      %v1953 = vrot.slane %v1881, 1
      %v1954 = vrot.slane %v1883, 1
      %v1955 = vrot.slane %v1885, 1
      %v1956 = vrot.slane %v1887, 1
      %v1957 = vrot.slane %v1889, 1
      %v1958 = vrot.slane %v1891, 1
      %v1959 = vrot.slane %v1893, 1
      %v1960 = vrot.slane %v1895, 1
      %v1961 = vrot.slane %v1897, 1
      %vm1962 = vcmp.lt.s32.totalorder %v371, 7
      %v1963 = vsel %vm1962, %v1898, %v1930
      %v1964 = vsel %vm1962, %v1899, %v1931
      %v1965 = vsel %vm1962, %v1900, %v1932
      %v1966 = vsel %vm1962, %v1901, %v1933
      %v1967 = vsel %vm1962, %v1902, %v1934
      %v1968 = vsel %vm1962, %v1903, %v1935
      %v1969 = vsel %vm1962, %v1904, %v1936
      %v1970 = vsel %vm1962, %v1905, %v1937
      %v1971 = vsel %vm1962, %v1906, %v1938
      %v1972 = vsel %vm1962, %v1907, %v1939
      %v1973 = vsel %vm1962, %v1908, %v1940
      %v1974 = vsel %vm1962, %v1909, %v1941
      %v1975 = vsel %vm1962, %v1910, %v1942
      %v1976 = vsel %vm1962, %v1911, %v1943
      %v1977 = vsel %vm1962, %v1912, %v1944
      %v1978 = vsel %vm1962, %v1913, %v1945
      %v1979 = vsel %vm1962, %v1914, %v1946
      %v1980 = vsel %vm1962, %v1915, %v1947
      %v1981 = vsel %vm1962, %v1916, %v1948
      %v1982 = vsel %vm1962, %v1917, %v1949
      %v1983 = vsel %vm1962, %v1918, %v1950
      %v1984 = vsel %vm1962, %v1919, %v1951
      %v1985 = vsel %vm1962, %v1920, %v1952
      %v1986 = vsel %vm1962, %v1921, %v1953
      %v1987 = vsel %vm1962, %v1922, %v1954
      %v1988 = vsel %vm1962, %v1923, %v1955
      %v1989 = vsel %vm1962, %v1924, %v1956
      %v1990 = vsel %vm1962, %v1925, %v1957
      %v1991 = vsel %vm1962, %v1926, %v1958
      %v1992 = vsel %vm1962, %v1927, %v1959
      %v1993 = vsel %vm1962, %v1928, %v1960
      %v1994 = vsel %vm1962, %v1929, %v1961
      %v1995 = vsel %vm1962, %v1930, %v1898
      %v1996 = vsel %vm1962, %v1931, %v1899
      %v1997 = vsel %vm1962, %v1932, %v1900
      %v1998 = vsel %vm1962, %v1933, %v1901
      %v1999 = vsel %vm1962, %v1934, %v1902
      %v2000 = vsel %vm1962, %v1935, %v1903
      %v2001 = vsel %vm1962, %v1936, %v1904
      %v2002 = vsel %vm1962, %v1937, %v1905
      %v2003 = vsel %vm1962, %v1938, %v1906
      %v2004 = vsel %vm1962, %v1939, %v1907
      %v2005 = vsel %vm1962, %v1940, %v1908
      %v2006 = vsel %vm1962, %v1941, %v1909
      %v2007 = vsel %vm1962, %v1942, %v1910
      %v2008 = vsel %vm1962, %v1943, %v1911
      %v2009 = vsel %vm1962, %v1944, %v1912
      %v2010 = vsel %vm1962, %v1945, %v1913
      %v2011 = vsel %vm1962, %v1946, %v1914
      %v2012 = vsel %vm1962, %v1947, %v1915
      %v2013 = vsel %vm1962, %v1948, %v1916
      %v2014 = vsel %vm1962, %v1949, %v1917
      %v2015 = vsel %vm1962, %v1950, %v1918
      %v2016 = vsel %vm1962, %v1951, %v1919
      %v2017 = vsel %vm1962, %v1952, %v1920
      %v2018 = vsel %vm1962, %v1953, %v1921
      %v2019 = vsel %vm1962, %v1954, %v1922
      %v2020 = vsel %vm1962, %v1955, %v1923
      %v2021 = vsel %vm1962, %v1956, %v1924
      %v2022 = vsel %vm1962, %v1957, %v1925
      %v2023 = vsel %vm1962, %v1958, %v1926
      %v2024 = vsel %vm1962, %v1959, %v1927
      %v2025 = vsel %vm1962, %v1960, %v1928
      %v2026 = vsel %vm1962, %v1961, %v1929
      %v2027 = vmax.f32 %v1834, %v1963
      %v2028 = vmax.f32 %v1835, %v1995
      %v2029 = vmax.f32 %v1836, %v1964
      %v2030 = vmax.f32 %v1837, %v1996
      %v2031 = vmax.f32 %v1838, %v1965
      %v2032 = vmax.f32 %v1839, %v1997
      %v2033 = vmax.f32 %v1840, %v1966
      %v2034 = vmax.f32 %v1841, %v1998
      %v2035 = vmax.f32 %v1842, %v1967
      %v2036 = vmax.f32 %v1843, %v1999
      %v2037 = vmax.f32 %v1844, %v1968
      %v2038 = vmax.f32 %v1845, %v2000
      %v2039 = vmax.f32 %v1846, %v1969
      %v2040 = vmax.f32 %v1847, %v2001
      %v2041 = vmax.f32 %v1848, %v1970
      %v2042 = vmax.f32 %v1849, %v2002
      %v2043 = vmax.f32 %v1850, %v1971
      %v2044 = vmax.f32 %v1851, %v2003
      %v2045 = vmax.f32 %v1852, %v1972
      %v2046 = vmax.f32 %v1853, %v2004
      %v2047 = vmax.f32 %v1854, %v1973
      %v2048 = vmax.f32 %v1855, %v2005
      %v2049 = vmax.f32 %v1856, %v1974
      %v2050 = vmax.f32 %v1857, %v2006
      %v2051 = vmax.f32 %v1858, %v1975
      %v2052 = vmax.f32 %v1859, %v2007
      %v2053 = vmax.f32 %v1860, %v1976
      %v2054 = vmax.f32 %v1861, %v2008
      %v2055 = vmax.f32 %v1862, %v1977
      %v2056 = vmax.f32 %v1863, %v2009
      %v2057 = vmax.f32 %v1864, %v1978
      %v2058 = vmax.f32 %v1865, %v2010
      %v2059 = vmax.f32 %v1866, %v1979
      %v2060 = vmax.f32 %v1867, %v2011
      %v2061 = vmax.f32 %v1868, %v1980
      %v2062 = vmax.f32 %v1869, %v2012
      %v2063 = vmax.f32 %v1870, %v1981
      %v2064 = vmax.f32 %v1871, %v2013
      %v2065 = vmax.f32 %v1872, %v1982
      %v2066 = vmax.f32 %v1873, %v2014
      %v2067 = vmax.f32 %v1874, %v1983
      %v2068 = vmax.f32 %v1875, %v2015
      %v2069 = vmax.f32 %v1876, %v1984
      %v2070 = vmax.f32 %v1877, %v2016
      %v2071 = vmax.f32 %v1878, %v1985
      %v2072 = vmax.f32 %v1879, %v2017
      %v2073 = vmax.f32 %v1880, %v1986
      %v2074 = vmax.f32 %v1881, %v2018
      %v2075 = vmax.f32 %v1882, %v1987
      %v2076 = vmax.f32 %v1883, %v2019
      %v2077 = vmax.f32 %v1884, %v1988
      %v2078 = vmax.f32 %v1885, %v2020
      %v2079 = vmax.f32 %v1886, %v1989
      %v2080 = vmax.f32 %v1887, %v2021
      %v2081 = vmax.f32 %v1888, %v1990
      %v2082 = vmax.f32 %v1889, %v2022
      %v2083 = vmax.f32 %v1890, %v1991
      %v2084 = vmax.f32 %v1891, %v2023
      %v2085 = vmax.f32 %v1892, %v1992
      %v2086 = vmax.f32 %v1893, %v2024
      %v2087 = vmax.f32 %v1894, %v1993
      %v2088 = vmax.f32 %v1895, %v2025
      %v2089 = vmax.f32 %v1896, %v1994
      %v2090 = vmax.f32 %v1897, %v2026
      %s2091 = scalar_lea.vmem [#allocation2], 16
      %2092 = vst.msk [vmem:[%s2091] sm:$0xff] %vm416, %v2027
      %2093 = vst.msk [vmem:[%s2091 + $0x8] sm:$0xff] %vm416, %v2028
      %2094 = vst.msk [vmem:[%s2091 + $0x10] sm:$0xff] %vm416, %v2029
      %2095 = vst.msk [vmem:[%s2091 + $0x18] sm:$0xff] %vm416, %v2030
      %2096 = vst.msk [vmem:[%s2091 + $0x20] sm:$0xff] %vm416, %v2031
      %2097 = vst.msk [vmem:[%s2091 + $0x28] sm:$0xff] %vm416, %v2032
      %2098 = vst.msk [vmem:[%s2091 + $0x30] sm:$0xff] %vm416, %v2033
      %2099 = vst.msk [vmem:[%s2091 + $0x38] sm:$0xff] %vm416, %v2034
      %2100 = vst.msk [vmem:[%s2091 + $0x40] sm:$0xff] %vm416, %v2035
      %2101 = vst.msk [vmem:[%s2091 + $0x48] sm:$0xff] %vm416, %v2036
      %2102 = vst.msk [vmem:[%s2091 + $0x50] sm:$0xff] %vm416, %v2037
      %2103 = vst.msk [vmem:[%s2091 + $0x58] sm:$0xff] %vm416, %v2038
      %2104 = vst.msk [vmem:[%s2091 + $0x60] sm:$0xff] %vm416, %v2039
      %2105 = vst.msk [vmem:[%s2091 + $0x68] sm:$0xff] %vm416, %v2040
      %2106 = vst.msk [vmem:[%s2091 + $0x70] sm:$0xff] %vm416, %v2041
      %2107 = vst.msk [vmem:[%s2091 + $0x78] sm:$0xff] %vm416, %v2042
      %2108 = vst.msk [vmem:[%s2091 + $0xa0] sm:$0xff] %vm416, %v2043
      %2109 = vst.msk [vmem:[%s2091 + $0xa8] sm:$0xff] %vm416, %v2044
      %2110 = vst.msk [vmem:[%s2091 + $0xb0] sm:$0xff] %vm416, %v2045
      %2111 = vst.msk [vmem:[%s2091 + $0xb8] sm:$0xff] %vm416, %v2046
      %2112 = vst.msk [vmem:[%s2091 + $0xc0] sm:$0xff] %vm416, %v2047
      %2113 = vst.msk [vmem:[%s2091 + $0xc8] sm:$0xff] %vm416, %v2048
      %2114 = vst.msk [vmem:[%s2091 + $0xd0] sm:$0xff] %vm416, %v2049
      %2115 = vst.msk [vmem:[%s2091 + $0xd8] sm:$0xff] %vm416, %v2050
      %2116 = vst.msk [vmem:[%s2091 + $0xe0] sm:$0xff] %vm416, %v2051
      %2117 = vst.msk [vmem:[%s2091 + $0xe8] sm:$0xff] %vm416, %v2052
      %2118 = vst.msk [vmem:[%s2091 + $0xf0] sm:$0xff] %vm416, %v2053
      %2119 = vst.msk [vmem:[%s2091 + $0xf8] sm:$0xff] %vm416, %v2054
      %2120 = vst.msk [vmem:[%s2091 + $0x100] sm:$0xff] %vm416, %v2055
      %2121 = vst.msk [vmem:[%s2091 + $0x108] sm:$0xff] %vm416, %v2056
      %2122 = vst.msk [vmem:[%s2091 + $0x110] sm:$0xff] %vm416, %v2057
      %2123 = vst.msk [vmem:[%s2091 + $0x118] sm:$0xff] %vm416, %v2058
      %2124 = vst.msk [vmem:[%s2091 + $0x140] sm:$0xff] %vm416, %v2059
      %2125 = vst.msk [vmem:[%s2091 + $0x148] sm:$0xff] %vm416, %v2060
      %2126 = vst.msk [vmem:[%s2091 + $0x150] sm:$0xff] %vm416, %v2061
      %2127 = vst.msk [vmem:[%s2091 + $0x158] sm:$0xff] %vm416, %v2062
      %2128 = vst.msk [vmem:[%s2091 + $0x160] sm:$0xff] %vm416, %v2063
      %2129 = vst.msk [vmem:[%s2091 + $0x168] sm:$0xff] %vm416, %v2064
      %2130 = vst.msk [vmem:[%s2091 + $0x170] sm:$0xff] %vm416, %v2065
      %2131 = vst.msk [vmem:[%s2091 + $0x178] sm:$0xff] %vm416, %v2066
      %2132 = vst.msk [vmem:[%s2091 + $0x180] sm:$0xff] %vm416, %v2067
      %2133 = vst.msk [vmem:[%s2091 + $0x188] sm:$0xff] %vm416, %v2068
      %2134 = vst.msk [vmem:[%s2091 + $0x190] sm:$0xff] %vm416, %v2069
      %2135 = vst.msk [vmem:[%s2091 + $0x198] sm:$0xff] %vm416, %v2070
      %2136 = vst.msk [vmem:[%s2091 + $0x1a0] sm:$0xff] %vm416, %v2071
      %2137 = vst.msk [vmem:[%s2091 + $0x1a8] sm:$0xff] %vm416, %v2072
      %2138 = vst.msk [vmem:[%s2091 + $0x1b0] sm:$0xff] %vm416, %v2073
      %2139 = vst.msk [vmem:[%s2091 + $0x1b8] sm:$0xff] %vm416, %v2074
      %2140 = vst.msk [vmem:[%s2091 + $0x1e0] sm:$0xff] %vm416, %v2075
      %2141 = vst.msk [vmem:[%s2091 + $0x1e8] sm:$0xff] %vm416, %v2076
      %2142 = vst.msk [vmem:[%s2091 + $0x1f0] sm:$0xff] %vm416, %v2077
      %2143 = vst.msk [vmem:[%s2091 + $0x1f8] sm:$0xff] %vm416, %v2078
      %2144 = vst.msk [vmem:[%s2091 + $0x200] sm:$0xff] %vm416, %v2079
      %2145 = vst.msk [vmem:[%s2091 + $0x208] sm:$0xff] %vm416, %v2080
      %2146 = vst.msk [vmem:[%s2091 + $0x210] sm:$0xff] %vm416, %v2081
      %2147 = vst.msk [vmem:[%s2091 + $0x218] sm:$0xff] %vm416, %v2082
      %2148 = vst.msk [vmem:[%s2091 + $0x220] sm:$0xff] %vm416, %v2083
      %2149 = vst.msk [vmem:[%s2091 + $0x228] sm:$0xff] %vm416, %v2084
      %2150 = vst.msk [vmem:[%s2091 + $0x230] sm:$0xff] %vm416, %v2085
      %2151 = vst.msk [vmem:[%s2091 + $0x238] sm:$0xff] %vm416, %v2086
      %2152 = vst.msk [vmem:[%s2091 + $0x240] sm:$0xff] %vm416, %v2087
      %2153 = vst.msk [vmem:[%s2091 + $0x248] sm:$0xff] %vm416, %v2088
      %2154 = vst.msk [vmem:[%s2091 + $0x250] sm:$0xff] %vm416, %v2089
      %2155 = vst.msk [vmem:[%s2091 + $0x258] sm:$0xff] %vm416, %v2090
      %v2156 = vld [vmem:[#allocation2] sm:$0xff]
      %v2157 = vld [vmem:[#allocation2 + $0x8] sm:$0xff]
      %v2158 = vld [vmem:[#allocation2 + $0x10] sm:$0xff]
      %v2159 = vld [vmem:[#allocation2 + $0x18] sm:$0xff]
      %v2160 = vld [vmem:[#allocation2 + $0x20] sm:$0xff]
      %v2161 = vld [vmem:[#allocation2 + $0x28] sm:$0xff]
      %v2162 = vld [vmem:[#allocation2 + $0x30] sm:$0xff]
      %v2163 = vld [vmem:[#allocation2 + $0x38] sm:$0xff]
      %v2164 = vld [vmem:[#allocation2 + $0x40] sm:$0xff]
      %v2165 = vld [vmem:[#allocation2 + $0x48] sm:$0xff]
      %v2166 = vld [vmem:[#allocation2 + $0x50] sm:$0xff]
      %v2167 = vld [vmem:[#allocation2 + $0x58] sm:$0xff]
      %v2168 = vld [vmem:[#allocation2 + $0x60] sm:$0xff]
      %v2169 = vld [vmem:[#allocation2 + $0x68] sm:$0xff]
      %v2170 = vld [vmem:[#allocation2 + $0x70] sm:$0xff]
      %v2171 = vld [vmem:[#allocation2 + $0x78] sm:$0xff]
      %v2172 = vld [vmem:[#allocation2 + $0xa0] sm:$0xff]
      %v2173 = vld [vmem:[#allocation2 + $0xa8] sm:$0xff]
      %v2174 = vld [vmem:[#allocation2 + $0xb0] sm:$0xff]
      %v2175 = vld [vmem:[#allocation2 + $0xb8] sm:$0xff]
      %v2176 = vld [vmem:[#allocation2 + $0xc0] sm:$0xff]
      %v2177 = vld [vmem:[#allocation2 + $0xc8] sm:$0xff]
      %v2178 = vld [vmem:[#allocation2 + $0xd0] sm:$0xff]
      %v2179 = vld [vmem:[#allocation2 + $0xd8] sm:$0xff]
      %v2180 = vld [vmem:[#allocation2 + $0xe0] sm:$0xff]
      %v2181 = vld [vmem:[#allocation2 + $0xe8] sm:$0xff]
      %v2182 = vld [vmem:[#allocation2 + $0xf0] sm:$0xff]
      %v2183 = vld [vmem:[#allocation2 + $0xf8] sm:$0xff]
      %v2184 = vld [vmem:[#allocation2 + $0x100] sm:$0xff]
      %v2185 = vld [vmem:[#allocation2 + $0x108] sm:$0xff]
      %v2186 = vld [vmem:[#allocation2 + $0x110] sm:$0xff]
      %v2187 = vld [vmem:[#allocation2 + $0x118] sm:$0xff]
      %v2188 = vld [vmem:[#allocation2 + $0x140] sm:$0xff]
      %v2189 = vld [vmem:[#allocation2 + $0x148] sm:$0xff]
      %v2190 = vld [vmem:[#allocation2 + $0x150] sm:$0xff]
      %v2191 = vld [vmem:[#allocation2 + $0x158] sm:$0xff]
      %v2192 = vld [vmem:[#allocation2 + $0x160] sm:$0xff]
      %v2193 = vld [vmem:[#allocation2 + $0x168] sm:$0xff]
      %v2194 = vld [vmem:[#allocation2 + $0x170] sm:$0xff]
      %v2195 = vld [vmem:[#allocation2 + $0x178] sm:$0xff]
      %v2196 = vld [vmem:[#allocation2 + $0x180] sm:$0xff]
      %v2197 = vld [vmem:[#allocation2 + $0x188] sm:$0xff]
      %v2198 = vld [vmem:[#allocation2 + $0x190] sm:$0xff]
      %v2199 = vld [vmem:[#allocation2 + $0x198] sm:$0xff]
      %v2200 = vld [vmem:[#allocation2 + $0x1a0] sm:$0xff]
      %v2201 = vld [vmem:[#allocation2 + $0x1a8] sm:$0xff]
      %v2202 = vld [vmem:[#allocation2 + $0x1b0] sm:$0xff]
      %v2203 = vld [vmem:[#allocation2 + $0x1b8] sm:$0xff]
      %v2204 = vld [vmem:[#allocation2 + $0x1e0] sm:$0xff]
      %v2205 = vld [vmem:[#allocation2 + $0x1e8] sm:$0xff]
      %v2206 = vld [vmem:[#allocation2 + $0x1f0] sm:$0xff]
      %v2207 = vld [vmem:[#allocation2 + $0x1f8] sm:$0xff]
      %v2208 = vld [vmem:[#allocation2 + $0x200] sm:$0xff]
      %v2209 = vld [vmem:[#allocation2 + $0x208] sm:$0xff]
      %v2210 = vld [vmem:[#allocation2 + $0x210] sm:$0xff]
      %v2211 = vld [vmem:[#allocation2 + $0x218] sm:$0xff]
      %v2212 = vld [vmem:[#allocation2 + $0x220] sm:$0xff]
      %v2213 = vld [vmem:[#allocation2 + $0x228] sm:$0xff]
      %v2214 = vld [vmem:[#allocation2 + $0x230] sm:$0xff]
      %v2215 = vld [vmem:[#allocation2 + $0x238] sm:$0xff]
      %v2216 = vld [vmem:[#allocation2 + $0x240] sm:$0xff]
      %v2217 = vld [vmem:[#allocation2 + $0x248] sm:$0xff]
      %v2218 = vld [vmem:[#allocation2 + $0x250] sm:$0xff]
      %v2219 = vld [vmem:[#allocation2 + $0x258] sm:$0xff]
      %v2220 = vrot.slane %v2156, 6
      %v2221 = vrot.slane %v2158, 6
      %v2222 = vrot.slane %v2160, 6
      %v2223 = vrot.slane %v2162, 6
      %v2224 = vrot.slane %v2164, 6
      %v2225 = vrot.slane %v2166, 6
      %v2226 = vrot.slane %v2168, 6
      %v2227 = vrot.slane %v2170, 6
      %v2228 = vrot.slane %v2172, 6
      %v2229 = vrot.slane %v2174, 6
      %v2230 = vrot.slane %v2176, 6
      %v2231 = vrot.slane %v2178, 6
      %v2232 = vrot.slane %v2180, 6
      %v2233 = vrot.slane %v2182, 6
      %v2234 = vrot.slane %v2184, 6
      %v2235 = vrot.slane %v2186, 6
      %v2236 = vrot.slane %v2188, 6
      %v2237 = vrot.slane %v2190, 6
      %v2238 = vrot.slane %v2192, 6
      %v2239 = vrot.slane %v2194, 6
      %v2240 = vrot.slane %v2196, 6
      %v2241 = vrot.slane %v2198, 6
      %v2242 = vrot.slane %v2200, 6
      %v2243 = vrot.slane %v2202, 6
      %v2244 = vrot.slane %v2204, 6
      %v2245 = vrot.slane %v2206, 6
      %v2246 = vrot.slane %v2208, 6
      %v2247 = vrot.slane %v2210, 6
      %v2248 = vrot.slane %v2212, 6
      %v2249 = vrot.slane %v2214, 6
      %v2250 = vrot.slane %v2216, 6
      %v2251 = vrot.slane %v2218, 6
      %v2252 = vrot.slane %v2157, 6
      %v2253 = vrot.slane %v2159, 6
      %v2254 = vrot.slane %v2161, 6
      %v2255 = vrot.slane %v2163, 6
      %v2256 = vrot.slane %v2165, 6
      %v2257 = vrot.slane %v2167, 6
      %v2258 = vrot.slane %v2169, 6
      %v2259 = vrot.slane %v2171, 6
      %v2260 = vrot.slane %v2173, 6
      %v2261 = vrot.slane %v2175, 6
      %v2262 = vrot.slane %v2177, 6
      %v2263 = vrot.slane %v2179, 6
      %v2264 = vrot.slane %v2181, 6
      %v2265 = vrot.slane %v2183, 6
      %v2266 = vrot.slane %v2185, 6
      %v2267 = vrot.slane %v2187, 6
      %v2268 = vrot.slane %v2189, 6
      %v2269 = vrot.slane %v2191, 6
      %v2270 = vrot.slane %v2193, 6
      %v2271 = vrot.slane %v2195, 6
      %v2272 = vrot.slane %v2197, 6
      %v2273 = vrot.slane %v2199, 6
      %v2274 = vrot.slane %v2201, 6
      %v2275 = vrot.slane %v2203, 6
      %v2276 = vrot.slane %v2205, 6
      %v2277 = vrot.slane %v2207, 6
      %v2278 = vrot.slane %v2209, 6
      %v2279 = vrot.slane %v2211, 6
      %v2280 = vrot.slane %v2213, 6
      %v2281 = vrot.slane %v2215, 6
      %v2282 = vrot.slane %v2217, 6
      %v2283 = vrot.slane %v2219, 6
      %vm2284 = vcmp.lt.s32.totalorder %v371, 2
      %v2285 = vsel %vm2284, %v2220, %v2252
      %v2286 = vsel %vm2284, %v2221, %v2253
      %v2287 = vsel %vm2284, %v2222, %v2254
      %v2288 = vsel %vm2284, %v2223, %v2255
      %v2289 = vsel %vm2284, %v2224, %v2256
      %v2290 = vsel %vm2284, %v2225, %v2257
      %v2291 = vsel %vm2284, %v2226, %v2258
      %v2292 = vsel %vm2284, %v2227, %v2259
      %v2293 = vsel %vm2284, %v2228, %v2260
      %v2294 = vsel %vm2284, %v2229, %v2261
      %v2295 = vsel %vm2284, %v2230, %v2262
      %v2296 = vsel %vm2284, %v2231, %v2263
      %v2297 = vsel %vm2284, %v2232, %v2264
      %v2298 = vsel %vm2284, %v2233, %v2265
      %v2299 = vsel %vm2284, %v2234, %v2266
      %v2300 = vsel %vm2284, %v2235, %v2267
      %v2301 = vsel %vm2284, %v2236, %v2268
      %v2302 = vsel %vm2284, %v2237, %v2269
      %v2303 = vsel %vm2284, %v2238, %v2270
      %v2304 = vsel %vm2284, %v2239, %v2271
      %v2305 = vsel %vm2284, %v2240, %v2272
      %v2306 = vsel %vm2284, %v2241, %v2273
      %v2307 = vsel %vm2284, %v2242, %v2274
      %v2308 = vsel %vm2284, %v2243, %v2275
      %v2309 = vsel %vm2284, %v2244, %v2276
      %v2310 = vsel %vm2284, %v2245, %v2277
      %v2311 = vsel %vm2284, %v2246, %v2278
      %v2312 = vsel %vm2284, %v2247, %v2279
      %v2313 = vsel %vm2284, %v2248, %v2280
      %v2314 = vsel %vm2284, %v2249, %v2281
      %v2315 = vsel %vm2284, %v2250, %v2282
      %v2316 = vsel %vm2284, %v2251, %v2283
      %v2317 = vsel %vm2284, %v2252, %v2220
      %v2318 = vsel %vm2284, %v2253, %v2221
      %v2319 = vsel %vm2284, %v2254, %v2222
      %v2320 = vsel %vm2284, %v2255, %v2223
      %v2321 = vsel %vm2284, %v2256, %v2224
      %v2322 = vsel %vm2284, %v2257, %v2225
      %v2323 = vsel %vm2284, %v2258, %v2226
      %v2324 = vsel %vm2284, %v2259, %v2227
      %v2325 = vsel %vm2284, %v2260, %v2228
      %v2326 = vsel %vm2284, %v2261, %v2229
      %v2327 = vsel %vm2284, %v2262, %v2230
      %v2328 = vsel %vm2284, %v2263, %v2231
      %v2329 = vsel %vm2284, %v2264, %v2232
      %v2330 = vsel %vm2284, %v2265, %v2233
      %v2331 = vsel %vm2284, %v2266, %v2234
      %v2332 = vsel %vm2284, %v2267, %v2235
      %v2333 = vsel %vm2284, %v2268, %v2236
      %v2334 = vsel %vm2284, %v2269, %v2237
      %v2335 = vsel %vm2284, %v2270, %v2238
      %v2336 = vsel %vm2284, %v2271, %v2239
      %v2337 = vsel %vm2284, %v2272, %v2240
      %v2338 = vsel %vm2284, %v2273, %v2241
      %v2339 = vsel %vm2284, %v2274, %v2242
      %v2340 = vsel %vm2284, %v2275, %v2243
      %v2341 = vsel %vm2284, %v2276, %v2244
      %v2342 = vsel %vm2284, %v2277, %v2245
      %v2343 = vsel %vm2284, %v2278, %v2246
      %v2344 = vsel %vm2284, %v2279, %v2247
      %v2345 = vsel %vm2284, %v2280, %v2248
      %v2346 = vsel %vm2284, %v2281, %v2249
      %v2347 = vsel %vm2284, %v2282, %v2250
      %v2348 = vsel %vm2284, %v2283, %v2251
      %v2349 = vmul.f32 %v2317, %v377
      %v2350 = vmul.f32 %v2285, %v378
      %v2351 = vmul.f32 %v2318, %v377
      %v2352 = vmul.f32 %v2286, %v378
      %v2353 = vmul.f32 %v2319, %v377
      %v2354 = vmul.f32 %v2287, %v378
      %v2355 = vmul.f32 %v2320, %v377
      %v2356 = vmul.f32 %v2288, %v378
      %v2357 = vmul.f32 %v2321, %v377
      %v2358 = vmul.f32 %v2289, %v378
      %v2359 = vmul.f32 %v2322, %v377
      %v2360 = vmul.f32 %v2290, %v378
      %v2361 = vmul.f32 %v2323, %v377
      %v2362 = vmul.f32 %v2291, %v378
      %v2363 = vmul.f32 %v2324, %v377
      %v2364 = vmul.f32 %v2292, %v378
      %v2365 = vmul.f32 %v2325, %v377
      %v2366 = vmul.f32 %v2293, %v378
      %v2367 = vmul.f32 %v2326, %v377
      %v2368 = vmul.f32 %v2294, %v378
      %v2369 = vmul.f32 %v2327, %v377
      %v2370 = vmul.f32 %v2295, %v378
      %v2371 = vmul.f32 %v2328, %v377
      %v2372 = vmul.f32 %v2296, %v378
      %v2373 = vmul.f32 %v2329, %v377
      %v2374 = vmul.f32 %v2297, %v378
      %v2375 = vmul.f32 %v2330, %v377
      %v2376 = vmul.f32 %v2298, %v378
      %v2377 = vmul.f32 %v2331, %v377
      %v2378 = vmul.f32 %v2299, %v378
      %v2379 = vmul.f32 %v2332, %v377
      %v2380 = vmul.f32 %v2300, %v378
      %v2381 = vmul.f32 %v2333, %v377
      %v2382 = vmul.f32 %v2301, %v378
      %v2383 = vmul.f32 %v2334, %v377
      %v2384 = vmul.f32 %v2302, %v378
      %v2385 = vmul.f32 %v2335, %v377
      %v2386 = vmul.f32 %v2303, %v378
      %v2387 = vmul.f32 %v2336, %v377
      %v2388 = vmul.f32 %v2304, %v378
      %v2389 = vmul.f32 %v2337, %v377
      %v2390 = vmul.f32 %v2305, %v378
      %v2391 = vmul.f32 %v2338, %v377
      %v2392 = vmul.f32 %v2306, %v378
      %v2393 = vmul.f32 %v2339, %v377
      %v2394 = vmul.f32 %v2307, %v378
      %v2395 = vmul.f32 %v2340, %v377
      %v2396 = vmul.f32 %v2308, %v378
      %v2397 = vmul.f32 %v2341, %v377
      %v2398 = vmul.f32 %v2309, %v378
      %v2399 = vmul.f32 %v2342, %v377
      %v2400 = vmul.f32 %v2310, %v378
      %v2401 = vmul.f32 %v2343, %v377
      %v2402 = vmul.f32 %v2311, %v378
      %v2403 = vmul.f32 %v2344, %v377
      %v2404 = vmul.f32 %v2312, %v378
      %v2405 = vmul.f32 %v2345, %v377
      %v2406 = vmul.f32 %v2313, %v378
      %v2407 = vmul.f32 %v2346, %v377
      %v2408 = vmul.f32 %v2314, %v378
      %v2409 = vmul.f32 %v2347, %v377
      %v2410 = vmul.f32 %v2315, %v378
      %v2411 = vmul.f32 %v2348, %v377
      %v2412 = vmul.f32 %v2316, %v378
      %v2413 = vrot.slane %v2156, 2
      %v2414 = vrot.slane %v2158, 2
      %v2415 = vrot.slane %v2160, 2
      %v2416 = vrot.slane %v2162, 2
      %v2417 = vrot.slane %v2164, 2
      %v2418 = vrot.slane %v2166, 2
      %v2419 = vrot.slane %v2168, 2
      %v2420 = vrot.slane %v2170, 2
      %v2421 = vrot.slane %v2172, 2
      %v2422 = vrot.slane %v2174, 2
      %v2423 = vrot.slane %v2176, 2
      %v2424 = vrot.slane %v2178, 2
      %v2425 = vrot.slane %v2180, 2
      %v2426 = vrot.slane %v2182, 2
      %v2427 = vrot.slane %v2184, 2
      %v2428 = vrot.slane %v2186, 2
      %v2429 = vrot.slane %v2188, 2
      %v2430 = vrot.slane %v2190, 2
      %v2431 = vrot.slane %v2192, 2
      %v2432 = vrot.slane %v2194, 2
      %v2433 = vrot.slane %v2196, 2
      %v2434 = vrot.slane %v2198, 2
      %v2435 = vrot.slane %v2200, 2
      %v2436 = vrot.slane %v2202, 2
      %v2437 = vrot.slane %v2204, 2
      %v2438 = vrot.slane %v2206, 2
      %v2439 = vrot.slane %v2208, 2
      %v2440 = vrot.slane %v2210, 2
      %v2441 = vrot.slane %v2212, 2
      %v2442 = vrot.slane %v2214, 2
      %v2443 = vrot.slane %v2216, 2
      %v2444 = vrot.slane %v2218, 2
      %v2445 = vrot.slane %v2157, 2
      %v2446 = vrot.slane %v2159, 2
      %v2447 = vrot.slane %v2161, 2
      %v2448 = vrot.slane %v2163, 2
      %v2449 = vrot.slane %v2165, 2
      %v2450 = vrot.slane %v2167, 2
      %v2451 = vrot.slane %v2169, 2
      %v2452 = vrot.slane %v2171, 2
      %v2453 = vrot.slane %v2173, 2
      %v2454 = vrot.slane %v2175, 2
      %v2455 = vrot.slane %v2177, 2
      %v2456 = vrot.slane %v2179, 2
      %v2457 = vrot.slane %v2181, 2
      %v2458 = vrot.slane %v2183, 2
      %v2459 = vrot.slane %v2185, 2
      %v2460 = vrot.slane %v2187, 2
      %v2461 = vrot.slane %v2189, 2
      %v2462 = vrot.slane %v2191, 2
      %v2463 = vrot.slane %v2193, 2
      %v2464 = vrot.slane %v2195, 2
      %v2465 = vrot.slane %v2197, 2
      %v2466 = vrot.slane %v2199, 2
      %v2467 = vrot.slane %v2201, 2
      %v2468 = vrot.slane %v2203, 2
      %v2469 = vrot.slane %v2205, 2
      %v2470 = vrot.slane %v2207, 2
      %v2471 = vrot.slane %v2209, 2
      %v2472 = vrot.slane %v2211, 2
      %v2473 = vrot.slane %v2213, 2
      %v2474 = vrot.slane %v2215, 2
      %v2475 = vrot.slane %v2217, 2
      %v2476 = vrot.slane %v2219, 2
      %vm2477 = vcmp.lt.s32.totalorder %v371, 6
      %v2478 = vsel %vm2477, %v2413, %v2445
      %v2479 = vsel %vm2477, %v2414, %v2446
      %v2480 = vsel %vm2477, %v2415, %v2447
      %v2481 = vsel %vm2477, %v2416, %v2448
      %v2482 = vsel %vm2477, %v2417, %v2449
      %v2483 = vsel %vm2477, %v2418, %v2450
      %v2484 = vsel %vm2477, %v2419, %v2451
      %v2485 = vsel %vm2477, %v2420, %v2452
      %v2486 = vsel %vm2477, %v2421, %v2453
      %v2487 = vsel %vm2477, %v2422, %v2454
      %v2488 = vsel %vm2477, %v2423, %v2455
      %v2489 = vsel %vm2477, %v2424, %v2456
      %v2490 = vsel %vm2477, %v2425, %v2457
      %v2491 = vsel %vm2477, %v2426, %v2458
      %v2492 = vsel %vm2477, %v2427, %v2459
      %v2493 = vsel %vm2477, %v2428, %v2460
      %v2494 = vsel %vm2477, %v2429, %v2461
      %v2495 = vsel %vm2477, %v2430, %v2462
      %v2496 = vsel %vm2477, %v2431, %v2463
      %v2497 = vsel %vm2477, %v2432, %v2464
      %v2498 = vsel %vm2477, %v2433, %v2465
      %v2499 = vsel %vm2477, %v2434, %v2466
      %v2500 = vsel %vm2477, %v2435, %v2467
      %v2501 = vsel %vm2477, %v2436, %v2468
      %v2502 = vsel %vm2477, %v2437, %v2469
      %v2503 = vsel %vm2477, %v2438, %v2470
      %v2504 = vsel %vm2477, %v2439, %v2471
      %v2505 = vsel %vm2477, %v2440, %v2472
      %v2506 = vsel %vm2477, %v2441, %v2473
      %v2507 = vsel %vm2477, %v2442, %v2474
      %v2508 = vsel %vm2477, %v2443, %v2475
      %v2509 = vsel %vm2477, %v2444, %v2476
      %v2510 = vsel %vm2477, %v2445, %v2413
      %v2511 = vsel %vm2477, %v2446, %v2414
      %v2512 = vsel %vm2477, %v2447, %v2415
      %v2513 = vsel %vm2477, %v2448, %v2416
      %v2514 = vsel %vm2477, %v2449, %v2417
      %v2515 = vsel %vm2477, %v2450, %v2418
      %v2516 = vsel %vm2477, %v2451, %v2419
      %v2517 = vsel %vm2477, %v2452, %v2420
      %v2518 = vsel %vm2477, %v2453, %v2421
      %v2519 = vsel %vm2477, %v2454, %v2422
      %v2520 = vsel %vm2477, %v2455, %v2423
      %v2521 = vsel %vm2477, %v2456, %v2424
      %v2522 = vsel %vm2477, %v2457, %v2425
      %v2523 = vsel %vm2477, %v2458, %v2426
      %v2524 = vsel %vm2477, %v2459, %v2427
      %v2525 = vsel %vm2477, %v2460, %v2428
      %v2526 = vsel %vm2477, %v2461, %v2429
      %v2527 = vsel %vm2477, %v2462, %v2430
      %v2528 = vsel %vm2477, %v2463, %v2431
      %v2529 = vsel %vm2477, %v2464, %v2432
      %v2530 = vsel %vm2477, %v2465, %v2433
      %v2531 = vsel %vm2477, %v2466, %v2434
      %v2532 = vsel %vm2477, %v2467, %v2435
      %v2533 = vsel %vm2477, %v2468, %v2436
      %v2534 = vsel %vm2477, %v2469, %v2437
      %v2535 = vsel %vm2477, %v2470, %v2438
      %v2536 = vsel %vm2477, %v2471, %v2439
      %v2537 = vsel %vm2477, %v2472, %v2440
      %v2538 = vsel %vm2477, %v2473, %v2441
      %v2539 = vsel %vm2477, %v2474, %v2442
      %v2540 = vsel %vm2477, %v2475, %v2443
      %v2541 = vsel %vm2477, %v2476, %v2444
      %v2542 = vmul.f32 %v2478, %v383
      %v2543 = vmul.f32 %v2510, %v384
      %v2544 = vmul.f32 %v2479, %v383
      %v2545 = vmul.f32 %v2511, %v384
      %v2546 = vmul.f32 %v2480, %v383
      %v2547 = vmul.f32 %v2512, %v384
      %v2548 = vmul.f32 %v2481, %v383
      %v2549 = vmul.f32 %v2513, %v384
      %v2550 = vmul.f32 %v2482, %v383
      %v2551 = vmul.f32 %v2514, %v384
      %v2552 = vmul.f32 %v2483, %v383
      %v2553 = vmul.f32 %v2515, %v384
      %v2554 = vmul.f32 %v2484, %v383
      %v2555 = vmul.f32 %v2516, %v384
      %v2556 = vmul.f32 %v2485, %v383
      %v2557 = vmul.f32 %v2517, %v384
      %v2558 = vmul.f32 %v2486, %v383
      %v2559 = vmul.f32 %v2518, %v384
      %v2560 = vmul.f32 %v2487, %v383
      %v2561 = vmul.f32 %v2519, %v384
      %v2562 = vmul.f32 %v2488, %v383
      %v2563 = vmul.f32 %v2520, %v384
      %v2564 = vmul.f32 %v2489, %v383
      %v2565 = vmul.f32 %v2521, %v384
      %v2566 = vmul.f32 %v2490, %v383
      %v2567 = vmul.f32 %v2522, %v384
      %v2568 = vmul.f32 %v2491, %v383
      %v2569 = vmul.f32 %v2523, %v384
      %v2570 = vmul.f32 %v2492, %v383
      %v2571 = vmul.f32 %v2524, %v384
      %v2572 = vmul.f32 %v2493, %v383
      %v2573 = vmul.f32 %v2525, %v384
      %v2574 = vmul.f32 %v2494, %v383
      %v2575 = vmul.f32 %v2526, %v384
      %v2576 = vmul.f32 %v2495, %v383
      %v2577 = vmul.f32 %v2527, %v384
      %v2578 = vmul.f32 %v2496, %v383
      %v2579 = vmul.f32 %v2528, %v384
      %v2580 = vmul.f32 %v2497, %v383
      %v2581 = vmul.f32 %v2529, %v384
      %v2582 = vmul.f32 %v2498, %v383
      %v2583 = vmul.f32 %v2530, %v384
      %v2584 = vmul.f32 %v2499, %v383
      %v2585 = vmul.f32 %v2531, %v384
      %v2586 = vmul.f32 %v2500, %v383
      %v2587 = vmul.f32 %v2532, %v384
      %v2588 = vmul.f32 %v2501, %v383
      %v2589 = vmul.f32 %v2533, %v384
      %v2590 = vmul.f32 %v2502, %v383
      %v2591 = vmul.f32 %v2534, %v384
      %v2592 = vmul.f32 %v2503, %v383
      %v2593 = vmul.f32 %v2535, %v384
      %v2594 = vmul.f32 %v2504, %v383
      %v2595 = vmul.f32 %v2536, %v384
      %v2596 = vmul.f32 %v2505, %v383
      %v2597 = vmul.f32 %v2537, %v384
      %v2598 = vmul.f32 %v2506, %v383
      %v2599 = vmul.f32 %v2538, %v384
      %v2600 = vmul.f32 %v2507, %v383
      %v2601 = vmul.f32 %v2539, %v384
      %v2602 = vmul.f32 %v2508, %v383
      %v2603 = vmul.f32 %v2540, %v384
      %v2604 = vmul.f32 %v2509, %v383
      %v2605 = vmul.f32 %v2541, %v384
      %v2606 = vld [vmem:[%s2091] sm:$0xff]
      %v2607 = vld [vmem:[%s2091 + $0x8] sm:$0xff]
      %v2608 = vld [vmem:[%s2091 + $0x10] sm:$0xff]
      %v2609 = vld [vmem:[%s2091 + $0x18] sm:$0xff]
      %v2610 = vld [vmem:[%s2091 + $0x20] sm:$0xff]
      %v2611 = vld [vmem:[%s2091 + $0x28] sm:$0xff]
      %v2612 = vld [vmem:[%s2091 + $0x30] sm:$0xff]
      %v2613 = vld [vmem:[%s2091 + $0x38] sm:$0xff]
      %v2614 = vld [vmem:[%s2091 + $0x40] sm:$0xff]
      %v2615 = vld [vmem:[%s2091 + $0x48] sm:$0xff]
      %v2616 = vld [vmem:[%s2091 + $0x50] sm:$0xff]
      %v2617 = vld [vmem:[%s2091 + $0x58] sm:$0xff]
      %v2618 = vld [vmem:[%s2091 + $0x60] sm:$0xff]
      %v2619 = vld [vmem:[%s2091 + $0x68] sm:$0xff]
      %v2620 = vld [vmem:[%s2091 + $0x70] sm:$0xff]
      %v2621 = vld [vmem:[%s2091 + $0x78] sm:$0xff]
      %v2622 = vld [vmem:[%s2091 + $0xa0] sm:$0xff]
      %v2623 = vld [vmem:[%s2091 + $0xa8] sm:$0xff]
      %v2624 = vld [vmem:[%s2091 + $0xb0] sm:$0xff]
      %v2625 = vld [vmem:[%s2091 + $0xb8] sm:$0xff]
      %v2626 = vld [vmem:[%s2091 + $0xc0] sm:$0xff]
      %v2627 = vld [vmem:[%s2091 + $0xc8] sm:$0xff]
      %v2628 = vld [vmem:[%s2091 + $0xd0] sm:$0xff]
      %v2629 = vld [vmem:[%s2091 + $0xd8] sm:$0xff]
      %v2630 = vld [vmem:[%s2091 + $0xe0] sm:$0xff]
      %v2631 = vld [vmem:[%s2091 + $0xe8] sm:$0xff]
      %v2632 = vld [vmem:[%s2091 + $0xf0] sm:$0xff]
      %v2633 = vld [vmem:[%s2091 + $0xf8] sm:$0xff]
      %v2634 = vld [vmem:[%s2091 + $0x100] sm:$0xff]
      %v2635 = vld [vmem:[%s2091 + $0x108] sm:$0xff]
      %v2636 = vld [vmem:[%s2091 + $0x110] sm:$0xff]
      %v2637 = vld [vmem:[%s2091 + $0x118] sm:$0xff]
      %v2638 = vld [vmem:[%s2091 + $0x140] sm:$0xff]
      %v2639 = vld [vmem:[%s2091 + $0x148] sm:$0xff]
      %v2640 = vld [vmem:[%s2091 + $0x150] sm:$0xff]
      %v2641 = vld [vmem:[%s2091 + $0x158] sm:$0xff]
      %v2642 = vld [vmem:[%s2091 + $0x160] sm:$0xff]
      %v2643 = vld [vmem:[%s2091 + $0x168] sm:$0xff]
      %v2644 = vld [vmem:[%s2091 + $0x170] sm:$0xff]
      %v2645 = vld [vmem:[%s2091 + $0x178] sm:$0xff]
      %v2646 = vld [vmem:[%s2091 + $0x180] sm:$0xff]
      %v2647 = vld [vmem:[%s2091 + $0x188] sm:$0xff]
      %v2648 = vld [vmem:[%s2091 + $0x190] sm:$0xff]
      %v2649 = vld [vmem:[%s2091 + $0x198] sm:$0xff]
      %v2650 = vld [vmem:[%s2091 + $0x1a0] sm:$0xff]
      %v2651 = vld [vmem:[%s2091 + $0x1a8] sm:$0xff]
      %v2652 = vld [vmem:[%s2091 + $0x1b0] sm:$0xff]
      %v2653 = vld [vmem:[%s2091 + $0x1b8] sm:$0xff]
      %v2654 = vld [vmem:[%s2091 + $0x1e0] sm:$0xff]
      %v2655 = vld [vmem:[%s2091 + $0x1e8] sm:$0xff]
      %v2656 = vld [vmem:[%s2091 + $0x1f0] sm:$0xff]
      %v2657 = vld [vmem:[%s2091 + $0x1f8] sm:$0xff]
      %v2658 = vld [vmem:[%s2091 + $0x200] sm:$0xff]
      %v2659 = vld [vmem:[%s2091 + $0x208] sm:$0xff]
      %v2660 = vld [vmem:[%s2091 + $0x210] sm:$0xff]
      %v2661 = vld [vmem:[%s2091 + $0x218] sm:$0xff]
      %v2662 = vld [vmem:[%s2091 + $0x220] sm:$0xff]
      %v2663 = vld [vmem:[%s2091 + $0x228] sm:$0xff]
      %v2664 = vld [vmem:[%s2091 + $0x230] sm:$0xff]
      %v2665 = vld [vmem:[%s2091 + $0x238] sm:$0xff]
      %v2666 = vld [vmem:[%s2091 + $0x240] sm:$0xff]
      %v2667 = vld [vmem:[%s2091 + $0x248] sm:$0xff]
      %v2668 = vld [vmem:[%s2091 + $0x250] sm:$0xff]
      %v2669 = vld [vmem:[%s2091 + $0x258] sm:$0xff]
      %v2670 = vrot.slane %v2606, 6
      %v2671 = vrot.slane %v2608, 6
      %v2672 = vrot.slane %v2610, 6
      %v2673 = vrot.slane %v2612, 6
      %v2674 = vrot.slane %v2614, 6
      %v2675 = vrot.slane %v2616, 6
      %v2676 = vrot.slane %v2618, 6
      %v2677 = vrot.slane %v2620, 6
      %v2678 = vrot.slane %v2622, 6
      %v2679 = vrot.slane %v2624, 6
      %v2680 = vrot.slane %v2626, 6
      %v2681 = vrot.slane %v2628, 6
      %v2682 = vrot.slane %v2630, 6
      %v2683 = vrot.slane %v2632, 6
      %v2684 = vrot.slane %v2634, 6
      %v2685 = vrot.slane %v2636, 6
      %v2686 = vrot.slane %v2638, 6
      %v2687 = vrot.slane %v2640, 6
      %v2688 = vrot.slane %v2642, 6
      %v2689 = vrot.slane %v2644, 6
      %v2690 = vrot.slane %v2646, 6
      %v2691 = vrot.slane %v2648, 6
      %v2692 = vrot.slane %v2650, 6
      %v2693 = vrot.slane %v2652, 6
      %v2694 = vrot.slane %v2654, 6
      %v2695 = vrot.slane %v2656, 6
      %v2696 = vrot.slane %v2658, 6
      %v2697 = vrot.slane %v2660, 6
      %v2698 = vrot.slane %v2662, 6
      %v2699 = vrot.slane %v2664, 6
      %v2700 = vrot.slane %v2666, 6
      %v2701 = vrot.slane %v2668, 6
      %v2702 = vrot.slane %v2607, 6
      %v2703 = vrot.slane %v2609, 6
      %v2704 = vrot.slane %v2611, 6
      %v2705 = vrot.slane %v2613, 6
      %v2706 = vrot.slane %v2615, 6
      %v2707 = vrot.slane %v2617, 6
      %v2708 = vrot.slane %v2619, 6
      %v2709 = vrot.slane %v2621, 6
      %v2710 = vrot.slane %v2623, 6
      %v2711 = vrot.slane %v2625, 6
      %v2712 = vrot.slane %v2627, 6
      %v2713 = vrot.slane %v2629, 6
      %v2714 = vrot.slane %v2631, 6
      %v2715 = vrot.slane %v2633, 6
      %v2716 = vrot.slane %v2635, 6
      %v2717 = vrot.slane %v2637, 6
      %v2718 = vrot.slane %v2639, 6
      %v2719 = vrot.slane %v2641, 6
      %v2720 = vrot.slane %v2643, 6
      %v2721 = vrot.slane %v2645, 6
      %v2722 = vrot.slane %v2647, 6
      %v2723 = vrot.slane %v2649, 6
      %v2724 = vrot.slane %v2651, 6
      %v2725 = vrot.slane %v2653, 6
      %v2726 = vrot.slane %v2655, 6
      %v2727 = vrot.slane %v2657, 6
      %v2728 = vrot.slane %v2659, 6
      %v2729 = vrot.slane %v2661, 6
      %v2730 = vrot.slane %v2663, 6
      %v2731 = vrot.slane %v2665, 6
      %v2732 = vrot.slane %v2667, 6
      %v2733 = vrot.slane %v2669, 6
      %v2734 = vsel %vm2284, %v2670, %v2702
      %v2735 = vsel %vm2284, %v2671, %v2703
      %v2736 = vsel %vm2284, %v2672, %v2704
      %v2737 = vsel %vm2284, %v2673, %v2705
      %v2738 = vsel %vm2284, %v2674, %v2706
      %v2739 = vsel %vm2284, %v2675, %v2707
      %v2740 = vsel %vm2284, %v2676, %v2708
      %v2741 = vsel %vm2284, %v2677, %v2709
      %v2742 = vsel %vm2284, %v2678, %v2710
      %v2743 = vsel %vm2284, %v2679, %v2711
      %v2744 = vsel %vm2284, %v2680, %v2712
      %v2745 = vsel %vm2284, %v2681, %v2713
      %v2746 = vsel %vm2284, %v2682, %v2714
      %v2747 = vsel %vm2284, %v2683, %v2715
      %v2748 = vsel %vm2284, %v2684, %v2716
      %v2749 = vsel %vm2284, %v2685, %v2717
      %v2750 = vsel %vm2284, %v2686, %v2718
      %v2751 = vsel %vm2284, %v2687, %v2719
      %v2752 = vsel %vm2284, %v2688, %v2720
      %v2753 = vsel %vm2284, %v2689, %v2721
      %v2754 = vsel %vm2284, %v2690, %v2722
      %v2755 = vsel %vm2284, %v2691, %v2723
      %v2756 = vsel %vm2284, %v2692, %v2724
      %v2757 = vsel %vm2284, %v2693, %v2725
      %v2758 = vsel %vm2284, %v2694, %v2726
      %v2759 = vsel %vm2284, %v2695, %v2727
      %v2760 = vsel %vm2284, %v2696, %v2728
      %v2761 = vsel %vm2284, %v2697, %v2729
      %v2762 = vsel %vm2284, %v2698, %v2730
      %v2763 = vsel %vm2284, %v2699, %v2731
      %v2764 = vsel %vm2284, %v2700, %v2732
      %v2765 = vsel %vm2284, %v2701, %v2733
      %v2766 = vsel %vm2284, %v2702, %v2670
      %v2767 = vsel %vm2284, %v2703, %v2671
      %v2768 = vsel %vm2284, %v2704, %v2672
      %v2769 = vsel %vm2284, %v2705, %v2673
      %v2770 = vsel %vm2284, %v2706, %v2674
      %v2771 = vsel %vm2284, %v2707, %v2675
      %v2772 = vsel %vm2284, %v2708, %v2676
      %v2773 = vsel %vm2284, %v2709, %v2677
      %v2774 = vsel %vm2284, %v2710, %v2678
      %v2775 = vsel %vm2284, %v2711, %v2679
      %v2776 = vsel %vm2284, %v2712, %v2680
      %v2777 = vsel %vm2284, %v2713, %v2681
      %v2778 = vsel %vm2284, %v2714, %v2682
      %v2779 = vsel %vm2284, %v2715, %v2683
      %v2780 = vsel %vm2284, %v2716, %v2684
      %v2781 = vsel %vm2284, %v2717, %v2685
      %v2782 = vsel %vm2284, %v2718, %v2686
      %v2783 = vsel %vm2284, %v2719, %v2687
      %v2784 = vsel %vm2284, %v2720, %v2688
      %v2785 = vsel %vm2284, %v2721, %v2689
      %v2786 = vsel %vm2284, %v2722, %v2690
      %v2787 = vsel %vm2284, %v2723, %v2691
      %v2788 = vsel %vm2284, %v2724, %v2692
      %v2789 = vsel %vm2284, %v2725, %v2693
      %v2790 = vsel %vm2284, %v2726, %v2694
      %v2791 = vsel %vm2284, %v2727, %v2695
      %v2792 = vsel %vm2284, %v2728, %v2696
      %v2793 = vsel %vm2284, %v2729, %v2697
      %v2794 = vsel %vm2284, %v2730, %v2698
      %v2795 = vsel %vm2284, %v2731, %v2699
      %v2796 = vsel %vm2284, %v2732, %v2700
      %v2797 = vsel %vm2284, %v2733, %v2701
      %v2798 = vmul.f32 %v2766, %v377
      %v2799 = vmul.f32 %v2734, %v378
      %v2800 = vmul.f32 %v2767, %v377
      %v2801 = vmul.f32 %v2735, %v378
      %v2802 = vmul.f32 %v2768, %v377
      %v2803 = vmul.f32 %v2736, %v378
      %v2804 = vmul.f32 %v2769, %v377
      %v2805 = vmul.f32 %v2737, %v378
      %v2806 = vmul.f32 %v2770, %v377
      %v2807 = vmul.f32 %v2738, %v378
      %v2808 = vmul.f32 %v2771, %v377
      %v2809 = vmul.f32 %v2739, %v378
      %v2810 = vmul.f32 %v2772, %v377
      %v2811 = vmul.f32 %v2740, %v378
      %v2812 = vmul.f32 %v2773, %v377
      %v2813 = vmul.f32 %v2741, %v378
      %v2814 = vmul.f32 %v2774, %v377
      %v2815 = vmul.f32 %v2742, %v378
      %v2816 = vmul.f32 %v2775, %v377
      %v2817 = vmul.f32 %v2743, %v378
      %v2818 = vmul.f32 %v2776, %v377
      %v2819 = vmul.f32 %v2744, %v378
      %v2820 = vmul.f32 %v2777, %v377
      %v2821 = vmul.f32 %v2745, %v378
      %v2822 = vmul.f32 %v2778, %v377
      %v2823 = vmul.f32 %v2746, %v378
      %v2824 = vmul.f32 %v2779, %v377
      %v2825 = vmul.f32 %v2747, %v378
      %v2826 = vmul.f32 %v2780, %v377
      %v2827 = vmul.f32 %v2748, %v378
      %v2828 = vmul.f32 %v2781, %v377
      %v2829 = vmul.f32 %v2749, %v378
      %v2830 = vmul.f32 %v2782, %v377
      %v2831 = vmul.f32 %v2750, %v378
      %v2832 = vmul.f32 %v2783, %v377
      %v2833 = vmul.f32 %v2751, %v378
      %v2834 = vmul.f32 %v2784, %v377
      %v2835 = vmul.f32 %v2752, %v378
      %v2836 = vmul.f32 %v2785, %v377
      %v2837 = vmul.f32 %v2753, %v378
      %v2838 = vmul.f32 %v2786, %v377
      %v2839 = vmul.f32 %v2754, %v378
      %v2840 = vmul.f32 %v2787, %v377
      %v2841 = vmul.f32 %v2755, %v378
      %v2842 = vmul.f32 %v2788, %v377
      %v2843 = vmul.f32 %v2756, %v378
      %v2844 = vmul.f32 %v2789, %v377
      %v2845 = vmul.f32 %v2757, %v378
      %v2846 = vmul.f32 %v2790, %v377
      %v2847 = vmul.f32 %v2758, %v378
      %v2848 = vmul.f32 %v2791, %v377
      %v2849 = vmul.f32 %v2759, %v378
      %v2850 = vmul.f32 %v2792, %v377
      %v2851 = vmul.f32 %v2760, %v378
      %v2852 = vmul.f32 %v2793, %v377
      %v2853 = vmul.f32 %v2761, %v378
      %v2854 = vmul.f32 %v2794, %v377
      %v2855 = vmul.f32 %v2762, %v378
      %v2856 = vmul.f32 %v2795, %v377
      %v2857 = vmul.f32 %v2763, %v378
      %v2858 = vmul.f32 %v2796, %v377
      %v2859 = vmul.f32 %v2764, %v378
      %v2860 = vmul.f32 %v2797, %v377
      %v2861 = vmul.f32 %v2765, %v378
      %v2862 = vrot.slane %v2606, 2
      %v2863 = vrot.slane %v2608, 2
      %v2864 = vrot.slane %v2610, 2
      %v2865 = vrot.slane %v2612, 2
      %v2866 = vrot.slane %v2614, 2
      %v2867 = vrot.slane %v2616, 2
      %v2868 = vrot.slane %v2618, 2
      %v2869 = vrot.slane %v2620, 2
      %v2870 = vrot.slane %v2622, 2
      %v2871 = vrot.slane %v2624, 2
      %v2872 = vrot.slane %v2626, 2
      %v2873 = vrot.slane %v2628, 2
      %v2874 = vrot.slane %v2630, 2
      %v2875 = vrot.slane %v2632, 2
      %v2876 = vrot.slane %v2634, 2
      %v2877 = vrot.slane %v2636, 2
      %v2878 = vrot.slane %v2638, 2
      %v2879 = vrot.slane %v2640, 2
      %v2880 = vrot.slane %v2642, 2
      %v2881 = vrot.slane %v2644, 2
      %v2882 = vrot.slane %v2646, 2
      %v2883 = vrot.slane %v2648, 2
      %v2884 = vrot.slane %v2650, 2
      %v2885 = vrot.slane %v2652, 2
      %v2886 = vrot.slane %v2654, 2
      %v2887 = vrot.slane %v2656, 2
      %v2888 = vrot.slane %v2658, 2
      %v2889 = vrot.slane %v2660, 2
      %v2890 = vrot.slane %v2662, 2
      %v2891 = vrot.slane %v2664, 2
      %v2892 = vrot.slane %v2666, 2
      %v2893 = vrot.slane %v2668, 2
      %v2894 = vrot.slane %v2607, 2
      %v2895 = vrot.slane %v2609, 2
      %v2896 = vrot.slane %v2611, 2
      %v2897 = vrot.slane %v2613, 2
      %v2898 = vrot.slane %v2615, 2
      %v2899 = vrot.slane %v2617, 2
      %v2900 = vrot.slane %v2619, 2
      %v2901 = vrot.slane %v2621, 2
      %v2902 = vrot.slane %v2623, 2
      %v2903 = vrot.slane %v2625, 2
      %v2904 = vrot.slane %v2627, 2
      %v2905 = vrot.slane %v2629, 2
      %v2906 = vrot.slane %v2631, 2
      %v2907 = vrot.slane %v2633, 2
      %v2908 = vrot.slane %v2635, 2
      %v2909 = vrot.slane %v2637, 2
      %v2910 = vrot.slane %v2639, 2
      %v2911 = vrot.slane %v2641, 2
      %v2912 = vrot.slane %v2643, 2
      %v2913 = vrot.slane %v2645, 2
      %v2914 = vrot.slane %v2647, 2
      %v2915 = vrot.slane %v2649, 2
      %v2916 = vrot.slane %v2651, 2
      %v2917 = vrot.slane %v2653, 2
      %v2918 = vrot.slane %v2655, 2
      %v2919 = vrot.slane %v2657, 2
      %v2920 = vrot.slane %v2659, 2
      %v2921 = vrot.slane %v2661, 2
      %v2922 = vrot.slane %v2663, 2
      %v2923 = vrot.slane %v2665, 2
      %v2924 = vrot.slane %v2667, 2
      %v2925 = vrot.slane %v2669, 2
      %v2926 = vsel %vm2477, %v2862, %v2894
      %v2927 = vsel %vm2477, %v2863, %v2895
      %v2928 = vsel %vm2477, %v2864, %v2896
      %v2929 = vsel %vm2477, %v2865, %v2897
      %v2930 = vsel %vm2477, %v2866, %v2898
      %v2931 = vsel %vm2477, %v2867, %v2899
      %v2932 = vsel %vm2477, %v2868, %v2900
      %v2933 = vsel %vm2477, %v2869, %v2901
      %v2934 = vsel %vm2477, %v2870, %v2902
      %v2935 = vsel %vm2477, %v2871, %v2903
      %v2936 = vsel %vm2477, %v2872, %v2904
      %v2937 = vsel %vm2477, %v2873, %v2905
      %v2938 = vsel %vm2477, %v2874, %v2906
      %v2939 = vsel %vm2477, %v2875, %v2907
      %v2940 = vsel %vm2477, %v2876, %v2908
      %v2941 = vsel %vm2477, %v2877, %v2909
      %v2942 = vsel %vm2477, %v2878, %v2910
      %v2943 = vsel %vm2477, %v2879, %v2911
      %v2944 = vsel %vm2477, %v2880, %v2912
      %v2945 = vsel %vm2477, %v2881, %v2913
      %v2946 = vsel %vm2477, %v2882, %v2914
      %v2947 = vsel %vm2477, %v2883, %v2915
      %v2948 = vsel %vm2477, %v2884, %v2916
      %v2949 = vsel %vm2477, %v2885, %v2917
      %v2950 = vsel %vm2477, %v2886, %v2918
      %v2951 = vsel %vm2477, %v2887, %v2919
      %v2952 = vsel %vm2477, %v2888, %v2920
      %v2953 = vsel %vm2477, %v2889, %v2921
      %v2954 = vsel %vm2477, %v2890, %v2922
      %v2955 = vsel %vm2477, %v2891, %v2923
      %v2956 = vsel %vm2477, %v2892, %v2924
      %v2957 = vsel %vm2477, %v2893, %v2925
      %v2958 = vsel %vm2477, %v2894, %v2862
      %v2959 = vsel %vm2477, %v2895, %v2863
      %v2960 = vsel %vm2477, %v2896, %v2864
      %v2961 = vsel %vm2477, %v2897, %v2865
      %v2962 = vsel %vm2477, %v2898, %v2866
      %v2963 = vsel %vm2477, %v2899, %v2867
      %v2964 = vsel %vm2477, %v2900, %v2868
      %v2965 = vsel %vm2477, %v2901, %v2869
      %v2966 = vsel %vm2477, %v2902, %v2870
      %v2967 = vsel %vm2477, %v2903, %v2871
      %v2968 = vsel %vm2477, %v2904, %v2872
      %v2969 = vsel %vm2477, %v2905, %v2873
      %v2970 = vsel %vm2477, %v2906, %v2874
      %v2971 = vsel %vm2477, %v2907, %v2875
      %v2972 = vsel %vm2477, %v2908, %v2876
      %v2973 = vsel %vm2477, %v2909, %v2877
      %v2974 = vsel %vm2477, %v2910, %v2878
      %v2975 = vsel %vm2477, %v2911, %v2879
      %v2976 = vsel %vm2477, %v2912, %v2880
      %v2977 = vsel %vm2477, %v2913, %v2881
      %v2978 = vsel %vm2477, %v2914, %v2882
      %v2979 = vsel %vm2477, %v2915, %v2883
      %v2980 = vsel %vm2477, %v2916, %v2884
      %v2981 = vsel %vm2477, %v2917, %v2885
      %v2982 = vsel %vm2477, %v2918, %v2886
      %v2983 = vsel %vm2477, %v2919, %v2887
      %v2984 = vsel %vm2477, %v2920, %v2888
      %v2985 = vsel %vm2477, %v2921, %v2889
      %v2986 = vsel %vm2477, %v2922, %v2890
      %v2987 = vsel %vm2477, %v2923, %v2891
      %v2988 = vsel %vm2477, %v2924, %v2892
      %v2989 = vsel %vm2477, %v2925, %v2893
      %v2990 = vmul.f32 %v2926, %v383
      %v2991 = vmul.f32 %v2958, %v384
      %v2992 = vmul.f32 %v2927, %v383
      %v2993 = vmul.f32 %v2959, %v384
      %v2994 = vmul.f32 %v2928, %v383
      %v2995 = vmul.f32 %v2960, %v384
      %v2996 = vmul.f32 %v2929, %v383
      %v2997 = vmul.f32 %v2961, %v384
      %v2998 = vmul.f32 %v2930, %v383
      %v2999 = vmul.f32 %v2962, %v384
      %v3000 = vmul.f32 %v2931, %v383
      %v3001 = vmul.f32 %v2963, %v384
      %v3002 = vmul.f32 %v2932, %v383
      %v3003 = vmul.f32 %v2964, %v384
      %v3004 = vmul.f32 %v2933, %v383
      %v3005 = vmul.f32 %v2965, %v384
      %v3006 = vmul.f32 %v2934, %v383
      %v3007 = vmul.f32 %v2966, %v384
      %v3008 = vmul.f32 %v2935, %v383
      %v3009 = vmul.f32 %v2967, %v384
      %v3010 = vmul.f32 %v2936, %v383
      %v3011 = vmul.f32 %v2968, %v384
      %v3012 = vmul.f32 %v2937, %v383
      %v3013 = vmul.f32 %v2969, %v384
      %v3014 = vmul.f32 %v2938, %v383
      %v3015 = vmul.f32 %v2970, %v384
      %v3016 = vmul.f32 %v2939, %v383
      %v3017 = vmul.f32 %v2971, %v384
      %v3018 = vmul.f32 %v2940, %v383
      %v3019 = vmul.f32 %v2972, %v384
      %v3020 = vmul.f32 %v2941, %v383
      %v3021 = vmul.f32 %v2973, %v384
      %v3022 = vmul.f32 %v2942, %v383
      %v3023 = vmul.f32 %v2974, %v384
      %v3024 = vmul.f32 %v2943, %v383
      %v3025 = vmul.f32 %v2975, %v384
      %v3026 = vmul.f32 %v2944, %v383
      %v3027 = vmul.f32 %v2976, %v384
      %v3028 = vmul.f32 %v2945, %v383
      %v3029 = vmul.f32 %v2977, %v384
      %v3030 = vmul.f32 %v2946, %v383
      %v3031 = vmul.f32 %v2978, %v384
      %v3032 = vmul.f32 %v2947, %v383
      %v3033 = vmul.f32 %v2979, %v384
      %v3034 = vmul.f32 %v2948, %v383
      %v3035 = vmul.f32 %v2980, %v384
      %v3036 = vmul.f32 %v2949, %v383
      %v3037 = vmul.f32 %v2981, %v384
      %v3038 = vmul.f32 %v2950, %v383
      %v3039 = vmul.f32 %v2982, %v384
      %v3040 = vmul.f32 %v2951, %v383
      %v3041 = vmul.f32 %v2983, %v384
      %v3042 = vmul.f32 %v2952, %v383
      %v3043 = vmul.f32 %v2984, %v384
      %v3044 = vmul.f32 %v2953, %v383
      %v3045 = vmul.f32 %v2985, %v384
      %v3046 = vmul.f32 %v2954, %v383
      %v3047 = vmul.f32 %v2986, %v384
      %v3048 = vmul.f32 %v2955, %v383
      %v3049 = vmul.f32 %v2987, %v384
      %v3050 = vmul.f32 %v2956, %v383
      %v3051 = vmul.f32 %v2988, %v384
      %v3052 = vmul.f32 %v2957, %v383
      %v3053 = vmul.f32 %v2989, %v384
      %s3054 = scalar_lea.vmem [#allocation2], 32
      %v3055 = vld [vmem:[%s3054] sm:$0xff]
      %v3056 = vld [vmem:[%s3054 + $0x8] sm:$0xff]
      %v3057 = vld [vmem:[%s3054 + $0x10] sm:$0xff]
      %v3058 = vld [vmem:[%s3054 + $0x18] sm:$0xff]
      %v3059 = vld [vmem:[%s3054 + $0x20] sm:$0xff]
      %v3060 = vld [vmem:[%s3054 + $0x28] sm:$0xff]
      %v3061 = vld [vmem:[%s3054 + $0x30] sm:$0xff]
      %v3062 = vld [vmem:[%s3054 + $0x38] sm:$0xff]
      %v3063 = vld [vmem:[%s3054 + $0x40] sm:$0xff]
      %v3064 = vld [vmem:[%s3054 + $0x48] sm:$0xff]
      %v3065 = vld [vmem:[%s3054 + $0x50] sm:$0xff]
      %v3066 = vld [vmem:[%s3054 + $0x58] sm:$0xff]
      %v3067 = vld [vmem:[%s3054 + $0x60] sm:$0xff]
      %v3068 = vld [vmem:[%s3054 + $0x68] sm:$0xff]
      %v3069 = vld [vmem:[%s3054 + $0x70] sm:$0xff]
      %v3070 = vld [vmem:[%s3054 + $0x78] sm:$0xff]
      %v3071 = vld [vmem:[%s3054 + $0xa0] sm:$0xff]
      %v3072 = vld [vmem:[%s3054 + $0xa8] sm:$0xff]
      %v3073 = vld [vmem:[%s3054 + $0xb0] sm:$0xff]
      %v3074 = vld [vmem:[%s3054 + $0xb8] sm:$0xff]
      %v3075 = vld [vmem:[%s3054 + $0xc0] sm:$0xff]
      %v3076 = vld [vmem:[%s3054 + $0xc8] sm:$0xff]
      %v3077 = vld [vmem:[%s3054 + $0xd0] sm:$0xff]
      %v3078 = vld [vmem:[%s3054 + $0xd8] sm:$0xff]
      %v3079 = vld [vmem:[%s3054 + $0xe0] sm:$0xff]
      %v3080 = vld [vmem:[%s3054 + $0xe8] sm:$0xff]
      %v3081 = vld [vmem:[%s3054 + $0xf0] sm:$0xff]
      %v3082 = vld [vmem:[%s3054 + $0xf8] sm:$0xff]
      %v3083 = vld [vmem:[%s3054 + $0x100] sm:$0xff]
      %v3084 = vld [vmem:[%s3054 + $0x108] sm:$0xff]
      %v3085 = vld [vmem:[%s3054 + $0x110] sm:$0xff]
      %v3086 = vld [vmem:[%s3054 + $0x118] sm:$0xff]
      %v3087 = vld [vmem:[%s3054 + $0x140] sm:$0xff]
      %v3088 = vld [vmem:[%s3054 + $0x148] sm:$0xff]
      %v3089 = vld [vmem:[%s3054 + $0x150] sm:$0xff]
      %v3090 = vld [vmem:[%s3054 + $0x158] sm:$0xff]
      %v3091 = vld [vmem:[%s3054 + $0x160] sm:$0xff]
      %v3092 = vld [vmem:[%s3054 + $0x168] sm:$0xff]
      %v3093 = vld [vmem:[%s3054 + $0x170] sm:$0xff]
      %v3094 = vld [vmem:[%s3054 + $0x178] sm:$0xff]
      %v3095 = vld [vmem:[%s3054 + $0x180] sm:$0xff]
      %v3096 = vld [vmem:[%s3054 + $0x188] sm:$0xff]
      %v3097 = vld [vmem:[%s3054 + $0x190] sm:$0xff]
      %v3098 = vld [vmem:[%s3054 + $0x198] sm:$0xff]
      %v3099 = vld [vmem:[%s3054 + $0x1a0] sm:$0xff]
      %v3100 = vld [vmem:[%s3054 + $0x1a8] sm:$0xff]
      %v3101 = vld [vmem:[%s3054 + $0x1b0] sm:$0xff]
      %v3102 = vld [vmem:[%s3054 + $0x1b8] sm:$0xff]
      %v3103 = vld [vmem:[%s3054 + $0x1e0] sm:$0xff]
      %v3104 = vld [vmem:[%s3054 + $0x1e8] sm:$0xff]
      %v3105 = vld [vmem:[%s3054 + $0x1f0] sm:$0xff]
      %v3106 = vld [vmem:[%s3054 + $0x1f8] sm:$0xff]
      %v3107 = vld [vmem:[%s3054 + $0x200] sm:$0xff]
      %v3108 = vld [vmem:[%s3054 + $0x208] sm:$0xff]
      %v3109 = vld [vmem:[%s3054 + $0x210] sm:$0xff]
      %v3110 = vld [vmem:[%s3054 + $0x218] sm:$0xff]
      %v3111 = vld [vmem:[%s3054 + $0x220] sm:$0xff]
      %v3112 = vld [vmem:[%s3054 + $0x228] sm:$0xff]
      %v3113 = vld [vmem:[%s3054 + $0x230] sm:$0xff]
      %v3114 = vld [vmem:[%s3054 + $0x238] sm:$0xff]
      %v3115 = vld [vmem:[%s3054 + $0x240] sm:$0xff]
      %v3116 = vld [vmem:[%s3054 + $0x248] sm:$0xff]
      %v3117 = vld [vmem:[%s3054 + $0x250] sm:$0xff]
      %v3118 = vld [vmem:[%s3054 + $0x258] sm:$0xff]
      %v3119 = vrot.slane %v3055, 6
      %v3120 = vrot.slane %v3057, 6
      %v3121 = vrot.slane %v3059, 6
      %v3122 = vrot.slane %v3061, 6
      %v3123 = vrot.slane %v3063, 6
      %v3124 = vrot.slane %v3065, 6
      %v3125 = vrot.slane %v3067, 6
      %v3126 = vrot.slane %v3069, 6
      %v3127 = vrot.slane %v3071, 6
      %v3128 = vrot.slane %v3073, 6
      %v3129 = vrot.slane %v3075, 6
      %v3130 = vrot.slane %v3077, 6
      %v3131 = vrot.slane %v3079, 6
      %v3132 = vrot.slane %v3081, 6
      %v3133 = vrot.slane %v3083, 6
      %v3134 = vrot.slane %v3085, 6
      %v3135 = vrot.slane %v3087, 6
      %v3136 = vrot.slane %v3089, 6
      %v3137 = vrot.slane %v3091, 6
      %v3138 = vrot.slane %v3093, 6
      %v3139 = vrot.slane %v3095, 6
      %v3140 = vrot.slane %v3097, 6
      %v3141 = vrot.slane %v3099, 6
      %v3142 = vrot.slane %v3101, 6
      %v3143 = vrot.slane %v3103, 6
      %v3144 = vrot.slane %v3105, 6
      %v3145 = vrot.slane %v3107, 6
      %v3146 = vrot.slane %v3109, 6
      %v3147 = vrot.slane %v3111, 6
      %v3148 = vrot.slane %v3113, 6
      %v3149 = vrot.slane %v3115, 6
      %v3150 = vrot.slane %v3117, 6
      %v3151 = vrot.slane %v3056, 6
      %v3152 = vrot.slane %v3058, 6
      %v3153 = vrot.slane %v3060, 6
      %v3154 = vrot.slane %v3062, 6
      %v3155 = vrot.slane %v3064, 6
      %v3156 = vrot.slane %v3066, 6
      %v3157 = vrot.slane %v3068, 6
      %v3158 = vrot.slane %v3070, 6
      %v3159 = vrot.slane %v3072, 6
      %v3160 = vrot.slane %v3074, 6
      %v3161 = vrot.slane %v3076, 6
      %v3162 = vrot.slane %v3078, 6
      %v3163 = vrot.slane %v3080, 6
      %v3164 = vrot.slane %v3082, 6
      %v3165 = vrot.slane %v3084, 6
      %v3166 = vrot.slane %v3086, 6
      %v3167 = vrot.slane %v3088, 6
      %v3168 = vrot.slane %v3090, 6
      %v3169 = vrot.slane %v3092, 6
      %v3170 = vrot.slane %v3094, 6
      %v3171 = vrot.slane %v3096, 6
      %v3172 = vrot.slane %v3098, 6
      %v3173 = vrot.slane %v3100, 6
      %v3174 = vrot.slane %v3102, 6
      %v3175 = vrot.slane %v3104, 6
      %v3176 = vrot.slane %v3106, 6
      %v3177 = vrot.slane %v3108, 6
      %v3178 = vrot.slane %v3110, 6
      %v3179 = vrot.slane %v3112, 6
      %v3180 = vrot.slane %v3114, 6
      %v3181 = vrot.slane %v3116, 6
      %v3182 = vrot.slane %v3118, 6
      %v3183 = vsel %vm2284, %v3119, %v3151
      %v3184 = vsel %vm2284, %v3120, %v3152
      %v3185 = vsel %vm2284, %v3121, %v3153
      %v3186 = vsel %vm2284, %v3122, %v3154
      %v3187 = vsel %vm2284, %v3123, %v3155
      %v3188 = vsel %vm2284, %v3124, %v3156
      %v3189 = vsel %vm2284, %v3125, %v3157
      %v3190 = vsel %vm2284, %v3126, %v3158
      %v3191 = vsel %vm2284, %v3127, %v3159
      %v3192 = vsel %vm2284, %v3128, %v3160
      %v3193 = vsel %vm2284, %v3129, %v3161
      %v3194 = vsel %vm2284, %v3130, %v3162
      %v3195 = vsel %vm2284, %v3131, %v3163
      %v3196 = vsel %vm2284, %v3132, %v3164
      %v3197 = vsel %vm2284, %v3133, %v3165
      %v3198 = vsel %vm2284, %v3134, %v3166
      %v3199 = vsel %vm2284, %v3135, %v3167
      %v3200 = vsel %vm2284, %v3136, %v3168
      %v3201 = vsel %vm2284, %v3137, %v3169
      %v3202 = vsel %vm2284, %v3138, %v3170
      %v3203 = vsel %vm2284, %v3139, %v3171
      %v3204 = vsel %vm2284, %v3140, %v3172
      %v3205 = vsel %vm2284, %v3141, %v3173
      %v3206 = vsel %vm2284, %v3142, %v3174
      %v3207 = vsel %vm2284, %v3143, %v3175
      %v3208 = vsel %vm2284, %v3144, %v3176
      %v3209 = vsel %vm2284, %v3145, %v3177
      %v3210 = vsel %vm2284, %v3146, %v3178
      %v3211 = vsel %vm2284, %v3147, %v3179
      %v3212 = vsel %vm2284, %v3148, %v3180
      %v3213 = vsel %vm2284, %v3149, %v3181
      %v3214 = vsel %vm2284, %v3150, %v3182
      %v3215 = vsel %vm2284, %v3151, %v3119
      %v3216 = vsel %vm2284, %v3152, %v3120
      %v3217 = vsel %vm2284, %v3153, %v3121
      %v3218 = vsel %vm2284, %v3154, %v3122
      %v3219 = vsel %vm2284, %v3155, %v3123
      %v3220 = vsel %vm2284, %v3156, %v3124
      %v3221 = vsel %vm2284, %v3157, %v3125
      %v3222 = vsel %vm2284, %v3158, %v3126
      %v3223 = vsel %vm2284, %v3159, %v3127
      %v3224 = vsel %vm2284, %v3160, %v3128
      %v3225 = vsel %vm2284, %v3161, %v3129
      %v3226 = vsel %vm2284, %v3162, %v3130
      %v3227 = vsel %vm2284, %v3163, %v3131
      %v3228 = vsel %vm2284, %v3164, %v3132
      %v3229 = vsel %vm2284, %v3165, %v3133
      %v3230 = vsel %vm2284, %v3166, %v3134
      %v3231 = vsel %vm2284, %v3167, %v3135
      %v3232 = vsel %vm2284, %v3168, %v3136
      %v3233 = vsel %vm2284, %v3169, %v3137
      %v3234 = vsel %vm2284, %v3170, %v3138
      %v3235 = vsel %vm2284, %v3171, %v3139
      %v3236 = vsel %vm2284, %v3172, %v3140
      %v3237 = vsel %vm2284, %v3173, %v3141
      %v3238 = vsel %vm2284, %v3174, %v3142
      %v3239 = vsel %vm2284, %v3175, %v3143
      %v3240 = vsel %vm2284, %v3176, %v3144
      %v3241 = vsel %vm2284, %v3177, %v3145
      %v3242 = vsel %vm2284, %v3178, %v3146
      %v3243 = vsel %vm2284, %v3179, %v3147
      %v3244 = vsel %vm2284, %v3180, %v3148
      %v3245 = vsel %vm2284, %v3181, %v3149
      %v3246 = vsel %vm2284, %v3182, %v3150
      %v3247 = vmul.f32 %v3215, %v377
      %v3248 = vmul.f32 %v3183, %v378
      %v3249 = vmul.f32 %v3216, %v377
      %v3250 = vmul.f32 %v3184, %v378
      %v3251 = vmul.f32 %v3217, %v377
      %v3252 = vmul.f32 %v3185, %v378
      %v3253 = vmul.f32 %v3218, %v377
      %v3254 = vmul.f32 %v3186, %v378
      %v3255 = vmul.f32 %v3219, %v377
      %v3256 = vmul.f32 %v3187, %v378
      %v3257 = vmul.f32 %v3220, %v377
      %v3258 = vmul.f32 %v3188, %v378
      %v3259 = vmul.f32 %v3221, %v377
      %v3260 = vmul.f32 %v3189, %v378
      %v3261 = vmul.f32 %v3222, %v377
      %v3262 = vmul.f32 %v3190, %v378
      %v3263 = vmul.f32 %v3223, %v377
      %v3264 = vmul.f32 %v3191, %v378
      %v3265 = vmul.f32 %v3224, %v377
      %v3266 = vmul.f32 %v3192, %v378
      %v3267 = vmul.f32 %v3225, %v377
      %v3268 = vmul.f32 %v3193, %v378
      %v3269 = vmul.f32 %v3226, %v377
      %v3270 = vmul.f32 %v3194, %v378
      %v3271 = vmul.f32 %v3227, %v377
      %v3272 = vmul.f32 %v3195, %v378
      %v3273 = vmul.f32 %v3228, %v377
      %v3274 = vmul.f32 %v3196, %v378
      %v3275 = vmul.f32 %v3229, %v377
      %v3276 = vmul.f32 %v3197, %v378
      %v3277 = vmul.f32 %v3230, %v377
      %v3278 = vmul.f32 %v3198, %v378
      %v3279 = vmul.f32 %v3231, %v377
      %v3280 = vmul.f32 %v3199, %v378
      %v3281 = vmul.f32 %v3232, %v377
      %v3282 = vmul.f32 %v3200, %v378
      %v3283 = vmul.f32 %v3233, %v377
      %v3284 = vmul.f32 %v3201, %v378
      %v3285 = vmul.f32 %v3234, %v377
      %v3286 = vmul.f32 %v3202, %v378
      %v3287 = vmul.f32 %v3235, %v377
      %v3288 = vmul.f32 %v3203, %v378
      %v3289 = vmul.f32 %v3236, %v377
      %v3290 = vmul.f32 %v3204, %v378
      %v3291 = vmul.f32 %v3237, %v377
      %v3292 = vmul.f32 %v3205, %v378
      %v3293 = vmul.f32 %v3238, %v377
      %v3294 = vmul.f32 %v3206, %v378
      %v3295 = vmul.f32 %v3239, %v377
      %v3296 = vmul.f32 %v3207, %v378
      %v3297 = vmul.f32 %v3240, %v377
      %v3298 = vmul.f32 %v3208, %v378
      %v3299 = vmul.f32 %v3241, %v377
      %v3300 = vmul.f32 %v3209, %v378
      %v3301 = vmul.f32 %v3242, %v377
      %v3302 = vmul.f32 %v3210, %v378
      %v3303 = vmul.f32 %v3243, %v377
      %v3304 = vmul.f32 %v3211, %v378
      %v3305 = vmul.f32 %v3244, %v377
      %v3306 = vmul.f32 %v3212, %v378
      %v3307 = vmul.f32 %v3245, %v377
      %v3308 = vmul.f32 %v3213, %v378
      %v3309 = vmul.f32 %v3246, %v377
      %v3310 = vmul.f32 %v3214, %v378
      %v3311 = vrot.slane %v3055, 2
      %v3312 = vrot.slane %v3057, 2
      %v3313 = vrot.slane %v3059, 2
      %v3314 = vrot.slane %v3061, 2
      %v3315 = vrot.slane %v3063, 2
      %v3316 = vrot.slane %v3065, 2
      %v3317 = vrot.slane %v3067, 2
      %v3318 = vrot.slane %v3069, 2
      %v3319 = vrot.slane %v3071, 2
      %v3320 = vrot.slane %v3073, 2
      %v3321 = vrot.slane %v3075, 2
      %v3322 = vrot.slane %v3077, 2
      %v3323 = vrot.slane %v3079, 2
      %v3324 = vrot.slane %v3081, 2
      %v3325 = vrot.slane %v3083, 2
      %v3326 = vrot.slane %v3085, 2
      %v3327 = vrot.slane %v3087, 2
      %v3328 = vrot.slane %v3089, 2
      %v3329 = vrot.slane %v3091, 2
      %v3330 = vrot.slane %v3093, 2
      %v3331 = vrot.slane %v3095, 2
      %v3332 = vrot.slane %v3097, 2
      %v3333 = vrot.slane %v3099, 2
      %v3334 = vrot.slane %v3101, 2
      %v3335 = vrot.slane %v3103, 2
      %v3336 = vrot.slane %v3105, 2
      %v3337 = vrot.slane %v3107, 2
      %v3338 = vrot.slane %v3109, 2
      %v3339 = vrot.slane %v3111, 2
      %v3340 = vrot.slane %v3113, 2
      %v3341 = vrot.slane %v3115, 2
      %v3342 = vrot.slane %v3117, 2
      %v3343 = vrot.slane %v3056, 2
      %v3344 = vrot.slane %v3058, 2
      %v3345 = vrot.slane %v3060, 2
      %v3346 = vrot.slane %v3062, 2
      %v3347 = vrot.slane %v3064, 2
      %v3348 = vrot.slane %v3066, 2
      %v3349 = vrot.slane %v3068, 2
      %v3350 = vrot.slane %v3070, 2
      %v3351 = vrot.slane %v3072, 2
      %v3352 = vrot.slane %v3074, 2
      %v3353 = vrot.slane %v3076, 2
      %v3354 = vrot.slane %v3078, 2
      %v3355 = vrot.slane %v3080, 2
      %v3356 = vrot.slane %v3082, 2
      %v3357 = vrot.slane %v3084, 2
      %v3358 = vrot.slane %v3086, 2
      %v3359 = vrot.slane %v3088, 2
      %v3360 = vrot.slane %v3090, 2
      %v3361 = vrot.slane %v3092, 2
      %v3362 = vrot.slane %v3094, 2
      %v3363 = vrot.slane %v3096, 2
      %v3364 = vrot.slane %v3098, 2
      %v3365 = vrot.slane %v3100, 2
      %v3366 = vrot.slane %v3102, 2
      %v3367 = vrot.slane %v3104, 2
      %v3368 = vrot.slane %v3106, 2
      %v3369 = vrot.slane %v3108, 2
      %v3370 = vrot.slane %v3110, 2
      %v3371 = vrot.slane %v3112, 2
      %v3372 = vrot.slane %v3114, 2
      %v3373 = vrot.slane %v3116, 2
      %v3374 = vrot.slane %v3118, 2
      %v3375 = vsel %vm2477, %v3311, %v3343
      %v3376 = vsel %vm2477, %v3312, %v3344
      %v3377 = vsel %vm2477, %v3313, %v3345
      %v3378 = vsel %vm2477, %v3314, %v3346
      %v3379 = vsel %vm2477, %v3315, %v3347
      %v3380 = vsel %vm2477, %v3316, %v3348
      %v3381 = vsel %vm2477, %v3317, %v3349
      %v3382 = vsel %vm2477, %v3318, %v3350
      %v3383 = vsel %vm2477, %v3319, %v3351
      %v3384 = vsel %vm2477, %v3320, %v3352
      %v3385 = vsel %vm2477, %v3321, %v3353
      %v3386 = vsel %vm2477, %v3322, %v3354
      %v3387 = vsel %vm2477, %v3323, %v3355
      %v3388 = vsel %vm2477, %v3324, %v3356
      %v3389 = vsel %vm2477, %v3325, %v3357
      %v3390 = vsel %vm2477, %v3326, %v3358
      %v3391 = vsel %vm2477, %v3327, %v3359
      %v3392 = vsel %vm2477, %v3328, %v3360
      %v3393 = vsel %vm2477, %v3329, %v3361
      %v3394 = vsel %vm2477, %v3330, %v3362
      %v3395 = vsel %vm2477, %v3331, %v3363
      %v3396 = vsel %vm2477, %v3332, %v3364
      %v3397 = vsel %vm2477, %v3333, %v3365
      %v3398 = vsel %vm2477, %v3334, %v3366
      %v3399 = vsel %vm2477, %v3335, %v3367
      %v3400 = vsel %vm2477, %v3336, %v3368
      %v3401 = vsel %vm2477, %v3337, %v3369
      %v3402 = vsel %vm2477, %v3338, %v3370
      %v3403 = vsel %vm2477, %v3339, %v3371
      %v3404 = vsel %vm2477, %v3340, %v3372
      %v3405 = vsel %vm2477, %v3341, %v3373
      %v3406 = vsel %vm2477, %v3342, %v3374
      %v3407 = vsel %vm2477, %v3343, %v3311
      %v3408 = vsel %vm2477, %v3344, %v3312
      %v3409 = vsel %vm2477, %v3345, %v3313
      %v3410 = vsel %vm2477, %v3346, %v3314
      %v3411 = vsel %vm2477, %v3347, %v3315
      %v3412 = vsel %vm2477, %v3348, %v3316
      %v3413 = vsel %vm2477, %v3349, %v3317
      %v3414 = vsel %vm2477, %v3350, %v3318
      %v3415 = vsel %vm2477, %v3351, %v3319
      %v3416 = vsel %vm2477, %v3352, %v3320
      %v3417 = vsel %vm2477, %v3353, %v3321
      %v3418 = vsel %vm2477, %v3354, %v3322
      %v3419 = vsel %vm2477, %v3355, %v3323
      %v3420 = vsel %vm2477, %v3356, %v3324
      %v3421 = vsel %vm2477, %v3357, %v3325
      %v3422 = vsel %vm2477, %v3358, %v3326
      %v3423 = vsel %vm2477, %v3359, %v3327
      %v3424 = vsel %vm2477, %v3360, %v3328
      %v3425 = vsel %vm2477, %v3361, %v3329
      %v3426 = vsel %vm2477, %v3362, %v3330
      %v3427 = vsel %vm2477, %v3363, %v3331
      %v3428 = vsel %vm2477, %v3364, %v3332
      %v3429 = vsel %vm2477, %v3365, %v3333
      %v3430 = vsel %vm2477, %v3366, %v3334
      %v3431 = vsel %vm2477, %v3367, %v3335
      %v3432 = vsel %vm2477, %v3368, %v3336
      %v3433 = vsel %vm2477, %v3369, %v3337
      %v3434 = vsel %vm2477, %v3370, %v3338
      %v3435 = vsel %vm2477, %v3371, %v3339
      %v3436 = vsel %vm2477, %v3372, %v3340
      %v3437 = vsel %vm2477, %v3373, %v3341
      %v3438 = vsel %vm2477, %v3374, %v3342
      %v3439 = vmul.f32 %v3375, %v383
      %v3440 = vmul.f32 %v3407, %v384
      %v3441 = vmul.f32 %v3376, %v383
      %v3442 = vmul.f32 %v3408, %v384
      %v3443 = vmul.f32 %v3377, %v383
      %v3444 = vmul.f32 %v3409, %v384
      %v3445 = vmul.f32 %v3378, %v383
      %v3446 = vmul.f32 %v3410, %v384
      %v3447 = vmul.f32 %v3379, %v383
      %v3448 = vmul.f32 %v3411, %v384
      %v3449 = vmul.f32 %v3380, %v383
      %v3450 = vmul.f32 %v3412, %v384
      %v3451 = vmul.f32 %v3381, %v383
      %v3452 = vmul.f32 %v3413, %v384
      %v3453 = vmul.f32 %v3382, %v383
      %v3454 = vmul.f32 %v3414, %v384
      %v3455 = vmul.f32 %v3383, %v383
      %v3456 = vmul.f32 %v3415, %v384
      %v3457 = vmul.f32 %v3384, %v383
      %v3458 = vmul.f32 %v3416, %v384
      %v3459 = vmul.f32 %v3385, %v383
      %v3460 = vmul.f32 %v3417, %v384
      %v3461 = vmul.f32 %v3386, %v383
      %v3462 = vmul.f32 %v3418, %v384
      %v3463 = vmul.f32 %v3387, %v383
      %v3464 = vmul.f32 %v3419, %v384
      %v3465 = vmul.f32 %v3388, %v383
      %v3466 = vmul.f32 %v3420, %v384
      %v3467 = vmul.f32 %v3389, %v383
      %v3468 = vmul.f32 %v3421, %v384
      %v3469 = vmul.f32 %v3390, %v383
      %v3470 = vmul.f32 %v3422, %v384
      %v3471 = vmul.f32 %v3391, %v383
      %v3472 = vmul.f32 %v3423, %v384
      %v3473 = vmul.f32 %v3392, %v383
      %v3474 = vmul.f32 %v3424, %v384
      %v3475 = vmul.f32 %v3393, %v383
      %v3476 = vmul.f32 %v3425, %v384
      %v3477 = vmul.f32 %v3394, %v383
      %v3478 = vmul.f32 %v3426, %v384
      %v3479 = vmul.f32 %v3395, %v383
      %v3480 = vmul.f32 %v3427, %v384
      %v3481 = vmul.f32 %v3396, %v383
      %v3482 = vmul.f32 %v3428, %v384
      %v3483 = vmul.f32 %v3397, %v383
      %v3484 = vmul.f32 %v3429, %v384
      %v3485 = vmul.f32 %v3398, %v383
      %v3486 = vmul.f32 %v3430, %v384
      %v3487 = vmul.f32 %v3399, %v383
      %v3488 = vmul.f32 %v3431, %v384
      %v3489 = vmul.f32 %v3400, %v383
      %v3490 = vmul.f32 %v3432, %v384
      %v3491 = vmul.f32 %v3401, %v383
      %v3492 = vmul.f32 %v3433, %v384
      %v3493 = vmul.f32 %v3402, %v383
      %v3494 = vmul.f32 %v3434, %v384
      %v3495 = vmul.f32 %v3403, %v383
      %v3496 = vmul.f32 %v3435, %v384
      %v3497 = vmul.f32 %v3404, %v383
      %v3498 = vmul.f32 %v3436, %v384
      %v3499 = vmul.f32 %v3405, %v383
      %v3500 = vmul.f32 %v3437, %v384
      %v3501 = vmul.f32 %v3406, %v383
      %v3502 = vmul.f32 %v3438, %v384
      %3567 = vrot.lane.b32.xlu0 %v2156, 32
      %v3568 = vpop.permute.xlu0 %3567
      %3569 = vrot.lane.b32.xlu0 %v2157, 32
      %v3570 = vpop.permute.xlu0 %3569
      %3571 = vrot.lane.b32.xlu0 %v2158, 32
      %v3572 = vpop.permute.xlu0 %3571
      %3573 = vrot.lane.b32.xlu0 %v2159, 32
      %v3574 = vpop.permute.xlu0 %3573
      %3575 = vrot.lane.b32.xlu0 %v2160, 32
      %v3576 = vpop.permute.xlu0 %3575
      %3577 = vrot.lane.b32.xlu0 %v2161, 32
      %v3578 = vpop.permute.xlu0 %3577
      %3579 = vrot.lane.b32.xlu0 %v2162, 32
      %v3580 = vpop.permute.xlu0 %3579
      %3581 = vrot.lane.b32.xlu0 %v2163, 32
      %v3582 = vpop.permute.xlu0 %3581
      %3583 = vrot.lane.b32.xlu0 %v2164, 32
      %v3584 = vpop.permute.xlu0 %3583
      %3585 = vrot.lane.b32.xlu0 %v2165, 32
      %v3586 = vpop.permute.xlu0 %3585
      %3587 = vrot.lane.b32.xlu0 %v2166, 32
      %v3588 = vpop.permute.xlu0 %3587
      %3589 = vrot.lane.b32.xlu0 %v2167, 32
      %v3590 = vpop.permute.xlu0 %3589
      %3591 = vrot.lane.b32.xlu0 %v2168, 32
      %v3592 = vpop.permute.xlu0 %3591
      %3593 = vrot.lane.b32.xlu0 %v2169, 32
      %v3594 = vpop.permute.xlu0 %3593
      %3595 = vrot.lane.b32.xlu0 %v2170, 32
      %v3596 = vpop.permute.xlu0 %3595
      %3597 = vrot.lane.b32.xlu0 %v2171, 32
      %v3598 = vpop.permute.xlu0 %3597
      %3599 = vrot.lane.b32.xlu0 %v2172, 32
      %v3600 = vpop.permute.xlu0 %3599
      %3601 = vrot.lane.b32.xlu0 %v2173, 32
      %v3602 = vpop.permute.xlu0 %3601
      %3603 = vrot.lane.b32.xlu0 %v2174, 32
      %v3604 = vpop.permute.xlu0 %3603
      %3605 = vrot.lane.b32.xlu0 %v2175, 32
      %v3606 = vpop.permute.xlu0 %3605
      %3607 = vrot.lane.b32.xlu0 %v2176, 32
      %v3608 = vpop.permute.xlu0 %3607
      %3609 = vrot.lane.b32.xlu0 %v2177, 32
      %v3610 = vpop.permute.xlu0 %3609
      %3611 = vrot.lane.b32.xlu0 %v2178, 32
      %v3612 = vpop.permute.xlu0 %3611
      %3613 = vrot.lane.b32.xlu0 %v2179, 32
      %v3614 = vpop.permute.xlu0 %3613
      %3615 = vrot.lane.b32.xlu0 %v2180, 32
      %v3616 = vpop.permute.xlu0 %3615
      %3617 = vrot.lane.b32.xlu0 %v2181, 32
      %v3618 = vpop.permute.xlu0 %3617
      %3619 = vrot.lane.b32.xlu0 %v2182, 32
      %v3620 = vpop.permute.xlu0 %3619
      %3621 = vrot.lane.b32.xlu0 %v2183, 32
      %v3622 = vpop.permute.xlu0 %3621
      %3623 = vrot.lane.b32.xlu0 %v2184, 32
      %v3624 = vpop.permute.xlu0 %3623
      %3625 = vrot.lane.b32.xlu0 %v2185, 32
      %v3626 = vpop.permute.xlu0 %3625
      %3627 = vrot.lane.b32.xlu0 %v2186, 32
      %v3628 = vpop.permute.xlu0 %3627
      %3629 = vrot.lane.b32.xlu0 %v2187, 32
      %v3630 = vpop.permute.xlu0 %3629
      %3631 = vrot.lane.b32.xlu0 %v2188, 32
      %v3632 = vpop.permute.xlu0 %3631
      %3633 = vrot.lane.b32.xlu0 %v2189, 32
      %v3634 = vpop.permute.xlu0 %3633
      %3635 = vrot.lane.b32.xlu0 %v2190, 32
      %v3636 = vpop.permute.xlu0 %3635
      %3637 = vrot.lane.b32.xlu0 %v2191, 32
      %v3638 = vpop.permute.xlu0 %3637
      %3639 = vrot.lane.b32.xlu0 %v2192, 32
      %v3640 = vpop.permute.xlu0 %3639
      %3641 = vrot.lane.b32.xlu0 %v2193, 32
      %v3642 = vpop.permute.xlu0 %3641
      %3643 = vrot.lane.b32.xlu0 %v2194, 32
      %v3644 = vpop.permute.xlu0 %3643
      %3645 = vrot.lane.b32.xlu0 %v2195, 32
      %v3646 = vpop.permute.xlu0 %3645
      %3647 = vrot.lane.b32.xlu0 %v2196, 32
      %v3648 = vpop.permute.xlu0 %3647
      %3649 = vrot.lane.b32.xlu0 %v2197, 32
      %v3650 = vpop.permute.xlu0 %3649
      %3651 = vrot.lane.b32.xlu0 %v2198, 32
      %v3652 = vpop.permute.xlu0 %3651
      %3653 = vrot.lane.b32.xlu0 %v2199, 32
      %v3654 = vpop.permute.xlu0 %3653
      %3655 = vrot.lane.b32.xlu0 %v2200, 32
      %v3656 = vpop.permute.xlu0 %3655
      %3657 = vrot.lane.b32.xlu0 %v2201, 32
      %v3658 = vpop.permute.xlu0 %3657
      %3659 = vrot.lane.b32.xlu0 %v2202, 32
      %v3660 = vpop.permute.xlu0 %3659
      %3661 = vrot.lane.b32.xlu0 %v2203, 32
      %v3662 = vpop.permute.xlu0 %3661
      %3663 = vrot.lane.b32.xlu0 %v2204, 32
      %v3664 = vpop.permute.xlu0 %3663
      %3665 = vrot.lane.b32.xlu0 %v2205, 32
      %v3666 = vpop.permute.xlu0 %3665
      %3667 = vrot.lane.b32.xlu0 %v2206, 32
      %v3668 = vpop.permute.xlu0 %3667
      %3669 = vrot.lane.b32.xlu0 %v2207, 32
      %v3670 = vpop.permute.xlu0 %3669
      %3671 = vrot.lane.b32.xlu0 %v2208, 32
      %v3672 = vpop.permute.xlu0 %3671
      %3673 = vrot.lane.b32.xlu0 %v2209, 32
      %v3674 = vpop.permute.xlu0 %3673
      %3675 = vrot.lane.b32.xlu0 %v2210, 32
      %v3676 = vpop.permute.xlu0 %3675
      %3677 = vrot.lane.b32.xlu0 %v2211, 32
      %v3678 = vpop.permute.xlu0 %3677
      %3679 = vrot.lane.b32.xlu0 %v2212, 32
      %v3680 = vpop.permute.xlu0 %3679
      %3681 = vrot.lane.b32.xlu0 %v2213, 32
      %v3682 = vpop.permute.xlu0 %3681
      %3683 = vrot.lane.b32.xlu0 %v2214, 32
      %v3684 = vpop.permute.xlu0 %3683
      %3685 = vrot.lane.b32.xlu0 %v2215, 32
      %v3686 = vpop.permute.xlu0 %3685
      %3687 = vrot.lane.b32.xlu0 %v2216, 32
      %v3688 = vpop.permute.xlu0 %3687
      %3689 = vrot.lane.b32.xlu0 %v2217, 32
      %v3690 = vpop.permute.xlu0 %3689
      %3691 = vrot.lane.b32.xlu0 %v2218, 32
      %v3692 = vpop.permute.xlu0 %3691
      %3693 = vrot.lane.b32.xlu0 %v2219, 32
      %v3694 = vpop.permute.xlu0 %3693
      %3823 = vrot.lane.b32.xlu0 %v2542, 64
      %v3824 = vpop.permute.xlu0 %3823
      %3825 = vrot.lane.b32.xlu0 %v2543, 64
      %v3826 = vpop.permute.xlu0 %3825
      %3827 = vrot.lane.b32.xlu0 %v2544, 64
      %v3828 = vpop.permute.xlu0 %3827
      %3829 = vrot.lane.b32.xlu0 %v2545, 64
      %v3830 = vpop.permute.xlu0 %3829
      %3831 = vrot.lane.b32.xlu0 %v2546, 64
      %v3832 = vpop.permute.xlu0 %3831
      %3833 = vrot.lane.b32.xlu0 %v2547, 64
      %v3834 = vpop.permute.xlu0 %3833
      %3835 = vrot.lane.b32.xlu0 %v2548, 64
      %v3836 = vpop.permute.xlu0 %3835
      %3837 = vrot.lane.b32.xlu0 %v2549, 64
      %v3838 = vpop.permute.xlu0 %3837
      %3839 = vrot.lane.b32.xlu0 %v2550, 64
      %v3840 = vpop.permute.xlu0 %3839
      %3841 = vrot.lane.b32.xlu0 %v2551, 64
      %v3842 = vpop.permute.xlu0 %3841
      %3843 = vrot.lane.b32.xlu0 %v2552, 64
      %v3844 = vpop.permute.xlu0 %3843
      %3845 = vrot.lane.b32.xlu0 %v2553, 64
      %v3846 = vpop.permute.xlu0 %3845
      %3847 = vrot.lane.b32.xlu0 %v2554, 64
      %v3848 = vpop.permute.xlu0 %3847
      %3849 = vrot.lane.b32.xlu0 %v2555, 64
      %v3850 = vpop.permute.xlu0 %3849
      %3851 = vrot.lane.b32.xlu0 %v2556, 64
      %v3852 = vpop.permute.xlu0 %3851
      %3853 = vrot.lane.b32.xlu0 %v2557, 64
      %v3854 = vpop.permute.xlu0 %3853
      %3855 = vrot.lane.b32.xlu0 %v2558, 64
      %v3856 = vpop.permute.xlu0 %3855
      %3857 = vrot.lane.b32.xlu0 %v2559, 64
      %v3858 = vpop.permute.xlu0 %3857
      %3859 = vrot.lane.b32.xlu0 %v2560, 64
      %v3860 = vpop.permute.xlu0 %3859
      %3861 = vrot.lane.b32.xlu0 %v2561, 64
      %v3862 = vpop.permute.xlu0 %3861
      %3863 = vrot.lane.b32.xlu0 %v2562, 64
      %v3864 = vpop.permute.xlu0 %3863
      %3865 = vrot.lane.b32.xlu0 %v2563, 64
      %v3866 = vpop.permute.xlu0 %3865
      %3867 = vrot.lane.b32.xlu0 %v2564, 64
      %v3868 = vpop.permute.xlu0 %3867
      %3869 = vrot.lane.b32.xlu0 %v2565, 64
      %v3870 = vpop.permute.xlu0 %3869
      %3871 = vrot.lane.b32.xlu0 %v2566, 64
      %v3872 = vpop.permute.xlu0 %3871
      %3873 = vrot.lane.b32.xlu0 %v2567, 64
      %v3874 = vpop.permute.xlu0 %3873
      %3875 = vrot.lane.b32.xlu0 %v2568, 64
      %v3876 = vpop.permute.xlu0 %3875
      %3877 = vrot.lane.b32.xlu0 %v2569, 64
      %v3878 = vpop.permute.xlu0 %3877
      %3879 = vrot.lane.b32.xlu0 %v2570, 64
      %v3880 = vpop.permute.xlu0 %3879
      %3881 = vrot.lane.b32.xlu0 %v2571, 64
      %v3882 = vpop.permute.xlu0 %3881
      %3883 = vrot.lane.b32.xlu0 %v2572, 64
      %v3884 = vpop.permute.xlu0 %3883
      %3885 = vrot.lane.b32.xlu0 %v2573, 64
      %v3886 = vpop.permute.xlu0 %3885
      %3887 = vrot.lane.b32.xlu0 %v2574, 64
      %v3888 = vpop.permute.xlu0 %3887
      %3889 = vrot.lane.b32.xlu0 %v2575, 64
      %v3890 = vpop.permute.xlu0 %3889
      %3891 = vrot.lane.b32.xlu0 %v2576, 64
      %v3892 = vpop.permute.xlu0 %3891
      %3893 = vrot.lane.b32.xlu0 %v2577, 64
      %v3894 = vpop.permute.xlu0 %3893
      %3895 = vrot.lane.b32.xlu0 %v2578, 64
      %v3896 = vpop.permute.xlu0 %3895
      %3897 = vrot.lane.b32.xlu0 %v2579, 64
      %v3898 = vpop.permute.xlu0 %3897
      %3899 = vrot.lane.b32.xlu0 %v2580, 64
      %v3900 = vpop.permute.xlu0 %3899
      %3901 = vrot.lane.b32.xlu0 %v2581, 64
      %v3902 = vpop.permute.xlu0 %3901
      %3903 = vrot.lane.b32.xlu0 %v2582, 64
      %v3904 = vpop.permute.xlu0 %3903
      %3905 = vrot.lane.b32.xlu0 %v2583, 64
      %v3906 = vpop.permute.xlu0 %3905
      %3907 = vrot.lane.b32.xlu0 %v2584, 64
      %v3908 = vpop.permute.xlu0 %3907
      %3909 = vrot.lane.b32.xlu0 %v2585, 64
      %v3910 = vpop.permute.xlu0 %3909
      %3911 = vrot.lane.b32.xlu0 %v2586, 64
      %v3912 = vpop.permute.xlu0 %3911
      %3913 = vrot.lane.b32.xlu0 %v2587, 64
      %v3914 = vpop.permute.xlu0 %3913
      %3915 = vrot.lane.b32.xlu0 %v2588, 64
      %v3916 = vpop.permute.xlu0 %3915
      %3917 = vrot.lane.b32.xlu0 %v2589, 64
      %v3918 = vpop.permute.xlu0 %3917
      %3919 = vrot.lane.b32.xlu0 %v2590, 64
      %v3920 = vpop.permute.xlu0 %3919
      %3921 = vrot.lane.b32.xlu0 %v2591, 64
      %v3922 = vpop.permute.xlu0 %3921
      %3923 = vrot.lane.b32.xlu0 %v2592, 64
      %v3924 = vpop.permute.xlu0 %3923
      %3925 = vrot.lane.b32.xlu0 %v2593, 64
      %v3926 = vpop.permute.xlu0 %3925
      %3927 = vrot.lane.b32.xlu0 %v2594, 64
      %v3928 = vpop.permute.xlu0 %3927
      %3929 = vrot.lane.b32.xlu0 %v2595, 64
      %v3930 = vpop.permute.xlu0 %3929
      %3931 = vrot.lane.b32.xlu0 %v2596, 64
      %v3932 = vpop.permute.xlu0 %3931
      %3933 = vrot.lane.b32.xlu0 %v2597, 64
      %v3934 = vpop.permute.xlu0 %3933
      %3935 = vrot.lane.b32.xlu0 %v2598, 64
      %v3936 = vpop.permute.xlu0 %3935
      %3937 = vrot.lane.b32.xlu0 %v2599, 64
      %v3938 = vpop.permute.xlu0 %3937
      %3939 = vrot.lane.b32.xlu0 %v2600, 64
      %v3940 = vpop.permute.xlu0 %3939
      %3941 = vrot.lane.b32.xlu0 %v2601, 64
      %v3942 = vpop.permute.xlu0 %3941
      %3943 = vrot.lane.b32.xlu0 %v2602, 64
      %v3944 = vpop.permute.xlu0 %3943
      %3945 = vrot.lane.b32.xlu0 %v2603, 64
      %v3946 = vpop.permute.xlu0 %3945
      %3947 = vrot.lane.b32.xlu0 %v2604, 64
      %v3948 = vpop.permute.xlu0 %3947
      %3949 = vrot.lane.b32.xlu0 %v2605, 64
      %v3950 = vpop.permute.xlu0 %3949
      %4079 = vrot.lane.b32.xlu0 %v2798, 96
      %v4080 = vpop.permute.xlu0 %4079
      %4081 = vrot.lane.b32.xlu0 %v2799, 96
      %v4082 = vpop.permute.xlu0 %4081
      %4083 = vrot.lane.b32.xlu0 %v2800, 96
      %v4084 = vpop.permute.xlu0 %4083
      %4085 = vrot.lane.b32.xlu0 %v2801, 96
      %v4086 = vpop.permute.xlu0 %4085
      %4087 = vrot.lane.b32.xlu0 %v2802, 96
      %v4088 = vpop.permute.xlu0 %4087
      %4089 = vrot.lane.b32.xlu0 %v2803, 96
      %v4090 = vpop.permute.xlu0 %4089
      %4091 = vrot.lane.b32.xlu0 %v2804, 96
      %v4092 = vpop.permute.xlu0 %4091
      %4093 = vrot.lane.b32.xlu0 %v2805, 96
      %v4094 = vpop.permute.xlu0 %4093
      %4095 = vrot.lane.b32.xlu0 %v2806, 96
      %v4096 = vpop.permute.xlu0 %4095
      %4097 = vrot.lane.b32.xlu0 %v2807, 96
      %v4098 = vpop.permute.xlu0 %4097
      %4099 = vrot.lane.b32.xlu0 %v2808, 96
      %v4100 = vpop.permute.xlu0 %4099
      %4101 = vrot.lane.b32.xlu0 %v2809, 96
      %v4102 = vpop.permute.xlu0 %4101
      %4103 = vrot.lane.b32.xlu0 %v2810, 96
      %v4104 = vpop.permute.xlu0 %4103
      %4105 = vrot.lane.b32.xlu0 %v2811, 96
      %v4106 = vpop.permute.xlu0 %4105
      %4107 = vrot.lane.b32.xlu0 %v2812, 96
      %v4108 = vpop.permute.xlu0 %4107
      %4109 = vrot.lane.b32.xlu0 %v2813, 96
      %v4110 = vpop.permute.xlu0 %4109
      %4111 = vrot.lane.b32.xlu0 %v2814, 96
      %v4112 = vpop.permute.xlu0 %4111
      %4113 = vrot.lane.b32.xlu0 %v2815, 96
      %v4114 = vpop.permute.xlu0 %4113
      %4115 = vrot.lane.b32.xlu0 %v2816, 96
      %v4116 = vpop.permute.xlu0 %4115
      %4117 = vrot.lane.b32.xlu0 %v2817, 96
      %v4118 = vpop.permute.xlu0 %4117
      %4119 = vrot.lane.b32.xlu0 %v2818, 96
      %v4120 = vpop.permute.xlu0 %4119
      %4121 = vrot.lane.b32.xlu0 %v2819, 96
      %v4122 = vpop.permute.xlu0 %4121
      %4123 = vrot.lane.b32.xlu0 %v2820, 96
      %v4124 = vpop.permute.xlu0 %4123
      %4125 = vrot.lane.b32.xlu0 %v2821, 96
      %v4126 = vpop.permute.xlu0 %4125
      %4127 = vrot.lane.b32.xlu0 %v2822, 96
      %v4128 = vpop.permute.xlu0 %4127
      %4129 = vrot.lane.b32.xlu0 %v2823, 96
      %v4130 = vpop.permute.xlu0 %4129
      %4131 = vrot.lane.b32.xlu0 %v2824, 96
      %v4132 = vpop.permute.xlu0 %4131
      %4133 = vrot.lane.b32.xlu0 %v2825, 96
      %v4134 = vpop.permute.xlu0 %4133
      %4135 = vrot.lane.b32.xlu0 %v2826, 96
      %v4136 = vpop.permute.xlu0 %4135
      %4137 = vrot.lane.b32.xlu0 %v2827, 96
      %v4138 = vpop.permute.xlu0 %4137
      %4139 = vrot.lane.b32.xlu0 %v2828, 96
      %v4140 = vpop.permute.xlu0 %4139
      %4141 = vrot.lane.b32.xlu0 %v2829, 96
      %v4142 = vpop.permute.xlu0 %4141
      %4143 = vrot.lane.b32.xlu0 %v2830, 96
      %v4144 = vpop.permute.xlu0 %4143
      %4145 = vrot.lane.b32.xlu0 %v2831, 96
      %v4146 = vpop.permute.xlu0 %4145
      %4147 = vrot.lane.b32.xlu0 %v2832, 96
      %v4148 = vpop.permute.xlu0 %4147
      %4149 = vrot.lane.b32.xlu0 %v2833, 96
      %v4150 = vpop.permute.xlu0 %4149
      %4151 = vrot.lane.b32.xlu0 %v2834, 96
      %v4152 = vpop.permute.xlu0 %4151
      %4153 = vrot.lane.b32.xlu0 %v2835, 96
      %v4154 = vpop.permute.xlu0 %4153
      %4155 = vrot.lane.b32.xlu0 %v2836, 96
      %v4156 = vpop.permute.xlu0 %4155
      %4157 = vrot.lane.b32.xlu0 %v2837, 96
      %v4158 = vpop.permute.xlu0 %4157
      %4159 = vrot.lane.b32.xlu0 %v2838, 96
      %v4160 = vpop.permute.xlu0 %4159
      %4161 = vrot.lane.b32.xlu0 %v2839, 96
      %v4162 = vpop.permute.xlu0 %4161
      %4163 = vrot.lane.b32.xlu0 %v2840, 96
      %v4164 = vpop.permute.xlu0 %4163
      %4165 = vrot.lane.b32.xlu0 %v2841, 96
      %v4166 = vpop.permute.xlu0 %4165
      %4167 = vrot.lane.b32.xlu0 %v2842, 96
      %v4168 = vpop.permute.xlu0 %4167
      %4169 = vrot.lane.b32.xlu0 %v2843, 96
      %v4170 = vpop.permute.xlu0 %4169
      %4171 = vrot.lane.b32.xlu0 %v2844, 96
      %v4172 = vpop.permute.xlu0 %4171
      %4173 = vrot.lane.b32.xlu0 %v2845, 96
      %v4174 = vpop.permute.xlu0 %4173
      %4175 = vrot.lane.b32.xlu0 %v2846, 96
      %v4176 = vpop.permute.xlu0 %4175
      %4177 = vrot.lane.b32.xlu0 %v2847, 96
      %v4178 = vpop.permute.xlu0 %4177
      %4179 = vrot.lane.b32.xlu0 %v2848, 96
      %v4180 = vpop.permute.xlu0 %4179
      %4181 = vrot.lane.b32.xlu0 %v2849, 96
      %v4182 = vpop.permute.xlu0 %4181
      %4183 = vrot.lane.b32.xlu0 %v2850, 96
      %v4184 = vpop.permute.xlu0 %4183
      %4185 = vrot.lane.b32.xlu0 %v2851, 96
      %v4186 = vpop.permute.xlu0 %4185
      %4187 = vrot.lane.b32.xlu0 %v2852, 96
      %v4188 = vpop.permute.xlu0 %4187
      %4189 = vrot.lane.b32.xlu0 %v2853, 96
      %v4190 = vpop.permute.xlu0 %4189
      %4191 = vrot.lane.b32.xlu0 %v2854, 96
      %v4192 = vpop.permute.xlu0 %4191
      %4193 = vrot.lane.b32.xlu0 %v2855, 96
      %v4194 = vpop.permute.xlu0 %4193
      %4195 = vrot.lane.b32.xlu0 %v2856, 96
      %v4196 = vpop.permute.xlu0 %4195
      %4197 = vrot.lane.b32.xlu0 %v2857, 96
      %v4198 = vpop.permute.xlu0 %4197
      %4199 = vrot.lane.b32.xlu0 %v2858, 96
      %v4200 = vpop.permute.xlu0 %4199
      %4201 = vrot.lane.b32.xlu0 %v2859, 96
      %v4202 = vpop.permute.xlu0 %4201
      %4203 = vrot.lane.b32.xlu0 %v2860, 96
      %v4204 = vpop.permute.xlu0 %4203
      %4205 = vrot.lane.b32.xlu0 %v2861, 96
      %v4206 = vpop.permute.xlu0 %4205
      %4335 = vrot.lane.b32.xlu0 %v2990, 32
      %v4336 = vpop.permute.xlu0 %4335
      %4337 = vrot.lane.b32.xlu0 %v2991, 32
      %v4338 = vpop.permute.xlu0 %4337
      %4339 = vrot.lane.b32.xlu0 %v2992, 32
      %v4340 = vpop.permute.xlu0 %4339
      %4341 = vrot.lane.b32.xlu0 %v2993, 32
      %v4342 = vpop.permute.xlu0 %4341
      %4343 = vrot.lane.b32.xlu0 %v2994, 32
      %v4344 = vpop.permute.xlu0 %4343
      %4345 = vrot.lane.b32.xlu0 %v2995, 32
      %v4346 = vpop.permute.xlu0 %4345
      %4347 = vrot.lane.b32.xlu0 %v2996, 32
      %v4348 = vpop.permute.xlu0 %4347
      %4349 = vrot.lane.b32.xlu0 %v2997, 32
      %v4350 = vpop.permute.xlu0 %4349
      %4351 = vrot.lane.b32.xlu0 %v2998, 32
      %v4352 = vpop.permute.xlu0 %4351
      %4353 = vrot.lane.b32.xlu0 %v2999, 32
      %v4354 = vpop.permute.xlu0 %4353
      %4355 = vrot.lane.b32.xlu0 %v3000, 32
      %v4356 = vpop.permute.xlu0 %4355
      %4357 = vrot.lane.b32.xlu0 %v3001, 32
      %v4358 = vpop.permute.xlu0 %4357
      %4359 = vrot.lane.b32.xlu0 %v3002, 32
      %v4360 = vpop.permute.xlu0 %4359
      %4361 = vrot.lane.b32.xlu0 %v3003, 32
      %v4362 = vpop.permute.xlu0 %4361
      %4363 = vrot.lane.b32.xlu0 %v3004, 32
      %v4364 = vpop.permute.xlu0 %4363
      %4365 = vrot.lane.b32.xlu0 %v3005, 32
      %v4366 = vpop.permute.xlu0 %4365
      %4367 = vrot.lane.b32.xlu0 %v3006, 32
      %v4368 = vpop.permute.xlu0 %4367
      %4369 = vrot.lane.b32.xlu0 %v3007, 32
      %v4370 = vpop.permute.xlu0 %4369
      %4371 = vrot.lane.b32.xlu0 %v3008, 32
      %v4372 = vpop.permute.xlu0 %4371
      %4373 = vrot.lane.b32.xlu0 %v3009, 32
      %v4374 = vpop.permute.xlu0 %4373
      %4375 = vrot.lane.b32.xlu0 %v3010, 32
      %v4376 = vpop.permute.xlu0 %4375
      %4377 = vrot.lane.b32.xlu0 %v3011, 32
      %v4378 = vpop.permute.xlu0 %4377
      %4379 = vrot.lane.b32.xlu0 %v3012, 32
      %v4380 = vpop.permute.xlu0 %4379
      %4381 = vrot.lane.b32.xlu0 %v3013, 32
      %v4382 = vpop.permute.xlu0 %4381
      %4383 = vrot.lane.b32.xlu0 %v3014, 32
      %v4384 = vpop.permute.xlu0 %4383
      %4385 = vrot.lane.b32.xlu0 %v3015, 32
      %v4386 = vpop.permute.xlu0 %4385
      %4387 = vrot.lane.b32.xlu0 %v3016, 32
      %v4388 = vpop.permute.xlu0 %4387
      %4389 = vrot.lane.b32.xlu0 %v3017, 32
      %v4390 = vpop.permute.xlu0 %4389
      %4391 = vrot.lane.b32.xlu0 %v3018, 32
      %v4392 = vpop.permute.xlu0 %4391
      %4393 = vrot.lane.b32.xlu0 %v3019, 32
      %v4394 = vpop.permute.xlu0 %4393
      %4395 = vrot.lane.b32.xlu0 %v3020, 32
      %v4396 = vpop.permute.xlu0 %4395
      %4397 = vrot.lane.b32.xlu0 %v3021, 32
      %v4398 = vpop.permute.xlu0 %4397
      %4399 = vrot.lane.b32.xlu0 %v3022, 32
      %v4400 = vpop.permute.xlu0 %4399
      %4401 = vrot.lane.b32.xlu0 %v3023, 32
      %v4402 = vpop.permute.xlu0 %4401
      %4403 = vrot.lane.b32.xlu0 %v3024, 32
      %v4404 = vpop.permute.xlu0 %4403
      %4405 = vrot.lane.b32.xlu0 %v3025, 32
      %v4406 = vpop.permute.xlu0 %4405
      %4407 = vrot.lane.b32.xlu0 %v3026, 32
      %v4408 = vpop.permute.xlu0 %4407
      %4409 = vrot.lane.b32.xlu0 %v3027, 32
      %v4410 = vpop.permute.xlu0 %4409
      %4411 = vrot.lane.b32.xlu0 %v3028, 32
      %v4412 = vpop.permute.xlu0 %4411
      %4413 = vrot.lane.b32.xlu0 %v3029, 32
      %v4414 = vpop.permute.xlu0 %4413
      %4415 = vrot.lane.b32.xlu0 %v3030, 32
      %v4416 = vpop.permute.xlu0 %4415
      %4417 = vrot.lane.b32.xlu0 %v3031, 32
      %v4418 = vpop.permute.xlu0 %4417
      %4419 = vrot.lane.b32.xlu0 %v3032, 32
      %v4420 = vpop.permute.xlu0 %4419
      %4421 = vrot.lane.b32.xlu0 %v3033, 32
      %v4422 = vpop.permute.xlu0 %4421
      %4423 = vrot.lane.b32.xlu0 %v3034, 32
      %v4424 = vpop.permute.xlu0 %4423
      %4425 = vrot.lane.b32.xlu0 %v3035, 32
      %v4426 = vpop.permute.xlu0 %4425
      %4427 = vrot.lane.b32.xlu0 %v3036, 32
      %v4428 = vpop.permute.xlu0 %4427
      %4429 = vrot.lane.b32.xlu0 %v3037, 32
      %v4430 = vpop.permute.xlu0 %4429
      %4431 = vrot.lane.b32.xlu0 %v3038, 32
      %v4432 = vpop.permute.xlu0 %4431
      %4433 = vrot.lane.b32.xlu0 %v3039, 32
      %v4434 = vpop.permute.xlu0 %4433
      %4435 = vrot.lane.b32.xlu0 %v3040, 32
      %v4436 = vpop.permute.xlu0 %4435
      %4437 = vrot.lane.b32.xlu0 %v3041, 32
      %v4438 = vpop.permute.xlu0 %4437
      %4439 = vrot.lane.b32.xlu0 %v3042, 32
      %v4440 = vpop.permute.xlu0 %4439
      %4441 = vrot.lane.b32.xlu0 %v3043, 32
      %v4442 = vpop.permute.xlu0 %4441
      %4443 = vrot.lane.b32.xlu0 %v3044, 32
      %v4444 = vpop.permute.xlu0 %4443
      %4445 = vrot.lane.b32.xlu0 %v3045, 32
      %v4446 = vpop.permute.xlu0 %4445
      %4447 = vrot.lane.b32.xlu0 %v3046, 32
      %v4448 = vpop.permute.xlu0 %4447
      %4449 = vrot.lane.b32.xlu0 %v3047, 32
      %v4450 = vpop.permute.xlu0 %4449
      %4451 = vrot.lane.b32.xlu0 %v3048, 32
      %v4452 = vpop.permute.xlu0 %4451
      %4453 = vrot.lane.b32.xlu0 %v3049, 32
      %v4454 = vpop.permute.xlu0 %4453
      %4455 = vrot.lane.b32.xlu0 %v3050, 32
      %v4456 = vpop.permute.xlu0 %4455
      %4457 = vrot.lane.b32.xlu0 %v3051, 32
      %v4458 = vpop.permute.xlu0 %4457
      %4459 = vrot.lane.b32.xlu0 %v3052, 32
      %v4460 = vpop.permute.xlu0 %4459
      %4461 = vrot.lane.b32.xlu0 %v3053, 32
      %v4462 = vpop.permute.xlu0 %4461
      %4591 = vrot.lane.b32.xlu0 %v3247, 64
      %v4592 = vpop.permute.xlu0 %4591
      %4593 = vrot.lane.b32.xlu0 %v3248, 64
      %v4594 = vpop.permute.xlu0 %4593
      %4595 = vrot.lane.b32.xlu0 %v3249, 64
      %v4596 = vpop.permute.xlu0 %4595
      %4597 = vrot.lane.b32.xlu0 %v3250, 64
      %v4598 = vpop.permute.xlu0 %4597
      %4599 = vrot.lane.b32.xlu0 %v3251, 64
      %v4600 = vpop.permute.xlu0 %4599
      %4601 = vrot.lane.b32.xlu0 %v3252, 64
      %v4602 = vpop.permute.xlu0 %4601
      %4603 = vrot.lane.b32.xlu0 %v3253, 64
      %v4604 = vpop.permute.xlu0 %4603
      %4605 = vrot.lane.b32.xlu0 %v3254, 64
      %v4606 = vpop.permute.xlu0 %4605
      %4607 = vrot.lane.b32.xlu0 %v3255, 64
      %v4608 = vpop.permute.xlu0 %4607
      %4609 = vrot.lane.b32.xlu0 %v3256, 64
      %v4610 = vpop.permute.xlu0 %4609
      %4611 = vrot.lane.b32.xlu0 %v3257, 64
      %v4612 = vpop.permute.xlu0 %4611
      %4613 = vrot.lane.b32.xlu0 %v3258, 64
      %v4614 = vpop.permute.xlu0 %4613
      %4615 = vrot.lane.b32.xlu0 %v3259, 64
      %v4616 = vpop.permute.xlu0 %4615
      %4617 = vrot.lane.b32.xlu0 %v3260, 64
      %v4618 = vpop.permute.xlu0 %4617
      %4619 = vrot.lane.b32.xlu0 %v3261, 64
      %v4620 = vpop.permute.xlu0 %4619
      %4621 = vrot.lane.b32.xlu0 %v3262, 64
      %v4622 = vpop.permute.xlu0 %4621
      %4623 = vrot.lane.b32.xlu0 %v3263, 64
      %v4624 = vpop.permute.xlu0 %4623
      %4625 = vrot.lane.b32.xlu0 %v3264, 64
      %v4626 = vpop.permute.xlu0 %4625
      %4627 = vrot.lane.b32.xlu0 %v3265, 64
      %v4628 = vpop.permute.xlu0 %4627
      %4629 = vrot.lane.b32.xlu0 %v3266, 64
      %v4630 = vpop.permute.xlu0 %4629
      %4631 = vrot.lane.b32.xlu0 %v3267, 64
      %v4632 = vpop.permute.xlu0 %4631
      %4633 = vrot.lane.b32.xlu0 %v3268, 64
      %v4634 = vpop.permute.xlu0 %4633
      %4635 = vrot.lane.b32.xlu0 %v3269, 64
      %v4636 = vpop.permute.xlu0 %4635
      %4637 = vrot.lane.b32.xlu0 %v3270, 64
      %v4638 = vpop.permute.xlu0 %4637
      %4639 = vrot.lane.b32.xlu0 %v3271, 64
      %v4640 = vpop.permute.xlu0 %4639
      %4641 = vrot.lane.b32.xlu0 %v3272, 64
      %v4642 = vpop.permute.xlu0 %4641
      %4643 = vrot.lane.b32.xlu0 %v3273, 64
      %v4644 = vpop.permute.xlu0 %4643
      %4645 = vrot.lane.b32.xlu0 %v3274, 64
      %v4646 = vpop.permute.xlu0 %4645
      %4647 = vrot.lane.b32.xlu0 %v3275, 64
      %v4648 = vpop.permute.xlu0 %4647
      %4649 = vrot.lane.b32.xlu0 %v3276, 64
      %v4650 = vpop.permute.xlu0 %4649
      %4651 = vrot.lane.b32.xlu0 %v3277, 64
      %v4652 = vpop.permute.xlu0 %4651
      %4653 = vrot.lane.b32.xlu0 %v3278, 64
      %v4654 = vpop.permute.xlu0 %4653
      %4655 = vrot.lane.b32.xlu0 %v3279, 64
      %v4656 = vpop.permute.xlu0 %4655
      %4657 = vrot.lane.b32.xlu0 %v3280, 64
      %v4658 = vpop.permute.xlu0 %4657
      %4659 = vrot.lane.b32.xlu0 %v3281, 64
      %v4660 = vpop.permute.xlu0 %4659
      %4661 = vrot.lane.b32.xlu0 %v3282, 64
      %v4662 = vpop.permute.xlu0 %4661
      %4663 = vrot.lane.b32.xlu0 %v3283, 64
      %v4664 = vpop.permute.xlu0 %4663
      %4665 = vrot.lane.b32.xlu0 %v3284, 64
      %v4666 = vpop.permute.xlu0 %4665
      %4667 = vrot.lane.b32.xlu0 %v3285, 64
      %v4668 = vpop.permute.xlu0 %4667
      %4669 = vrot.lane.b32.xlu0 %v3286, 64
      %v4670 = vpop.permute.xlu0 %4669
      %4671 = vrot.lane.b32.xlu0 %v3287, 64
      %v4672 = vpop.permute.xlu0 %4671
      %4673 = vrot.lane.b32.xlu0 %v3288, 64
      %v4674 = vpop.permute.xlu0 %4673
      %4675 = vrot.lane.b32.xlu0 %v3289, 64
      %v4676 = vpop.permute.xlu0 %4675
      %4677 = vrot.lane.b32.xlu0 %v3290, 64
      %v4678 = vpop.permute.xlu0 %4677
      %4679 = vrot.lane.b32.xlu0 %v3291, 64
      %v4680 = vpop.permute.xlu0 %4679
      %4681 = vrot.lane.b32.xlu0 %v3292, 64
      %v4682 = vpop.permute.xlu0 %4681
      %4683 = vrot.lane.b32.xlu0 %v3293, 64
      %v4684 = vpop.permute.xlu0 %4683
      %4685 = vrot.lane.b32.xlu0 %v3294, 64
      %v4686 = vpop.permute.xlu0 %4685
      %4687 = vrot.lane.b32.xlu0 %v3295, 64
      %v4688 = vpop.permute.xlu0 %4687
      %4689 = vrot.lane.b32.xlu0 %v3296, 64
      %v4690 = vpop.permute.xlu0 %4689
      %4691 = vrot.lane.b32.xlu0 %v3297, 64
      %v4692 = vpop.permute.xlu0 %4691
      %4693 = vrot.lane.b32.xlu0 %v3298, 64
      %v4694 = vpop.permute.xlu0 %4693
      %4695 = vrot.lane.b32.xlu0 %v3299, 64
      %v4696 = vpop.permute.xlu0 %4695
      %4697 = vrot.lane.b32.xlu0 %v3300, 64
      %v4698 = vpop.permute.xlu0 %4697
      %4699 = vrot.lane.b32.xlu0 %v3301, 64
      %v4700 = vpop.permute.xlu0 %4699
      %4701 = vrot.lane.b32.xlu0 %v3302, 64
      %v4702 = vpop.permute.xlu0 %4701
      %4703 = vrot.lane.b32.xlu0 %v3303, 64
      %v4704 = vpop.permute.xlu0 %4703
      %4705 = vrot.lane.b32.xlu0 %v3304, 64
      %v4706 = vpop.permute.xlu0 %4705
      %4707 = vrot.lane.b32.xlu0 %v3305, 64
      %v4708 = vpop.permute.xlu0 %4707
      %4709 = vrot.lane.b32.xlu0 %v3306, 64
      %v4710 = vpop.permute.xlu0 %4709
      %4711 = vrot.lane.b32.xlu0 %v3307, 64
      %v4712 = vpop.permute.xlu0 %4711
      %4713 = vrot.lane.b32.xlu0 %v3308, 64
      %v4714 = vpop.permute.xlu0 %4713
      %4715 = vrot.lane.b32.xlu0 %v3309, 64
      %v4716 = vpop.permute.xlu0 %4715
      %4717 = vrot.lane.b32.xlu0 %v3310, 64
      %v4718 = vpop.permute.xlu0 %4717
      %4847 = vrot.lane.b32.xlu0 %v3055, 96
      %v4848 = vpop.permute.xlu0 %4847
      %4849 = vrot.lane.b32.xlu0 %v3056, 96
      %v4850 = vpop.permute.xlu0 %4849
      %4851 = vrot.lane.b32.xlu0 %v3057, 96
      %v4852 = vpop.permute.xlu0 %4851
      %4853 = vrot.lane.b32.xlu0 %v3058, 96
      %v4854 = vpop.permute.xlu0 %4853
      %4855 = vrot.lane.b32.xlu0 %v3059, 96
      %v4856 = vpop.permute.xlu0 %4855
      %4857 = vrot.lane.b32.xlu0 %v3060, 96
      %v4858 = vpop.permute.xlu0 %4857
      %4859 = vrot.lane.b32.xlu0 %v3061, 96
      %v4860 = vpop.permute.xlu0 %4859
      %4861 = vrot.lane.b32.xlu0 %v3062, 96
      %v4862 = vpop.permute.xlu0 %4861
      %4863 = vrot.lane.b32.xlu0 %v3063, 96
      %v4864 = vpop.permute.xlu0 %4863
      %4865 = vrot.lane.b32.xlu0 %v3064, 96
      %v4866 = vpop.permute.xlu0 %4865
      %4867 = vrot.lane.b32.xlu0 %v3065, 96
      %v4868 = vpop.permute.xlu0 %4867
      %4869 = vrot.lane.b32.xlu0 %v3066, 96
      %v4870 = vpop.permute.xlu0 %4869
      %4871 = vrot.lane.b32.xlu0 %v3067, 96
      %v4872 = vpop.permute.xlu0 %4871
      %4873 = vrot.lane.b32.xlu0 %v3068, 96
      %v4874 = vpop.permute.xlu0 %4873
      %4875 = vrot.lane.b32.xlu0 %v3069, 96
      %v4876 = vpop.permute.xlu0 %4875
      %4877 = vrot.lane.b32.xlu0 %v3070, 96
      %v4878 = vpop.permute.xlu0 %4877
      %4879 = vrot.lane.b32.xlu0 %v3071, 96
      %v4880 = vpop.permute.xlu0 %4879
      %4881 = vrot.lane.b32.xlu0 %v3072, 96
      %v4882 = vpop.permute.xlu0 %4881
      %4883 = vrot.lane.b32.xlu0 %v3073, 96
      %v4884 = vpop.permute.xlu0 %4883
      %4885 = vrot.lane.b32.xlu0 %v3074, 96
      %v4886 = vpop.permute.xlu0 %4885
      %4887 = vrot.lane.b32.xlu0 %v3075, 96
      %v4888 = vpop.permute.xlu0 %4887
      %4889 = vrot.lane.b32.xlu0 %v3076, 96
      %v4890 = vpop.permute.xlu0 %4889
      %4891 = vrot.lane.b32.xlu0 %v3077, 96
      %v4892 = vpop.permute.xlu0 %4891
      %4893 = vrot.lane.b32.xlu0 %v3078, 96
      %v4894 = vpop.permute.xlu0 %4893
      %4895 = vrot.lane.b32.xlu0 %v3079, 96
      %v4896 = vpop.permute.xlu0 %4895
      %4897 = vrot.lane.b32.xlu0 %v3080, 96
      %v4898 = vpop.permute.xlu0 %4897
      %4899 = vrot.lane.b32.xlu0 %v3081, 96
      %v4900 = vpop.permute.xlu0 %4899
      %4901 = vrot.lane.b32.xlu0 %v3082, 96
      %v4902 = vpop.permute.xlu0 %4901
      %4903 = vrot.lane.b32.xlu0 %v3083, 96
      %v4904 = vpop.permute.xlu0 %4903
      %4905 = vrot.lane.b32.xlu0 %v3084, 96
      %v4906 = vpop.permute.xlu0 %4905
      %4907 = vrot.lane.b32.xlu0 %v3085, 96
      %v4908 = vpop.permute.xlu0 %4907
      %4909 = vrot.lane.b32.xlu0 %v3086, 96
      %v4910 = vpop.permute.xlu0 %4909
      %4911 = vrot.lane.b32.xlu0 %v3087, 96
      %v4912 = vpop.permute.xlu0 %4911
      %4913 = vrot.lane.b32.xlu0 %v3088, 96
      %v4914 = vpop.permute.xlu0 %4913
      %4915 = vrot.lane.b32.xlu0 %v3089, 96
      %v4916 = vpop.permute.xlu0 %4915
      %4917 = vrot.lane.b32.xlu0 %v3090, 96
      %v4918 = vpop.permute.xlu0 %4917
      %4919 = vrot.lane.b32.xlu0 %v3091, 96
      %v4920 = vpop.permute.xlu0 %4919
      %4921 = vrot.lane.b32.xlu0 %v3092, 96
      %v4922 = vpop.permute.xlu0 %4921
      %4923 = vrot.lane.b32.xlu0 %v3093, 96
      %v4924 = vpop.permute.xlu0 %4923
      %4925 = vrot.lane.b32.xlu0 %v3094, 96
      %v4926 = vpop.permute.xlu0 %4925
      %4927 = vrot.lane.b32.xlu0 %v3095, 96
      %v4928 = vpop.permute.xlu0 %4927
      %4929 = vrot.lane.b32.xlu0 %v3096, 96
      %v4930 = vpop.permute.xlu0 %4929
      %4931 = vrot.lane.b32.xlu0 %v3097, 96
      %v4932 = vpop.permute.xlu0 %4931
      %4933 = vrot.lane.b32.xlu0 %v3098, 96
      %v4934 = vpop.permute.xlu0 %4933
      %4935 = vrot.lane.b32.xlu0 %v3099, 96
      %v4936 = vpop.permute.xlu0 %4935
      %4937 = vrot.lane.b32.xlu0 %v3100, 96
      %v4938 = vpop.permute.xlu0 %4937
      %4939 = vrot.lane.b32.xlu0 %v3101, 96
      %v4940 = vpop.permute.xlu0 %4939
      %4941 = vrot.lane.b32.xlu0 %v3102, 96
      %v4942 = vpop.permute.xlu0 %4941
      %4943 = vrot.lane.b32.xlu0 %v3103, 96
      %v4944 = vpop.permute.xlu0 %4943
      %4945 = vrot.lane.b32.xlu0 %v3104, 96
      %v4946 = vpop.permute.xlu0 %4945
      %4947 = vrot.lane.b32.xlu0 %v3105, 96
      %v4948 = vpop.permute.xlu0 %4947
      %4949 = vrot.lane.b32.xlu0 %v3106, 96
      %v4950 = vpop.permute.xlu0 %4949
      %4951 = vrot.lane.b32.xlu0 %v3107, 96
      %v4952 = vpop.permute.xlu0 %4951
      %4953 = vrot.lane.b32.xlu0 %v3108, 96
      %v4954 = vpop.permute.xlu0 %4953
      %4955 = vrot.lane.b32.xlu0 %v3109, 96
      %v4956 = vpop.permute.xlu0 %4955
      %4957 = vrot.lane.b32.xlu0 %v3110, 96
      %v4958 = vpop.permute.xlu0 %4957
      %4959 = vrot.lane.b32.xlu0 %v3111, 96
      %v4960 = vpop.permute.xlu0 %4959
      %4961 = vrot.lane.b32.xlu0 %v3112, 96
      %v4962 = vpop.permute.xlu0 %4961
      %4963 = vrot.lane.b32.xlu0 %v3113, 96
      %v4964 = vpop.permute.xlu0 %4963
      %4965 = vrot.lane.b32.xlu0 %v3114, 96
      %v4966 = vpop.permute.xlu0 %4965
      %4967 = vrot.lane.b32.xlu0 %v3115, 96
      %v4968 = vpop.permute.xlu0 %4967
      %4969 = vrot.lane.b32.xlu0 %v3116, 96
      %v4970 = vpop.permute.xlu0 %4969
      %4971 = vrot.lane.b32.xlu0 %v3117, 96
      %v4972 = vpop.permute.xlu0 %4971
      %4973 = vrot.lane.b32.xlu0 %v3118, 96
      %v4974 = vpop.permute.xlu0 %4973
      %v5039 = vsel %vm416, %v2349, %v3568
      %v5040 = vsel %vm416, %v2350, %v3570
      %v5041 = vsel %vm416, %v2351, %v3572
      %v5042 = vsel %vm416, %v2352, %v3574
      %v5043 = vsel %vm416, %v2353, %v3576
      %v5044 = vsel %vm416, %v2354, %v3578
      %v5045 = vsel %vm416, %v2355, %v3580
      %v5046 = vsel %vm416, %v2356, %v3582
      %v5047 = vsel %vm416, %v2357, %v3584
      %v5048 = vsel %vm416, %v2358, %v3586
      %v5049 = vsel %vm416, %v2359, %v3588
      %v5050 = vsel %vm416, %v2360, %v3590
      %v5051 = vsel %vm416, %v2361, %v3592
      %v5052 = vsel %vm416, %v2362, %v3594
      %v5053 = vsel %vm416, %v2363, %v3596
      %v5054 = vsel %vm416, %v2364, %v3598
      %v5055 = vsel %vm416, %v2365, %v3600
      %v5056 = vsel %vm416, %v2366, %v3602
      %v5057 = vsel %vm416, %v2367, %v3604
      %v5058 = vsel %vm416, %v2368, %v3606
      %v5059 = vsel %vm416, %v2369, %v3608
      %v5060 = vsel %vm416, %v2370, %v3610
      %v5061 = vsel %vm416, %v2371, %v3612
      %v5062 = vsel %vm416, %v2372, %v3614
      %v5063 = vsel %vm416, %v2373, %v3616
      %v5064 = vsel %vm416, %v2374, %v3618
      %v5065 = vsel %vm416, %v2375, %v3620
      %v5066 = vsel %vm416, %v2376, %v3622
      %v5067 = vsel %vm416, %v2377, %v3624
      %v5068 = vsel %vm416, %v2378, %v3626
      %v5069 = vsel %vm416, %v2379, %v3628
      %v5070 = vsel %vm416, %v2380, %v3630
      %v5071 = vsel %vm416, %v2381, %v3632
      %v5072 = vsel %vm416, %v2382, %v3634
      %v5073 = vsel %vm416, %v2383, %v3636
      %v5074 = vsel %vm416, %v2384, %v3638
      %v5075 = vsel %vm416, %v2385, %v3640
      %v5076 = vsel %vm416, %v2386, %v3642
      %v5077 = vsel %vm416, %v2387, %v3644
      %v5078 = vsel %vm416, %v2388, %v3646
      %v5079 = vsel %vm416, %v2389, %v3648
      %v5080 = vsel %vm416, %v2390, %v3650
      %v5081 = vsel %vm416, %v2391, %v3652
      %v5082 = vsel %vm416, %v2392, %v3654
      %v5083 = vsel %vm416, %v2393, %v3656
      %v5084 = vsel %vm416, %v2394, %v3658
      %v5085 = vsel %vm416, %v2395, %v3660
      %v5086 = vsel %vm416, %v2396, %v3662
      %v5087 = vsel %vm416, %v2397, %v3664
      %v5088 = vsel %vm416, %v2398, %v3666
      %v5089 = vsel %vm416, %v2399, %v3668
      %v5090 = vsel %vm416, %v2400, %v3670
      %v5091 = vsel %vm416, %v2401, %v3672
      %v5092 = vsel %vm416, %v2402, %v3674
      %v5093 = vsel %vm416, %v2403, %v3676
      %v5094 = vsel %vm416, %v2404, %v3678
      %v5095 = vsel %vm416, %v2405, %v3680
      %v5096 = vsel %vm416, %v2406, %v3682
      %v5097 = vsel %vm416, %v2407, %v3684
      %v5098 = vsel %vm416, %v2408, %v3686
      %v5099 = vsel %vm416, %v2409, %v3688
      %v5100 = vsel %vm416, %v2410, %v3690
      %v5101 = vsel %vm416, %v2411, %v3692
      %v5102 = vsel %vm416, %v2412, %v3694
      %v5103 = vsel %vm434, %v5039, %v3824
      %v5104 = vsel %vm434, %v5040, %v3826
      %v5105 = vsel %vm434, %v5041, %v3828
      %v5106 = vsel %vm434, %v5042, %v3830
      %v5107 = vsel %vm434, %v5043, %v3832
      %v5108 = vsel %vm434, %v5044, %v3834
      %v5109 = vsel %vm434, %v5045, %v3836
      %v5110 = vsel %vm434, %v5046, %v3838
      %v5111 = vsel %vm434, %v5047, %v3840
      %v5112 = vsel %vm434, %v5048, %v3842
      %v5113 = vsel %vm434, %v5049, %v3844
      %v5114 = vsel %vm434, %v5050, %v3846
      %v5115 = vsel %vm434, %v5051, %v3848
      %v5116 = vsel %vm434, %v5052, %v3850
      %v5117 = vsel %vm434, %v5053, %v3852
      %v5118 = vsel %vm434, %v5054, %v3854
      %v5119 = vsel %vm434, %v5055, %v3856
      %v5120 = vsel %vm434, %v5056, %v3858
      %v5121 = vsel %vm434, %v5057, %v3860
      %v5122 = vsel %vm434, %v5058, %v3862
      %v5123 = vsel %vm434, %v5059, %v3864
      %v5124 = vsel %vm434, %v5060, %v3866
      %v5125 = vsel %vm434, %v5061, %v3868
      %v5126 = vsel %vm434, %v5062, %v3870
      %v5127 = vsel %vm434, %v5063, %v3872
      %v5128 = vsel %vm434, %v5064, %v3874
      %v5129 = vsel %vm434, %v5065, %v3876
      %v5130 = vsel %vm434, %v5066, %v3878
      %v5131 = vsel %vm434, %v5067, %v3880
      %v5132 = vsel %vm434, %v5068, %v3882
      %v5133 = vsel %vm434, %v5069, %v3884
      %v5134 = vsel %vm434, %v5070, %v3886
      %v5135 = vsel %vm434, %v5071, %v3888
      %v5136 = vsel %vm434, %v5072, %v3890
      %v5137 = vsel %vm434, %v5073, %v3892
      %v5138 = vsel %vm434, %v5074, %v3894
      %v5139 = vsel %vm434, %v5075, %v3896
      %v5140 = vsel %vm434, %v5076, %v3898
      %v5141 = vsel %vm434, %v5077, %v3900
      %v5142 = vsel %vm434, %v5078, %v3902
      %v5143 = vsel %vm434, %v5079, %v3904
      %v5144 = vsel %vm434, %v5080, %v3906
      %v5145 = vsel %vm434, %v5081, %v3908
      %v5146 = vsel %vm434, %v5082, %v3910
      %v5147 = vsel %vm434, %v5083, %v3912
      %v5148 = vsel %vm434, %v5084, %v3914
      %v5149 = vsel %vm434, %v5085, %v3916
      %v5150 = vsel %vm434, %v5086, %v3918
      %v5151 = vsel %vm434, %v5087, %v3920
      %v5152 = vsel %vm434, %v5088, %v3922
      %v5153 = vsel %vm434, %v5089, %v3924
      %v5154 = vsel %vm434, %v5090, %v3926
      %v5155 = vsel %vm434, %v5091, %v3928
      %v5156 = vsel %vm434, %v5092, %v3930
      %v5157 = vsel %vm434, %v5093, %v3932
      %v5158 = vsel %vm434, %v5094, %v3934
      %v5159 = vsel %vm434, %v5095, %v3936
      %v5160 = vsel %vm434, %v5096, %v3938
      %v5161 = vsel %vm434, %v5097, %v3940
      %v5162 = vsel %vm434, %v5098, %v3942
      %v5163 = vsel %vm434, %v5099, %v3944
      %v5164 = vsel %vm434, %v5100, %v3946
      %v5165 = vsel %vm434, %v5101, %v3948
      %v5166 = vsel %vm434, %v5102, %v3950
      %vm5167 = vcmask 785408
      %v5168 = vsel %vm5167, %v5103, %v4080
      %v5169 = vsel %vm5167, %v5104, %v4082
      %v5170 = vsel %vm5167, %v5105, %v4084
      %v5171 = vsel %vm5167, %v5106, %v4086
      %v5172 = vsel %vm5167, %v5107, %v4088
      %v5173 = vsel %vm5167, %v5108, %v4090
      %v5174 = vsel %vm5167, %v5109, %v4092
      %v5175 = vsel %vm5167, %v5110, %v4094
      %v5176 = vsel %vm5167, %v5111, %v4096
      %v5177 = vsel %vm5167, %v5112, %v4098
      %v5178 = vsel %vm5167, %v5113, %v4100
      %v5179 = vsel %vm5167, %v5114, %v4102
      %v5180 = vsel %vm5167, %v5115, %v4104
      %v5181 = vsel %vm5167, %v5116, %v4106
      %v5182 = vsel %vm5167, %v5117, %v4108
      %v5183 = vsel %vm5167, %v5118, %v4110
      %v5184 = vsel %vm5167, %v5119, %v4112
      %v5185 = vsel %vm5167, %v5120, %v4114
      %v5186 = vsel %vm5167, %v5121, %v4116
      %v5187 = vsel %vm5167, %v5122, %v4118
      %v5188 = vsel %vm5167, %v5123, %v4120
      %v5189 = vsel %vm5167, %v5124, %v4122
      %v5190 = vsel %vm5167, %v5125, %v4124
      %v5191 = vsel %vm5167, %v5126, %v4126
      %v5192 = vsel %vm5167, %v5127, %v4128
      %v5193 = vsel %vm5167, %v5128, %v4130
      %v5194 = vsel %vm5167, %v5129, %v4132
      %v5195 = vsel %vm5167, %v5130, %v4134
      %v5196 = vsel %vm5167, %v5131, %v4136
      %v5197 = vsel %vm5167, %v5132, %v4138
      %v5198 = vsel %vm5167, %v5133, %v4140
      %v5199 = vsel %vm5167, %v5134, %v4142
      %v5200 = vsel %vm5167, %v5135, %v4144
      %v5201 = vsel %vm5167, %v5136, %v4146
      %v5202 = vsel %vm5167, %v5137, %v4148
      %v5203 = vsel %vm5167, %v5138, %v4150
      %v5204 = vsel %vm5167, %v5139, %v4152
      %v5205 = vsel %vm5167, %v5140, %v4154
      %v5206 = vsel %vm5167, %v5141, %v4156
      %v5207 = vsel %vm5167, %v5142, %v4158
      %v5208 = vsel %vm5167, %v5143, %v4160
      %v5209 = vsel %vm5167, %v5144, %v4162
      %v5210 = vsel %vm5167, %v5145, %v4164
      %v5211 = vsel %vm5167, %v5146, %v4166
      %v5212 = vsel %vm5167, %v5147, %v4168
      %v5213 = vsel %vm5167, %v5148, %v4170
      %v5214 = vsel %vm5167, %v5149, %v4172
      %v5215 = vsel %vm5167, %v5150, %v4174
      %v5216 = vsel %vm5167, %v5151, %v4176
      %v5217 = vsel %vm5167, %v5152, %v4178
      %v5218 = vsel %vm5167, %v5153, %v4180
      %v5219 = vsel %vm5167, %v5154, %v4182
      %v5220 = vsel %vm5167, %v5155, %v4184
      %v5221 = vsel %vm5167, %v5156, %v4186
      %v5222 = vsel %vm5167, %v5157, %v4188
      %v5223 = vsel %vm5167, %v5158, %v4190
      %v5224 = vsel %vm5167, %v5159, %v4192
      %v5225 = vsel %vm5167, %v5160, %v4194
      %v5226 = vsel %vm5167, %v5161, %v4196
      %v5227 = vsel %vm5167, %v5162, %v4198
      %v5228 = vsel %vm5167, %v5163, %v4200
      %v5229 = vsel %vm5167, %v5164, %v4202
      %v5230 = vsel %vm5167, %v5165, %v4204
      %v5231 = vsel %vm5167, %v5166, %v4206
      %v5232 = vsel %vm416, %v2606, %v4336
      %v5233 = vsel %vm416, %v2607, %v4338
      %v5234 = vsel %vm416, %v2608, %v4340
      %v5235 = vsel %vm416, %v2609, %v4342
      %v5236 = vsel %vm416, %v2610, %v4344
      %v5237 = vsel %vm416, %v2611, %v4346
      %v5238 = vsel %vm416, %v2612, %v4348
      %v5239 = vsel %vm416, %v2613, %v4350
      %v5240 = vsel %vm416, %v2614, %v4352
      %v5241 = vsel %vm416, %v2615, %v4354
      %v5242 = vsel %vm416, %v2616, %v4356
      %v5243 = vsel %vm416, %v2617, %v4358
      %v5244 = vsel %vm416, %v2618, %v4360
      %v5245 = vsel %vm416, %v2619, %v4362
      %v5246 = vsel %vm416, %v2620, %v4364
      %v5247 = vsel %vm416, %v2621, %v4366
      %v5248 = vsel %vm416, %v2622, %v4368
      %v5249 = vsel %vm416, %v2623, %v4370
      %v5250 = vsel %vm416, %v2624, %v4372
      %v5251 = vsel %vm416, %v2625, %v4374
      %v5252 = vsel %vm416, %v2626, %v4376
      %v5253 = vsel %vm416, %v2627, %v4378
      %v5254 = vsel %vm416, %v2628, %v4380
      %v5255 = vsel %vm416, %v2629, %v4382
      %v5256 = vsel %vm416, %v2630, %v4384
      %v5257 = vsel %vm416, %v2631, %v4386
      %v5258 = vsel %vm416, %v2632, %v4388
      %v5259 = vsel %vm416, %v2633, %v4390
      %v5260 = vsel %vm416, %v2634, %v4392
      %v5261 = vsel %vm416, %v2635, %v4394
      %v5262 = vsel %vm416, %v2636, %v4396
      %v5263 = vsel %vm416, %v2637, %v4398
      %v5264 = vsel %vm416, %v2638, %v4400
      %v5265 = vsel %vm416, %v2639, %v4402
      %v5266 = vsel %vm416, %v2640, %v4404
      %v5267 = vsel %vm416, %v2641, %v4406
      %v5268 = vsel %vm416, %v2642, %v4408
      %v5269 = vsel %vm416, %v2643, %v4410
      %v5270 = vsel %vm416, %v2644, %v4412
      %v5271 = vsel %vm416, %v2645, %v4414
      %v5272 = vsel %vm416, %v2646, %v4416
      %v5273 = vsel %vm416, %v2647, %v4418
      %v5274 = vsel %vm416, %v2648, %v4420
      %v5275 = vsel %vm416, %v2649, %v4422
      %v5276 = vsel %vm416, %v2650, %v4424
      %v5277 = vsel %vm416, %v2651, %v4426
      %v5278 = vsel %vm416, %v2652, %v4428
      %v5279 = vsel %vm416, %v2653, %v4430
      %v5280 = vsel %vm416, %v2654, %v4432
      %v5281 = vsel %vm416, %v2655, %v4434
      %v5282 = vsel %vm416, %v2656, %v4436
      %v5283 = vsel %vm416, %v2657, %v4438
      %v5284 = vsel %vm416, %v2658, %v4440
      %v5285 = vsel %vm416, %v2659, %v4442
      %v5286 = vsel %vm416, %v2660, %v4444
      %v5287 = vsel %vm416, %v2661, %v4446
      %v5288 = vsel %vm416, %v2662, %v4448
      %v5289 = vsel %vm416, %v2663, %v4450
      %v5290 = vsel %vm416, %v2664, %v4452
      %v5291 = vsel %vm416, %v2665, %v4454
      %v5292 = vsel %vm416, %v2666, %v4456
      %v5293 = vsel %vm416, %v2667, %v4458
      %v5294 = vsel %vm416, %v2668, %v4460
      %v5295 = vsel %vm416, %v2669, %v4462
      %v5296 = vsel %vm434, %v5232, %v4592
      %v5297 = vsel %vm434, %v5233, %v4594
      %v5298 = vsel %vm434, %v5234, %v4596
      %v5299 = vsel %vm434, %v5235, %v4598
      %v5300 = vsel %vm434, %v5236, %v4600
      %v5301 = vsel %vm434, %v5237, %v4602
      %v5302 = vsel %vm434, %v5238, %v4604
      %v5303 = vsel %vm434, %v5239, %v4606
      %v5304 = vsel %vm434, %v5240, %v4608
      %v5305 = vsel %vm434, %v5241, %v4610
      %v5306 = vsel %vm434, %v5242, %v4612
      %v5307 = vsel %vm434, %v5243, %v4614
      %v5308 = vsel %vm434, %v5244, %v4616
      %v5309 = vsel %vm434, %v5245, %v4618
      %v5310 = vsel %vm434, %v5246, %v4620
      %v5311 = vsel %vm434, %v5247, %v4622
      %v5312 = vsel %vm434, %v5248, %v4624
      %v5313 = vsel %vm434, %v5249, %v4626
      %v5314 = vsel %vm434, %v5250, %v4628
      %v5315 = vsel %vm434, %v5251, %v4630
      %v5316 = vsel %vm434, %v5252, %v4632
      %v5317 = vsel %vm434, %v5253, %v4634
      %v5318 = vsel %vm434, %v5254, %v4636
      %v5319 = vsel %vm434, %v5255, %v4638
      %v5320 = vsel %vm434, %v5256, %v4640
      %v5321 = vsel %vm434, %v5257, %v4642
      %v5322 = vsel %vm434, %v5258, %v4644
      %v5323 = vsel %vm434, %v5259, %v4646
      %v5324 = vsel %vm434, %v5260, %v4648
      %v5325 = vsel %vm434, %v5261, %v4650
      %v5326 = vsel %vm434, %v5262, %v4652
      %v5327 = vsel %vm434, %v5263, %v4654
      %v5328 = vsel %vm434, %v5264, %v4656
      %v5329 = vsel %vm434, %v5265, %v4658
      %v5330 = vsel %vm434, %v5266, %v4660
      %v5331 = vsel %vm434, %v5267, %v4662
      %v5332 = vsel %vm434, %v5268, %v4664
      %v5333 = vsel %vm434, %v5269, %v4666
      %v5334 = vsel %vm434, %v5270, %v4668
      %v5335 = vsel %vm434, %v5271, %v4670
      %v5336 = vsel %vm434, %v5272, %v4672
      %v5337 = vsel %vm434, %v5273, %v4674
      %v5338 = vsel %vm434, %v5274, %v4676
      %v5339 = vsel %vm434, %v5275, %v4678
      %v5340 = vsel %vm434, %v5276, %v4680
      %v5341 = vsel %vm434, %v5277, %v4682
      %v5342 = vsel %vm434, %v5278, %v4684
      %v5343 = vsel %vm434, %v5279, %v4686
      %v5344 = vsel %vm434, %v5280, %v4688
      %v5345 = vsel %vm434, %v5281, %v4690
      %v5346 = vsel %vm434, %v5282, %v4692
      %v5347 = vsel %vm434, %v5283, %v4694
      %v5348 = vsel %vm434, %v5284, %v4696
      %v5349 = vsel %vm434, %v5285, %v4698
      %v5350 = vsel %vm434, %v5286, %v4700
      %v5351 = vsel %vm434, %v5287, %v4702
      %v5352 = vsel %vm434, %v5288, %v4704
      %v5353 = vsel %vm434, %v5289, %v4706
      %v5354 = vsel %vm434, %v5290, %v4708
      %v5355 = vsel %vm434, %v5291, %v4710
      %v5356 = vsel %vm434, %v5292, %v4712
      %v5357 = vsel %vm434, %v5293, %v4714
      %v5358 = vsel %vm434, %v5294, %v4716
      %v5359 = vsel %vm434, %v5295, %v4718
      %v5360 = vsel %vm5167, %v5296, %v4848
      %v5361 = vsel %vm5167, %v5297, %v4850
      %v5362 = vsel %vm5167, %v5298, %v4852
      %v5363 = vsel %vm5167, %v5299, %v4854
      %v5364 = vsel %vm5167, %v5300, %v4856
      %v5365 = vsel %vm5167, %v5301, %v4858
      %v5366 = vsel %vm5167, %v5302, %v4860
      %v5367 = vsel %vm5167, %v5303, %v4862
      %v5368 = vsel %vm5167, %v5304, %v4864
      %v5369 = vsel %vm5167, %v5305, %v4866
      %v5370 = vsel %vm5167, %v5306, %v4868
      %v5371 = vsel %vm5167, %v5307, %v4870
      %v5372 = vsel %vm5167, %v5308, %v4872
      %v5373 = vsel %vm5167, %v5309, %v4874
      %v5374 = vsel %vm5167, %v5310, %v4876
      %v5375 = vsel %vm5167, %v5311, %v4878
      %v5376 = vsel %vm5167, %v5312, %v4880
      %v5377 = vsel %vm5167, %v5313, %v4882
      %v5378 = vsel %vm5167, %v5314, %v4884
      %v5379 = vsel %vm5167, %v5315, %v4886
      %v5380 = vsel %vm5167, %v5316, %v4888
      %v5381 = vsel %vm5167, %v5317, %v4890
      %v5382 = vsel %vm5167, %v5318, %v4892
      %v5383 = vsel %vm5167, %v5319, %v4894
      %v5384 = vsel %vm5167, %v5320, %v4896
      %v5385 = vsel %vm5167, %v5321, %v4898
      %v5386 = vsel %vm5167, %v5322, %v4900
      %v5387 = vsel %vm5167, %v5323, %v4902
      %v5388 = vsel %vm5167, %v5324, %v4904
      %v5389 = vsel %vm5167, %v5325, %v4906
      %v5390 = vsel %vm5167, %v5326, %v4908
      %v5391 = vsel %vm5167, %v5327, %v4910
      %v5392 = vsel %vm5167, %v5328, %v4912
      %v5393 = vsel %vm5167, %v5329, %v4914
      %v5394 = vsel %vm5167, %v5330, %v4916
      %v5395 = vsel %vm5167, %v5331, %v4918
      %v5396 = vsel %vm5167, %v5332, %v4920
      %v5397 = vsel %vm5167, %v5333, %v4922
      %v5398 = vsel %vm5167, %v5334, %v4924
      %v5399 = vsel %vm5167, %v5335, %v4926
      %v5400 = vsel %vm5167, %v5336, %v4928
      %v5401 = vsel %vm5167, %v5337, %v4930
      %v5402 = vsel %vm5167, %v5338, %v4932
      %v5403 = vsel %vm5167, %v5339, %v4934
      %v5404 = vsel %vm5167, %v5340, %v4936
      %v5405 = vsel %vm5167, %v5341, %v4938
      %v5406 = vsel %vm5167, %v5342, %v4940
      %v5407 = vsel %vm5167, %v5343, %v4942
      %v5408 = vsel %vm5167, %v5344, %v4944
      %v5409 = vsel %vm5167, %v5345, %v4946
      %v5410 = vsel %vm5167, %v5346, %v4948
      %v5411 = vsel %vm5167, %v5347, %v4950
      %v5412 = vsel %vm5167, %v5348, %v4952
      %v5413 = vsel %vm5167, %v5349, %v4954
      %v5414 = vsel %vm5167, %v5350, %v4956
      %v5415 = vsel %vm5167, %v5351, %v4958
      %v5416 = vsel %vm5167, %v5352, %v4960
      %v5417 = vsel %vm5167, %v5353, %v4962
      %v5418 = vsel %vm5167, %v5354, %v4964
      %v5419 = vsel %vm5167, %v5355, %v4966
      %v5420 = vsel %vm5167, %v5356, %v4968
      %v5421 = vsel %vm5167, %v5357, %v4970
      %v5422 = vsel %vm5167, %v5358, %v4972
      %v5423 = vsel %vm5167, %v5359, %v4974
      %v5424 = vpack.c.bf16 %v5169, %v5168
      %v5425 = vpack.c.bf16 %v5361, %v5360
      %v5426 = vpack.c.bf16 %v3440, %v3439
      %v5427 = vpack.c.bf16 %v5171, %v5170
      %v5428 = vpack.c.bf16 %v5363, %v5362
      %v5429 = vpack.c.bf16 %v3442, %v3441
      %v5430 = vpack.c.bf16 %v5173, %v5172
      %v5431 = vpack.c.bf16 %v5365, %v5364
      %v5432 = vpack.c.bf16 %v3444, %v3443
      %v5433 = vpack.c.bf16 %v5175, %v5174
      %v5434 = vpack.c.bf16 %v5367, %v5366
      %v5435 = vpack.c.bf16 %v3446, %v3445
      %v5436 = vpack.c.bf16 %v5177, %v5176
      %v5437 = vpack.c.bf16 %v5369, %v5368
      %v5438 = vpack.c.bf16 %v3448, %v3447
      %v5439 = vpack.c.bf16 %v5179, %v5178
      %v5440 = vpack.c.bf16 %v5371, %v5370
      %v5441 = vpack.c.bf16 %v3450, %v3449
      %v5442 = vpack.c.bf16 %v5181, %v5180
      %v5443 = vpack.c.bf16 %v5373, %v5372
      %v5444 = vpack.c.bf16 %v3452, %v3451
      %v5445 = vpack.c.bf16 %v5183, %v5182
      %v5446 = vpack.c.bf16 %v5375, %v5374
      %v5447 = vpack.c.bf16 %v3454, %v3453
      %v5448 = vpack.c.bf16 %v5185, %v5184
      %v5449 = vpack.c.bf16 %v5377, %v5376
      %v5450 = vpack.c.bf16 %v3456, %v3455
      %v5451 = vpack.c.bf16 %v5187, %v5186
      %v5452 = vpack.c.bf16 %v5379, %v5378
      %v5453 = vpack.c.bf16 %v3458, %v3457
      %v5454 = vpack.c.bf16 %v5189, %v5188
      %v5455 = vpack.c.bf16 %v5381, %v5380
      %v5456 = vpack.c.bf16 %v3460, %v3459
      %v5457 = vpack.c.bf16 %v5191, %v5190
      %v5458 = vpack.c.bf16 %v5383, %v5382
      %v5459 = vpack.c.bf16 %v3462, %v3461
      %v5460 = vpack.c.bf16 %v5193, %v5192
      %v5461 = vpack.c.bf16 %v5385, %v5384
      %v5462 = vpack.c.bf16 %v3464, %v3463
      %v5463 = vpack.c.bf16 %v5195, %v5194
      %v5464 = vpack.c.bf16 %v5387, %v5386
      %v5465 = vpack.c.bf16 %v3466, %v3465
      %v5466 = vpack.c.bf16 %v5197, %v5196
      %v5467 = vpack.c.bf16 %v5389, %v5388
      %v5468 = vpack.c.bf16 %v3468, %v3467
      %v5469 = vpack.c.bf16 %v5199, %v5198
      %v5470 = vpack.c.bf16 %v5391, %v5390
      %v5471 = vpack.c.bf16 %v3470, %v3469
      %v5472 = vpack.c.bf16 %v5201, %v5200
      %v5473 = vpack.c.bf16 %v5393, %v5392
      %v5474 = vpack.c.bf16 %v3472, %v3471
      %v5475 = vpack.c.bf16 %v5203, %v5202
      %v5476 = vpack.c.bf16 %v5395, %v5394
      %v5477 = vpack.c.bf16 %v3474, %v3473
      %v5478 = vpack.c.bf16 %v5205, %v5204
      %v5479 = vpack.c.bf16 %v5397, %v5396
      %v5480 = vpack.c.bf16 %v3476, %v3475
      %v5481 = vpack.c.bf16 %v5207, %v5206
      %v5482 = vpack.c.bf16 %v5399, %v5398
      %v5483 = vpack.c.bf16 %v3478, %v3477
      %v5484 = vpack.c.bf16 %v5209, %v5208
      %v5485 = vpack.c.bf16 %v5401, %v5400
      %v5486 = vpack.c.bf16 %v3480, %v3479
      %v5487 = vpack.c.bf16 %v5211, %v5210
      %v5488 = vpack.c.bf16 %v5403, %v5402
      %v5489 = vpack.c.bf16 %v3482, %v3481
      %v5490 = vpack.c.bf16 %v5213, %v5212
      %v5491 = vpack.c.bf16 %v5405, %v5404
      %v5492 = vpack.c.bf16 %v3484, %v3483
      %v5493 = vpack.c.bf16 %v5215, %v5214
      %v5494 = vpack.c.bf16 %v5407, %v5406
      %v5495 = vpack.c.bf16 %v3486, %v3485
      %v5496 = vpack.c.bf16 %v5217, %v5216
      %v5497 = vpack.c.bf16 %v5409, %v5408
      %v5498 = vpack.c.bf16 %v3488, %v3487
      %v5499 = vpack.c.bf16 %v5219, %v5218
      %v5500 = vpack.c.bf16 %v5411, %v5410
      %v5501 = vpack.c.bf16 %v3490, %v3489
      %v5502 = vpack.c.bf16 %v5221, %v5220
      %v5503 = vpack.c.bf16 %v5413, %v5412
      %v5504 = vpack.c.bf16 %v3492, %v3491
      %v5505 = vpack.c.bf16 %v5223, %v5222
      %v5506 = vpack.c.bf16 %v5415, %v5414
      %v5507 = vpack.c.bf16 %v3494, %v3493
      %v5508 = vpack.c.bf16 %v5225, %v5224
      %v5509 = vpack.c.bf16 %v5417, %v5416
      %v5510 = vpack.c.bf16 %v3496, %v3495
      %v5511 = vpack.c.bf16 %v5227, %v5226
      %v5512 = vpack.c.bf16 %v5419, %v5418
      %v5513 = vpack.c.bf16 %v3498, %v3497
      %v5514 = vpack.c.bf16 %v5229, %v5228
      %v5515 = vpack.c.bf16 %v5421, %v5420
      %v5516 = vpack.c.bf16 %v3500, %v3499
      %v5517 = vpack.c.bf16 %v5231, %v5230
      %v5518 = vpack.c.bf16 %v5423, %v5422
      %v5519 = vpack.c.bf16 %v3502, %v3501
      %v5520 = vld [vmem:[%s4] sm:$0xf]
      %v5521 = vld [vmem:[%s4 + $0x4] sm:$0xf]
      %v5522 = vld [vmem:[%s4 + $0x8] sm:$0xf]
      %v5523 = vld [vmem:[%s4 + $0xc] sm:$0xf]
      %v5524 = vld [vmem:[%s4 + $0x10] sm:$0xf]
      %v5525 = vld [vmem:[%s4 + $0x14] sm:$0xf]
      %v5526 = vld [vmem:[%s4 + $0x18] sm:$0xf]
      %v5527 = vld [vmem:[%s4 + $0x1c] sm:$0xf]
      %v5528 = vld [vmem:[%s4 + $0x20] sm:$0xf]
      %v5529 = vld [vmem:[%s4 + $0x24] sm:$0xf]
      %v5530 = vld [vmem:[%s4 + $0x28] sm:$0xf]
      %v5531 = vld [vmem:[%s4 + $0x2c] sm:$0xf]
      %v5532 = vld [vmem:[%s4 + $0x30] sm:$0xf]
      %v5533 = vld [vmem:[%s4 + $0x34] sm:$0xf]
      %v5534 = vld [vmem:[%s4 + $0x38] sm:$0xf]
      %v5535 = vld [vmem:[%s4 + $0x3c] sm:$0xf]
      %v5536 = vld [vmem:[%s4 + $0x40] sm:$0xf]
      %v5537 = vld [vmem:[%s4 + $0x44] sm:$0xf]
      %v5538 = vld [vmem:[%s4 + $0x48] sm:$0xf]
      %v5539 = vld [vmem:[%s4 + $0x4c] sm:$0xf]
      %v5540 = vld [vmem:[%s4 + $0x50] sm:$0xf]
      %v5541 = vld [vmem:[%s4 + $0x54] sm:$0xf]
      %v5542 = vld [vmem:[%s4 + $0x58] sm:$0xf]
      %v5543 = vld [vmem:[%s4 + $0x5c] sm:$0xf]
      %v5544 = vld [vmem:[%s4 + $0x60] sm:$0xf]
      %v5545 = vld [vmem:[%s4 + $0x64] sm:$0xf]
      %v5546 = vld [vmem:[%s4 + $0x68] sm:$0xf]
      %v5547 = vld [vmem:[%s4 + $0x6c] sm:$0xf]
      %v5548 = vld [vmem:[%s4 + $0x70] sm:$0xf]
      %v5549 = vld [vmem:[%s4 + $0x74] sm:$0xf]
      %v5550 = vld [vmem:[%s4 + $0x78] sm:$0xf]
      %v5551 = vld [vmem:[%s4 + $0x7c] sm:$0xf]
      %v5552 = vld [vmem:[%s4 + $0x80] sm:$0xf]
      %v5553 = vld [vmem:[%s4 + $0x84] sm:$0xf]
      %v5554 = vld [vmem:[%s4 + $0x88] sm:$0xf]
      %v5555 = vld [vmem:[%s4 + $0x8c] sm:$0xf]
      %v5592 = vunpack.c.l.b16 %v5520
      %v5593 = vunpack.c.l.b16 %v5521
      %v5594 = vunpack.c.l.b16 %v5522
      %v5595 = vunpack.c.l.b16 %v5523
      %v5596 = vunpack.c.l.b16 %v5524
      %v5597 = vunpack.c.l.b16 %v5525
      %v5598 = vunpack.c.l.b16 %v5526
      %v5599 = vunpack.c.l.b16 %v5527
      %v5600 = vunpack.c.l.b16 %v5528
      %v5601 = vunpack.c.l.b16 %v5529
      %v5602 = vunpack.c.l.b16 %v5530
      %v5603 = vunpack.c.l.b16 %v5531
      %v5604 = vunpack.c.l.b16 %v5532
      %v5605 = vunpack.c.l.b16 %v5533
      %v5606 = vunpack.c.l.b16 %v5534
      %v5607 = vunpack.c.l.b16 %v5535
      %v5608 = vunpack.c.l.b16 %v5536
      %v5609 = vunpack.c.l.b16 %v5537
      %v5610 = vunpack.c.l.b16 %v5538
      %v5611 = vunpack.c.l.b16 %v5539
      %v5612 = vunpack.c.l.b16 %v5540
      %v5613 = vunpack.c.l.b16 %v5541
      %v5614 = vunpack.c.l.b16 %v5542
      %v5615 = vunpack.c.l.b16 %v5543
      %v5616 = vunpack.c.l.b16 %v5544
      %v5617 = vunpack.c.l.b16 %v5545
      %v5618 = vunpack.c.l.b16 %v5546
      %v5619 = vunpack.c.l.b16 %v5547
      %v5620 = vunpack.c.l.b16 %v5548
      %v5621 = vunpack.c.l.b16 %v5549
      %v5622 = vunpack.c.l.b16 %v5550
      %v5623 = vunpack.c.l.b16 %v5551
      %v5624 = vunpack.c.l.b16 %v5552
      %v5625 = vunpack.c.l.b16 %v5553
      %v5626 = vunpack.c.l.b16 %v5554
      %v5627 = vunpack.c.l.b16 %v5555
      %v5628 = vpack.c.b16 %v5593, %v5592
      %v5629 = vpack.c.b16 %v5595, %v5594
      %v5630 = vpack.c.b16 %v5597, %v5596
      %v5631 = vpack.c.b16 %v5599, %v5598
      %v5632 = vpack.c.b16 %v5601, %v5600
      %v5633 = vpack.c.b16 %v5603, %v5602
      %v5634 = vpack.c.b16 %v5605, %v5604
      %v5635 = vpack.c.b16 %v5607, %v5606
      %v5636 = vpack.c.b16 %v5609, %v5608
      %v5637 = vpack.c.b16 %v5611, %v5610
      %v5638 = vpack.c.b16 %v5613, %v5612
      %v5639 = vpack.c.b16 %v5615, %v5614
      %v5640 = vpack.c.b16 %v5617, %v5616
      %v5641 = vpack.c.b16 %v5619, %v5618
      %v5642 = vpack.c.b16 %v5621, %v5620
      %v5643 = vpack.c.b16 %v5623, %v5622
      %v5644 = vpack.c.b16 %v5625, %v5624
      %v5645 = vpack.c.b16 %v5627, %v5626
      %v5665 = vsel %vm416, %v5426, 0
      %v5668 = vsel %vm416, %v5429, 0
      %v5671 = vsel %vm416, %v5432, 0
      %v5674 = vsel %vm416, %v5435, 0
      %v5677 = vsel %vm416, %v5438, 0
      %v5680 = vsel %vm416, %v5441, 0
      %v5683 = vsel %vm416, %v5444, 0
      %v5686 = vsel %vm416, %v5447, 0
      %v5689 = vsel %vm416, %v5450, 0
      %v5692 = vsel %vm416, %v5453, 0
      %v5695 = vsel %vm416, %v5456, 0
      %v5698 = vsel %vm416, %v5459, 0
      %v5701 = vsel %vm416, %v5462, 0
      %v5704 = vsel %vm416, %v5465, 0
      %v5707 = vsel %vm416, %v5468, 0
      %v5710 = vsel %vm416, %v5471, 0
      %v5713 = vsel %vm416, %v5474, 0
      %v5716 = vsel %vm416, %v5477, 0
      %v5719 = vsel %vm416, %v5480, 0
      %v5722 = vsel %vm416, %v5483, 0
      %v5725 = vsel %vm416, %v5486, 0
      %v5728 = vsel %vm416, %v5489, 0
      %v5731 = vsel %vm416, %v5492, 0
      %v5734 = vsel %vm416, %v5495, 0
      %v5737 = vsel %vm416, %v5498, 0
      %v5740 = vsel %vm416, %v5501, 0
      %v5743 = vsel %vm416, %v5504, 0
      %v5746 = vsel %vm416, %v5507, 0
      %v5749 = vsel %vm416, %v5510, 0
      %v5752 = vsel %vm416, %v5513, 0
      %v5755 = vsel %vm416, %v5516, 0
      %v5758 = vsel %vm416, %v5519, 0
      %5760 = vmatpush.bf16.msra.mxu0 %v5635
      %5761 = vmatpush.bf16.msra.mxu0 %v5634
      %5762 = vmatpush.bf16.msra.mxu0 %v5633
      %5763 = vmatpush.bf16.msra.mxu0 %v5632
      %5764 = vmatpush.bf16.msra.mxu0 %v5631
      %5765 = vmatpush.bf16.msra.mxu0 %v5630
      %5766 = vmatpush.bf16.msra.mxu0 %v5629
      %5767 = vmatpush.bf16.msra.mxu0 %v5628
      %5768 = vmatmul.bf16.gmra.mxu0 %v5424
      %v5769 = vpop.f32.mrf.mxu0
      %v5770 = vadd.f32 0.0, %v5769
      %v5771 = vpop.f32.mrf.mxu0
      %v5772 = vadd.f32 0.0, %v5771
      %5773 = vmatmul.bf16.gmra.mxu0 %v5427
      %v5774 = vpop.f32.mrf.mxu0
      %v5775 = vadd.f32 0.0, %v5774
      %v5776 = vpop.f32.mrf.mxu0
      %v5777 = vadd.f32 0.0, %v5776
      %5778 = vmatmul.bf16.gmra.mxu0 %v5430
      %v5779 = vpop.f32.mrf.mxu0
      %v5780 = vadd.f32 0.0, %v5779
      %v5781 = vpop.f32.mrf.mxu0
      %v5782 = vadd.f32 0.0, %v5781
      %5783 = vmatmul.bf16.gmra.mxu0 %v5433
      %v5784 = vpop.f32.mrf.mxu0
      %v5785 = vadd.f32 0.0, %v5784
      %v5786 = vpop.f32.mrf.mxu0
      %v5787 = vadd.f32 0.0, %v5786
      %5788 = vmatmul.bf16.gmra.mxu0 %v5436
      %v5789 = vpop.f32.mrf.mxu0
      %v5790 = vadd.f32 0.0, %v5789
      %v5791 = vpop.f32.mrf.mxu0
      %v5792 = vadd.f32 0.0, %v5791
      %5793 = vmatmul.bf16.gmra.mxu0 %v5439
      %v5794 = vpop.f32.mrf.mxu0
      %v5795 = vadd.f32 0.0, %v5794
      %v5796 = vpop.f32.mrf.mxu0
      %v5797 = vadd.f32 0.0, %v5796
      %5798 = vmatmul.bf16.gmra.mxu0 %v5442
      %v5799 = vpop.f32.mrf.mxu0
      %v5800 = vadd.f32 0.0, %v5799
      %v5801 = vpop.f32.mrf.mxu0
      %v5802 = vadd.f32 0.0, %v5801
      %5803 = vmatmul.bf16.gmra.mxu0 %v5445
      %v5804 = vpop.f32.mrf.mxu0
      %v5805 = vadd.f32 0.0, %v5804
      %v5806 = vpop.f32.mrf.mxu0
      %v5807 = vadd.f32 0.0, %v5806
      %5808 = vmatmul.bf16.gmra.mxu0 %v5448
      %v5809 = vpop.f32.mrf.mxu0
      %v5810 = vadd.f32 0.0, %v5809
      %v5811 = vpop.f32.mrf.mxu0
      %v5812 = vadd.f32 0.0, %v5811
      %5813 = vmatmul.bf16.gmra.mxu0 %v5451
      %v5814 = vpop.f32.mrf.mxu0
      %v5815 = vadd.f32 0.0, %v5814
      %v5816 = vpop.f32.mrf.mxu0
      %v5817 = vadd.f32 0.0, %v5816
      %5818 = vmatmul.bf16.gmra.mxu0 %v5454
      %v5819 = vpop.f32.mrf.mxu0
      %v5820 = vadd.f32 0.0, %v5819
      %v5821 = vpop.f32.mrf.mxu0
      %v5822 = vadd.f32 0.0, %v5821
      %5823 = vmatmul.bf16.gmra.mxu0 %v5457
      %v5824 = vpop.f32.mrf.mxu0
      %v5825 = vadd.f32 0.0, %v5824
      %v5826 = vpop.f32.mrf.mxu0
      %v5827 = vadd.f32 0.0, %v5826
      %5828 = vmatmul.bf16.gmra.mxu0 %v5460
      %v5829 = vpop.f32.mrf.mxu0
      %v5830 = vadd.f32 0.0, %v5829
      %v5831 = vpop.f32.mrf.mxu0
      %v5832 = vadd.f32 0.0, %v5831
      %5833 = vmatmul.bf16.gmra.mxu0 %v5463
      %v5834 = vpop.f32.mrf.mxu0
      %v5835 = vadd.f32 0.0, %v5834
      %v5836 = vpop.f32.mrf.mxu0
      %v5837 = vadd.f32 0.0, %v5836
      %5838 = vmatmul.bf16.gmra.mxu0 %v5466
      %v5839 = vpop.f32.mrf.mxu0
      %v5840 = vadd.f32 0.0, %v5839
      %v5841 = vpop.f32.mrf.mxu0
      %v5842 = vadd.f32 0.0, %v5841
      %5843 = vmatmul.bf16.gmra.mxu0 %v5469
      %v5844 = vpop.f32.mrf.mxu0
      %v5845 = vadd.f32 0.0, %v5844
      %v5846 = vpop.f32.mrf.mxu0
      %v5847 = vadd.f32 0.0, %v5846
      %5848 = vmatmul.bf16.gmra.mxu0 %v5472
      %v5849 = vpop.f32.mrf.mxu0
      %v5850 = vadd.f32 0.0, %v5849
      %v5851 = vpop.f32.mrf.mxu0
      %v5852 = vadd.f32 0.0, %v5851
      %5853 = vmatmul.bf16.gmra.mxu0 %v5475
      %v5854 = vpop.f32.mrf.mxu0
      %v5855 = vadd.f32 0.0, %v5854
      %v5856 = vpop.f32.mrf.mxu0
      %v5857 = vadd.f32 0.0, %v5856
      %5858 = vmatmul.bf16.gmra.mxu0 %v5478
      %v5859 = vpop.f32.mrf.mxu0
      %v5860 = vadd.f32 0.0, %v5859
      %v5861 = vpop.f32.mrf.mxu0
      %v5862 = vadd.f32 0.0, %v5861
      %5863 = vmatmul.bf16.gmra.mxu0 %v5481
      %v5864 = vpop.f32.mrf.mxu0
      %v5865 = vadd.f32 0.0, %v5864
      %v5866 = vpop.f32.mrf.mxu0
      %v5867 = vadd.f32 0.0, %v5866
      %5868 = vmatmul.bf16.gmra.mxu0 %v5484
      %v5869 = vpop.f32.mrf.mxu0
      %v5870 = vadd.f32 0.0, %v5869
      %v5871 = vpop.f32.mrf.mxu0
      %v5872 = vadd.f32 0.0, %v5871
      %5873 = vmatmul.bf16.gmra.mxu0 %v5487
      %v5874 = vpop.f32.mrf.mxu0
      %v5875 = vadd.f32 0.0, %v5874
      %v5876 = vpop.f32.mrf.mxu0
      %v5877 = vadd.f32 0.0, %v5876
      %5878 = vmatmul.bf16.gmra.mxu0 %v5490
      %v5879 = vpop.f32.mrf.mxu0
      %v5880 = vadd.f32 0.0, %v5879
      %v5881 = vpop.f32.mrf.mxu0
      %v5882 = vadd.f32 0.0, %v5881
      %5883 = vmatmul.bf16.gmra.mxu0 %v5493
      %v5884 = vpop.f32.mrf.mxu0
      %v5885 = vadd.f32 0.0, %v5884
      %v5886 = vpop.f32.mrf.mxu0
      %v5887 = vadd.f32 0.0, %v5886
      %5888 = vmatmul.bf16.gmra.mxu0 %v5496
      %v5889 = vpop.f32.mrf.mxu0
      %v5890 = vadd.f32 0.0, %v5889
      %v5891 = vpop.f32.mrf.mxu0
      %v5892 = vadd.f32 0.0, %v5891
      %5893 = vmatmul.bf16.gmra.mxu0 %v5499
      %v5894 = vpop.f32.mrf.mxu0
      %v5895 = vadd.f32 0.0, %v5894
      %v5896 = vpop.f32.mrf.mxu0
      %v5897 = vadd.f32 0.0, %v5896
      %5898 = vmatmul.bf16.gmra.mxu0 %v5502
      %v5899 = vpop.f32.mrf.mxu0
      %v5900 = vadd.f32 0.0, %v5899
      %v5901 = vpop.f32.mrf.mxu0
      %v5902 = vadd.f32 0.0, %v5901
      %5903 = vmatmul.bf16.gmra.mxu0 %v5505
      %v5904 = vpop.f32.mrf.mxu0
      %v5905 = vadd.f32 0.0, %v5904
      %v5906 = vpop.f32.mrf.mxu0
      %v5907 = vadd.f32 0.0, %v5906
      %5908 = vmatmul.bf16.gmra.mxu0 %v5508
      %v5909 = vpop.f32.mrf.mxu0
      %v5910 = vadd.f32 0.0, %v5909
      %v5911 = vpop.f32.mrf.mxu0
      %v5912 = vadd.f32 0.0, %v5911
      %5913 = vmatmul.bf16.gmra.mxu0 %v5511
      %v5914 = vpop.f32.mrf.mxu0
      %v5915 = vadd.f32 0.0, %v5914
      %v5916 = vpop.f32.mrf.mxu0
      %v5917 = vadd.f32 0.0, %v5916
      %5918 = vmatmul.bf16.gmra.mxu0 %v5514
      %v5919 = vpop.f32.mrf.mxu0
      %v5920 = vadd.f32 0.0, %v5919
      %v5921 = vpop.f32.mrf.mxu0
      %v5922 = vadd.f32 0.0, %v5921
      %5923 = vmatmul.bf16.gmra.mxu0 %v5517
      %v5924 = vpop.f32.mrf.mxu0
      %v5925 = vadd.f32 0.0, %v5924
      %v5926 = vpop.f32.mrf.mxu0
      %v5927 = vadd.f32 0.0, %v5926
      %5928 = vdwg.mxu0
      %5929 = vmatpush.bf16.msra.mxu0 %v5643
      %5930 = vmatpush.bf16.msra.mxu0 %v5642
      %5931 = vmatpush.bf16.msra.mxu0 %v5641
      %5932 = vmatpush.bf16.msra.mxu0 %v5640
      %5933 = vmatpush.bf16.msra.mxu0 %v5639
      %5934 = vmatpush.bf16.msra.mxu0 %v5638
      %5935 = vmatpush.bf16.msra.mxu0 %v5637
      %5936 = vmatpush.bf16.msra.mxu0 %v5636
      %5937 = vmatmul.bf16.gmra.mxu0 %v5425
      %v5938 = vpop.f32.mrf.mxu0
      %v5939 = vadd.f32 %v5770, %v5938
      %v5940 = vpop.f32.mrf.mxu0
      %v5941 = vadd.f32 %v5772, %v5940
      %5942 = vmatmul.bf16.gmra.mxu0 %v5428
      %v5943 = vpop.f32.mrf.mxu0
      %v5944 = vadd.f32 %v5775, %v5943
      %v5945 = vpop.f32.mrf.mxu0
      %v5946 = vadd.f32 %v5777, %v5945
      %5947 = vmatmul.bf16.gmra.mxu0 %v5431
      %v5948 = vpop.f32.mrf.mxu0
      %v5949 = vadd.f32 %v5780, %v5948
      %v5950 = vpop.f32.mrf.mxu0
      %v5951 = vadd.f32 %v5782, %v5950
      %5952 = vmatmul.bf16.gmra.mxu0 %v5434
      %v5953 = vpop.f32.mrf.mxu0
      %v5954 = vadd.f32 %v5785, %v5953
      %v5955 = vpop.f32.mrf.mxu0
      %v5956 = vadd.f32 %v5787, %v5955
      %5957 = vmatmul.bf16.gmra.mxu0 %v5437
      %v5958 = vpop.f32.mrf.mxu0
      %v5959 = vadd.f32 %v5790, %v5958
      %v5960 = vpop.f32.mrf.mxu0
      %v5961 = vadd.f32 %v5792, %v5960
      %5962 = vmatmul.bf16.gmra.mxu0 %v5440
      %v5963 = vpop.f32.mrf.mxu0
      %v5964 = vadd.f32 %v5795, %v5963
      %v5965 = vpop.f32.mrf.mxu0
      %v5966 = vadd.f32 %v5797, %v5965
      %5967 = vmatmul.bf16.gmra.mxu0 %v5443
      %v5968 = vpop.f32.mrf.mxu0
      %v5969 = vadd.f32 %v5800, %v5968
      %v5970 = vpop.f32.mrf.mxu0
      %v5971 = vadd.f32 %v5802, %v5970
      %5972 = vmatmul.bf16.gmra.mxu0 %v5446
      %v5973 = vpop.f32.mrf.mxu0
      %v5974 = vadd.f32 %v5805, %v5973
      %v5975 = vpop.f32.mrf.mxu0
      %v5976 = vadd.f32 %v5807, %v5975
      %5977 = vmatmul.bf16.gmra.mxu0 %v5449
      %v5978 = vpop.f32.mrf.mxu0
      %v5979 = vadd.f32 %v5810, %v5978
      %v5980 = vpop.f32.mrf.mxu0
      %v5981 = vadd.f32 %v5812, %v5980
      %5982 = vmatmul.bf16.gmra.mxu0 %v5452
      %v5983 = vpop.f32.mrf.mxu0
      %v5984 = vadd.f32 %v5815, %v5983
      %v5985 = vpop.f32.mrf.mxu0
      %v5986 = vadd.f32 %v5817, %v5985
      %5987 = vmatmul.bf16.gmra.mxu0 %v5455
      %v5988 = vpop.f32.mrf.mxu0
      %v5989 = vadd.f32 %v5820, %v5988
      %v5990 = vpop.f32.mrf.mxu0
      %v5991 = vadd.f32 %v5822, %v5990
      %5992 = vmatmul.bf16.gmra.mxu0 %v5458
      %v5993 = vpop.f32.mrf.mxu0
      %v5994 = vadd.f32 %v5825, %v5993
      %v5995 = vpop.f32.mrf.mxu0
      %v5996 = vadd.f32 %v5827, %v5995
      %5997 = vmatmul.bf16.gmra.mxu0 %v5461
      %v5998 = vpop.f32.mrf.mxu0
      %v5999 = vadd.f32 %v5830, %v5998
      %v6000 = vpop.f32.mrf.mxu0
      %v6001 = vadd.f32 %v5832, %v6000
      %6002 = vmatmul.bf16.gmra.mxu0 %v5464
      %v6003 = vpop.f32.mrf.mxu0
      %v6004 = vadd.f32 %v5835, %v6003
      %v6005 = vpop.f32.mrf.mxu0
      %v6006 = vadd.f32 %v5837, %v6005
      %6007 = vmatmul.bf16.gmra.mxu0 %v5467
      %v6008 = vpop.f32.mrf.mxu0
      %v6009 = vadd.f32 %v5840, %v6008
      %v6010 = vpop.f32.mrf.mxu0
      %v6011 = vadd.f32 %v5842, %v6010
      %6012 = vmatmul.bf16.gmra.mxu0 %v5470
      %v6013 = vpop.f32.mrf.mxu0
      %v6014 = vadd.f32 %v5845, %v6013
      %v6015 = vpop.f32.mrf.mxu0
      %v6016 = vadd.f32 %v5847, %v6015
      %6017 = vmatmul.bf16.gmra.mxu0 %v5473
      %v6018 = vpop.f32.mrf.mxu0
      %v6019 = vadd.f32 %v5850, %v6018
      %v6020 = vpop.f32.mrf.mxu0
      %v6021 = vadd.f32 %v5852, %v6020
      %6022 = vmatmul.bf16.gmra.mxu0 %v5476
      %v6023 = vpop.f32.mrf.mxu0
      %v6024 = vadd.f32 %v5855, %v6023
      %v6025 = vpop.f32.mrf.mxu0
      %v6026 = vadd.f32 %v5857, %v6025
      %6027 = vmatmul.bf16.gmra.mxu0 %v5479
      %v6028 = vpop.f32.mrf.mxu0
      %v6029 = vadd.f32 %v5860, %v6028
      %v6030 = vpop.f32.mrf.mxu0
      %v6031 = vadd.f32 %v5862, %v6030
      %6032 = vmatmul.bf16.gmra.mxu0 %v5482
      %v6033 = vpop.f32.mrf.mxu0
      %v6034 = vadd.f32 %v5865, %v6033
      %v6035 = vpop.f32.mrf.mxu0
      %v6036 = vadd.f32 %v5867, %v6035
      %6037 = vmatmul.bf16.gmra.mxu0 %v5485
      %v6038 = vpop.f32.mrf.mxu0
      %v6039 = vadd.f32 %v5870, %v6038
      %v6040 = vpop.f32.mrf.mxu0
      %v6041 = vadd.f32 %v5872, %v6040
      %6042 = vmatmul.bf16.gmra.mxu0 %v5488
      %v6043 = vpop.f32.mrf.mxu0
      %v6044 = vadd.f32 %v5875, %v6043
      %v6045 = vpop.f32.mrf.mxu0
      %v6046 = vadd.f32 %v5877, %v6045
      %6047 = vmatmul.bf16.gmra.mxu0 %v5491
      %v6048 = vpop.f32.mrf.mxu0
      %v6049 = vadd.f32 %v5880, %v6048
      %v6050 = vpop.f32.mrf.mxu0
      %v6051 = vadd.f32 %v5882, %v6050
      %6052 = vmatmul.bf16.gmra.mxu0 %v5494
      %v6053 = vpop.f32.mrf.mxu0
      %v6054 = vadd.f32 %v5885, %v6053
      %v6055 = vpop.f32.mrf.mxu0
      %v6056 = vadd.f32 %v5887, %v6055
      %6057 = vmatmul.bf16.gmra.mxu0 %v5497
      %v6058 = vpop.f32.mrf.mxu0
      %v6059 = vadd.f32 %v5890, %v6058
      %v6060 = vpop.f32.mrf.mxu0
      %v6061 = vadd.f32 %v5892, %v6060
      %6062 = vmatmul.bf16.gmra.mxu0 %v5500
      %v6063 = vpop.f32.mrf.mxu0
      %v6064 = vadd.f32 %v5895, %v6063
      %v6065 = vpop.f32.mrf.mxu0
      %v6066 = vadd.f32 %v5897, %v6065
      %6067 = vmatmul.bf16.gmra.mxu0 %v5503
      %v6068 = vpop.f32.mrf.mxu0
      %v6069 = vadd.f32 %v5900, %v6068
      %v6070 = vpop.f32.mrf.mxu0
      %v6071 = vadd.f32 %v5902, %v6070
      %6072 = vmatmul.bf16.gmra.mxu0 %v5506
      %v6073 = vpop.f32.mrf.mxu0
      %v6074 = vadd.f32 %v5905, %v6073
      %v6075 = vpop.f32.mrf.mxu0
      %v6076 = vadd.f32 %v5907, %v6075
      %6077 = vmatmul.bf16.gmra.mxu0 %v5509
      %v6078 = vpop.f32.mrf.mxu0
      %v6079 = vadd.f32 %v5910, %v6078
      %v6080 = vpop.f32.mrf.mxu0
      %v6081 = vadd.f32 %v5912, %v6080
      %6082 = vmatmul.bf16.gmra.mxu0 %v5512
      %v6083 = vpop.f32.mrf.mxu0
      %v6084 = vadd.f32 %v5915, %v6083
      %v6085 = vpop.f32.mrf.mxu0
      %v6086 = vadd.f32 %v5917, %v6085
      %6087 = vmatmul.bf16.gmra.mxu0 %v5515
      %v6088 = vpop.f32.mrf.mxu0
      %v6089 = vadd.f32 %v5920, %v6088
      %v6090 = vpop.f32.mrf.mxu0
      %v6091 = vadd.f32 %v5922, %v6090
      %6092 = vmatmul.bf16.gmra.mxu0 %v5518
      %v6093 = vpop.f32.mrf.mxu0
      %v6094 = vadd.f32 %v5925, %v6093
      %v6095 = vpop.f32.mrf.mxu0
      %v6096 = vadd.f32 %v5927, %v6095
      %6097 = vdwg.mxu0
      %6098 = vmatpush.bf16.msra.mxu0 0
      %6099 = vmatpush.bf16.msra.mxu0 0
      %6100 = vmatpush.bf16.msra.mxu0 0
      %6101 = vmatpush.bf16.msra.mxu0 0
      %6102 = vmatpush.bf16.msra.mxu0 0
      %6103 = vmatpush.bf16.msra.mxu0 0
      %6104 = vmatpush.bf16.msra.mxu0 %v5645
      %6105 = vmatpush.bf16.msra.mxu0 %v5644
      %6106 = vmatmul.bf16.gmra.mxu0 %v5665
      %v6107 = vpop.f32.mrf.mxu0
      %v6108 = vadd.f32 %v5939, %v6107
      %v6109 = vpop.f32.mrf.mxu0
      %v6110 = vadd.f32 %v5941, %v6109
      %6111 = vmatmul.bf16.gmra.mxu0 %v5668
      %v6112 = vpop.f32.mrf.mxu0
      %v6113 = vadd.f32 %v5944, %v6112
      %v6114 = vpop.f32.mrf.mxu0
      %v6115 = vadd.f32 %v5946, %v6114
      %6116 = vmatmul.bf16.gmra.mxu0 %v5671
      %v6117 = vpop.f32.mrf.mxu0
      %v6118 = vadd.f32 %v5949, %v6117
      %v6119 = vpop.f32.mrf.mxu0
      %v6120 = vadd.f32 %v5951, %v6119
      %6121 = vmatmul.bf16.gmra.mxu0 %v5674
      %v6122 = vpop.f32.mrf.mxu0
      %v6123 = vadd.f32 %v5954, %v6122
      %v6124 = vpop.f32.mrf.mxu0
      %v6125 = vadd.f32 %v5956, %v6124
      %6126 = vmatmul.bf16.gmra.mxu0 %v5677
      %v6127 = vpop.f32.mrf.mxu0
      %v6128 = vadd.f32 %v5959, %v6127
      %v6129 = vpop.f32.mrf.mxu0
      %v6130 = vadd.f32 %v5961, %v6129
      %6131 = vmatmul.bf16.gmra.mxu0 %v5680
      %v6132 = vpop.f32.mrf.mxu0
      %v6133 = vadd.f32 %v5964, %v6132
      %v6134 = vpop.f32.mrf.mxu0
      %v6135 = vadd.f32 %v5966, %v6134
      %6136 = vmatmul.bf16.gmra.mxu0 %v5683
      %v6137 = vpop.f32.mrf.mxu0
      %v6138 = vadd.f32 %v5969, %v6137
      %v6139 = vpop.f32.mrf.mxu0
      %v6140 = vadd.f32 %v5971, %v6139
      %6141 = vmatmul.bf16.gmra.mxu0 %v5686
      %v6142 = vpop.f32.mrf.mxu0
      %v6143 = vadd.f32 %v5974, %v6142
      %v6144 = vpop.f32.mrf.mxu0
      %v6145 = vadd.f32 %v5976, %v6144
      %6146 = vmatmul.bf16.gmra.mxu0 %v5689
      %v6147 = vpop.f32.mrf.mxu0
      %v6148 = vadd.f32 %v5979, %v6147
      %v6149 = vpop.f32.mrf.mxu0
      %v6150 = vadd.f32 %v5981, %v6149
      %6151 = vmatmul.bf16.gmra.mxu0 %v5692
      %v6152 = vpop.f32.mrf.mxu0
      %v6153 = vadd.f32 %v5984, %v6152
      %v6154 = vpop.f32.mrf.mxu0
      %v6155 = vadd.f32 %v5986, %v6154
      %6156 = vmatmul.bf16.gmra.mxu0 %v5695
      %v6157 = vpop.f32.mrf.mxu0
      %v6158 = vadd.f32 %v5989, %v6157
      %v6159 = vpop.f32.mrf.mxu0
      %v6160 = vadd.f32 %v5991, %v6159
      %6161 = vmatmul.bf16.gmra.mxu0 %v5698
      %v6162 = vpop.f32.mrf.mxu0
      %v6163 = vadd.f32 %v5994, %v6162
      %v6164 = vpop.f32.mrf.mxu0
      %v6165 = vadd.f32 %v5996, %v6164
      %6166 = vmatmul.bf16.gmra.mxu0 %v5701
      %v6167 = vpop.f32.mrf.mxu0
      %v6168 = vadd.f32 %v5999, %v6167
      %v6169 = vpop.f32.mrf.mxu0
      %v6170 = vadd.f32 %v6001, %v6169
      %6171 = vmatmul.bf16.gmra.mxu0 %v5704
      %v6172 = vpop.f32.mrf.mxu0
      %v6173 = vadd.f32 %v6004, %v6172
      %v6174 = vpop.f32.mrf.mxu0
      %v6175 = vadd.f32 %v6006, %v6174
      %6176 = vmatmul.bf16.gmra.mxu0 %v5707
      %v6177 = vpop.f32.mrf.mxu0
      %v6178 = vadd.f32 %v6009, %v6177
      %v6179 = vpop.f32.mrf.mxu0
      %v6180 = vadd.f32 %v6011, %v6179
      %6181 = vmatmul.bf16.gmra.mxu0 %v5710
      %v6182 = vpop.f32.mrf.mxu0
      %v6183 = vadd.f32 %v6014, %v6182
      %v6184 = vpop.f32.mrf.mxu0
      %v6185 = vadd.f32 %v6016, %v6184
      %6186 = vmatmul.bf16.gmra.mxu0 %v5713
      %v6187 = vpop.f32.mrf.mxu0
      %v6188 = vadd.f32 %v6019, %v6187
      %v6189 = vpop.f32.mrf.mxu0
      %v6190 = vadd.f32 %v6021, %v6189
      %6191 = vmatmul.bf16.gmra.mxu0 %v5716
      %v6192 = vpop.f32.mrf.mxu0
      %v6193 = vadd.f32 %v6024, %v6192
      %v6194 = vpop.f32.mrf.mxu0
      %v6195 = vadd.f32 %v6026, %v6194
      %6196 = vmatmul.bf16.gmra.mxu0 %v5719
      %v6197 = vpop.f32.mrf.mxu0
      %v6198 = vadd.f32 %v6029, %v6197
      %v6199 = vpop.f32.mrf.mxu0
      %v6200 = vadd.f32 %v6031, %v6199
      %6201 = vmatmul.bf16.gmra.mxu0 %v5722
      %v6202 = vpop.f32.mrf.mxu0
      %v6203 = vadd.f32 %v6034, %v6202
      %v6204 = vpop.f32.mrf.mxu0
      %v6205 = vadd.f32 %v6036, %v6204
      %6206 = vmatmul.bf16.gmra.mxu0 %v5725
      %v6207 = vpop.f32.mrf.mxu0
      %v6208 = vadd.f32 %v6039, %v6207
      %v6209 = vpop.f32.mrf.mxu0
      %v6210 = vadd.f32 %v6041, %v6209
      %6211 = vmatmul.bf16.gmra.mxu0 %v5728
      %v6212 = vpop.f32.mrf.mxu0
      %v6213 = vadd.f32 %v6044, %v6212
      %v6214 = vpop.f32.mrf.mxu0
      %v6215 = vadd.f32 %v6046, %v6214
      %6216 = vmatmul.bf16.gmra.mxu0 %v5731
      %v6217 = vpop.f32.mrf.mxu0
      %v6218 = vadd.f32 %v6049, %v6217
      %v6219 = vpop.f32.mrf.mxu0
      %v6220 = vadd.f32 %v6051, %v6219
      %6221 = vmatmul.bf16.gmra.mxu0 %v5734
      %v6222 = vpop.f32.mrf.mxu0
      %v6223 = vadd.f32 %v6054, %v6222
      %v6224 = vpop.f32.mrf.mxu0
      %v6225 = vadd.f32 %v6056, %v6224
      %6226 = vmatmul.bf16.gmra.mxu0 %v5737
      %v6227 = vpop.f32.mrf.mxu0
      %v6228 = vadd.f32 %v6059, %v6227
      %v6229 = vpop.f32.mrf.mxu0
      %v6230 = vadd.f32 %v6061, %v6229
      %6231 = vmatmul.bf16.gmra.mxu0 %v5740
      %v6232 = vpop.f32.mrf.mxu0
      %v6233 = vadd.f32 %v6064, %v6232
      %v6234 = vpop.f32.mrf.mxu0
      %v6235 = vadd.f32 %v6066, %v6234
      %6236 = vmatmul.bf16.gmra.mxu0 %v5743
      %v6237 = vpop.f32.mrf.mxu0
      %v6238 = vadd.f32 %v6069, %v6237
      %v6239 = vpop.f32.mrf.mxu0
      %v6240 = vadd.f32 %v6071, %v6239
      %6241 = vmatmul.bf16.gmra.mxu0 %v5746
      %v6242 = vpop.f32.mrf.mxu0
      %v6243 = vadd.f32 %v6074, %v6242
      %v6244 = vpop.f32.mrf.mxu0
      %v6245 = vadd.f32 %v6076, %v6244
      %6246 = vmatmul.bf16.gmra.mxu0 %v5749
      %v6247 = vpop.f32.mrf.mxu0
      %v6248 = vadd.f32 %v6079, %v6247
      %v6249 = vpop.f32.mrf.mxu0
      %v6250 = vadd.f32 %v6081, %v6249
      %6251 = vmatmul.bf16.gmra.mxu0 %v5752
      %v6252 = vpop.f32.mrf.mxu0
      %v6253 = vadd.f32 %v6084, %v6252
      %v6254 = vpop.f32.mrf.mxu0
      %v6255 = vadd.f32 %v6086, %v6254
      %6256 = vmatmul.bf16.gmra.mxu0 %v5755
      %v6257 = vpop.f32.mrf.mxu0
      %v6258 = vadd.f32 %v6089, %v6257
      %v6259 = vpop.f32.mrf.mxu0
      %v6260 = vadd.f32 %v6091, %v6259
      %6261 = vmatmul.bf16.gmra.mxu0 %v5758
      %v6262 = vpop.f32.mrf.mxu0
      %v6263 = vadd.f32 %v6094, %v6262
      %v6264 = vpop.f32.mrf.mxu0
      %v6265 = vadd.f32 %v6096, %v6264
      %6266 = vdwg.mxu0
      %v6268 = vperm.slane %v366, 0
      %v6270 = vmul.f32 %v6108, %v6268
      %v6271 = vmul.f32 %v6110, %v6268
      %v6272 = vmul.f32 %v6113, %v6268
      %v6273 = vmul.f32 %v6115, %v6268
      %v6274 = vmul.f32 %v6118, %v6268
      %v6275 = vmul.f32 %v6120, %v6268
      %v6276 = vmul.f32 %v6123, %v6268
      %v6277 = vmul.f32 %v6125, %v6268
      %v6278 = vmul.f32 %v6128, %v6268
      %v6279 = vmul.f32 %v6130, %v6268
      %v6280 = vmul.f32 %v6133, %v6268
      %v6281 = vmul.f32 %v6135, %v6268
      %v6282 = vmul.f32 %v6138, %v6268
      %v6283 = vmul.f32 %v6140, %v6268
      %v6284 = vmul.f32 %v6143, %v6268
      %v6285 = vmul.f32 %v6145, %v6268
      %v6286 = vmul.f32 %v6148, %v6268
      %v6287 = vmul.f32 %v6150, %v6268
      %v6288 = vmul.f32 %v6153, %v6268
      %v6289 = vmul.f32 %v6155, %v6268
      %v6290 = vmul.f32 %v6158, %v6268
      %v6291 = vmul.f32 %v6160, %v6268
      %v6292 = vmul.f32 %v6163, %v6268
      %v6293 = vmul.f32 %v6165, %v6268
      %v6294 = vmul.f32 %v6168, %v6268
      %v6295 = vmul.f32 %v6170, %v6268
      %v6296 = vmul.f32 %v6173, %v6268
      %v6297 = vmul.f32 %v6175, %v6268
      %v6298 = vmul.f32 %v6178, %v6268
      %v6299 = vmul.f32 %v6180, %v6268
      %v6300 = vmul.f32 %v6183, %v6268
      %v6301 = vmul.f32 %v6185, %v6268
      %v6302 = vmul.f32 %v6188, %v6268
      %v6303 = vmul.f32 %v6190, %v6268
      %v6304 = vmul.f32 %v6193, %v6268
      %v6305 = vmul.f32 %v6195, %v6268
      %v6306 = vmul.f32 %v6198, %v6268
      %v6307 = vmul.f32 %v6200, %v6268
      %v6308 = vmul.f32 %v6203, %v6268
      %v6309 = vmul.f32 %v6205, %v6268
      %v6310 = vmul.f32 %v6208, %v6268
      %v6311 = vmul.f32 %v6210, %v6268
      %v6312 = vmul.f32 %v6213, %v6268
      %v6313 = vmul.f32 %v6215, %v6268
      %v6314 = vmul.f32 %v6218, %v6268
      %v6315 = vmul.f32 %v6220, %v6268
      %v6316 = vmul.f32 %v6223, %v6268
      %v6317 = vmul.f32 %v6225, %v6268
      %v6318 = vmul.f32 %v6228, %v6268
      %v6319 = vmul.f32 %v6230, %v6268
      %v6320 = vmul.f32 %v6233, %v6268
      %v6321 = vmul.f32 %v6235, %v6268
      %v6322 = vmul.f32 %v6238, %v6268
      %v6323 = vmul.f32 %v6240, %v6268
      %v6324 = vmul.f32 %v6243, %v6268
      %v6325 = vmul.f32 %v6245, %v6268
      %v6326 = vmul.f32 %v6248, %v6268
      %v6327 = vmul.f32 %v6250, %v6268
      %v6328 = vmul.f32 %v6253, %v6268
      %v6329 = vmul.f32 %v6255, %v6268
      %v6330 = vmul.f32 %v6258, %v6268
      %v6331 = vmul.f32 %v6260, %v6268
      %v6332 = vmul.f32 %v6263, %v6268
      %v6333 = vmul.f32 %v6265, %v6268
      %v6335 = vperm.slane %v367, 0
      %v6337 = vadd.f32 %v6270, %v6335
      %v6338 = vadd.f32 %v6271, %v6335
      %v6339 = vadd.f32 %v6272, %v6335
      %v6340 = vadd.f32 %v6273, %v6335
      %v6341 = vadd.f32 %v6274, %v6335
      %v6342 = vadd.f32 %v6275, %v6335
      %v6343 = vadd.f32 %v6276, %v6335
      %v6344 = vadd.f32 %v6277, %v6335
      %v6345 = vadd.f32 %v6278, %v6335
      %v6346 = vadd.f32 %v6279, %v6335
      %v6347 = vadd.f32 %v6280, %v6335
      %v6348 = vadd.f32 %v6281, %v6335
      %v6349 = vadd.f32 %v6282, %v6335
      %v6350 = vadd.f32 %v6283, %v6335
      %v6351 = vadd.f32 %v6284, %v6335
      %v6352 = vadd.f32 %v6285, %v6335
      %v6353 = vadd.f32 %v6286, %v6335
      %v6354 = vadd.f32 %v6287, %v6335
      %v6355 = vadd.f32 %v6288, %v6335
      %v6356 = vadd.f32 %v6289, %v6335
      %v6357 = vadd.f32 %v6290, %v6335
      %v6358 = vadd.f32 %v6291, %v6335
      %v6359 = vadd.f32 %v6292, %v6335
      %v6360 = vadd.f32 %v6293, %v6335
      %v6361 = vadd.f32 %v6294, %v6335
      %v6362 = vadd.f32 %v6295, %v6335
      %v6363 = vadd.f32 %v6296, %v6335
      %v6364 = vadd.f32 %v6297, %v6335
      %v6365 = vadd.f32 %v6298, %v6335
      %v6366 = vadd.f32 %v6299, %v6335
      %v6367 = vadd.f32 %v6300, %v6335
      %v6368 = vadd.f32 %v6301, %v6335
      %v6369 = vadd.f32 %v6302, %v6335
      %v6370 = vadd.f32 %v6303, %v6335
      %v6371 = vadd.f32 %v6304, %v6335
      %v6372 = vadd.f32 %v6305, %v6335
      %v6373 = vadd.f32 %v6306, %v6335
      %v6374 = vadd.f32 %v6307, %v6335
      %v6375 = vadd.f32 %v6308, %v6335
      %v6376 = vadd.f32 %v6309, %v6335
      %v6377 = vadd.f32 %v6310, %v6335
      %v6378 = vadd.f32 %v6311, %v6335
      %v6379 = vadd.f32 %v6312, %v6335
      %v6380 = vadd.f32 %v6313, %v6335
      %v6381 = vadd.f32 %v6314, %v6335
      %v6382 = vadd.f32 %v6315, %v6335
      %v6383 = vadd.f32 %v6316, %v6335
      %v6384 = vadd.f32 %v6317, %v6335
      %v6385 = vadd.f32 %v6318, %v6335
      %v6386 = vadd.f32 %v6319, %v6335
      %v6387 = vadd.f32 %v6320, %v6335
      %v6388 = vadd.f32 %v6321, %v6335
      %v6389 = vadd.f32 %v6322, %v6335
      %v6390 = vadd.f32 %v6323, %v6335
      %v6391 = vadd.f32 %v6324, %v6335
      %v6392 = vadd.f32 %v6325, %v6335
      %v6393 = vadd.f32 %v6326, %v6335
      %v6394 = vadd.f32 %v6327, %v6335
      %v6395 = vadd.f32 %v6328, %v6335
      %v6396 = vadd.f32 %v6329, %v6335
      %v6397 = vadd.f32 %v6330, %v6335
      %v6398 = vadd.f32 %v6331, %v6335
      %v6399 = vadd.f32 %v6332, %v6335
      %v6400 = vadd.f32 %v6333, %v6335
      %v6401 = vmax.f32 %v6337, 0.0
      %v6402 = vmax.f32 %v6338, 0.0
      %v6403 = vmax.f32 %v6339, 0.0
      %v6404 = vmax.f32 %v6340, 0.0
      %v6405 = vmax.f32 %v6341, 0.0
      %v6406 = vmax.f32 %v6342, 0.0
      %v6407 = vmax.f32 %v6343, 0.0
      %v6408 = vmax.f32 %v6344, 0.0
      %v6409 = vmax.f32 %v6345, 0.0
      %v6410 = vmax.f32 %v6346, 0.0
      %v6411 = vmax.f32 %v6347, 0.0
      %v6412 = vmax.f32 %v6348, 0.0
      %v6413 = vmax.f32 %v6349, 0.0
      %v6414 = vmax.f32 %v6350, 0.0
      %v6415 = vmax.f32 %v6351, 0.0
      %v6416 = vmax.f32 %v6352, 0.0
      %v6417 = vmax.f32 %v6353, 0.0
      %v6418 = vmax.f32 %v6354, 0.0
      %v6419 = vmax.f32 %v6355, 0.0
      %v6420 = vmax.f32 %v6356, 0.0
      %v6421 = vmax.f32 %v6357, 0.0
      %v6422 = vmax.f32 %v6358, 0.0
      %v6423 = vmax.f32 %v6359, 0.0
      %v6424 = vmax.f32 %v6360, 0.0
      %v6425 = vmax.f32 %v6361, 0.0
      %v6426 = vmax.f32 %v6362, 0.0
      %v6427 = vmax.f32 %v6363, 0.0
      %v6428 = vmax.f32 %v6364, 0.0
      %v6429 = vmax.f32 %v6365, 0.0
      %v6430 = vmax.f32 %v6366, 0.0
      %v6431 = vmax.f32 %v6367, 0.0
      %v6432 = vmax.f32 %v6368, 0.0
      %v6433 = vmax.f32 %v6369, 0.0
      %v6434 = vmax.f32 %v6370, 0.0
      %v6435 = vmax.f32 %v6371, 0.0
      %v6436 = vmax.f32 %v6372, 0.0
      %v6437 = vmax.f32 %v6373, 0.0
      %v6438 = vmax.f32 %v6374, 0.0
      %v6439 = vmax.f32 %v6375, 0.0
      %v6440 = vmax.f32 %v6376, 0.0
      %v6441 = vmax.f32 %v6377, 0.0
      %v6442 = vmax.f32 %v6378, 0.0
      %v6443 = vmax.f32 %v6379, 0.0
      %v6444 = vmax.f32 %v6380, 0.0
      %v6445 = vmax.f32 %v6381, 0.0
      %v6446 = vmax.f32 %v6382, 0.0
      %v6447 = vmax.f32 %v6383, 0.0
      %v6448 = vmax.f32 %v6384, 0.0
      %v6449 = vmax.f32 %v6385, 0.0
      %v6450 = vmax.f32 %v6386, 0.0
      %v6451 = vmax.f32 %v6387, 0.0
      %v6452 = vmax.f32 %v6388, 0.0
      %v6453 = vmax.f32 %v6389, 0.0
      %v6454 = vmax.f32 %v6390, 0.0
      %v6455 = vmax.f32 %v6391, 0.0
      %v6456 = vmax.f32 %v6392, 0.0
      %v6457 = vmax.f32 %v6393, 0.0
      %v6458 = vmax.f32 %v6394, 0.0
      %v6459 = vmax.f32 %v6395, 0.0
      %v6460 = vmax.f32 %v6396, 0.0
      %v6461 = vmax.f32 %v6397, 0.0
      %v6462 = vmax.f32 %v6398, 0.0
      %v6463 = vmax.f32 %v6399, 0.0
      %v6464 = vmax.f32 %v6400, 0.0
      %v6465 = vmax.f32 %v6401, %v6403
      %v6466 = vmax.f32 %v6402, %v6404
      %v6467 = vmax.f32 %v6405, %v6407
      %v6468 = vmax.f32 %v6406, %v6408
      %v6469 = vmax.f32 %v6409, %v6411
      %v6470 = vmax.f32 %v6410, %v6412
      %v6471 = vmax.f32 %v6413, %v6415
      %v6472 = vmax.f32 %v6414, %v6416
      %v6473 = vmax.f32 %v6417, %v6419
      %v6474 = vmax.f32 %v6418, %v6420
      %v6475 = vmax.f32 %v6421, %v6423
      %v6476 = vmax.f32 %v6422, %v6424
      %v6477 = vmax.f32 %v6425, %v6427
      %v6478 = vmax.f32 %v6426, %v6428
      %v6479 = vmax.f32 %v6429, %v6431
      %v6480 = vmax.f32 %v6430, %v6432
      %v6481 = vmax.f32 %v6433, %v6435
      %v6482 = vmax.f32 %v6434, %v6436
      %v6483 = vmax.f32 %v6437, %v6439
      %v6484 = vmax.f32 %v6438, %v6440
      %v6485 = vmax.f32 %v6441, %v6443
      %v6486 = vmax.f32 %v6442, %v6444
      %v6487 = vmax.f32 %v6445, %v6447
      %v6488 = vmax.f32 %v6446, %v6448
      %v6489 = vmax.f32 %v6449, %v6451
      %v6490 = vmax.f32 %v6450, %v6452
      %v6491 = vmax.f32 %v6453, %v6455
      %v6492 = vmax.f32 %v6454, %v6456
      %v6493 = vmax.f32 %v6457, %v6459
      %v6494 = vmax.f32 %v6458, %v6460
      %v6495 = vmax.f32 %v6461, %v6463
      %v6496 = vmax.f32 %v6462, %v6464
      %v6497 = vrot.slane %v6465, 2
      %v6498 = vrot.slane %v6467, 2
      %v6499 = vrot.slane %v6469, 2
      %v6500 = vrot.slane %v6471, 2
      %v6501 = vrot.slane %v6473, 2
      %v6502 = vrot.slane %v6475, 2
      %v6503 = vrot.slane %v6477, 2
      %v6504 = vrot.slane %v6479, 2
      %v6505 = vrot.slane %v6481, 2
      %v6506 = vrot.slane %v6483, 2
      %v6507 = vrot.slane %v6485, 2
      %v6508 = vrot.slane %v6487, 2
      %v6509 = vrot.slane %v6489, 2
      %v6510 = vrot.slane %v6491, 2
      %v6511 = vrot.slane %v6493, 2
      %v6512 = vrot.slane %v6495, 2
      %v6513 = vrot.slane %v6466, 2
      %v6514 = vrot.slane %v6468, 2
      %v6515 = vrot.slane %v6470, 2
      %v6516 = vrot.slane %v6472, 2
      %v6517 = vrot.slane %v6474, 2
      %v6518 = vrot.slane %v6476, 2
      %v6519 = vrot.slane %v6478, 2
      %v6520 = vrot.slane %v6480, 2
      %v6521 = vrot.slane %v6482, 2
      %v6522 = vrot.slane %v6484, 2
      %v6523 = vrot.slane %v6486, 2
      %v6524 = vrot.slane %v6488, 2
      %v6525 = vrot.slane %v6490, 2
      %v6526 = vrot.slane %v6492, 2
      %v6527 = vrot.slane %v6494, 2
      %v6528 = vrot.slane %v6496, 2
      %v6529 = vsel %vm2477, %v6497, %v6513
      %v6530 = vsel %vm2477, %v6498, %v6514
      %v6531 = vsel %vm2477, %v6499, %v6515
      %v6532 = vsel %vm2477, %v6500, %v6516
      %v6533 = vsel %vm2477, %v6501, %v6517
      %v6534 = vsel %vm2477, %v6502, %v6518
      %v6535 = vsel %vm2477, %v6503, %v6519
      %v6536 = vsel %vm2477, %v6504, %v6520
      %v6537 = vsel %vm2477, %v6505, %v6521
      %v6538 = vsel %vm2477, %v6506, %v6522
      %v6539 = vsel %vm2477, %v6507, %v6523
      %v6540 = vsel %vm2477, %v6508, %v6524
      %v6541 = vsel %vm2477, %v6509, %v6525
      %v6542 = vsel %vm2477, %v6510, %v6526
      %v6543 = vsel %vm2477, %v6511, %v6527
      %v6544 = vsel %vm2477, %v6512, %v6528
      %v6545 = vsel %vm2477, %v6513, %v6497
      %v6546 = vsel %vm2477, %v6514, %v6498
      %v6547 = vsel %vm2477, %v6515, %v6499
      %v6548 = vsel %vm2477, %v6516, %v6500
      %v6549 = vsel %vm2477, %v6517, %v6501
      %v6550 = vsel %vm2477, %v6518, %v6502
      %v6551 = vsel %vm2477, %v6519, %v6503
      %v6552 = vsel %vm2477, %v6520, %v6504
      %v6553 = vsel %vm2477, %v6521, %v6505
      %v6554 = vsel %vm2477, %v6522, %v6506
      %v6555 = vsel %vm2477, %v6523, %v6507
      %v6556 = vsel %vm2477, %v6524, %v6508
      %v6557 = vsel %vm2477, %v6525, %v6509
      %v6558 = vsel %vm2477, %v6526, %v6510
      %v6559 = vsel %vm2477, %v6527, %v6511
      %v6560 = vsel %vm2477, %v6528, %v6512
      %v6561 = vmax.f32 %v6465, %v6529
      %v6562 = vmax.f32 %v6466, %v6545
      %v6563 = vmax.f32 %v6467, %v6530
      %v6564 = vmax.f32 %v6468, %v6546
      %v6565 = vmax.f32 %v6469, %v6531
      %v6566 = vmax.f32 %v6470, %v6547
      %v6567 = vmax.f32 %v6471, %v6532
      %v6568 = vmax.f32 %v6472, %v6548
      %v6569 = vmax.f32 %v6473, %v6533
      %v6570 = vmax.f32 %v6474, %v6549
      %v6571 = vmax.f32 %v6475, %v6534
      %v6572 = vmax.f32 %v6476, %v6550
      %v6573 = vmax.f32 %v6477, %v6535
      %v6574 = vmax.f32 %v6478, %v6551
      %v6575 = vmax.f32 %v6479, %v6536
      %v6576 = vmax.f32 %v6480, %v6552
      %v6577 = vmax.f32 %v6481, %v6537
      %v6578 = vmax.f32 %v6482, %v6553
      %v6579 = vmax.f32 %v6483, %v6538
      %v6580 = vmax.f32 %v6484, %v6554
      %v6581 = vmax.f32 %v6485, %v6539
      %v6582 = vmax.f32 %v6486, %v6555
      %v6583 = vmax.f32 %v6487, %v6540
      %v6584 = vmax.f32 %v6488, %v6556
      %v6585 = vmax.f32 %v6489, %v6541
      %v6586 = vmax.f32 %v6490, %v6557
      %v6587 = vmax.f32 %v6491, %v6542
      %v6588 = vmax.f32 %v6492, %v6558
      %v6589 = vmax.f32 %v6493, %v6543
      %v6590 = vmax.f32 %v6494, %v6559
      %v6591 = vmax.f32 %v6495, %v6544
      %v6592 = vmax.f32 %v6496, %v6560
      %s6593 = scalar_lea.vmem [#allocation3], 16
      %6594 = vst.msk [vmem:[%s6593] sm:$0xff] %vm434, %v6561
      %6595 = vst.msk [vmem:[%s6593 + $0x8] sm:$0xff] %vm434, %v6562
      %6596 = vst.msk [vmem:[%s6593 + $0x10] sm:$0xff] %vm434, %v6563
      %6597 = vst.msk [vmem:[%s6593 + $0x18] sm:$0xff] %vm434, %v6564
      %6598 = vst.msk [vmem:[%s6593 + $0x20] sm:$0xff] %vm434, %v6565
      %6599 = vst.msk [vmem:[%s6593 + $0x28] sm:$0xff] %vm434, %v6566
      %6600 = vst.msk [vmem:[%s6593 + $0x30] sm:$0xff] %vm434, %v6567
      %6601 = vst.msk [vmem:[%s6593 + $0x38] sm:$0xff] %vm434, %v6568
      %6602 = vst.msk [vmem:[%s6593 + $0x60] sm:$0xff] %vm434, %v6569
      %6603 = vst.msk [vmem:[%s6593 + $0x68] sm:$0xff] %vm434, %v6570
      %6604 = vst.msk [vmem:[%s6593 + $0x70] sm:$0xff] %vm434, %v6571
      %6605 = vst.msk [vmem:[%s6593 + $0x78] sm:$0xff] %vm434, %v6572
      %6606 = vst.msk [vmem:[%s6593 + $0x80] sm:$0xff] %vm434, %v6573
      %6607 = vst.msk [vmem:[%s6593 + $0x88] sm:$0xff] %vm434, %v6574
      %6608 = vst.msk [vmem:[%s6593 + $0x90] sm:$0xff] %vm434, %v6575
      %6609 = vst.msk [vmem:[%s6593 + $0x98] sm:$0xff] %vm434, %v6576
      %6610 = vst.msk [vmem:[%s6593 + $0xc0] sm:$0xff] %vm434, %v6577
      %6611 = vst.msk [vmem:[%s6593 + $0xc8] sm:$0xff] %vm434, %v6578
      %6612 = vst.msk [vmem:[%s6593 + $0xd0] sm:$0xff] %vm434, %v6579
      %6613 = vst.msk [vmem:[%s6593 + $0xd8] sm:$0xff] %vm434, %v6580
      %6614 = vst.msk [vmem:[%s6593 + $0xe0] sm:$0xff] %vm434, %v6581
      %6615 = vst.msk [vmem:[%s6593 + $0xe8] sm:$0xff] %vm434, %v6582
      %6616 = vst.msk [vmem:[%s6593 + $0xf0] sm:$0xff] %vm434, %v6583
      %6617 = vst.msk [vmem:[%s6593 + $0xf8] sm:$0xff] %vm434, %v6584
      %6618 = vst.msk [vmem:[%s6593 + $0x120] sm:$0xff] %vm434, %v6585
      %6619 = vst.msk [vmem:[%s6593 + $0x128] sm:$0xff] %vm434, %v6586
      %6620 = vst.msk [vmem:[%s6593 + $0x130] sm:$0xff] %vm434, %v6587
      %6621 = vst.msk [vmem:[%s6593 + $0x138] sm:$0xff] %vm434, %v6588
      %6622 = vst.msk [vmem:[%s6593 + $0x140] sm:$0xff] %vm434, %v6589
      %6623 = vst.msk [vmem:[%s6593 + $0x148] sm:$0xff] %vm434, %v6590
      %6624 = vst.msk [vmem:[%s6593 + $0x150] sm:$0xff] %vm434, %v6591
      %6625 = vst.msk [vmem:[%s6593 + $0x158] sm:$0xff] %vm434, %v6592
      %v6626 = vld [vmem:[#allocation3] sm:$0xff]
      %v6627 = vld [vmem:[#allocation3 + $0x8] sm:$0xff]
      %v6628 = vld [vmem:[#allocation3 + $0x10] sm:$0xff]
      %v6629 = vld [vmem:[#allocation3 + $0x18] sm:$0xff]
      %v6630 = vld [vmem:[#allocation3 + $0x20] sm:$0xff]
      %v6631 = vld [vmem:[#allocation3 + $0x28] sm:$0xff]
      %v6632 = vld [vmem:[#allocation3 + $0x30] sm:$0xff]
      %v6633 = vld [vmem:[#allocation3 + $0x38] sm:$0xff]
      %v6634 = vld [vmem:[#allocation3 + $0x60] sm:$0xff]
      %v6635 = vld [vmem:[#allocation3 + $0x68] sm:$0xff]
      %v6636 = vld [vmem:[#allocation3 + $0x70] sm:$0xff]
      %v6637 = vld [vmem:[#allocation3 + $0x78] sm:$0xff]
      %v6638 = vld [vmem:[#allocation3 + $0x80] sm:$0xff]
      %v6639 = vld [vmem:[#allocation3 + $0x88] sm:$0xff]
      %v6640 = vld [vmem:[#allocation3 + $0x90] sm:$0xff]
      %v6641 = vld [vmem:[#allocation3 + $0x98] sm:$0xff]
      %v6642 = vld [vmem:[#allocation3 + $0xc0] sm:$0xff]
      %v6643 = vld [vmem:[#allocation3 + $0xc8] sm:$0xff]
      %v6644 = vld [vmem:[#allocation3 + $0xd0] sm:$0xff]
      %v6645 = vld [vmem:[#allocation3 + $0xd8] sm:$0xff]
      %v6646 = vld [vmem:[#allocation3 + $0xe0] sm:$0xff]
      %v6647 = vld [vmem:[#allocation3 + $0xe8] sm:$0xff]
      %v6648 = vld [vmem:[#allocation3 + $0xf0] sm:$0xff]
      %v6649 = vld [vmem:[#allocation3 + $0xf8] sm:$0xff]
      %v6650 = vld [vmem:[#allocation3 + $0x120] sm:$0xff]
      %v6651 = vld [vmem:[#allocation3 + $0x128] sm:$0xff]
      %v6652 = vld [vmem:[#allocation3 + $0x130] sm:$0xff]
      %v6653 = vld [vmem:[#allocation3 + $0x138] sm:$0xff]
      %v6654 = vld [vmem:[#allocation3 + $0x140] sm:$0xff]
      %v6655 = vld [vmem:[#allocation3 + $0x148] sm:$0xff]
      %v6656 = vld [vmem:[#allocation3 + $0x150] sm:$0xff]
      %v6657 = vld [vmem:[#allocation3 + $0x158] sm:$0xff]
      %v6658 = vrot.slane %v6626, 4
      %v6659 = vrot.slane %v6628, 4
      %v6660 = vrot.slane %v6630, 4
      %v6661 = vrot.slane %v6632, 4
      %v6662 = vrot.slane %v6634, 4
      %v6663 = vrot.slane %v6636, 4
      %v6664 = vrot.slane %v6638, 4
      %v6665 = vrot.slane %v6640, 4
      %v6666 = vrot.slane %v6642, 4
      %v6667 = vrot.slane %v6644, 4
      %v6668 = vrot.slane %v6646, 4
      %v6669 = vrot.slane %v6648, 4
      %v6670 = vrot.slane %v6650, 4
      %v6671 = vrot.slane %v6652, 4
      %v6672 = vrot.slane %v6654, 4
      %v6673 = vrot.slane %v6656, 4
      %v6674 = vrot.slane %v6627, 4
      %v6675 = vrot.slane %v6629, 4
      %v6676 = vrot.slane %v6631, 4
      %v6677 = vrot.slane %v6633, 4
      %v6678 = vrot.slane %v6635, 4
      %v6679 = vrot.slane %v6637, 4
      %v6680 = vrot.slane %v6639, 4
      %v6681 = vrot.slane %v6641, 4
      %v6682 = vrot.slane %v6643, 4
      %v6683 = vrot.slane %v6645, 4
      %v6684 = vrot.slane %v6647, 4
      %v6685 = vrot.slane %v6649, 4
      %v6686 = vrot.slane %v6651, 4
      %v6687 = vrot.slane %v6653, 4
      %v6688 = vrot.slane %v6655, 4
      %v6689 = vrot.slane %v6657, 4
      %vm6690 = vcmp.lt.s32.totalorder %v371, 4
      %v6691 = vsel %vm6690, %v6658, %v6674
      %v6692 = vsel %vm6690, %v6659, %v6675
      %v6693 = vsel %vm6690, %v6660, %v6676
      %v6694 = vsel %vm6690, %v6661, %v6677
      %v6695 = vsel %vm6690, %v6662, %v6678
      %v6696 = vsel %vm6690, %v6663, %v6679
      %v6697 = vsel %vm6690, %v6664, %v6680
      %v6698 = vsel %vm6690, %v6665, %v6681
      %v6699 = vsel %vm6690, %v6666, %v6682
      %v6700 = vsel %vm6690, %v6667, %v6683
      %v6701 = vsel %vm6690, %v6668, %v6684
      %v6702 = vsel %vm6690, %v6669, %v6685
      %v6703 = vsel %vm6690, %v6670, %v6686
      %v6704 = vsel %vm6690, %v6671, %v6687
      %v6705 = vsel %vm6690, %v6672, %v6688
      %v6706 = vsel %vm6690, %v6673, %v6689
      %v6707 = vsel %vm6690, %v6674, %v6658
      %v6708 = vsel %vm6690, %v6675, %v6659
      %v6709 = vsel %vm6690, %v6676, %v6660
      %v6710 = vsel %vm6690, %v6677, %v6661
      %v6711 = vsel %vm6690, %v6678, %v6662
      %v6712 = vsel %vm6690, %v6679, %v6663
      %v6713 = vsel %vm6690, %v6680, %v6664
      %v6714 = vsel %vm6690, %v6681, %v6665
      %v6715 = vsel %vm6690, %v6682, %v6666
      %v6716 = vsel %vm6690, %v6683, %v6667
      %v6717 = vsel %vm6690, %v6684, %v6668
      %v6718 = vsel %vm6690, %v6685, %v6669
      %v6719 = vsel %vm6690, %v6686, %v6670
      %v6720 = vsel %vm6690, %v6687, %v6671
      %v6721 = vsel %vm6690, %v6688, %v6672
      %v6722 = vsel %vm6690, %v6689, %v6673
      %v6723 = vmul.f32 %v6707, %v389
      %v6724 = vmul.f32 %v6691, %v390
      %v6725 = vmul.f32 %v6708, %v389
      %v6726 = vmul.f32 %v6692, %v390
      %v6727 = vmul.f32 %v6709, %v389
      %v6728 = vmul.f32 %v6693, %v390
      %v6729 = vmul.f32 %v6710, %v389
      %v6730 = vmul.f32 %v6694, %v390
      %v6731 = vmul.f32 %v6711, %v389
      %v6732 = vmul.f32 %v6695, %v390
      %v6733 = vmul.f32 %v6712, %v389
      %v6734 = vmul.f32 %v6696, %v390
      %v6735 = vmul.f32 %v6713, %v389
      %v6736 = vmul.f32 %v6697, %v390
      %v6737 = vmul.f32 %v6714, %v389
      %v6738 = vmul.f32 %v6698, %v390
      %v6739 = vmul.f32 %v6715, %v389
      %v6740 = vmul.f32 %v6699, %v390
      %v6741 = vmul.f32 %v6716, %v389
      %v6742 = vmul.f32 %v6700, %v390
      %v6743 = vmul.f32 %v6717, %v389
      %v6744 = vmul.f32 %v6701, %v390
      %v6745 = vmul.f32 %v6718, %v389
      %v6746 = vmul.f32 %v6702, %v390
      %v6747 = vmul.f32 %v6719, %v389
      %v6748 = vmul.f32 %v6703, %v390
      %v6749 = vmul.f32 %v6720, %v389
      %v6750 = vmul.f32 %v6704, %v390
      %v6751 = vmul.f32 %v6721, %v389
      %v6752 = vmul.f32 %v6705, %v390
      %v6753 = vmul.f32 %v6722, %v389
      %v6754 = vmul.f32 %v6706, %v390
      %v6755 = vmul.f32 %v6691, %v395
      %v6756 = vmul.f32 %v6707, %v396
      %v6757 = vmul.f32 %v6692, %v395
      %v6758 = vmul.f32 %v6708, %v396
      %v6759 = vmul.f32 %v6693, %v395
      %v6760 = vmul.f32 %v6709, %v396
      %v6761 = vmul.f32 %v6694, %v395
      %v6762 = vmul.f32 %v6710, %v396
      %v6763 = vmul.f32 %v6695, %v395
      %v6764 = vmul.f32 %v6711, %v396
      %v6765 = vmul.f32 %v6696, %v395
      %v6766 = vmul.f32 %v6712, %v396
      %v6767 = vmul.f32 %v6697, %v395
      %v6768 = vmul.f32 %v6713, %v396
      %v6769 = vmul.f32 %v6698, %v395
      %v6770 = vmul.f32 %v6714, %v396
      %v6771 = vmul.f32 %v6699, %v395
      %v6772 = vmul.f32 %v6715, %v396
      %v6773 = vmul.f32 %v6700, %v395
      %v6774 = vmul.f32 %v6716, %v396
      %v6775 = vmul.f32 %v6701, %v395
      %v6776 = vmul.f32 %v6717, %v396
      %v6777 = vmul.f32 %v6702, %v395
      %v6778 = vmul.f32 %v6718, %v396
      %v6779 = vmul.f32 %v6703, %v395
      %v6780 = vmul.f32 %v6719, %v396
      %v6781 = vmul.f32 %v6704, %v395
      %v6782 = vmul.f32 %v6720, %v396
      %v6783 = vmul.f32 %v6705, %v395
      %v6784 = vmul.f32 %v6721, %v396
      %v6785 = vmul.f32 %v6706, %v395
      %v6786 = vmul.f32 %v6722, %v396
      %v6787 = vld [vmem:[%s6593] sm:$0xff]
      %v6788 = vld [vmem:[%s6593 + $0x8] sm:$0xff]
      %v6789 = vld [vmem:[%s6593 + $0x10] sm:$0xff]
      %v6790 = vld [vmem:[%s6593 + $0x18] sm:$0xff]
      %v6791 = vld [vmem:[%s6593 + $0x20] sm:$0xff]
      %v6792 = vld [vmem:[%s6593 + $0x28] sm:$0xff]
      %v6793 = vld [vmem:[%s6593 + $0x30] sm:$0xff]
      %v6794 = vld [vmem:[%s6593 + $0x38] sm:$0xff]
      %v6795 = vld [vmem:[%s6593 + $0x60] sm:$0xff]
      %v6796 = vld [vmem:[%s6593 + $0x68] sm:$0xff]
      %v6797 = vld [vmem:[%s6593 + $0x70] sm:$0xff]
      %v6798 = vld [vmem:[%s6593 + $0x78] sm:$0xff]
      %v6799 = vld [vmem:[%s6593 + $0x80] sm:$0xff]
      %v6800 = vld [vmem:[%s6593 + $0x88] sm:$0xff]
      %v6801 = vld [vmem:[%s6593 + $0x90] sm:$0xff]
      %v6802 = vld [vmem:[%s6593 + $0x98] sm:$0xff]
      %v6803 = vld [vmem:[%s6593 + $0xc0] sm:$0xff]
      %v6804 = vld [vmem:[%s6593 + $0xc8] sm:$0xff]
      %v6805 = vld [vmem:[%s6593 + $0xd0] sm:$0xff]
      %v6806 = vld [vmem:[%s6593 + $0xd8] sm:$0xff]
      %v6807 = vld [vmem:[%s6593 + $0xe0] sm:$0xff]
      %v6808 = vld [vmem:[%s6593 + $0xe8] sm:$0xff]
      %v6809 = vld [vmem:[%s6593 + $0xf0] sm:$0xff]
      %v6810 = vld [vmem:[%s6593 + $0xf8] sm:$0xff]
      %v6811 = vld [vmem:[%s6593 + $0x120] sm:$0xff]
      %v6812 = vld [vmem:[%s6593 + $0x128] sm:$0xff]
      %v6813 = vld [vmem:[%s6593 + $0x130] sm:$0xff]
      %v6814 = vld [vmem:[%s6593 + $0x138] sm:$0xff]
      %v6815 = vld [vmem:[%s6593 + $0x140] sm:$0xff]
      %v6816 = vld [vmem:[%s6593 + $0x148] sm:$0xff]
      %v6817 = vld [vmem:[%s6593 + $0x150] sm:$0xff]
      %v6818 = vld [vmem:[%s6593 + $0x158] sm:$0xff]
      %v6819 = vrot.slane %v6787, 4
      %v6820 = vrot.slane %v6789, 4
      %v6821 = vrot.slane %v6791, 4
      %v6822 = vrot.slane %v6793, 4
      %v6823 = vrot.slane %v6795, 4
      %v6824 = vrot.slane %v6797, 4
      %v6825 = vrot.slane %v6799, 4
      %v6826 = vrot.slane %v6801, 4
      %v6827 = vrot.slane %v6803, 4
      %v6828 = vrot.slane %v6805, 4
      %v6829 = vrot.slane %v6807, 4
      %v6830 = vrot.slane %v6809, 4
      %v6831 = vrot.slane %v6811, 4
      %v6832 = vrot.slane %v6813, 4
      %v6833 = vrot.slane %v6815, 4
      %v6834 = vrot.slane %v6817, 4
      %v6835 = vrot.slane %v6788, 4
      %v6836 = vrot.slane %v6790, 4
      %v6837 = vrot.slane %v6792, 4
      %v6838 = vrot.slane %v6794, 4
      %v6839 = vrot.slane %v6796, 4
      %v6840 = vrot.slane %v6798, 4
      %v6841 = vrot.slane %v6800, 4
      %v6842 = vrot.slane %v6802, 4
      %v6843 = vrot.slane %v6804, 4
      %v6844 = vrot.slane %v6806, 4
      %v6845 = vrot.slane %v6808, 4
      %v6846 = vrot.slane %v6810, 4
      %v6847 = vrot.slane %v6812, 4
      %v6848 = vrot.slane %v6814, 4
      %v6849 = vrot.slane %v6816, 4
      %v6850 = vrot.slane %v6818, 4
      %v6851 = vsel %vm6690, %v6819, %v6835
      %v6852 = vsel %vm6690, %v6820, %v6836
      %v6853 = vsel %vm6690, %v6821, %v6837
      %v6854 = vsel %vm6690, %v6822, %v6838
      %v6855 = vsel %vm6690, %v6823, %v6839
      %v6856 = vsel %vm6690, %v6824, %v6840
      %v6857 = vsel %vm6690, %v6825, %v6841
      %v6858 = vsel %vm6690, %v6826, %v6842
      %v6859 = vsel %vm6690, %v6827, %v6843
      %v6860 = vsel %vm6690, %v6828, %v6844
      %v6861 = vsel %vm6690, %v6829, %v6845
      %v6862 = vsel %vm6690, %v6830, %v6846
      %v6863 = vsel %vm6690, %v6831, %v6847
      %v6864 = vsel %vm6690, %v6832, %v6848
      %v6865 = vsel %vm6690, %v6833, %v6849
      %v6866 = vsel %vm6690, %v6834, %v6850
      %v6867 = vsel %vm6690, %v6835, %v6819
      %v6868 = vsel %vm6690, %v6836, %v6820
      %v6869 = vsel %vm6690, %v6837, %v6821
      %v6870 = vsel %vm6690, %v6838, %v6822
      %v6871 = vsel %vm6690, %v6839, %v6823
      %v6872 = vsel %vm6690, %v6840, %v6824
      %v6873 = vsel %vm6690, %v6841, %v6825
      %v6874 = vsel %vm6690, %v6842, %v6826
      %v6875 = vsel %vm6690, %v6843, %v6827
      %v6876 = vsel %vm6690, %v6844, %v6828
      %v6877 = vsel %vm6690, %v6845, %v6829
      %v6878 = vsel %vm6690, %v6846, %v6830
      %v6879 = vsel %vm6690, %v6847, %v6831
      %v6880 = vsel %vm6690, %v6848, %v6832
      %v6881 = vsel %vm6690, %v6849, %v6833
      %v6882 = vsel %vm6690, %v6850, %v6834
      %v6883 = vmul.f32 %v6867, %v389
      %v6884 = vmul.f32 %v6851, %v390
      %v6885 = vmul.f32 %v6868, %v389
      %v6886 = vmul.f32 %v6852, %v390
      %v6887 = vmul.f32 %v6869, %v389
      %v6888 = vmul.f32 %v6853, %v390
      %v6889 = vmul.f32 %v6870, %v389
      %v6890 = vmul.f32 %v6854, %v390
      %v6891 = vmul.f32 %v6871, %v389
      %v6892 = vmul.f32 %v6855, %v390
      %v6893 = vmul.f32 %v6872, %v389
      %v6894 = vmul.f32 %v6856, %v390
      %v6895 = vmul.f32 %v6873, %v389
      %v6896 = vmul.f32 %v6857, %v390
      %v6897 = vmul.f32 %v6874, %v389
      %v6898 = vmul.f32 %v6858, %v390
      %v6899 = vmul.f32 %v6875, %v389
      %v6900 = vmul.f32 %v6859, %v390
      %v6901 = vmul.f32 %v6876, %v389
      %v6902 = vmul.f32 %v6860, %v390
      %v6903 = vmul.f32 %v6877, %v389
      %v6904 = vmul.f32 %v6861, %v390
      %v6905 = vmul.f32 %v6878, %v389
      %v6906 = vmul.f32 %v6862, %v390
      %v6907 = vmul.f32 %v6879, %v389
      %v6908 = vmul.f32 %v6863, %v390
      %v6909 = vmul.f32 %v6880, %v389
      %v6910 = vmul.f32 %v6864, %v390
      %v6911 = vmul.f32 %v6881, %v389
      %v6912 = vmul.f32 %v6865, %v390
      %v6913 = vmul.f32 %v6882, %v389
      %v6914 = vmul.f32 %v6866, %v390
      %v6915 = vmul.f32 %v6851, %v395
      %v6916 = vmul.f32 %v6867, %v396
      %v6917 = vmul.f32 %v6852, %v395
      %v6918 = vmul.f32 %v6868, %v396
      %v6919 = vmul.f32 %v6853, %v395
      %v6920 = vmul.f32 %v6869, %v396
      %v6921 = vmul.f32 %v6854, %v395
      %v6922 = vmul.f32 %v6870, %v396
      %v6923 = vmul.f32 %v6855, %v395
      %v6924 = vmul.f32 %v6871, %v396
      %v6925 = vmul.f32 %v6856, %v395
      %v6926 = vmul.f32 %v6872, %v396
      %v6927 = vmul.f32 %v6857, %v395
      %v6928 = vmul.f32 %v6873, %v396
      %v6929 = vmul.f32 %v6858, %v395
      %v6930 = vmul.f32 %v6874, %v396
      %v6931 = vmul.f32 %v6859, %v395
      %v6932 = vmul.f32 %v6875, %v396
      %v6933 = vmul.f32 %v6860, %v395
      %v6934 = vmul.f32 %v6876, %v396
      %v6935 = vmul.f32 %v6861, %v395
      %v6936 = vmul.f32 %v6877, %v396
      %v6937 = vmul.f32 %v6862, %v395
      %v6938 = vmul.f32 %v6878, %v396
      %v6939 = vmul.f32 %v6863, %v395
      %v6940 = vmul.f32 %v6879, %v396
      %v6941 = vmul.f32 %v6864, %v395
      %v6942 = vmul.f32 %v6880, %v396
      %v6943 = vmul.f32 %v6865, %v395
      %v6944 = vmul.f32 %v6881, %v396
      %v6945 = vmul.f32 %v6866, %v395
      %v6946 = vmul.f32 %v6882, %v396
      %s6947 = scalar_lea.vmem [#allocation3], 32
      %v6948 = vld [vmem:[%s6947] sm:$0xff]
      %v6949 = vld [vmem:[%s6947 + $0x8] sm:$0xff]
      %v6950 = vld [vmem:[%s6947 + $0x10] sm:$0xff]
      %v6951 = vld [vmem:[%s6947 + $0x18] sm:$0xff]
      %v6952 = vld [vmem:[%s6947 + $0x20] sm:$0xff]
      %v6953 = vld [vmem:[%s6947 + $0x28] sm:$0xff]
      %v6954 = vld [vmem:[%s6947 + $0x30] sm:$0xff]
      %v6955 = vld [vmem:[%s6947 + $0x38] sm:$0xff]
      %v6956 = vld [vmem:[%s6947 + $0x60] sm:$0xff]
      %v6957 = vld [vmem:[%s6947 + $0x68] sm:$0xff]
      %v6958 = vld [vmem:[%s6947 + $0x70] sm:$0xff]
      %v6959 = vld [vmem:[%s6947 + $0x78] sm:$0xff]
      %v6960 = vld [vmem:[%s6947 + $0x80] sm:$0xff]
      %v6961 = vld [vmem:[%s6947 + $0x88] sm:$0xff]
      %v6962 = vld [vmem:[%s6947 + $0x90] sm:$0xff]
      %v6963 = vld [vmem:[%s6947 + $0x98] sm:$0xff]
      %v6964 = vld [vmem:[%s6947 + $0xc0] sm:$0xff]
      %v6965 = vld [vmem:[%s6947 + $0xc8] sm:$0xff]
      %v6966 = vld [vmem:[%s6947 + $0xd0] sm:$0xff]
      %v6967 = vld [vmem:[%s6947 + $0xd8] sm:$0xff]
      %v6968 = vld [vmem:[%s6947 + $0xe0] sm:$0xff]
      %v6969 = vld [vmem:[%s6947 + $0xe8] sm:$0xff]
      %v6970 = vld [vmem:[%s6947 + $0xf0] sm:$0xff]
      %v6971 = vld [vmem:[%s6947 + $0xf8] sm:$0xff]
      %v6972 = vld [vmem:[%s6947 + $0x120] sm:$0xff]
      %v6973 = vld [vmem:[%s6947 + $0x128] sm:$0xff]
      %v6974 = vld [vmem:[%s6947 + $0x130] sm:$0xff]
      %v6975 = vld [vmem:[%s6947 + $0x138] sm:$0xff]
      %v6976 = vld [vmem:[%s6947 + $0x140] sm:$0xff]
      %v6977 = vld [vmem:[%s6947 + $0x148] sm:$0xff]
      %v6978 = vld [vmem:[%s6947 + $0x150] sm:$0xff]
      %v6979 = vld [vmem:[%s6947 + $0x158] sm:$0xff]
      %v6980 = vrot.slane %v6948, 4
      %v6981 = vrot.slane %v6950, 4
      %v6982 = vrot.slane %v6952, 4
      %v6983 = vrot.slane %v6954, 4
      %v6984 = vrot.slane %v6956, 4
      %v6985 = vrot.slane %v6958, 4
      %v6986 = vrot.slane %v6960, 4
      %v6987 = vrot.slane %v6962, 4
      %v6988 = vrot.slane %v6964, 4
      %v6989 = vrot.slane %v6966, 4
      %v6990 = vrot.slane %v6968, 4
      %v6991 = vrot.slane %v6970, 4
      %v6992 = vrot.slane %v6972, 4
      %v6993 = vrot.slane %v6974, 4
      %v6994 = vrot.slane %v6976, 4
      %v6995 = vrot.slane %v6978, 4
      %v6996 = vrot.slane %v6949, 4
      %v6997 = vrot.slane %v6951, 4
      %v6998 = vrot.slane %v6953, 4
      %v6999 = vrot.slane %v6955, 4
      %v7000 = vrot.slane %v6957, 4
      %v7001 = vrot.slane %v6959, 4
      %v7002 = vrot.slane %v6961, 4
      %v7003 = vrot.slane %v6963, 4
      %v7004 = vrot.slane %v6965, 4
      %v7005 = vrot.slane %v6967, 4
      %v7006 = vrot.slane %v6969, 4
      %v7007 = vrot.slane %v6971, 4
      %v7008 = vrot.slane %v6973, 4
      %v7009 = vrot.slane %v6975, 4
      %v7010 = vrot.slane %v6977, 4
      %v7011 = vrot.slane %v6979, 4
      %v7012 = vsel %vm6690, %v6980, %v6996
      %v7013 = vsel %vm6690, %v6981, %v6997
      %v7014 = vsel %vm6690, %v6982, %v6998
      %v7015 = vsel %vm6690, %v6983, %v6999
      %v7016 = vsel %vm6690, %v6984, %v7000
      %v7017 = vsel %vm6690, %v6985, %v7001
      %v7018 = vsel %vm6690, %v6986, %v7002
      %v7019 = vsel %vm6690, %v6987, %v7003
      %v7020 = vsel %vm6690, %v6988, %v7004
      %v7021 = vsel %vm6690, %v6989, %v7005
      %v7022 = vsel %vm6690, %v6990, %v7006
      %v7023 = vsel %vm6690, %v6991, %v7007
      %v7024 = vsel %vm6690, %v6992, %v7008
      %v7025 = vsel %vm6690, %v6993, %v7009
      %v7026 = vsel %vm6690, %v6994, %v7010
      %v7027 = vsel %vm6690, %v6995, %v7011
      %v7028 = vsel %vm6690, %v6996, %v6980
      %v7029 = vsel %vm6690, %v6997, %v6981
      %v7030 = vsel %vm6690, %v6998, %v6982
      %v7031 = vsel %vm6690, %v6999, %v6983
      %v7032 = vsel %vm6690, %v7000, %v6984
      %v7033 = vsel %vm6690, %v7001, %v6985
      %v7034 = vsel %vm6690, %v7002, %v6986
      %v7035 = vsel %vm6690, %v7003, %v6987
      %v7036 = vsel %vm6690, %v7004, %v6988
      %v7037 = vsel %vm6690, %v7005, %v6989
      %v7038 = vsel %vm6690, %v7006, %v6990
      %v7039 = vsel %vm6690, %v7007, %v6991
      %v7040 = vsel %vm6690, %v7008, %v6992
      %v7041 = vsel %vm6690, %v7009, %v6993
      %v7042 = vsel %vm6690, %v7010, %v6994
      %v7043 = vsel %vm6690, %v7011, %v6995
      %v7044 = vmul.f32 %v7028, %v389
      %v7045 = vmul.f32 %v7012, %v390
      %v7046 = vmul.f32 %v7029, %v389
      %v7047 = vmul.f32 %v7013, %v390
      %v7048 = vmul.f32 %v7030, %v389
      %v7049 = vmul.f32 %v7014, %v390
      %v7050 = vmul.f32 %v7031, %v389
      %v7051 = vmul.f32 %v7015, %v390
      %v7052 = vmul.f32 %v7032, %v389
      %v7053 = vmul.f32 %v7016, %v390
      %v7054 = vmul.f32 %v7033, %v389
      %v7055 = vmul.f32 %v7017, %v390
      %v7056 = vmul.f32 %v7034, %v389
      %v7057 = vmul.f32 %v7018, %v390
      %v7058 = vmul.f32 %v7035, %v389
      %v7059 = vmul.f32 %v7019, %v390
      %v7060 = vmul.f32 %v7036, %v389
      %v7061 = vmul.f32 %v7020, %v390
      %v7062 = vmul.f32 %v7037, %v389
      %v7063 = vmul.f32 %v7021, %v390
      %v7064 = vmul.f32 %v7038, %v389
      %v7065 = vmul.f32 %v7022, %v390
      %v7066 = vmul.f32 %v7039, %v389
      %v7067 = vmul.f32 %v7023, %v390
      %v7068 = vmul.f32 %v7040, %v389
      %v7069 = vmul.f32 %v7024, %v390
      %v7070 = vmul.f32 %v7041, %v389
      %v7071 = vmul.f32 %v7025, %v390
      %v7072 = vmul.f32 %v7042, %v389
      %v7073 = vmul.f32 %v7026, %v390
      %v7074 = vmul.f32 %v7043, %v389
      %v7075 = vmul.f32 %v7027, %v390
      %v7076 = vmul.f32 %v7012, %v395
      %v7077 = vmul.f32 %v7028, %v396
      %v7078 = vmul.f32 %v7013, %v395
      %v7079 = vmul.f32 %v7029, %v396
      %v7080 = vmul.f32 %v7014, %v395
      %v7081 = vmul.f32 %v7030, %v396
      %v7082 = vmul.f32 %v7015, %v395
      %v7083 = vmul.f32 %v7031, %v396
      %v7084 = vmul.f32 %v7016, %v395
      %v7085 = vmul.f32 %v7032, %v396
      %v7086 = vmul.f32 %v7017, %v395
      %v7087 = vmul.f32 %v7033, %v396
      %v7088 = vmul.f32 %v7018, %v395
      %v7089 = vmul.f32 %v7034, %v396
      %v7090 = vmul.f32 %v7019, %v395
      %v7091 = vmul.f32 %v7035, %v396
      %v7092 = vmul.f32 %v7020, %v395
      %v7093 = vmul.f32 %v7036, %v396
      %v7094 = vmul.f32 %v7021, %v395
      %v7095 = vmul.f32 %v7037, %v396
      %v7096 = vmul.f32 %v7022, %v395
      %v7097 = vmul.f32 %v7038, %v396
      %v7098 = vmul.f32 %v7023, %v395
      %v7099 = vmul.f32 %v7039, %v396
      %v7100 = vmul.f32 %v7024, %v395
      %v7101 = vmul.f32 %v7040, %v396
      %v7102 = vmul.f32 %v7025, %v395
      %v7103 = vmul.f32 %v7041, %v396
      %v7104 = vmul.f32 %v7026, %v395
      %v7105 = vmul.f32 %v7042, %v396
      %v7106 = vmul.f32 %v7027, %v395
      %v7107 = vmul.f32 %v7043, %v396
      %7140 = vrot.lane.b32.xlu0 %v6626, 64
      %v7141 = vpop.permute.xlu0 %7140
      %7142 = vrot.lane.b32.xlu0 %v6627, 64
      %v7143 = vpop.permute.xlu0 %7142
      %7144 = vrot.lane.b32.xlu0 %v6628, 64
      %v7145 = vpop.permute.xlu0 %7144
      %7146 = vrot.lane.b32.xlu0 %v6629, 64
      %v7147 = vpop.permute.xlu0 %7146
      %7148 = vrot.lane.b32.xlu0 %v6630, 64
      %v7149 = vpop.permute.xlu0 %7148
      %7150 = vrot.lane.b32.xlu0 %v6631, 64
      %v7151 = vpop.permute.xlu0 %7150
      %7152 = vrot.lane.b32.xlu0 %v6632, 64
      %v7153 = vpop.permute.xlu0 %7152
      %7154 = vrot.lane.b32.xlu0 %v6633, 64
      %v7155 = vpop.permute.xlu0 %7154
      %7156 = vrot.lane.b32.xlu0 %v6634, 64
      %v7157 = vpop.permute.xlu0 %7156
      %7158 = vrot.lane.b32.xlu0 %v6635, 64
      %v7159 = vpop.permute.xlu0 %7158
      %7160 = vrot.lane.b32.xlu0 %v6636, 64
      %v7161 = vpop.permute.xlu0 %7160
      %7162 = vrot.lane.b32.xlu0 %v6637, 64
      %v7163 = vpop.permute.xlu0 %7162
      %7164 = vrot.lane.b32.xlu0 %v6638, 64
      %v7165 = vpop.permute.xlu0 %7164
      %7166 = vrot.lane.b32.xlu0 %v6639, 64
      %v7167 = vpop.permute.xlu0 %7166
      %7168 = vrot.lane.b32.xlu0 %v6640, 64
      %v7169 = vpop.permute.xlu0 %7168
      %7170 = vrot.lane.b32.xlu0 %v6641, 64
      %v7171 = vpop.permute.xlu0 %7170
      %7172 = vrot.lane.b32.xlu0 %v6642, 64
      %v7173 = vpop.permute.xlu0 %7172
      %7174 = vrot.lane.b32.xlu0 %v6643, 64
      %v7175 = vpop.permute.xlu0 %7174
      %7176 = vrot.lane.b32.xlu0 %v6644, 64
      %v7177 = vpop.permute.xlu0 %7176
      %7178 = vrot.lane.b32.xlu0 %v6645, 64
      %v7179 = vpop.permute.xlu0 %7178
      %7180 = vrot.lane.b32.xlu0 %v6646, 64
      %v7181 = vpop.permute.xlu0 %7180
      %7182 = vrot.lane.b32.xlu0 %v6647, 64
      %v7183 = vpop.permute.xlu0 %7182
      %7184 = vrot.lane.b32.xlu0 %v6648, 64
      %v7185 = vpop.permute.xlu0 %7184
      %7186 = vrot.lane.b32.xlu0 %v6649, 64
      %v7187 = vpop.permute.xlu0 %7186
      %7188 = vrot.lane.b32.xlu0 %v6650, 64
      %v7189 = vpop.permute.xlu0 %7188
      %7190 = vrot.lane.b32.xlu0 %v6651, 64
      %v7191 = vpop.permute.xlu0 %7190
      %7192 = vrot.lane.b32.xlu0 %v6652, 64
      %v7193 = vpop.permute.xlu0 %7192
      %7194 = vrot.lane.b32.xlu0 %v6653, 64
      %v7195 = vpop.permute.xlu0 %7194
      %7196 = vrot.lane.b32.xlu0 %v6654, 64
      %v7197 = vpop.permute.xlu0 %7196
      %7198 = vrot.lane.b32.xlu0 %v6655, 64
      %v7199 = vpop.permute.xlu0 %7198
      %7200 = vrot.lane.b32.xlu0 %v6656, 64
      %v7201 = vpop.permute.xlu0 %7200
      %7202 = vrot.lane.b32.xlu0 %v6657, 64
      %v7203 = vpop.permute.xlu0 %7202
      %7268 = vrot.lane.b32.xlu0 %v6883, 64
      %v7269 = vpop.permute.xlu0 %7268
      %7270 = vrot.lane.b32.xlu0 %v6884, 64
      %v7271 = vpop.permute.xlu0 %7270
      %7272 = vrot.lane.b32.xlu0 %v6885, 64
      %v7273 = vpop.permute.xlu0 %7272
      %7274 = vrot.lane.b32.xlu0 %v6886, 64
      %v7275 = vpop.permute.xlu0 %7274
      %7276 = vrot.lane.b32.xlu0 %v6887, 64
      %v7277 = vpop.permute.xlu0 %7276
      %7278 = vrot.lane.b32.xlu0 %v6888, 64
      %v7279 = vpop.permute.xlu0 %7278
      %7280 = vrot.lane.b32.xlu0 %v6889, 64
      %v7281 = vpop.permute.xlu0 %7280
      %7282 = vrot.lane.b32.xlu0 %v6890, 64
      %v7283 = vpop.permute.xlu0 %7282
      %7284 = vrot.lane.b32.xlu0 %v6891, 64
      %v7285 = vpop.permute.xlu0 %7284
      %7286 = vrot.lane.b32.xlu0 %v6892, 64
      %v7287 = vpop.permute.xlu0 %7286
      %7288 = vrot.lane.b32.xlu0 %v6893, 64
      %v7289 = vpop.permute.xlu0 %7288
      %7290 = vrot.lane.b32.xlu0 %v6894, 64
      %v7291 = vpop.permute.xlu0 %7290
      %7292 = vrot.lane.b32.xlu0 %v6895, 64
      %v7293 = vpop.permute.xlu0 %7292
      %7294 = vrot.lane.b32.xlu0 %v6896, 64
      %v7295 = vpop.permute.xlu0 %7294
      %7296 = vrot.lane.b32.xlu0 %v6897, 64
      %v7297 = vpop.permute.xlu0 %7296
      %7298 = vrot.lane.b32.xlu0 %v6898, 64
      %v7299 = vpop.permute.xlu0 %7298
      %7300 = vrot.lane.b32.xlu0 %v6899, 64
      %v7301 = vpop.permute.xlu0 %7300
      %7302 = vrot.lane.b32.xlu0 %v6900, 64
      %v7303 = vpop.permute.xlu0 %7302
      %7304 = vrot.lane.b32.xlu0 %v6901, 64
      %v7305 = vpop.permute.xlu0 %7304
      %7306 = vrot.lane.b32.xlu0 %v6902, 64
      %v7307 = vpop.permute.xlu0 %7306
      %7308 = vrot.lane.b32.xlu0 %v6903, 64
      %v7309 = vpop.permute.xlu0 %7308
      %7310 = vrot.lane.b32.xlu0 %v6904, 64
      %v7311 = vpop.permute.xlu0 %7310
      %7312 = vrot.lane.b32.xlu0 %v6905, 64
      %v7313 = vpop.permute.xlu0 %7312
      %7314 = vrot.lane.b32.xlu0 %v6906, 64
      %v7315 = vpop.permute.xlu0 %7314
      %7316 = vrot.lane.b32.xlu0 %v6907, 64
      %v7317 = vpop.permute.xlu0 %7316
      %7318 = vrot.lane.b32.xlu0 %v6908, 64
      %v7319 = vpop.permute.xlu0 %7318
      %7320 = vrot.lane.b32.xlu0 %v6909, 64
      %v7321 = vpop.permute.xlu0 %7320
      %7322 = vrot.lane.b32.xlu0 %v6910, 64
      %v7323 = vpop.permute.xlu0 %7322
      %7324 = vrot.lane.b32.xlu0 %v6911, 64
      %v7325 = vpop.permute.xlu0 %7324
      %7326 = vrot.lane.b32.xlu0 %v6912, 64
      %v7327 = vpop.permute.xlu0 %7326
      %7328 = vrot.lane.b32.xlu0 %v6913, 64
      %v7329 = vpop.permute.xlu0 %7328
      %7330 = vrot.lane.b32.xlu0 %v6914, 64
      %v7331 = vpop.permute.xlu0 %7330
      %7396 = vrot.lane.b32.xlu0 %v6915, 64
      %v7397 = vpop.permute.xlu0 %7396
      %7398 = vrot.lane.b32.xlu0 %v6916, 64
      %v7399 = vpop.permute.xlu0 %7398
      %7400 = vrot.lane.b32.xlu0 %v6917, 64
      %v7401 = vpop.permute.xlu0 %7400
      %7402 = vrot.lane.b32.xlu0 %v6918, 64
      %v7403 = vpop.permute.xlu0 %7402
      %7404 = vrot.lane.b32.xlu0 %v6919, 64
      %v7405 = vpop.permute.xlu0 %7404
      %7406 = vrot.lane.b32.xlu0 %v6920, 64
      %v7407 = vpop.permute.xlu0 %7406
      %7408 = vrot.lane.b32.xlu0 %v6921, 64
      %v7409 = vpop.permute.xlu0 %7408
      %7410 = vrot.lane.b32.xlu0 %v6922, 64
      %v7411 = vpop.permute.xlu0 %7410
      %7412 = vrot.lane.b32.xlu0 %v6923, 64
      %v7413 = vpop.permute.xlu0 %7412
      %7414 = vrot.lane.b32.xlu0 %v6924, 64
      %v7415 = vpop.permute.xlu0 %7414
      %7416 = vrot.lane.b32.xlu0 %v6925, 64
      %v7417 = vpop.permute.xlu0 %7416
      %7418 = vrot.lane.b32.xlu0 %v6926, 64
      %v7419 = vpop.permute.xlu0 %7418
      %7420 = vrot.lane.b32.xlu0 %v6927, 64
      %v7421 = vpop.permute.xlu0 %7420
      %7422 = vrot.lane.b32.xlu0 %v6928, 64
      %v7423 = vpop.permute.xlu0 %7422
      %7424 = vrot.lane.b32.xlu0 %v6929, 64
      %v7425 = vpop.permute.xlu0 %7424
      %7426 = vrot.lane.b32.xlu0 %v6930, 64
      %v7427 = vpop.permute.xlu0 %7426
      %7428 = vrot.lane.b32.xlu0 %v6931, 64
      %v7429 = vpop.permute.xlu0 %7428
      %7430 = vrot.lane.b32.xlu0 %v6932, 64
      %v7431 = vpop.permute.xlu0 %7430
      %7432 = vrot.lane.b32.xlu0 %v6933, 64
      %v7433 = vpop.permute.xlu0 %7432
      %7434 = vrot.lane.b32.xlu0 %v6934, 64
      %v7435 = vpop.permute.xlu0 %7434
      %7436 = vrot.lane.b32.xlu0 %v6935, 64
      %v7437 = vpop.permute.xlu0 %7436
      %7438 = vrot.lane.b32.xlu0 %v6936, 64
      %v7439 = vpop.permute.xlu0 %7438
      %7440 = vrot.lane.b32.xlu0 %v6937, 64
      %v7441 = vpop.permute.xlu0 %7440
      %7442 = vrot.lane.b32.xlu0 %v6938, 64
      %v7443 = vpop.permute.xlu0 %7442
      %7444 = vrot.lane.b32.xlu0 %v6939, 64
      %v7445 = vpop.permute.xlu0 %7444
      %7446 = vrot.lane.b32.xlu0 %v6940, 64
      %v7447 = vpop.permute.xlu0 %7446
      %7448 = vrot.lane.b32.xlu0 %v6941, 64
      %v7449 = vpop.permute.xlu0 %7448
      %7450 = vrot.lane.b32.xlu0 %v6942, 64
      %v7451 = vpop.permute.xlu0 %7450
      %7452 = vrot.lane.b32.xlu0 %v6943, 64
      %v7453 = vpop.permute.xlu0 %7452
      %7454 = vrot.lane.b32.xlu0 %v6944, 64
      %v7455 = vpop.permute.xlu0 %7454
      %7456 = vrot.lane.b32.xlu0 %v6945, 64
      %v7457 = vpop.permute.xlu0 %7456
      %7458 = vrot.lane.b32.xlu0 %v6946, 64
      %v7459 = vpop.permute.xlu0 %7458
      %7524 = vrot.lane.b32.xlu0 %v6948, 64
      %v7525 = vpop.permute.xlu0 %7524
      %7526 = vrot.lane.b32.xlu0 %v6949, 64
      %v7527 = vpop.permute.xlu0 %7526
      %7528 = vrot.lane.b32.xlu0 %v6950, 64
      %v7529 = vpop.permute.xlu0 %7528
      %7530 = vrot.lane.b32.xlu0 %v6951, 64
      %v7531 = vpop.permute.xlu0 %7530
      %7532 = vrot.lane.b32.xlu0 %v6952, 64
      %v7533 = vpop.permute.xlu0 %7532
      %7534 = vrot.lane.b32.xlu0 %v6953, 64
      %v7535 = vpop.permute.xlu0 %7534
      %7536 = vrot.lane.b32.xlu0 %v6954, 64
      %v7537 = vpop.permute.xlu0 %7536
      %7538 = vrot.lane.b32.xlu0 %v6955, 64
      %v7539 = vpop.permute.xlu0 %7538
      %7540 = vrot.lane.b32.xlu0 %v6956, 64
      %v7541 = vpop.permute.xlu0 %7540
      %7542 = vrot.lane.b32.xlu0 %v6957, 64
      %v7543 = vpop.permute.xlu0 %7542
      %7544 = vrot.lane.b32.xlu0 %v6958, 64
      %v7545 = vpop.permute.xlu0 %7544
      %7546 = vrot.lane.b32.xlu0 %v6959, 64
      %v7547 = vpop.permute.xlu0 %7546
      %7548 = vrot.lane.b32.xlu0 %v6960, 64
      %v7549 = vpop.permute.xlu0 %7548
      %7550 = vrot.lane.b32.xlu0 %v6961, 64
      %v7551 = vpop.permute.xlu0 %7550
      %7552 = vrot.lane.b32.xlu0 %v6962, 64
      %v7553 = vpop.permute.xlu0 %7552
      %7554 = vrot.lane.b32.xlu0 %v6963, 64
      %v7555 = vpop.permute.xlu0 %7554
      %7556 = vrot.lane.b32.xlu0 %v6964, 64
      %v7557 = vpop.permute.xlu0 %7556
      %7558 = vrot.lane.b32.xlu0 %v6965, 64
      %v7559 = vpop.permute.xlu0 %7558
      %7560 = vrot.lane.b32.xlu0 %v6966, 64
      %v7561 = vpop.permute.xlu0 %7560
      %7562 = vrot.lane.b32.xlu0 %v6967, 64
      %v7563 = vpop.permute.xlu0 %7562
      %7564 = vrot.lane.b32.xlu0 %v6968, 64
      %v7565 = vpop.permute.xlu0 %7564
      %7566 = vrot.lane.b32.xlu0 %v6969, 64
      %v7567 = vpop.permute.xlu0 %7566
      %7568 = vrot.lane.b32.xlu0 %v6970, 64
      %v7569 = vpop.permute.xlu0 %7568
      %7570 = vrot.lane.b32.xlu0 %v6971, 64
      %v7571 = vpop.permute.xlu0 %7570
      %7572 = vrot.lane.b32.xlu0 %v6972, 64
      %v7573 = vpop.permute.xlu0 %7572
      %7574 = vrot.lane.b32.xlu0 %v6973, 64
      %v7575 = vpop.permute.xlu0 %7574
      %7576 = vrot.lane.b32.xlu0 %v6974, 64
      %v7577 = vpop.permute.xlu0 %7576
      %7578 = vrot.lane.b32.xlu0 %v6975, 64
      %v7579 = vpop.permute.xlu0 %7578
      %7580 = vrot.lane.b32.xlu0 %v6976, 64
      %v7581 = vpop.permute.xlu0 %7580
      %7582 = vrot.lane.b32.xlu0 %v6977, 64
      %v7583 = vpop.permute.xlu0 %7582
      %7584 = vrot.lane.b32.xlu0 %v6978, 64
      %v7585 = vpop.permute.xlu0 %7584
      %7586 = vrot.lane.b32.xlu0 %v6979, 64
      %v7587 = vpop.permute.xlu0 %7586
      %v7620 = vsel %vm434, %v6723, %v7141
      %v7621 = vsel %vm434, %v6724, %v7143
      %v7622 = vsel %vm434, %v6725, %v7145
      %v7623 = vsel %vm434, %v6726, %v7147
      %v7624 = vsel %vm434, %v6727, %v7149
      %v7625 = vsel %vm434, %v6728, %v7151
      %v7626 = vsel %vm434, %v6729, %v7153
      %v7627 = vsel %vm434, %v6730, %v7155
      %v7628 = vsel %vm434, %v6731, %v7157
      %v7629 = vsel %vm434, %v6732, %v7159
      %v7630 = vsel %vm434, %v6733, %v7161
      %v7631 = vsel %vm434, %v6734, %v7163
      %v7632 = vsel %vm434, %v6735, %v7165
      %v7633 = vsel %vm434, %v6736, %v7167
      %v7634 = vsel %vm434, %v6737, %v7169
      %v7635 = vsel %vm434, %v6738, %v7171
      %v7636 = vsel %vm434, %v6739, %v7173
      %v7637 = vsel %vm434, %v6740, %v7175
      %v7638 = vsel %vm434, %v6741, %v7177
      %v7639 = vsel %vm434, %v6742, %v7179
      %v7640 = vsel %vm434, %v6743, %v7181
      %v7641 = vsel %vm434, %v6744, %v7183
      %v7642 = vsel %vm434, %v6745, %v7185
      %v7643 = vsel %vm434, %v6746, %v7187
      %v7644 = vsel %vm434, %v6747, %v7189
      %v7645 = vsel %vm434, %v6748, %v7191
      %v7646 = vsel %vm434, %v6749, %v7193
      %v7647 = vsel %vm434, %v6750, %v7195
      %v7648 = vsel %vm434, %v6751, %v7197
      %v7649 = vsel %vm434, %v6752, %v7199
      %v7650 = vsel %vm434, %v6753, %v7201
      %v7651 = vsel %vm434, %v6754, %v7203
      %v7652 = vsel %vm434, %v6755, %v7269
      %v7653 = vsel %vm434, %v6756, %v7271
      %v7654 = vsel %vm434, %v6757, %v7273
      %v7655 = vsel %vm434, %v6758, %v7275
      %v7656 = vsel %vm434, %v6759, %v7277
      %v7657 = vsel %vm434, %v6760, %v7279
      %v7658 = vsel %vm434, %v6761, %v7281
      %v7659 = vsel %vm434, %v6762, %v7283
      %v7660 = vsel %vm434, %v6763, %v7285
      %v7661 = vsel %vm434, %v6764, %v7287
      %v7662 = vsel %vm434, %v6765, %v7289
      %v7663 = vsel %vm434, %v6766, %v7291
      %v7664 = vsel %vm434, %v6767, %v7293
      %v7665 = vsel %vm434, %v6768, %v7295
      %v7666 = vsel %vm434, %v6769, %v7297
      %v7667 = vsel %vm434, %v6770, %v7299
      %v7668 = vsel %vm434, %v6771, %v7301
      %v7669 = vsel %vm434, %v6772, %v7303
      %v7670 = vsel %vm434, %v6773, %v7305
      %v7671 = vsel %vm434, %v6774, %v7307
      %v7672 = vsel %vm434, %v6775, %v7309
      %v7673 = vsel %vm434, %v6776, %v7311
      %v7674 = vsel %vm434, %v6777, %v7313
      %v7675 = vsel %vm434, %v6778, %v7315
      %v7676 = vsel %vm434, %v6779, %v7317
      %v7677 = vsel %vm434, %v6780, %v7319
      %v7678 = vsel %vm434, %v6781, %v7321
      %v7679 = vsel %vm434, %v6782, %v7323
      %v7680 = vsel %vm434, %v6783, %v7325
      %v7681 = vsel %vm434, %v6784, %v7327
      %v7682 = vsel %vm434, %v6785, %v7329
      %v7683 = vsel %vm434, %v6786, %v7331
      %v7684 = vsel %vm434, %v6787, %v7397
      %v7685 = vsel %vm434, %v6788, %v7399
      %v7686 = vsel %vm434, %v6789, %v7401
      %v7687 = vsel %vm434, %v6790, %v7403
      %v7688 = vsel %vm434, %v6791, %v7405
      %v7689 = vsel %vm434, %v6792, %v7407
      %v7690 = vsel %vm434, %v6793, %v7409
      %v7691 = vsel %vm434, %v6794, %v7411
      %v7692 = vsel %vm434, %v6795, %v7413
      %v7693 = vsel %vm434, %v6796, %v7415
      %v7694 = vsel %vm434, %v6797, %v7417
      %v7695 = vsel %vm434, %v6798, %v7419
      %v7696 = vsel %vm434, %v6799, %v7421
      %v7697 = vsel %vm434, %v6800, %v7423
      %v7698 = vsel %vm434, %v6801, %v7425
      %v7699 = vsel %vm434, %v6802, %v7427
      %v7700 = vsel %vm434, %v6803, %v7429
      %v7701 = vsel %vm434, %v6804, %v7431
      %v7702 = vsel %vm434, %v6805, %v7433
      %v7703 = vsel %vm434, %v6806, %v7435
      %v7704 = vsel %vm434, %v6807, %v7437
      %v7705 = vsel %vm434, %v6808, %v7439
      %v7706 = vsel %vm434, %v6809, %v7441
      %v7707 = vsel %vm434, %v6810, %v7443
      %v7708 = vsel %vm434, %v6811, %v7445
      %v7709 = vsel %vm434, %v6812, %v7447
      %v7710 = vsel %vm434, %v6813, %v7449
      %v7711 = vsel %vm434, %v6814, %v7451
      %v7712 = vsel %vm434, %v6815, %v7453
      %v7713 = vsel %vm434, %v6816, %v7455
      %v7714 = vsel %vm434, %v6817, %v7457
      %v7715 = vsel %vm434, %v6818, %v7459
      %v7716 = vsel %vm434, %v7044, %v7525
      %v7717 = vsel %vm434, %v7045, %v7527
      %v7718 = vsel %vm434, %v7046, %v7529
      %v7719 = vsel %vm434, %v7047, %v7531
      %v7720 = vsel %vm434, %v7048, %v7533
      %v7721 = vsel %vm434, %v7049, %v7535
      %v7722 = vsel %vm434, %v7050, %v7537
      %v7723 = vsel %vm434, %v7051, %v7539
      %v7724 = vsel %vm434, %v7052, %v7541
      %v7725 = vsel %vm434, %v7053, %v7543
      %v7726 = vsel %vm434, %v7054, %v7545
      %v7727 = vsel %vm434, %v7055, %v7547
      %v7728 = vsel %vm434, %v7056, %v7549
      %v7729 = vsel %vm434, %v7057, %v7551
      %v7730 = vsel %vm434, %v7058, %v7553
      %v7731 = vsel %vm434, %v7059, %v7555
      %v7732 = vsel %vm434, %v7060, %v7557
      %v7733 = vsel %vm434, %v7061, %v7559
      %v7734 = vsel %vm434, %v7062, %v7561
      %v7735 = vsel %vm434, %v7063, %v7563
      %v7736 = vsel %vm434, %v7064, %v7565
      %v7737 = vsel %vm434, %v7065, %v7567
      %v7738 = vsel %vm434, %v7066, %v7569
      %v7739 = vsel %vm434, %v7067, %v7571
      %v7740 = vsel %vm434, %v7068, %v7573
      %v7741 = vsel %vm434, %v7069, %v7575
      %v7742 = vsel %vm434, %v7070, %v7577
      %v7743 = vsel %vm434, %v7071, %v7579
      %v7744 = vsel %vm434, %v7072, %v7581
      %v7745 = vsel %vm434, %v7073, %v7583
      %v7746 = vsel %vm434, %v7074, %v7585
      %v7747 = vsel %vm434, %v7075, %v7587
      %v7748 = vpack.c.bf16 %v7621, %v7620
      %v7749 = vpack.c.bf16 %v7653, %v7652
      %v7750 = vpack.c.bf16 %v7685, %v7684
      %v7751 = vpack.c.bf16 %v7717, %v7716
      %v7752 = vpack.c.bf16 %v7077, %v7076
      %v7753 = vpack.c.bf16 %v7623, %v7622
      %v7754 = vpack.c.bf16 %v7655, %v7654
      %v7755 = vpack.c.bf16 %v7687, %v7686
      %v7756 = vpack.c.bf16 %v7719, %v7718
      %v7757 = vpack.c.bf16 %v7079, %v7078
      %v7758 = vpack.c.bf16 %v7625, %v7624
      %v7759 = vpack.c.bf16 %v7657, %v7656
      %v7760 = vpack.c.bf16 %v7689, %v7688
      %v7761 = vpack.c.bf16 %v7721, %v7720
      %v7762 = vpack.c.bf16 %v7081, %v7080
      %v7763 = vpack.c.bf16 %v7627, %v7626
      %v7764 = vpack.c.bf16 %v7659, %v7658
      %v7765 = vpack.c.bf16 %v7691, %v7690
      %v7766 = vpack.c.bf16 %v7723, %v7722
      %v7767 = vpack.c.bf16 %v7083, %v7082
      %v7768 = vpack.c.bf16 %v7629, %v7628
      %v7769 = vpack.c.bf16 %v7661, %v7660
      %v7770 = vpack.c.bf16 %v7693, %v7692
      %v7771 = vpack.c.bf16 %v7725, %v7724
      %v7772 = vpack.c.bf16 %v7085, %v7084
      %v7773 = vpack.c.bf16 %v7631, %v7630
      %v7774 = vpack.c.bf16 %v7663, %v7662
      %v7775 = vpack.c.bf16 %v7695, %v7694
      %v7776 = vpack.c.bf16 %v7727, %v7726
      %v7777 = vpack.c.bf16 %v7087, %v7086
      %v7778 = vpack.c.bf16 %v7633, %v7632
      %v7779 = vpack.c.bf16 %v7665, %v7664
      %v7780 = vpack.c.bf16 %v7697, %v7696
      %v7781 = vpack.c.bf16 %v7729, %v7728
      %v7782 = vpack.c.bf16 %v7089, %v7088
      %v7783 = vpack.c.bf16 %v7635, %v7634
      %v7784 = vpack.c.bf16 %v7667, %v7666
      %v7785 = vpack.c.bf16 %v7699, %v7698
      %v7786 = vpack.c.bf16 %v7731, %v7730
      %v7787 = vpack.c.bf16 %v7091, %v7090
      %v7788 = vpack.c.bf16 %v7637, %v7636
      %v7789 = vpack.c.bf16 %v7669, %v7668
      %v7790 = vpack.c.bf16 %v7701, %v7700
      %v7791 = vpack.c.bf16 %v7733, %v7732
      %v7792 = vpack.c.bf16 %v7093, %v7092
      %v7793 = vpack.c.bf16 %v7639, %v7638
      %v7794 = vpack.c.bf16 %v7671, %v7670
      %v7795 = vpack.c.bf16 %v7703, %v7702
      %v7796 = vpack.c.bf16 %v7735, %v7734
      %v7797 = vpack.c.bf16 %v7095, %v7094
      %v7798 = vpack.c.bf16 %v7641, %v7640
      %v7799 = vpack.c.bf16 %v7673, %v7672
      %v7800 = vpack.c.bf16 %v7705, %v7704
      %v7801 = vpack.c.bf16 %v7737, %v7736
      %v7802 = vpack.c.bf16 %v7097, %v7096
      %v7803 = vpack.c.bf16 %v7643, %v7642
      %v7804 = vpack.c.bf16 %v7675, %v7674
      %v7805 = vpack.c.bf16 %v7707, %v7706
      %v7806 = vpack.c.bf16 %v7739, %v7738
      %v7807 = vpack.c.bf16 %v7099, %v7098
      %v7808 = vpack.c.bf16 %v7645, %v7644
      %v7809 = vpack.c.bf16 %v7677, %v7676
      %v7810 = vpack.c.bf16 %v7709, %v7708
      %v7811 = vpack.c.bf16 %v7741, %v7740
      %v7812 = vpack.c.bf16 %v7101, %v7100
      %v7813 = vpack.c.bf16 %v7647, %v7646
      %v7814 = vpack.c.bf16 %v7679, %v7678
      %v7815 = vpack.c.bf16 %v7711, %v7710
      %v7816 = vpack.c.bf16 %v7743, %v7742
      %v7817 = vpack.c.bf16 %v7103, %v7102
      %v7818 = vpack.c.bf16 %v7649, %v7648
      %v7819 = vpack.c.bf16 %v7681, %v7680
      %v7820 = vpack.c.bf16 %v7713, %v7712
      %v7821 = vpack.c.bf16 %v7745, %v7744
      %v7822 = vpack.c.bf16 %v7105, %v7104
      %v7823 = vpack.c.bf16 %v7651, %v7650
      %v7824 = vpack.c.bf16 %v7683, %v7682
      %v7825 = vpack.c.bf16 %v7715, %v7714
      %v7826 = vpack.c.bf16 %v7747, %v7746
      %v7827 = vpack.c.bf16 %v7107, %v7106
      %v7828 = vld [vmem:[%s7] sm:$0xf]
      %v7829 = vld [vmem:[%s7 + $0x4] sm:$0xf]
      %v7830 = vld [vmem:[%s7 + $0x8] sm:$0xf]
      %v7831 = vld [vmem:[%s7 + $0xc] sm:$0xf]
      %v7832 = vld [vmem:[%s7 + $0x10] sm:$0xf]
      %v7833 = vld [vmem:[%s7 + $0x14] sm:$0xf]
      %v7834 = vld [vmem:[%s7 + $0x18] sm:$0xf]
      %v7835 = vld [vmem:[%s7 + $0x1c] sm:$0xf]
      %v7836 = vld [vmem:[%s7 + $0x20] sm:$0xf]
      %v7837 = vld [vmem:[%s7 + $0x24] sm:$0xf]
      %v7838 = vld [vmem:[%s7 + $0x28] sm:$0xf]
      %v7839 = vld [vmem:[%s7 + $0x2c] sm:$0xf]
      %v7840 = vld [vmem:[%s7 + $0x30] sm:$0xf]
      %v7841 = vld [vmem:[%s7 + $0x34] sm:$0xf]
      %v7842 = vld [vmem:[%s7 + $0x38] sm:$0xf]
      %v7843 = vld [vmem:[%s7 + $0x3c] sm:$0xf]
      %v7844 = vld [vmem:[%s7 + $0x40] sm:$0xf]
      %v7845 = vld [vmem:[%s7 + $0x44] sm:$0xf]
      %v7846 = vld [vmem:[%s7 + $0x48] sm:$0xf]
      %v7847 = vld [vmem:[%s7 + $0x4c] sm:$0xf]
      %v7848 = vld [vmem:[%s7 + $0x50] sm:$0xf]
      %v7849 = vld [vmem:[%s7 + $0x54] sm:$0xf]
      %v7850 = vld [vmem:[%s7 + $0x58] sm:$0xf]
      %v7851 = vld [vmem:[%s7 + $0x5c] sm:$0xf]
      %v7852 = vld [vmem:[%s7 + $0x60] sm:$0xf]
      %v7853 = vld [vmem:[%s7 + $0x64] sm:$0xf]
      %v7854 = vld [vmem:[%s7 + $0x68] sm:$0xf]
      %v7855 = vld [vmem:[%s7 + $0x6c] sm:$0xf]
      %v7856 = vld [vmem:[%s7 + $0x70] sm:$0xf]
      %v7857 = vld [vmem:[%s7 + $0x74] sm:$0xf]
      %v7858 = vld [vmem:[%s7 + $0x78] sm:$0xf]
      %v7859 = vld [vmem:[%s7 + $0x7c] sm:$0xf]
      %v7860 = vld [vmem:[%s7 + $0x80] sm:$0xf]
      %v7861 = vld [vmem:[%s7 + $0x84] sm:$0xf]
      %v7862 = vld [vmem:[%s7 + $0x88] sm:$0xf]
      %v7863 = vld [vmem:[%s7 + $0x8c] sm:$0xf]
      %v7864 = vld [vmem:[%s7 + $0x90] sm:$0xf]
      %v7865 = vld [vmem:[%s7 + $0x94] sm:$0xf]
      %v7866 = vld [vmem:[%s7 + $0x98] sm:$0xf]
      %v7867 = vld [vmem:[%s7 + $0x9c] sm:$0xf]
      %v7868 = vld [vmem:[%s7 + $0xa0] sm:$0xf]
      %v7869 = vld [vmem:[%s7 + $0xa4] sm:$0xf]
      %v7870 = vld [vmem:[%s7 + $0xa8] sm:$0xf]
      %v7871 = vld [vmem:[%s7 + $0xac] sm:$0xf]
      %v7872 = vld [vmem:[%s7 + $0xb0] sm:$0xf]
      %v7873 = vld [vmem:[%s7 + $0xb4] sm:$0xf]
      %v7874 = vld [vmem:[%s7 + $0xb8] sm:$0xf]
      %v7875 = vld [vmem:[%s7 + $0xbc] sm:$0xf]
      %v7876 = vld [vmem:[%s7 + $0xc0] sm:$0xf]
      %v7877 = vld [vmem:[%s7 + $0xc4] sm:$0xf]
      %v7878 = vld [vmem:[%s7 + $0xc8] sm:$0xf]
      %v7879 = vld [vmem:[%s7 + $0xcc] sm:$0xf]
      %v7880 = vld [vmem:[%s7 + $0xd0] sm:$0xf]
      %v7881 = vld [vmem:[%s7 + $0xd4] sm:$0xf]
      %v7882 = vld [vmem:[%s7 + $0xd8] sm:$0xf]
      %v7883 = vld [vmem:[%s7 + $0xdc] sm:$0xf]
      %v7884 = vld [vmem:[%s7 + $0xe0] sm:$0xf]
      %v7885 = vld [vmem:[%s7 + $0xe4] sm:$0xf]
      %v7886 = vld [vmem:[%s7 + $0xe8] sm:$0xf]
      %v7887 = vld [vmem:[%s7 + $0xec] sm:$0xf]
      %v7888 = vld [vmem:[%s7 + $0xf0] sm:$0xf]
      %v7889 = vld [vmem:[%s7 + $0xf4] sm:$0xf]
      %v7890 = vld [vmem:[%s7 + $0xf8] sm:$0xf]
      %v7891 = vld [vmem:[%s7 + $0xfc] sm:$0xf]
      %v7892 = vld [vmem:[%s7 + $0x100] sm:$0xf]
      %v7893 = vld [vmem:[%s7 + $0x104] sm:$0xf]
      %v7894 = vld [vmem:[%s7 + $0x108] sm:$0xf]
      %v7895 = vld [vmem:[%s7 + $0x10c] sm:$0xf]
      %v7896 = vld [vmem:[%s7 + $0x110] sm:$0xf]
      %v7897 = vld [vmem:[%s7 + $0x114] sm:$0xf]
      %v7898 = vld [vmem:[%s7 + $0x118] sm:$0xf]
      %v7899 = vld [vmem:[%s7 + $0x11c] sm:$0xf]
      %v7972 = vunpack.c.l.b16 %v7828
      %v7973 = vunpack.c.l.b16 %v7829
      %v7974 = vunpack.c.l.b16 %v7830
      %v7975 = vunpack.c.l.b16 %v7831
      %v7976 = vunpack.c.l.b16 %v7832
      %v7977 = vunpack.c.l.b16 %v7833
      %v7978 = vunpack.c.l.b16 %v7834
      %v7979 = vunpack.c.l.b16 %v7835
      %v7980 = vunpack.c.l.b16 %v7836
      %v7981 = vunpack.c.l.b16 %v7837
      %v7982 = vunpack.c.l.b16 %v7838
      %v7983 = vunpack.c.l.b16 %v7839
      %v7984 = vunpack.c.l.b16 %v7840
      %v7985 = vunpack.c.l.b16 %v7841
      %v7986 = vunpack.c.l.b16 %v7842
      %v7987 = vunpack.c.l.b16 %v7843
      %v7988 = vunpack.c.l.b16 %v7844
      %v7989 = vunpack.c.l.b16 %v7845
      %v7990 = vunpack.c.l.b16 %v7846
      %v7991 = vunpack.c.l.b16 %v7847
      %v7992 = vunpack.c.l.b16 %v7848
      %v7993 = vunpack.c.l.b16 %v7849
      %v7994 = vunpack.c.l.b16 %v7850
      %v7995 = vunpack.c.l.b16 %v7851
      %v7996 = vunpack.c.l.b16 %v7852
      %v7997 = vunpack.c.l.b16 %v7853
      %v7998 = vunpack.c.l.b16 %v7854
      %v7999 = vunpack.c.l.b16 %v7855
      %v8000 = vunpack.c.l.b16 %v7856
      %v8001 = vunpack.c.l.b16 %v7857
      %v8002 = vunpack.c.l.b16 %v7858
      %v8003 = vunpack.c.l.b16 %v7859
      %v8004 = vunpack.c.l.b16 %v7860
      %v8005 = vunpack.c.l.b16 %v7861
      %v8006 = vunpack.c.l.b16 %v7862
      %v8007 = vunpack.c.l.b16 %v7863
      %v8008 = vunpack.c.l.b16 %v7864
      %v8009 = vunpack.c.l.b16 %v7865
      %v8010 = vunpack.c.l.b16 %v7866
      %v8011 = vunpack.c.l.b16 %v7867
      %v8012 = vunpack.c.l.b16 %v7868
      %v8013 = vunpack.c.l.b16 %v7869
      %v8014 = vunpack.c.l.b16 %v7870
      %v8015 = vunpack.c.l.b16 %v7871
      %v8016 = vunpack.c.l.b16 %v7872
      %v8017 = vunpack.c.l.b16 %v7873
      %v8018 = vunpack.c.l.b16 %v7874
      %v8019 = vunpack.c.l.b16 %v7875
      %v8020 = vunpack.c.l.b16 %v7876
      %v8021 = vunpack.c.l.b16 %v7877
      %v8022 = vunpack.c.l.b16 %v7878
      %v8023 = vunpack.c.l.b16 %v7879
      %v8024 = vunpack.c.l.b16 %v7880
      %v8025 = vunpack.c.l.b16 %v7881
      %v8026 = vunpack.c.l.b16 %v7882
      %v8027 = vunpack.c.l.b16 %v7883
      %v8028 = vunpack.c.l.b16 %v7884
      %v8029 = vunpack.c.l.b16 %v7885
      %v8030 = vunpack.c.l.b16 %v7886
      %v8031 = vunpack.c.l.b16 %v7887
      %v8032 = vunpack.c.l.b16 %v7888
      %v8033 = vunpack.c.l.b16 %v7889
      %v8034 = vunpack.c.l.b16 %v7890
      %v8035 = vunpack.c.l.b16 %v7891
      %v8036 = vunpack.c.l.b16 %v7892
      %v8037 = vunpack.c.l.b16 %v7893
      %v8038 = vunpack.c.l.b16 %v7894
      %v8039 = vunpack.c.l.b16 %v7895
      %v8040 = vunpack.c.l.b16 %v7896
      %v8041 = vunpack.c.l.b16 %v7897
      %v8042 = vunpack.c.l.b16 %v7898
      %v8043 = vunpack.c.l.b16 %v7899
      %v8044 = vpack.c.b16 %v7973, %v7972
      %v8045 = vpack.c.b16 %v7975, %v7974
      %v8046 = vpack.c.b16 %v7977, %v7976
      %v8047 = vpack.c.b16 %v7979, %v7978
      %v8048 = vpack.c.b16 %v7981, %v7980
      %v8049 = vpack.c.b16 %v7983, %v7982
      %v8050 = vpack.c.b16 %v7985, %v7984
      %v8051 = vpack.c.b16 %v7987, %v7986
      %v8052 = vpack.c.b16 %v7989, %v7988
      %v8053 = vpack.c.b16 %v7991, %v7990
      %v8054 = vpack.c.b16 %v7993, %v7992
      %v8055 = vpack.c.b16 %v7995, %v7994
      %v8056 = vpack.c.b16 %v7997, %v7996
      %v8057 = vpack.c.b16 %v7999, %v7998
      %v8058 = vpack.c.b16 %v8001, %v8000
      %v8059 = vpack.c.b16 %v8003, %v8002
      %v8060 = vpack.c.b16 %v8005, %v8004
      %v8061 = vpack.c.b16 %v8007, %v8006
      %v8062 = vpack.c.b16 %v8009, %v8008
      %v8063 = vpack.c.b16 %v8011, %v8010
      %v8064 = vpack.c.b16 %v8013, %v8012
      %v8065 = vpack.c.b16 %v8015, %v8014
      %v8066 = vpack.c.b16 %v8017, %v8016
      %v8067 = vpack.c.b16 %v8019, %v8018
      %v8068 = vpack.c.b16 %v8021, %v8020
      %v8069 = vpack.c.b16 %v8023, %v8022
      %v8070 = vpack.c.b16 %v8025, %v8024
      %v8071 = vpack.c.b16 %v8027, %v8026
      %v8072 = vpack.c.b16 %v8029, %v8028
      %v8073 = vpack.c.b16 %v8031, %v8030
      %v8074 = vpack.c.b16 %v8033, %v8032
      %v8075 = vpack.c.b16 %v8035, %v8034
      %v8076 = vpack.c.b16 %v8037, %v8036
      %v8077 = vpack.c.b16 %v8039, %v8038
      %v8078 = vpack.c.b16 %v8041, %v8040
      %v8079 = vpack.c.b16 %v8043, %v8042
      %v8117 = vsel %vm434, %v7752, 0
      %v8120 = vsel %vm434, %v7757, 0
      %v8123 = vsel %vm434, %v7762, 0
      %v8126 = vsel %vm434, %v7767, 0
      %v8129 = vsel %vm434, %v7772, 0
      %v8132 = vsel %vm434, %v7777, 0
      %v8135 = vsel %vm434, %v7782, 0
      %v8138 = vsel %vm434, %v7787, 0
      %v8141 = vsel %vm434, %v7792, 0
      %v8144 = vsel %vm434, %v7797, 0
      %v8147 = vsel %vm434, %v7802, 0
      %v8150 = vsel %vm434, %v7807, 0
      %v8153 = vsel %vm434, %v7812, 0
      %v8156 = vsel %vm434, %v7817, 0
      %v8159 = vsel %vm434, %v7822, 0
      %v8162 = vsel %vm434, %v7827, 0
      %8164 = vmatpush.bf16.msra.mxu0 %v8051
      %8165 = vmatpush.bf16.msra.mxu0 %v8050
      %8166 = vmatpush.bf16.msra.mxu0 %v8049
      %8167 = vmatpush.bf16.msra.mxu0 %v8048
      %8168 = vmatpush.bf16.msra.mxu0 %v8047
      %8169 = vmatpush.bf16.msra.mxu0 %v8046
      %8170 = vmatpush.bf16.msra.mxu0 %v8045
      %8171 = vmatpush.bf16.msra.mxu0 %v8044
      %8172 = vmatmul.bf16.gmra.mxu0 %v7748
      %v8173 = vpop.f32.mrf.mxu0
      %v8174 = vadd.f32 0.0, %v8173
      %v8175 = vpop.f32.mrf.mxu0
      %v8176 = vadd.f32 0.0, %v8175
      %8177 = vmatmul.bf16.gmra.mxu0 %v7753
      %v8178 = vpop.f32.mrf.mxu0
      %v8179 = vadd.f32 0.0, %v8178
      %v8180 = vpop.f32.mrf.mxu0
      %v8181 = vadd.f32 0.0, %v8180
      %8182 = vmatmul.bf16.gmra.mxu0 %v7758
      %v8183 = vpop.f32.mrf.mxu0
      %v8184 = vadd.f32 0.0, %v8183
      %v8185 = vpop.f32.mrf.mxu0
      %v8186 = vadd.f32 0.0, %v8185
      %8187 = vmatmul.bf16.gmra.mxu0 %v7763
      %v8188 = vpop.f32.mrf.mxu0
      %v8189 = vadd.f32 0.0, %v8188
      %v8190 = vpop.f32.mrf.mxu0
      %v8191 = vadd.f32 0.0, %v8190
      %8192 = vmatmul.bf16.gmra.mxu0 %v7768
      %v8193 = vpop.f32.mrf.mxu0
      %v8194 = vadd.f32 0.0, %v8193
      %v8195 = vpop.f32.mrf.mxu0
      %v8196 = vadd.f32 0.0, %v8195
      %8197 = vmatmul.bf16.gmra.mxu0 %v7773
      %v8198 = vpop.f32.mrf.mxu0
      %v8199 = vadd.f32 0.0, %v8198
      %v8200 = vpop.f32.mrf.mxu0
      %v8201 = vadd.f32 0.0, %v8200
      %8202 = vmatmul.bf16.gmra.mxu0 %v7778
      %v8203 = vpop.f32.mrf.mxu0
      %v8204 = vadd.f32 0.0, %v8203
      %v8205 = vpop.f32.mrf.mxu0
      %v8206 = vadd.f32 0.0, %v8205
      %8207 = vmatmul.bf16.gmra.mxu0 %v7783
      %v8208 = vpop.f32.mrf.mxu0
      %v8209 = vadd.f32 0.0, %v8208
      %v8210 = vpop.f32.mrf.mxu0
      %v8211 = vadd.f32 0.0, %v8210
      %8212 = vmatmul.bf16.gmra.mxu0 %v7788
      %v8213 = vpop.f32.mrf.mxu0
      %v8214 = vadd.f32 0.0, %v8213
      %v8215 = vpop.f32.mrf.mxu0
      %v8216 = vadd.f32 0.0, %v8215
      %8217 = vmatmul.bf16.gmra.mxu0 %v7793
      %v8218 = vpop.f32.mrf.mxu0
      %v8219 = vadd.f32 0.0, %v8218
      %v8220 = vpop.f32.mrf.mxu0
      %v8221 = vadd.f32 0.0, %v8220
      %8222 = vmatmul.bf16.gmra.mxu0 %v7798
      %v8223 = vpop.f32.mrf.mxu0
      %v8224 = vadd.f32 0.0, %v8223
      %v8225 = vpop.f32.mrf.mxu0
      %v8226 = vadd.f32 0.0, %v8225
      %8227 = vmatmul.bf16.gmra.mxu0 %v7803
      %v8228 = vpop.f32.mrf.mxu0
      %v8229 = vadd.f32 0.0, %v8228
      %v8230 = vpop.f32.mrf.mxu0
      %v8231 = vadd.f32 0.0, %v8230
      %8232 = vmatmul.bf16.gmra.mxu0 %v7808
      %v8233 = vpop.f32.mrf.mxu0
      %v8234 = vadd.f32 0.0, %v8233
      %v8235 = vpop.f32.mrf.mxu0
      %v8236 = vadd.f32 0.0, %v8235
      %8237 = vmatmul.bf16.gmra.mxu0 %v7813
      %v8238 = vpop.f32.mrf.mxu0
      %v8239 = vadd.f32 0.0, %v8238
      %v8240 = vpop.f32.mrf.mxu0
      %v8241 = vadd.f32 0.0, %v8240
      %8242 = vmatmul.bf16.gmra.mxu0 %v7818
      %v8243 = vpop.f32.mrf.mxu0
      %v8244 = vadd.f32 0.0, %v8243
      %v8245 = vpop.f32.mrf.mxu0
      %v8246 = vadd.f32 0.0, %v8245
      %8247 = vmatmul.bf16.gmra.mxu0 %v7823
      %v8248 = vpop.f32.mrf.mxu0
      %v8249 = vadd.f32 0.0, %v8248
      %v8250 = vpop.f32.mrf.mxu0
      %v8251 = vadd.f32 0.0, %v8250
      %8252 = vdwg.mxu0
      %8253 = vmatpush.bf16.msra.mxu0 %v8059
      %8254 = vmatpush.bf16.msra.mxu0 %v8058
      %8255 = vmatpush.bf16.msra.mxu0 %v8057
      %8256 = vmatpush.bf16.msra.mxu0 %v8056
      %8257 = vmatpush.bf16.msra.mxu0 %v8055
      %8258 = vmatpush.bf16.msra.mxu0 %v8054
      %8259 = vmatpush.bf16.msra.mxu0 %v8053
      %8260 = vmatpush.bf16.msra.mxu0 %v8052
      %8261 = vmatmul.bf16.gmra.mxu0 %v7749
      %v8262 = vpop.f32.mrf.mxu0
      %v8263 = vadd.f32 %v8174, %v8262
      %v8264 = vpop.f32.mrf.mxu0
      %v8265 = vadd.f32 %v8176, %v8264
      %8266 = vmatmul.bf16.gmra.mxu0 %v7754
      %v8267 = vpop.f32.mrf.mxu0
      %v8268 = vadd.f32 %v8179, %v8267
      %v8269 = vpop.f32.mrf.mxu0
      %v8270 = vadd.f32 %v8181, %v8269
      %8271 = vmatmul.bf16.gmra.mxu0 %v7759
      %v8272 = vpop.f32.mrf.mxu0
      %v8273 = vadd.f32 %v8184, %v8272
      %v8274 = vpop.f32.mrf.mxu0
      %v8275 = vadd.f32 %v8186, %v8274
      %8276 = vmatmul.bf16.gmra.mxu0 %v7764
      %v8277 = vpop.f32.mrf.mxu0
      %v8278 = vadd.f32 %v8189, %v8277
      %v8279 = vpop.f32.mrf.mxu0
      %v8280 = vadd.f32 %v8191, %v8279
      %8281 = vmatmul.bf16.gmra.mxu0 %v7769
      %v8282 = vpop.f32.mrf.mxu0
      %v8283 = vadd.f32 %v8194, %v8282
      %v8284 = vpop.f32.mrf.mxu0
      %v8285 = vadd.f32 %v8196, %v8284
      %8286 = vmatmul.bf16.gmra.mxu0 %v7774
      %v8287 = vpop.f32.mrf.mxu0
      %v8288 = vadd.f32 %v8199, %v8287
      %v8289 = vpop.f32.mrf.mxu0
      %v8290 = vadd.f32 %v8201, %v8289
      %8291 = vmatmul.bf16.gmra.mxu0 %v7779
      %v8292 = vpop.f32.mrf.mxu0
      %v8293 = vadd.f32 %v8204, %v8292
      %v8294 = vpop.f32.mrf.mxu0
      %v8295 = vadd.f32 %v8206, %v8294
      %8296 = vmatmul.bf16.gmra.mxu0 %v7784
      %v8297 = vpop.f32.mrf.mxu0
      %v8298 = vadd.f32 %v8209, %v8297
      %v8299 = vpop.f32.mrf.mxu0
      %v8300 = vadd.f32 %v8211, %v8299
      %8301 = vmatmul.bf16.gmra.mxu0 %v7789
      %v8302 = vpop.f32.mrf.mxu0
      %v8303 = vadd.f32 %v8214, %v8302
      %v8304 = vpop.f32.mrf.mxu0
      %v8305 = vadd.f32 %v8216, %v8304
      %8306 = vmatmul.bf16.gmra.mxu0 %v7794
      %v8307 = vpop.f32.mrf.mxu0
      %v8308 = vadd.f32 %v8219, %v8307
      %v8309 = vpop.f32.mrf.mxu0
      %v8310 = vadd.f32 %v8221, %v8309
      %8311 = vmatmul.bf16.gmra.mxu0 %v7799
      %v8312 = vpop.f32.mrf.mxu0
      %v8313 = vadd.f32 %v8224, %v8312
      %v8314 = vpop.f32.mrf.mxu0
      %v8315 = vadd.f32 %v8226, %v8314
      %8316 = vmatmul.bf16.gmra.mxu0 %v7804
      %v8317 = vpop.f32.mrf.mxu0
      %v8318 = vadd.f32 %v8229, %v8317
      %v8319 = vpop.f32.mrf.mxu0
      %v8320 = vadd.f32 %v8231, %v8319
      %8321 = vmatmul.bf16.gmra.mxu0 %v7809
      %v8322 = vpop.f32.mrf.mxu0
      %v8323 = vadd.f32 %v8234, %v8322
      %v8324 = vpop.f32.mrf.mxu0
      %v8325 = vadd.f32 %v8236, %v8324
      %8326 = vmatmul.bf16.gmra.mxu0 %v7814
      %v8327 = vpop.f32.mrf.mxu0
      %v8328 = vadd.f32 %v8239, %v8327
      %v8329 = vpop.f32.mrf.mxu0
      %v8330 = vadd.f32 %v8241, %v8329
      %8331 = vmatmul.bf16.gmra.mxu0 %v7819
      %v8332 = vpop.f32.mrf.mxu0
      %v8333 = vadd.f32 %v8244, %v8332
      %v8334 = vpop.f32.mrf.mxu0
      %v8335 = vadd.f32 %v8246, %v8334
      %8336 = vmatmul.bf16.gmra.mxu0 %v7824
      %v8337 = vpop.f32.mrf.mxu0
      %v8338 = vadd.f32 %v8249, %v8337
      %v8339 = vpop.f32.mrf.mxu0
      %v8340 = vadd.f32 %v8251, %v8339
      %8341 = vdwg.mxu0
      %8342 = vmatpush.bf16.msra.mxu0 %v8067
      %8343 = vmatpush.bf16.msra.mxu0 %v8066
      %8344 = vmatpush.bf16.msra.mxu0 %v8065
      %8345 = vmatpush.bf16.msra.mxu0 %v8064
      %8346 = vmatpush.bf16.msra.mxu0 %v8063
      %8347 = vmatpush.bf16.msra.mxu0 %v8062
      %8348 = vmatpush.bf16.msra.mxu0 %v8061
      %8349 = vmatpush.bf16.msra.mxu0 %v8060
      %8350 = vmatmul.bf16.gmra.mxu0 %v7750
      %v8351 = vpop.f32.mrf.mxu0
      %v8352 = vadd.f32 %v8263, %v8351
      %v8353 = vpop.f32.mrf.mxu0
      %v8354 = vadd.f32 %v8265, %v8353
      %8355 = vmatmul.bf16.gmra.mxu0 %v7755
      %v8356 = vpop.f32.mrf.mxu0
      %v8357 = vadd.f32 %v8268, %v8356
      %v8358 = vpop.f32.mrf.mxu0
      %v8359 = vadd.f32 %v8270, %v8358
      %8360 = vmatmul.bf16.gmra.mxu0 %v7760
      %v8361 = vpop.f32.mrf.mxu0
      %v8362 = vadd.f32 %v8273, %v8361
      %v8363 = vpop.f32.mrf.mxu0
      %v8364 = vadd.f32 %v8275, %v8363
      %8365 = vmatmul.bf16.gmra.mxu0 %v7765
      %v8366 = vpop.f32.mrf.mxu0
      %v8367 = vadd.f32 %v8278, %v8366
      %v8368 = vpop.f32.mrf.mxu0
      %v8369 = vadd.f32 %v8280, %v8368
      %8370 = vmatmul.bf16.gmra.mxu0 %v7770
      %v8371 = vpop.f32.mrf.mxu0
      %v8372 = vadd.f32 %v8283, %v8371
      %v8373 = vpop.f32.mrf.mxu0
      %v8374 = vadd.f32 %v8285, %v8373
      %8375 = vmatmul.bf16.gmra.mxu0 %v7775
      %v8376 = vpop.f32.mrf.mxu0
      %v8377 = vadd.f32 %v8288, %v8376
      %v8378 = vpop.f32.mrf.mxu0
      %v8379 = vadd.f32 %v8290, %v8378
      %8380 = vmatmul.bf16.gmra.mxu0 %v7780
      %v8381 = vpop.f32.mrf.mxu0
      %v8382 = vadd.f32 %v8293, %v8381
      %v8383 = vpop.f32.mrf.mxu0
      %v8384 = vadd.f32 %v8295, %v8383
      %8385 = vmatmul.bf16.gmra.mxu0 %v7785
      %v8386 = vpop.f32.mrf.mxu0
      %v8387 = vadd.f32 %v8298, %v8386
      %v8388 = vpop.f32.mrf.mxu0
      %v8389 = vadd.f32 %v8300, %v8388
      %8390 = vmatmul.bf16.gmra.mxu0 %v7790
      %v8391 = vpop.f32.mrf.mxu0
      %v8392 = vadd.f32 %v8303, %v8391
      %v8393 = vpop.f32.mrf.mxu0
      %v8394 = vadd.f32 %v8305, %v8393
      %8395 = vmatmul.bf16.gmra.mxu0 %v7795
      %v8396 = vpop.f32.mrf.mxu0
      %v8397 = vadd.f32 %v8308, %v8396
      %v8398 = vpop.f32.mrf.mxu0
      %v8399 = vadd.f32 %v8310, %v8398
      %8400 = vmatmul.bf16.gmra.mxu0 %v7800
      %v8401 = vpop.f32.mrf.mxu0
      %v8402 = vadd.f32 %v8313, %v8401
      %v8403 = vpop.f32.mrf.mxu0
      %v8404 = vadd.f32 %v8315, %v8403
      %8405 = vmatmul.bf16.gmra.mxu0 %v7805
      %v8406 = vpop.f32.mrf.mxu0
      %v8407 = vadd.f32 %v8318, %v8406
      %v8408 = vpop.f32.mrf.mxu0
      %v8409 = vadd.f32 %v8320, %v8408
      %8410 = vmatmul.bf16.gmra.mxu0 %v7810
      %v8411 = vpop.f32.mrf.mxu0
      %v8412 = vadd.f32 %v8323, %v8411
      %v8413 = vpop.f32.mrf.mxu0
      %v8414 = vadd.f32 %v8325, %v8413
      %8415 = vmatmul.bf16.gmra.mxu0 %v7815
      %v8416 = vpop.f32.mrf.mxu0
      %v8417 = vadd.f32 %v8328, %v8416
      %v8418 = vpop.f32.mrf.mxu0
      %v8419 = vadd.f32 %v8330, %v8418
      %8420 = vmatmul.bf16.gmra.mxu0 %v7820
      %v8421 = vpop.f32.mrf.mxu0
      %v8422 = vadd.f32 %v8333, %v8421
      %v8423 = vpop.f32.mrf.mxu0
      %v8424 = vadd.f32 %v8335, %v8423
      %8425 = vmatmul.bf16.gmra.mxu0 %v7825
      %v8426 = vpop.f32.mrf.mxu0
      %v8427 = vadd.f32 %v8338, %v8426
      %v8428 = vpop.f32.mrf.mxu0
      %v8429 = vadd.f32 %v8340, %v8428
      %8430 = vdwg.mxu0
      %8431 = vmatpush.bf16.msra.mxu0 %v8075
      %8432 = vmatpush.bf16.msra.mxu0 %v8074
      %8433 = vmatpush.bf16.msra.mxu0 %v8073
      %8434 = vmatpush.bf16.msra.mxu0 %v8072
      %8435 = vmatpush.bf16.msra.mxu0 %v8071
      %8436 = vmatpush.bf16.msra.mxu0 %v8070
      %8437 = vmatpush.bf16.msra.mxu0 %v8069
      %8438 = vmatpush.bf16.msra.mxu0 %v8068
      %8439 = vmatmul.bf16.gmra.mxu0 %v7751
      %v8440 = vpop.f32.mrf.mxu0
      %v8441 = vadd.f32 %v8352, %v8440
      %v8442 = vpop.f32.mrf.mxu0
      %v8443 = vadd.f32 %v8354, %v8442
      %8444 = vmatmul.bf16.gmra.mxu0 %v7756
      %v8445 = vpop.f32.mrf.mxu0
      %v8446 = vadd.f32 %v8357, %v8445
      %v8447 = vpop.f32.mrf.mxu0
      %v8448 = vadd.f32 %v8359, %v8447
      %8449 = vmatmul.bf16.gmra.mxu0 %v7761
      %v8450 = vpop.f32.mrf.mxu0
      %v8451 = vadd.f32 %v8362, %v8450
      %v8452 = vpop.f32.mrf.mxu0
      %v8453 = vadd.f32 %v8364, %v8452
      %8454 = vmatmul.bf16.gmra.mxu0 %v7766
      %v8455 = vpop.f32.mrf.mxu0
      %v8456 = vadd.f32 %v8367, %v8455
      %v8457 = vpop.f32.mrf.mxu0
      %v8458 = vadd.f32 %v8369, %v8457
      %8459 = vmatmul.bf16.gmra.mxu0 %v7771
      %v8460 = vpop.f32.mrf.mxu0
      %v8461 = vadd.f32 %v8372, %v8460
      %v8462 = vpop.f32.mrf.mxu0
      %v8463 = vadd.f32 %v8374, %v8462
      %8464 = vmatmul.bf16.gmra.mxu0 %v7776
      %v8465 = vpop.f32.mrf.mxu0
      %v8466 = vadd.f32 %v8377, %v8465
      %v8467 = vpop.f32.mrf.mxu0
      %v8468 = vadd.f32 %v8379, %v8467
      %8469 = vmatmul.bf16.gmra.mxu0 %v7781
      %v8470 = vpop.f32.mrf.mxu0
      %v8471 = vadd.f32 %v8382, %v8470
      %v8472 = vpop.f32.mrf.mxu0
      %v8473 = vadd.f32 %v8384, %v8472
      %8474 = vmatmul.bf16.gmra.mxu0 %v7786
      %v8475 = vpop.f32.mrf.mxu0
      %v8476 = vadd.f32 %v8387, %v8475
      %v8477 = vpop.f32.mrf.mxu0
      %v8478 = vadd.f32 %v8389, %v8477
      %8479 = vmatmul.bf16.gmra.mxu0 %v7791
      %v8480 = vpop.f32.mrf.mxu0
      %v8481 = vadd.f32 %v8392, %v8480
      %v8482 = vpop.f32.mrf.mxu0
      %v8483 = vadd.f32 %v8394, %v8482
      %8484 = vmatmul.bf16.gmra.mxu0 %v7796
      %v8485 = vpop.f32.mrf.mxu0
      %v8486 = vadd.f32 %v8397, %v8485
      %v8487 = vpop.f32.mrf.mxu0
      %v8488 = vadd.f32 %v8399, %v8487
      %8489 = vmatmul.bf16.gmra.mxu0 %v7801
      %v8490 = vpop.f32.mrf.mxu0
      %v8491 = vadd.f32 %v8402, %v8490
      %v8492 = vpop.f32.mrf.mxu0
      %v8493 = vadd.f32 %v8404, %v8492
      %8494 = vmatmul.bf16.gmra.mxu0 %v7806
      %v8495 = vpop.f32.mrf.mxu0
      %v8496 = vadd.f32 %v8407, %v8495
      %v8497 = vpop.f32.mrf.mxu0
      %v8498 = vadd.f32 %v8409, %v8497
      %8499 = vmatmul.bf16.gmra.mxu0 %v7811
      %v8500 = vpop.f32.mrf.mxu0
      %v8501 = vadd.f32 %v8412, %v8500
      %v8502 = vpop.f32.mrf.mxu0
      %v8503 = vadd.f32 %v8414, %v8502
      %8504 = vmatmul.bf16.gmra.mxu0 %v7816
      %v8505 = vpop.f32.mrf.mxu0
      %v8506 = vadd.f32 %v8417, %v8505
      %v8507 = vpop.f32.mrf.mxu0
      %v8508 = vadd.f32 %v8419, %v8507
      %8509 = vmatmul.bf16.gmra.mxu0 %v7821
      %v8510 = vpop.f32.mrf.mxu0
      %v8511 = vadd.f32 %v8422, %v8510
      %v8512 = vpop.f32.mrf.mxu0
      %v8513 = vadd.f32 %v8424, %v8512
      %8514 = vmatmul.bf16.gmra.mxu0 %v7826
      %v8515 = vpop.f32.mrf.mxu0
      %v8516 = vadd.f32 %v8427, %v8515
      %v8517 = vpop.f32.mrf.mxu0
      %v8518 = vadd.f32 %v8429, %v8517
      %8519 = vdwg.mxu0
      %8520 = vmatpush.bf16.msra.mxu0 0
      %8521 = vmatpush.bf16.msra.mxu0 0
      %8522 = vmatpush.bf16.msra.mxu0 0
      %8523 = vmatpush.bf16.msra.mxu0 0
      %8524 = vmatpush.bf16.msra.mxu0 %v8079
      %8525 = vmatpush.bf16.msra.mxu0 %v8078
      %8526 = vmatpush.bf16.msra.mxu0 %v8077
      %8527 = vmatpush.bf16.msra.mxu0 %v8076
      %8528 = vmatmul.bf16.gmra.mxu0 %v8117
      %v8529 = vpop.f32.mrf.mxu0
      %v8530 = vadd.f32 %v8441, %v8529
      %v8531 = vpop.f32.mrf.mxu0
      %v8532 = vadd.f32 %v8443, %v8531
      %8533 = vmatmul.bf16.gmra.mxu0 %v8120
      %v8534 = vpop.f32.mrf.mxu0
      %v8535 = vadd.f32 %v8446, %v8534
      %v8536 = vpop.f32.mrf.mxu0
      %v8537 = vadd.f32 %v8448, %v8536
      %8538 = vmatmul.bf16.gmra.mxu0 %v8123
      %v8539 = vpop.f32.mrf.mxu0
      %v8540 = vadd.f32 %v8451, %v8539
      %v8541 = vpop.f32.mrf.mxu0
      %v8542 = vadd.f32 %v8453, %v8541
      %8543 = vmatmul.bf16.gmra.mxu0 %v8126
      %v8544 = vpop.f32.mrf.mxu0
      %v8545 = vadd.f32 %v8456, %v8544
      %v8546 = vpop.f32.mrf.mxu0
      %v8547 = vadd.f32 %v8458, %v8546
      %8548 = vmatmul.bf16.gmra.mxu0 %v8129
      %v8549 = vpop.f32.mrf.mxu0
      %v8550 = vadd.f32 %v8461, %v8549
      %v8551 = vpop.f32.mrf.mxu0
      %v8552 = vadd.f32 %v8463, %v8551
      %8553 = vmatmul.bf16.gmra.mxu0 %v8132
      %v8554 = vpop.f32.mrf.mxu0
      %v8555 = vadd.f32 %v8466, %v8554
      %v8556 = vpop.f32.mrf.mxu0
      %v8557 = vadd.f32 %v8468, %v8556
      %8558 = vmatmul.bf16.gmra.mxu0 %v8135
      %v8559 = vpop.f32.mrf.mxu0
      %v8560 = vadd.f32 %v8471, %v8559
      %v8561 = vpop.f32.mrf.mxu0
      %v8562 = vadd.f32 %v8473, %v8561
      %8563 = vmatmul.bf16.gmra.mxu0 %v8138
      %v8564 = vpop.f32.mrf.mxu0
      %v8565 = vadd.f32 %v8476, %v8564
      %v8566 = vpop.f32.mrf.mxu0
      %v8567 = vadd.f32 %v8478, %v8566
      %8568 = vmatmul.bf16.gmra.mxu0 %v8141
      %v8569 = vpop.f32.mrf.mxu0
      %v8570 = vadd.f32 %v8481, %v8569
      %v8571 = vpop.f32.mrf.mxu0
      %v8572 = vadd.f32 %v8483, %v8571
      %8573 = vmatmul.bf16.gmra.mxu0 %v8144
      %v8574 = vpop.f32.mrf.mxu0
      %v8575 = vadd.f32 %v8486, %v8574
      %v8576 = vpop.f32.mrf.mxu0
      %v8577 = vadd.f32 %v8488, %v8576
      %8578 = vmatmul.bf16.gmra.mxu0 %v8147
      %v8579 = vpop.f32.mrf.mxu0
      %v8580 = vadd.f32 %v8491, %v8579
      %v8581 = vpop.f32.mrf.mxu0
      %v8582 = vadd.f32 %v8493, %v8581
      %8583 = vmatmul.bf16.gmra.mxu0 %v8150
      %v8584 = vpop.f32.mrf.mxu0
      %v8585 = vadd.f32 %v8496, %v8584
      %v8586 = vpop.f32.mrf.mxu0
      %v8587 = vadd.f32 %v8498, %v8586
      %8588 = vmatmul.bf16.gmra.mxu0 %v8153
      %v8589 = vpop.f32.mrf.mxu0
      %v8590 = vadd.f32 %v8501, %v8589
      %v8591 = vpop.f32.mrf.mxu0
      %v8592 = vadd.f32 %v8503, %v8591
      %8593 = vmatmul.bf16.gmra.mxu0 %v8156
      %v8594 = vpop.f32.mrf.mxu0
      %v8595 = vadd.f32 %v8506, %v8594
      %v8596 = vpop.f32.mrf.mxu0
      %v8597 = vadd.f32 %v8508, %v8596
      %8598 = vmatmul.bf16.gmra.mxu0 %v8159
      %v8599 = vpop.f32.mrf.mxu0
      %v8600 = vadd.f32 %v8511, %v8599
      %v8601 = vpop.f32.mrf.mxu0
      %v8602 = vadd.f32 %v8513, %v8601
      %8603 = vmatmul.bf16.gmra.mxu0 %v8162
      %v8604 = vpop.f32.mrf.mxu0
      %v8605 = vadd.f32 %v8516, %v8604
      %v8606 = vpop.f32.mrf.mxu0
      %v8607 = vadd.f32 %v8518, %v8606
      %8608 = vdwg.mxu0
      %v8610 = vperm.slane %v368, 0
      %v8612 = vmul.f32 %v8530, %v8610
      %v8613 = vmul.f32 %v8532, %v8610
      %v8614 = vmul.f32 %v8535, %v8610
      %v8615 = vmul.f32 %v8537, %v8610
      %v8616 = vmul.f32 %v8540, %v8610
      %v8617 = vmul.f32 %v8542, %v8610
      %v8618 = vmul.f32 %v8545, %v8610
      %v8619 = vmul.f32 %v8547, %v8610
      %v8620 = vmul.f32 %v8550, %v8610
      %v8621 = vmul.f32 %v8552, %v8610
      %v8622 = vmul.f32 %v8555, %v8610
      %v8623 = vmul.f32 %v8557, %v8610
      %v8624 = vmul.f32 %v8560, %v8610
      %v8625 = vmul.f32 %v8562, %v8610
      %v8626 = vmul.f32 %v8565, %v8610
      %v8627 = vmul.f32 %v8567, %v8610
      %v8628 = vmul.f32 %v8570, %v8610
      %v8629 = vmul.f32 %v8572, %v8610
      %v8630 = vmul.f32 %v8575, %v8610
      %v8631 = vmul.f32 %v8577, %v8610
      %v8632 = vmul.f32 %v8580, %v8610
      %v8633 = vmul.f32 %v8582, %v8610
      %v8634 = vmul.f32 %v8585, %v8610
      %v8635 = vmul.f32 %v8587, %v8610
      %v8636 = vmul.f32 %v8590, %v8610
      %v8637 = vmul.f32 %v8592, %v8610
      %v8638 = vmul.f32 %v8595, %v8610
      %v8639 = vmul.f32 %v8597, %v8610
      %v8640 = vmul.f32 %v8600, %v8610
      %v8641 = vmul.f32 %v8602, %v8610
      %v8642 = vmul.f32 %v8605, %v8610
      %v8643 = vmul.f32 %v8607, %v8610
      %v8645 = vperm.slane %v369, 0
      %v8647 = vadd.f32 %v8612, %v8645
      %v8648 = vadd.f32 %v8613, %v8645
      %v8649 = vadd.f32 %v8614, %v8645
      %v8650 = vadd.f32 %v8615, %v8645
      %v8651 = vadd.f32 %v8616, %v8645
      %v8652 = vadd.f32 %v8617, %v8645
      %v8653 = vadd.f32 %v8618, %v8645
      %v8654 = vadd.f32 %v8619, %v8645
      %v8655 = vadd.f32 %v8620, %v8645
      %v8656 = vadd.f32 %v8621, %v8645
      %v8657 = vadd.f32 %v8622, %v8645
      %v8658 = vadd.f32 %v8623, %v8645
      %v8659 = vadd.f32 %v8624, %v8645
      %v8660 = vadd.f32 %v8625, %v8645
      %v8661 = vadd.f32 %v8626, %v8645
      %v8662 = vadd.f32 %v8627, %v8645
      %v8663 = vadd.f32 %v8628, %v8645
      %v8664 = vadd.f32 %v8629, %v8645
      %v8665 = vadd.f32 %v8630, %v8645
      %v8666 = vadd.f32 %v8631, %v8645
      %v8667 = vadd.f32 %v8632, %v8645
      %v8668 = vadd.f32 %v8633, %v8645
      %v8669 = vadd.f32 %v8634, %v8645
      %v8670 = vadd.f32 %v8635, %v8645
      %v8671 = vadd.f32 %v8636, %v8645
      %v8672 = vadd.f32 %v8637, %v8645
      %v8673 = vadd.f32 %v8638, %v8645
      %v8674 = vadd.f32 %v8639, %v8645
      %v8675 = vadd.f32 %v8640, %v8645
      %v8676 = vadd.f32 %v8641, %v8645
      %v8677 = vadd.f32 %v8642, %v8645
      %v8678 = vadd.f32 %v8643, %v8645
      %v8679 = vmax.f32 %v8647, 0.0
      %v8680 = vmax.f32 %v8648, 0.0
      %v8681 = vmax.f32 %v8649, 0.0
      %v8682 = vmax.f32 %v8650, 0.0
      %v8683 = vmax.f32 %v8651, 0.0
      %v8684 = vmax.f32 %v8652, 0.0
      %v8685 = vmax.f32 %v8653, 0.0
      %v8686 = vmax.f32 %v8654, 0.0
      %v8687 = vmax.f32 %v8655, 0.0
      %v8688 = vmax.f32 %v8656, 0.0
      %v8689 = vmax.f32 %v8657, 0.0
      %v8690 = vmax.f32 %v8658, 0.0
      %v8691 = vmax.f32 %v8659, 0.0
      %v8692 = vmax.f32 %v8660, 0.0
      %v8693 = vmax.f32 %v8661, 0.0
      %v8694 = vmax.f32 %v8662, 0.0
      %v8695 = vmax.f32 %v8663, 0.0
      %v8696 = vmax.f32 %v8664, 0.0
      %v8697 = vmax.f32 %v8665, 0.0
      %v8698 = vmax.f32 %v8666, 0.0
      %v8699 = vmax.f32 %v8667, 0.0
      %v8700 = vmax.f32 %v8668, 0.0
      %v8701 = vmax.f32 %v8669, 0.0
      %v8702 = vmax.f32 %v8670, 0.0
      %v8703 = vmax.f32 %v8671, 0.0
      %v8704 = vmax.f32 %v8672, 0.0
      %v8705 = vmax.f32 %v8673, 0.0
      %v8706 = vmax.f32 %v8674, 0.0
      %v8707 = vmax.f32 %v8675, 0.0
      %v8708 = vmax.f32 %v8676, 0.0
      %v8709 = vmax.f32 %v8677, 0.0
      %v8710 = vmax.f32 %v8678, 0.0
      %8711 = vmatpush.msra.mxu0 %v8694
      %8712 = vmatpush.msra.mxu0 %v8693
      %8713 = vmatpush.msra.mxu0 %v8692
      %8714 = vmatpush.msra.mxu0 %v8691
      %8715 = vmatpush.msra.mxu0 %v8690
      %8716 = vmatpush.msra.mxu0 %v8689
      %8717 = vmatpush.msra.mxu0 %v8688
      %8718 = vmatpush.msra.mxu0 %v8687
      %8719 = vmatpush.msra.mxu0 %v8686
      %8720 = vmatpush.msra.mxu0 %v8685
      %8721 = vmatpush.msra.mxu0 %v8684
      %8722 = vmatpush.msra.mxu0 %v8683
      %8723 = vmatpush.msra.mxu0 %v8682
      %8724 = vmatpush.msra.mxu0 %v8681
      %8725 = vmatpush.msra.mxu0 %v8680
      %8726 = vmatpush.msra.mxu0 %v8679
      %8727 = vmatmul.f32.gmra.mxu0 %v414
      %v8728 = vpop.f32.mrf.mxu0
      %v8729 = vadd.f32 0.0, %v8728
      %8730 = vdwg.mxu0
      %8731 = vmatpush.msra.mxu0 %v8710
      %8732 = vmatpush.msra.mxu0 %v8709
      %8733 = vmatpush.msra.mxu0 %v8708
      %8734 = vmatpush.msra.mxu0 %v8707
      %8735 = vmatpush.msra.mxu0 %v8706
      %8736 = vmatpush.msra.mxu0 %v8705
      %8737 = vmatpush.msra.mxu0 %v8704
      %8738 = vmatpush.msra.mxu0 %v8703
      %8739 = vmatpush.msra.mxu0 %v8702
      %8740 = vmatpush.msra.mxu0 %v8701
      %8741 = vmatpush.msra.mxu0 %v8700
      %8742 = vmatpush.msra.mxu0 %v8699
      %8743 = vmatpush.msra.mxu0 %v8698
      %8744 = vmatpush.msra.mxu0 %v8697
      %8745 = vmatpush.msra.mxu0 %v8696
      %8746 = vmatpush.msra.mxu0 %v8695
      %8747 = vmatmul.f32.gmra.mxu0 %v415
      %v8748 = vpop.f32.mrf.mxu0
      %v8749 = vadd.f32 %v8729, %v8748
      %8750 = vdwg.mxu0
      %vm8751 = vcmask 519168
      %8752 = vst.msk [vmem:[%s362] sm:$0xf] %vm8751, %v8749
      %p8753 = scmp.lt.s32.totalorder %s21, 1
      %s8754 = scalar_select %p8753, %s21, 1
      %s8755 = smul.addr %s8754, 4
      %s8756 = scalar_lea.vmem %s10, %s8755
      // Predicated region
      $region61: #{cnn_lstm_forward.2} parent=59 // pred_check
        %p8757 = pneg %p254
      $region62: #{cnn_lstm_forward.2} parent=59 // pred_check_branch
        %8759 = sbr.rel (%p8757) target = $region64
      $region63: #{cnn_lstm_forward.2} parent=59 // pred_region
        _
      $region64: #{cnn_lstm_forward.2} parent=59 // pred_fallthru
        _
    $region60: #{cnn_lstm_forward.2} parent=5 // pred_fallthru
      _
    %p8760 = scmp.le.s32.totalorder 2, %s16
    // Predicated region
    $region65: #{cnn_lstm_forward.2} parent=5 // pred_check
      %p8761 = pneg %p8760
    $region66: #{cnn_lstm_forward.2} parent=5 // pred_check_branch
      %8763 = sbr.rel (%p8761) target = $region68
    $region67: #{cnn_lstm_forward.2} parent=5 // pred_region
      %s8764 = ssub.s32 %s16, 2
      // Predicated region
      $region69: #{cnn_lstm_forward.2} parent=67 // pred_check
        %p8765 = pneg %p260
      $region70: #{cnn_lstm_forward.2} parent=67 // pred_check_branch
        %8767 = sbr.rel (%p8765) target = $region72
      $region71: #{cnn_lstm_forward.2} parent=67 // pred_region
        %p8768 = scmp.lt.s32.totalorder %s22, 1
        %s8769 = scalar_select %p8768, %s22, 1
        %s8770 = smul.addr %s8769, 4
        %s8771 = scalar_lea.vmem %s10, %s8770
      $region72: #{cnn_lstm_forward.2} parent=67 // pred_fallthru
        _
    $region68: #{cnn_lstm_forward.2} parent=5 // pred_fallthru
      _
  $region6: #{cnn_lstm_forward.2} parent=0 // loop_footer
    %s20 = sadd.s32 1, %s16
  $region7: #{cnn_lstm_forward.2} parent=0 // loop_footer_branch
    %15 = sbr.rel target = $region3
  $region8: #{cnn_lstm_forward.2} parent=0 // loop_exit
    _

</llo_original>
